<compile_context>
chip_gen: v7x
topology: tpu7x:2x2x1
jax: 0.10.0
libtpu: 0.0.40
codegen_flags: <defaults>
</compile_context>

<pallas_src>
import functools

import jax
import jax.numpy as jnp
from jax.experimental import pallas as pl
from jax.experimental.pallas import tpu as pltpu

_K = 3     # conv kernel size
_PK = 3    # pool window
_PS = 2    # pool stride


# ------------------------------ kernel helpers ------------------------------ #

def _conv3x3_flat(a, w_taps, cin, n_rows, row_stride, col_stride):
    """3x3 VALID conv on a row-flattened activation (row = y*W + x), tap accumulation.

    w_taps: (9*cin, cout); tap k = dy*3 + dx lives in rows [k*cin, (k+1)*cin).
    Offset (dy, dx) is the constant row shift dy*row_stride + dx*col_stride.
    Returns (n_rows, cout) fp32 (no bias / activation).
    """
    acc = None
    for dy in range(_K):
        for dx in range(_K):
            k = dy * _K + dx
            s = dy * row_stride + dx * col_stride
            part = jnp.dot(a[s:s + n_rows], w_taps[k * cin:(k + 1) * cin],
                           preferred_element_type=jnp.float32)
            acc = part if acc is None else acc + part
    return acc


def _maxpool3_flat(a, n_rows, row_stride, col_stride):
    """3x3 max over the flattened-row grid, separable (3 vertical + 3 horizontal maxes).

    The stride-2 of MaxPool2d only changes which home rows are consumed downstream,
    so no strided access is needed here.
    """
    nv = n_rows + (_PK - 1) * col_stride
    v = jnp.maximum(jnp.maximum(a[0:nv], a[row_stride:row_stride + nv]),
                    a[2 * row_stride:2 * row_stride + nv])
    return jnp.maximum(
        jnp.maximum(v[0:n_rows], v[col_stride:col_stride + n_rows]),
        v[2 * col_stride:2 * col_stride + n_rows])


# ------------------------------ fused kernel ------------------------------- #

def _fused_forward_kernel(
    x_ref, w1_ref, b1_ref, w2_ref, b2_ref,
    wf1_ref, bf1_ref, wf2_ref, bf2_ref, wf3_ref, bf3_ref,
    o_ref,
    *, W, Cin, C1, C1R, P1R, C2R, P2R, feat_rows,
):
    f32, bf16 = jnp.float32, jnp.bfloat16

    x = x_ref[...]                                               # (H*W, Cin) bf16

    # ---- conv1 + bias + ReLU (9 shifted-slab matmuls, M=C1R, fp32 accumulate) ----
    c1 = _conv3x3_flat(x, w1_ref[...], Cin, C1R, W, 1)
    c1 = jnp.maximum(c1 + b1_ref[...], 0.0)                     # (C1R, C1) f32

    # ---- maxpool1 (3x3, stride 2) ----
    p1 = _maxpool3_flat(c1, P1R, W, 1).astype(bf16)              # (P1R, C1) bf16 MXU feed

    # ---- conv2 + bias + ReLU on the pool1 "home row" grid (strides 2W / 2) ----
    c2 = _conv3x3_flat(p1, w2_ref[...], C1, C2R, _PS * W, _PS)
    c2 = jnp.maximum(c2 + b2_ref[...], 0.0)                     # (C2R, C2) f32

    # ---- maxpool2 (3x3, stride 2) on the conv2 home-row grid ----
    p2 = _maxpool3_flat(c2, P2R, _PS * W, _PS)                   # (P2R, C2) f32

    # ---- flatten (NCHW order folded into wf1) -> lane-dense (1, PH2*PW2*C2) row ----
    feat = jnp.concatenate([p2[r:r + 1, :] for r in feat_rows], axis=1).astype(bf16)

    # ---- MLP head: fc1 -> ReLU -> (dropout=id) -> fc2 -> ReLU -> (dropout=id) -> fc3 ----
    z = jnp.maximum(jnp.dot(feat, wf1_ref[...], preferred_element_type=f32)
                    + bf1_ref[...], 0.0)
    z = jnp.maximum(jnp.dot(z.astype(bf16), wf2_ref[...], preferred_element_type=f32)
                    + bf2_ref[...], 0.0)
    z = jnp.dot(z.astype(bf16), wf3_ref[...], preferred_element_type=f32) + bf3_ref[...]
    o_ref[...] = z


# --------------------------------- wrapper --------------------------------- #

def _pool_out(size):
    return (size - _PK) // _PS + 1


def pack_params(params):
    """One-time weight re-layout / casts (done once at init, not per forward call)."""
    f32, bf16 = jnp.float32, jnp.bfloat16
    c1, cin = params['conv1_w'].shape[:2]
    c2 = params['conv2_w'].shape[0]

    # conv taps -> (9*Cin, Cout) with row index (dy*3 + dx)*Cin + ci
    w1 = jnp.transpose(params['conv1_w'], (2, 3, 1, 0)).reshape(_K * _K * cin, c1).astype(bf16)
    w2 = jnp.transpose(params['conv2_w'], (2, 3, 1, 0)).reshape(_K * _K * c1, c2).astype(bf16)

    # fc1: fold PyTorch's NCHW flatten (c, h, w) into the kernel's (h, w, c) feature order
    n_feat = params['fc1_w'].shape[1]
    hw = n_feat // c2
    side = int(round(hw ** 0.5))
    assert side * side * c2 == n_feat, "fc1 input is not a square spatial map"
    wf1 = jnp.transpose(params['fc1_w'].reshape(-1, c2, side, side),
                        (2, 3, 1, 0)).reshape(n_feat, -1).astype(bf16)

    return {
        'w1': w1, 'b1': params['conv1_b'].reshape(1, -1).astype(f32),
        'w2': w2, 'b2': params['conv2_b'].reshape(1, -1).astype(f32),
        'wf1': wf1, 'bf1': params['fc1_b'].reshape(1, -1).astype(f32),
        'wf2': params['fc2_w'].T.astype(bf16),
        'bf2': params['fc2_b'].reshape(1, -1).astype(f32),
        'wf3': params['fc3_w'].T.astype(bf16),
        'bf3': params['fc3_b'].reshape(1, -1).astype(f32),
    }


def conv_classification_forward(x_nchw, packed):
    n, cin, h, w = x_nchw.shape
    c1 = packed['w1'].shape[1]
    c2 = packed['w2'].shape[1]
    out_dim = packed['wf3'].shape[1]

    oh1, ow1 = h - (_K - 1), w - (_K - 1)
    ph1, pw1 = _pool_out(oh1), _pool_out(ow1)
    oh2, ow2 = ph1 - (_K - 1), pw1 - (_K - 1)
    ph2, pw2 = _pool_out(oh2), _pool_out(ow2)
    assert ph2 * pw2 * c2 == packed['wf1'].shape[0], "spatial size mismatch with fc1"

    # Flattened "home row" extents (row = y*W + x of the original input grid):
    #   conv1 home stride (W, 1); pool1/conv2 home stride (2W, 2); pool2 home stride (4W, 4).
    p2r = _PS * _PS * w * (ph2 - 1) + _PS * _PS * (pw2 - 1) + 1      # pool2 rows needed
    c2r = p2r + (_PK - 1) * _PS * (w + 1)                            # conv2 rows needed
    p1r = c2r + (_K - 1) * _PS * (w + 1)                             # pool1 rows needed
    c1r = p1r + (_PK - 1) * (w + 1)                                  # conv1 rows needed
    assert c1r + (_K - 1) * (w + 1) <= h * w, "input too small for flattened-row conv"
    feat_rows = tuple(_PS * _PS * (w * qy + qx) for qy in range(ph2) for qx in range(pw2))

    # NCHW -> NHWC (channels on lanes) -> row-flattened (N, H*W, Cin), bf16 MXU feed.
    x_flat = jnp.transpose(x_nchw, (0, 2, 3, 1)).reshape(n, h * w, cin).astype(jnp.bfloat16)

    kernel = functools.partial(
        _fused_forward_kernel,
        W=w, Cin=cin, C1=c1, C1R=c1r, P1R=p1r, C2R=c2r, P2R=p2r, feat_rows=feat_rows,
    )

    def _full(a):   # whole-array block, constant index map (resident across grid steps)
        nd = a.ndim
        return pl.BlockSpec(a.shape, lambda i, _nd=nd: (0,) * _nd)

    out = pl.pallas_call(
        kernel,
        out_shape=jax.ShapeDtypeStruct((n, 1, out_dim), jnp.float32),
        grid=(n,),
        in_specs=[
            pl.BlockSpec((None, h * w, cin), lambda i: (i, 0, 0)),   # per-sample input
            _full(packed['w1']), _full(packed['b1']),
            _full(packed['w2']), _full(packed['b2']),
            _full(packed['wf1']), _full(packed['bf1']),
            _full(packed['wf2']), _full(packed['bf2']),
            _full(packed['wf3']), _full(packed['bf3']),
        ],
        out_specs=pl.BlockSpec((None, 1, out_dim), lambda i: (i, 0, 0)),
        compiler_params=pltpu.CompilerParams(dimension_semantics=("parallel",)),
    )(x_flat, packed['w1'], packed['b1'], packed['w2'], packed['b2'],
      packed['wf1'], packed['bf1'], packed['wf2'], packed['bf2'],
      packed['wf3'], packed['bf3'])
    return out.reshape(n, out_dim)


# ------------------------------ jax reference ------------------------------ #

def _ref_maxpool_nchw(y):
    """MaxPool2d(kernel=3, stride=2), VALID, NCHW (pure jnp)."""
    _, _, h, w = y.shape
    oh, ow = _pool_out(h), _pool_out(w)
    m = None
    for dy in range(_PK):
        for dx in range(_PK):
            sl = y[:, :, dy:dy + _PS * (oh - 1) + 1:_PS, dx:dx + _PS * (ow - 1) + 1:_PS]
            m = sl if m is None else jnp.maximum(m, sl)
    return m


def reference_forward(x_nchw, params):
    """Independent lax.conv reference quantising MXU operands to bf16 at the same
    points as the Pallas kernel (fp32 accumulation everywhere)."""
    f32, bf16 = jnp.float32, jnp.bfloat16
    y = jax.lax.conv_general_dilated(
        x_nchw.astype(bf16), params['conv1_w'].astype(bf16), (1, 1), 'VALID',
        dimension_numbers=('NCHW', 'OIHW', 'NCHW'), preferred_element_type=f32)
    y = jnp.maximum(y + params['conv1_b'][None, :, None, None], 0.0)
    y = _ref_maxpool_nchw(y)
    y = jax.lax.conv_general_dilated(
        y.astype(bf16), params['conv2_w'].astype(bf16), (1, 1), 'VALID',
        dimension_numbers=('NCHW', 'OIHW', 'NCHW'), preferred_element_type=f32)
    y = jnp.maximum(y + params['conv2_b'][None, :, None, None], 0.0)
    y = _ref_maxpool_nchw(y)
    z = y.reshape(y.shape[0], -1)                         # PyTorch NCHW flatten (c, h, w)
    z = jnp.maximum(jnp.dot(z.astype(bf16), params['fc1_w'].T.astype(bf16),
                            preferred_element_type=f32) + params['fc1_b'], 0.0)
    z = jnp.maximum(jnp.dot(z.astype(bf16), params['fc2_w'].T.astype(bf16),
                            preferred_element_type=f32) + params['fc2_b'], 0.0)
    return jnp.dot(z.astype(bf16), params['fc3_w'].T.astype(bf16),
                   preferred_element_type=f32) + params['fc3_b']


# ------------------------------ parameter init ------------------------------ #

def init_params(key, input_dim, output_dim):
    ks = jax.random.split(key, 10)

    def xavier_normal(k, shape):   # shape = (out_features, in_features)
        std = (2.0 / (shape[0] + shape[1])) ** 0.5
        return std * jax.random.normal(k, shape, jnp.float32)

    return {
        # conv weights kept in PyTorch layout (Cout, Cin, KH, KW)
        'conv1_w': 0.1 * jax.random.normal(ks[0], (32, input_dim, 3, 3), jnp.float32),
        'conv1_b': 0.1 * jax.random.normal(ks[1], (32,), jnp.float32),
        'conv2_w': 0.1 * jax.random.normal(ks[2], (64, 32, 3, 3), jnp.float32),
        'conv2_b': 0.1 * jax.random.normal(ks[3], (64,), jnp.float32),
        # linear weights in PyTorch layout (out_features, in_features), xavier-normal
        'fc1_w': xavier_normal(ks[4], (32, 64 * 4 * 4)),
        'fc1_b': 0.1 * jax.random.normal(ks[5], (32,), jnp.float32),
        'fc2_w': xavier_normal(ks[6], (16, 32)),
        'fc2_b': 0.1 * jax.random.normal(ks[7], (16,), jnp.float32),
        'fc3_w': xavier_normal(ks[8], (output_dim, 16)),
        'fc3_b': 0.1 * jax.random.normal(ks[9], (output_dim,), jnp.float32),
    }


if __name__ == "__main__":
    key = jax.random.PRNGKey(0)
    kx, kp = jax.random.split(key)

    batch, input_dim, output_dim = 2, 3, 10
    # 25x25 spatial input: conv->23, pool->11, conv->9, pool->4  => 64*4*4 matches fc1.
    x = jax.random.normal(kx, (batch, input_dim, 25, 25), jnp.float32)
    params = init_params(kp, input_dim, output_dim)
    packed = pack_params(params)          # one-time weight packing (not per call)

    fwd = jax.jit(conv_classification_forward)
    out = jax.block_until_ready(fwd(x, packed))

    ref = reference_forward(x, params)
    err = jnp.max(jnp.abs(out - ref))
    assert out.shape == (batch, output_dim)
    assert bool(jnp.all(jnp.isfinite(out)))
    assert bool(jnp.allclose(out, ref, rtol=1e-2, atol=1e-2)), f"max abs err {err}"
    print("KERNEL_OK")
</pallas_src>

<mosaic_0001>
module attributes {stable_mosaic.version = 11 : i64} {
  func.func @_fused_forward_kernel(%arg0: i32, %arg1: memref<1x625x3xbf16, #tpu.memory_space<vmem>>, %arg2: memref<27x32xbf16, #tpu.memory_space<vmem>>, %arg3: memref<1x32xf32, #tpu.memory_space<vmem>>, %arg4: memref<288x64xbf16, #tpu.memory_space<vmem>>, %arg5: memref<1x64xf32, #tpu.memory_space<vmem>>, %arg6: memref<1024x32xbf16, #tpu.memory_space<vmem>>, %arg7: memref<1x32xf32, #tpu.memory_space<vmem>>, %arg8: memref<32x16xbf16, #tpu.memory_space<vmem>>, %arg9: memref<1x16xf32, #tpu.memory_space<vmem>>, %arg10: memref<16x10xbf16, #tpu.memory_space<vmem>>, %arg11: memref<1x10xf32, #tpu.memory_space<vmem>>, %arg12: memref<1x1x10xf32, #tpu.memory_space<vmem>>) attributes {dimension_semantics = [#tpu.dimension_semantics<parallel>], iteration_bounds = array<i64: 2>, scalar_prefetch = 0 : i64, scratch_operands = 0 : i64, tpu.core_type = #tpu.core_type<tc>, window_params = [{transform_indices = @transform_0, window_bounds = array<i64: 1, 625, 3>}, {pipeline_mode = #tpu.pipeline_mode<synchronous>, transform_indices = @transform_1, window_bounds = array<i64: 27, 32>}, {pipeline_mode = #tpu.pipeline_mode<synchronous>, transform_indices = @transform_2, window_bounds = array<i64: 1, 32>}, {pipeline_mode = #tpu.pipeline_mode<synchronous>, transform_indices = @transform_3, window_bounds = array<i64: 288, 64>}, {pipeline_mode = #tpu.pipeline_mode<synchronous>, transform_indices = @transform_4, window_bounds = array<i64: 1, 64>}, {pipeline_mode = #tpu.pipeline_mode<synchronous>, transform_indices = @transform_5, window_bounds = array<i64: 1024, 32>}, {pipeline_mode = #tpu.pipeline_mode<synchronous>, transform_indices = @transform_6, window_bounds = array<i64: 1, 32>}, {pipeline_mode = #tpu.pipeline_mode<synchronous>, transform_indices = @transform_7, window_bounds = array<i64: 32, 16>}, {pipeline_mode = #tpu.pipeline_mode<synchronous>, transform_indices = @transform_8, window_bounds = array<i64: 1, 16>}, {pipeline_mode = #tpu.pipeline_mode<synchronous>, transform_indices = @transform_9, window_bounds = array<i64: 16, 10>}, {pipeline_mode = #tpu.pipeline_mode<synchronous>, transform_indices = @transform_10, window_bounds = array<i64: 1, 10>}, {transform_indices = @transform_11, window_bounds = array<i64: 1, 1, 10>}]} {
    %c0 = arith.constant 0 : index
    %c0_0 = arith.constant 0 : index
    %c0_1 = arith.constant 0 : index
    %0 = vector.load %arg1[%c0, %c0_0, %c0_1] : memref<1x625x3xbf16, #tpu.memory_space<vmem>>, vector<1x625x3xbf16>
    %1 = vector.shape_cast %0 : vector<1x625x3xbf16> to vector<625x3xbf16>
    %c0_2 = arith.constant 0 : index
    %c0_3 = arith.constant 0 : index
    %2 = vector.load %arg2[%c0_2, %c0_3] : memref<27x32xbf16, #tpu.memory_space<vmem>>, vector<27x32xbf16>
    %3 = vector.extract_strided_slice %1 {offsets = [0, 0], sizes = [573, 3], strides = [1, 1]} : vector<625x3xbf16> to vector<573x3xbf16>
    %4 = vector.extract_strided_slice %2 {offsets = [0, 0], sizes = [3, 32], strides = [1, 1]} : vector<27x32xbf16> to vector<3x32xbf16>
    %cst = arith.constant dense<0.000000e+00> : vector<573x32xf32>
    %5 = tpu.matmul %3, %4, %cst {dimension_numbers = #tpu.dot_dimension_numbers<[1], [0], [0], [1], [0, 0, 1, 1], [], []>} : vector<573x3xbf16>, vector<3x32xbf16>, vector<573x32xf32> -> vector<573x32xf32>
    %6 = vector.extract_strided_slice %1 {offsets = [1, 0], sizes = [573, 3], strides = [1, 1]} : vector<625x3xbf16> to vector<573x3xbf16>
    %7 = vector.extract_strided_slice %2 {offsets = [3, 0], sizes = [3, 32], strides = [1, 1]} : vector<27x32xbf16> to vector<3x32xbf16>
    %cst_4 = arith.constant dense<0.000000e+00> : vector<573x32xf32>
    %8 = tpu.matmul %6, %7, %cst_4 {dimension_numbers = #tpu.dot_dimension_numbers<[1], [0], [0], [1], [0, 0, 1, 1], [], []>} : vector<573x3xbf16>, vector<3x32xbf16>, vector<573x32xf32> -> vector<573x32xf32>
    %9 = arith.addf %5, %8 : vector<573x32xf32>
    %10 = vector.extract_strided_slice %1 {offsets = [2, 0], sizes = [573, 3], strides = [1, 1]} : vector<625x3xbf16> to vector<573x3xbf16>
    %11 = vector.extract_strided_slice %2 {offsets = [6, 0], sizes = [3, 32], strides = [1, 1]} : vector<27x32xbf16> to vector<3x32xbf16>
    %cst_5 = arith.constant dense<0.000000e+00> : vector<573x32xf32>
    %12 = tpu.matmul %10, %11, %cst_5 {dimension_numbers = #tpu.dot_dimension_numbers<[1], [0], [0], [1], [0, 0, 1, 1], [], []>} : vector<573x3xbf16>, vector<3x32xbf16>, vector<573x32xf32> -> vector<573x32xf32>
    %13 = arith.addf %9, %12 : vector<573x32xf32>
    %14 = vector.extract_strided_slice %1 {offsets = [25, 0], sizes = [573, 3], strides = [1, 1]} : vector<625x3xbf16> to vector<573x3xbf16>
    %15 = vector.extract_strided_slice %2 {offsets = [9, 0], sizes = [3, 32], strides = [1, 1]} : vector<27x32xbf16> to vector<3x32xbf16>
    %cst_6 = arith.constant dense<0.000000e+00> : vector<573x32xf32>
    %16 = tpu.matmul %14, %15, %cst_6 {dimension_numbers = #tpu.dot_dimension_numbers<[1], [0], [0], [1], [0, 0, 1, 1], [], []>} : vector<573x3xbf16>, vector<3x32xbf16>, vector<573x32xf32> -> vector<573x32xf32>
    %17 = arith.addf %13, %16 : vector<573x32xf32>
    %18 = vector.extract_strided_slice %1 {offsets = [26, 0], sizes = [573, 3], strides = [1, 1]} : vector<625x3xbf16> to vector<573x3xbf16>
    %19 = vector.extract_strided_slice %2 {offsets = [12, 0], sizes = [3, 32], strides = [1, 1]} : vector<27x32xbf16> to vector<3x32xbf16>
    %cst_7 = arith.constant dense<0.000000e+00> : vector<573x32xf32>
    %20 = tpu.matmul %18, %19, %cst_7 {dimension_numbers = #tpu.dot_dimension_numbers<[1], [0], [0], [1], [0, 0, 1, 1], [], []>} : vector<573x3xbf16>, vector<3x32xbf16>, vector<573x32xf32> -> vector<573x32xf32>
    %21 = arith.addf %17, %20 : vector<573x32xf32>
    %22 = vector.extract_strided_slice %1 {offsets = [27, 0], sizes = [573, 3], strides = [1, 1]} : vector<625x3xbf16> to vector<573x3xbf16>
    %23 = vector.extract_strided_slice %2 {offsets = [15, 0], sizes = [3, 32], strides = [1, 1]} : vector<27x32xbf16> to vector<3x32xbf16>
    %cst_8 = arith.constant dense<0.000000e+00> : vector<573x32xf32>
    %24 = tpu.matmul %22, %23, %cst_8 {dimension_numbers = #tpu.dot_dimension_numbers<[1], [0], [0], [1], [0, 0, 1, 1], [], []>} : vector<573x3xbf16>, vector<3x32xbf16>, vector<573x32xf32> -> vector<573x32xf32>
    %25 = arith.addf %21, %24 : vector<573x32xf32>
    %26 = vector.extract_strided_slice %1 {offsets = [50, 0], sizes = [573, 3], strides = [1, 1]} : vector<625x3xbf16> to vector<573x3xbf16>
    %27 = vector.extract_strided_slice %2 {offsets = [18, 0], sizes = [3, 32], strides = [1, 1]} : vector<27x32xbf16> to vector<3x32xbf16>
    %cst_9 = arith.constant dense<0.000000e+00> : vector<573x32xf32>
    %28 = tpu.matmul %26, %27, %cst_9 {dimension_numbers = #tpu.dot_dimension_numbers<[1], [0], [0], [1], [0, 0, 1, 1], [], []>} : vector<573x3xbf16>, vector<3x32xbf16>, vector<573x32xf32> -> vector<573x32xf32>
    %29 = arith.addf %25, %28 : vector<573x32xf32>
    %30 = vector.extract_strided_slice %1 {offsets = [51, 0], sizes = [573, 3], strides = [1, 1]} : vector<625x3xbf16> to vector<573x3xbf16>
    %31 = vector.extract_strided_slice %2 {offsets = [21, 0], sizes = [3, 32], strides = [1, 1]} : vector<27x32xbf16> to vector<3x32xbf16>
    %cst_10 = arith.constant dense<0.000000e+00> : vector<573x32xf32>
    %32 = tpu.matmul %30, %31, %cst_10 {dimension_numbers = #tpu.dot_dimension_numbers<[1], [0], [0], [1], [0, 0, 1, 1], [], []>} : vector<573x3xbf16>, vector<3x32xbf16>, vector<573x32xf32> -> vector<573x32xf32>
    %33 = arith.addf %29, %32 : vector<573x32xf32>
    %34 = vector.extract_strided_slice %1 {offsets = [52, 0], sizes = [573, 3], strides = [1, 1]} : vector<625x3xbf16> to vector<573x3xbf16>
    %35 = vector.extract_strided_slice %2 {offsets = [24, 0], sizes = [3, 32], strides = [1, 1]} : vector<27x32xbf16> to vector<3x32xbf16>
    %cst_11 = arith.constant dense<0.000000e+00> : vector<573x32xf32>
    %36 = tpu.matmul %34, %35, %cst_11 {dimension_numbers = #tpu.dot_dimension_numbers<[1], [0], [0], [1], [0, 0, 1, 1], [], []>} : vector<573x3xbf16>, vector<3x32xbf16>, vector<573x32xf32> -> vector<573x32xf32>
    %37 = arith.addf %33, %36 : vector<573x32xf32>
    %c0_12 = arith.constant 0 : index
    %c0_13 = arith.constant 0 : index
    %38 = vector.load %arg3[%c0_12, %c0_13] : memref<1x32xf32, #tpu.memory_space<vmem>>, vector<1x32xf32>
    %39 = vector.broadcast %38 : vector<1x32xf32> to vector<573x32xf32>
    %40 = arith.addf %37, %39 : vector<573x32xf32>
    %cst_14 = arith.constant 0.000000e+00 : f32
    %41 = vector.broadcast %cst_14 : f32 to vector<573x32xf32>
    %42 = arith.maximumf %40, %41 : vector<573x32xf32>
    %43 = vector.extract_strided_slice %42 {offsets = [0, 0], sizes = [523, 32], strides = [1, 1]} : vector<573x32xf32> to vector<523x32xf32>
    %44 = vector.extract_strided_slice %42 {offsets = [25, 0], sizes = [523, 32], strides = [1, 1]} : vector<573x32xf32> to vector<523x32xf32>
    %45 = arith.maximumf %43, %44 : vector<523x32xf32>
    %46 = vector.extract_strided_slice %42 {offsets = [50, 0], sizes = [523, 32], strides = [1, 1]} : vector<573x32xf32> to vector<523x32xf32>
    %47 = arith.maximumf %45, %46 : vector<523x32xf32>
    %48 = vector.extract_strided_slice %47 {offsets = [0, 0], sizes = [521, 32], strides = [1, 1]} : vector<523x32xf32> to vector<521x32xf32>
    %49 = vector.extract_strided_slice %47 {offsets = [1, 0], sizes = [521, 32], strides = [1, 1]} : vector<523x32xf32> to vector<521x32xf32>
    %50 = arith.maximumf %48, %49 : vector<521x32xf32>
    %51 = vector.extract_strided_slice %47 {offsets = [2, 0], sizes = [521, 32], strides = [1, 1]} : vector<523x32xf32> to vector<521x32xf32>
    %52 = arith.maximumf %50, %51 : vector<521x32xf32>
    %53 = arith.truncf %52 : vector<521x32xf32> to vector<521x32xbf16>
    %c0_15 = arith.constant 0 : index
    %c0_16 = arith.constant 0 : index
    %54 = vector.load %arg4[%c0_15, %c0_16] : memref<288x64xbf16, #tpu.memory_space<vmem>>, vector<288x64xbf16>
    %55 = vector.extract_strided_slice %53 {offsets = [0, 0], sizes = [417, 32], strides = [1, 1]} : vector<521x32xbf16> to vector<417x32xbf16>
    %56 = vector.extract_strided_slice %54 {offsets = [0, 0], sizes = [32, 64], strides = [1, 1]} : vector<288x64xbf16> to vector<32x64xbf16>
    %cst_17 = arith.constant dense<0.000000e+00> : vector<417x64xf32>
    %57 = tpu.matmul %55, %56, %cst_17 {dimension_numbers = #tpu.dot_dimension_numbers<[1], [0], [0], [1], [0, 0, 1, 1], [], []>} : vector<417x32xbf16>, vector<32x64xbf16>, vector<417x64xf32> -> vector<417x64xf32>
    %58 = vector.extract_strided_slice %53 {offsets = [2, 0], sizes = [417, 32], strides = [1, 1]} : vector<521x32xbf16> to vector<417x32xbf16>
    %59 = vector.extract_strided_slice %54 {offsets = [32, 0], sizes = [32, 64], strides = [1, 1]} : vector<288x64xbf16> to vector<32x64xbf16>
    %cst_18 = arith.constant dense<0.000000e+00> : vector<417x64xf32>
    %60 = tpu.matmul %58, %59, %cst_18 {dimension_numbers = #tpu.dot_dimension_numbers<[1], [0], [0], [1], [0, 0, 1, 1], [], []>} : vector<417x32xbf16>, vector<32x64xbf16>, vector<417x64xf32> -> vector<417x64xf32>
    %61 = arith.addf %57, %60 : vector<417x64xf32>
    %62 = vector.extract_strided_slice %53 {offsets = [4, 0], sizes = [417, 32], strides = [1, 1]} : vector<521x32xbf16> to vector<417x32xbf16>
    %63 = vector.extract_strided_slice %54 {offsets = [64, 0], sizes = [32, 64], strides = [1, 1]} : vector<288x64xbf16> to vector<32x64xbf16>
    %cst_19 = arith.constant dense<0.000000e+00> : vector<417x64xf32>
    %64 = tpu.matmul %62, %63, %cst_19 {dimension_numbers = #tpu.dot_dimension_numbers<[1], [0], [0], [1], [0, 0, 1, 1], [], []>} : vector<417x32xbf16>, vector<32x64xbf16>, vector<417x64xf32> -> vector<417x64xf32>
    %65 = arith.addf %61, %64 : vector<417x64xf32>
    %66 = vector.extract_strided_slice %53 {offsets = [50, 0], sizes = [417, 32], strides = [1, 1]} : vector<521x32xbf16> to vector<417x32xbf16>
    %67 = vector.extract_strided_slice %54 {offsets = [96, 0], sizes = [32, 64], strides = [1, 1]} : vector<288x64xbf16> to vector<32x64xbf16>
    %cst_20 = arith.constant dense<0.000000e+00> : vector<417x64xf32>
    %68 = tpu.matmul %66, %67, %cst_20 {dimension_numbers = #tpu.dot_dimension_numbers<[1], [0], [0], [1], [0, 0, 1, 1], [], []>} : vector<417x32xbf16>, vector<32x64xbf16>, vector<417x64xf32> -> vector<417x64xf32>
    %69 = arith.addf %65, %68 : vector<417x64xf32>
    %70 = vector.extract_strided_slice %53 {offsets = [52, 0], sizes = [417, 32], strides = [1, 1]} : vector<521x32xbf16> to vector<417x32xbf16>
    %71 = vector.extract_strided_slice %54 {offsets = [128, 0], sizes = [32, 64], strides = [1, 1]} : vector<288x64xbf16> to vector<32x64xbf16>
    %cst_21 = arith.constant dense<0.000000e+00> : vector<417x64xf32>
    %72 = tpu.matmul %70, %71, %cst_21 {dimension_numbers = #tpu.dot_dimension_numbers<[1], [0], [0], [1], [0, 0, 1, 1], [], []>} : vector<417x32xbf16>, vector<32x64xbf16>, vector<417x64xf32> -> vector<417x64xf32>
    %73 = arith.addf %69, %72 : vector<417x64xf32>
    %74 = vector.extract_strided_slice %53 {offsets = [54, 0], sizes = [417, 32], strides = [1, 1]} : vector<521x32xbf16> to vector<417x32xbf16>
    %75 = vector.extract_strided_slice %54 {offsets = [160, 0], sizes = [32, 64], strides = [1, 1]} : vector<288x64xbf16> to vector<32x64xbf16>
    %cst_22 = arith.constant dense<0.000000e+00> : vector<417x64xf32>
    %76 = tpu.matmul %74, %75, %cst_22 {dimension_numbers = #tpu.dot_dimension_numbers<[1], [0], [0], [1], [0, 0, 1, 1], [], []>} : vector<417x32xbf16>, vector<32x64xbf16>, vector<417x64xf32> -> vector<417x64xf32>
    %77 = arith.addf %73, %76 : vector<417x64xf32>
    %78 = vector.extract_strided_slice %53 {offsets = [100, 0], sizes = [417, 32], strides = [1, 1]} : vector<521x32xbf16> to vector<417x32xbf16>
    %79 = vector.extract_strided_slice %54 {offsets = [192, 0], sizes = [32, 64], strides = [1, 1]} : vector<288x64xbf16> to vector<32x64xbf16>
    %cst_23 = arith.constant dense<0.000000e+00> : vector<417x64xf32>
    %80 = tpu.matmul %78, %79, %cst_23 {dimension_numbers = #tpu.dot_dimension_numbers<[1], [0], [0], [1], [0, 0, 1, 1], [], []>} : vector<417x32xbf16>, vector<32x64xbf16>, vector<417x64xf32> -> vector<417x64xf32>
    %81 = arith.addf %77, %80 : vector<417x64xf32>
    %82 = vector.extract_strided_slice %53 {offsets = [102, 0], sizes = [417, 32], strides = [1, 1]} : vector<521x32xbf16> to vector<417x32xbf16>
    %83 = vector.extract_strided_slice %54 {offsets = [224, 0], sizes = [32, 64], strides = [1, 1]} : vector<288x64xbf16> to vector<32x64xbf16>
    %cst_24 = arith.constant dense<0.000000e+00> : vector<417x64xf32>
    %84 = tpu.matmul %82, %83, %cst_24 {dimension_numbers = #tpu.dot_dimension_numbers<[1], [0], [0], [1], [0, 0, 1, 1], [], []>} : vector<417x32xbf16>, vector<32x64xbf16>, vector<417x64xf32> -> vector<417x64xf32>
    %85 = arith.addf %81, %84 : vector<417x64xf32>
    %86 = vector.extract_strided_slice %53 {offsets = [104, 0], sizes = [417, 32], strides = [1, 1]} : vector<521x32xbf16> to vector<417x32xbf16>
    %87 = vector.extract_strided_slice %54 {offsets = [256, 0], sizes = [32, 64], strides = [1, 1]} : vector<288x64xbf16> to vector<32x64xbf16>
    %cst_25 = arith.constant dense<0.000000e+00> : vector<417x64xf32>
    %88 = tpu.matmul %86, %87, %cst_25 {dimension_numbers = #tpu.dot_dimension_numbers<[1], [0], [0], [1], [0, 0, 1, 1], [], []>} : vector<417x32xbf16>, vector<32x64xbf16>, vector<417x64xf32> -> vector<417x64xf32>
    %89 = arith.addf %85, %88 : vector<417x64xf32>
    %c0_26 = arith.constant 0 : index
    %c0_27 = arith.constant 0 : index
    %90 = vector.load %arg5[%c0_26, %c0_27] : memref<1x64xf32, #tpu.memory_space<vmem>>, vector<1x64xf32>
    %91 = vector.broadcast %90 : vector<1x64xf32> to vector<417x64xf32>
    %92 = arith.addf %89, %91 : vector<417x64xf32>
    %cst_28 = arith.constant 0.000000e+00 : f32
    %93 = vector.broadcast %cst_28 : f32 to vector<417x64xf32>
    %94 = arith.maximumf %92, %93 : vector<417x64xf32>
    %95 = vector.extract_strided_slice %94 {offsets = [0, 0], sizes = [317, 64], strides = [1, 1]} : vector<417x64xf32> to vector<317x64xf32>
    %96 = vector.extract_strided_slice %94 {offsets = [50, 0], sizes = [317, 64], strides = [1, 1]} : vector<417x64xf32> to vector<317x64xf32>
    %97 = arith.maximumf %95, %96 : vector<317x64xf32>
    %98 = vector.extract_strided_slice %94 {offsets = [100, 0], sizes = [317, 64], strides = [1, 1]} : vector<417x64xf32> to vector<317x64xf32>
    %99 = arith.maximumf %97, %98 : vector<317x64xf32>
    %100 = vector.extract_strided_slice %99 {offsets = [0, 0], sizes = [313, 64], strides = [1, 1]} : vector<317x64xf32> to vector<313x64xf32>
    %101 = vector.extract_strided_slice %99 {offsets = [2, 0], sizes = [313, 64], strides = [1, 1]} : vector<317x64xf32> to vector<313x64xf32>
    %102 = arith.maximumf %100, %101 : vector<313x64xf32>
    %103 = vector.extract_strided_slice %99 {offsets = [4, 0], sizes = [313, 64], strides = [1, 1]} : vector<317x64xf32> to vector<313x64xf32>
    %104 = arith.maximumf %102, %103 : vector<313x64xf32>
    %105 = vector.extract_strided_slice %104 {offsets = [0, 0], sizes = [1, 64], strides = [1, 1]} : vector<313x64xf32> to vector<1x64xf32>
    %106 = vector.extract_strided_slice %104 {offsets = [4, 0], sizes = [1, 64], strides = [1, 1]} : vector<313x64xf32> to vector<1x64xf32>
    %107 = vector.extract_strided_slice %104 {offsets = [8, 0], sizes = [1, 64], strides = [1, 1]} : vector<313x64xf32> to vector<1x64xf32>
    %108 = vector.extract_strided_slice %104 {offsets = [12, 0], sizes = [1, 64], strides = [1, 1]} : vector<313x64xf32> to vector<1x64xf32>
    %109 = vector.extract_strided_slice %104 {offsets = [100, 0], sizes = [1, 64], strides = [1, 1]} : vector<313x64xf32> to vector<1x64xf32>
    %110 = vector.extract_strided_slice %104 {offsets = [104, 0], sizes = [1, 64], strides = [1, 1]} : vector<313x64xf32> to vector<1x64xf32>
    %111 = vector.extract_strided_slice %104 {offsets = [108, 0], sizes = [1, 64], strides = [1, 1]} : vector<313x64xf32> to vector<1x64xf32>
    %112 = vector.extract_strided_slice %104 {offsets = [112, 0], sizes = [1, 64], strides = [1, 1]} : vector<313x64xf32> to vector<1x64xf32>
    %113 = vector.extract_strided_slice %104 {offsets = [200, 0], sizes = [1, 64], strides = [1, 1]} : vector<313x64xf32> to vector<1x64xf32>
    %114 = vector.extract_strided_slice %104 {offsets = [204, 0], sizes = [1, 64], strides = [1, 1]} : vector<313x64xf32> to vector<1x64xf32>
    %115 = vector.extract_strided_slice %104 {offsets = [208, 0], sizes = [1, 64], strides = [1, 1]} : vector<313x64xf32> to vector<1x64xf32>
    %116 = vector.extract_strided_slice %104 {offsets = [212, 0], sizes = [1, 64], strides = [1, 1]} : vector<313x64xf32> to vector<1x64xf32>
    %117 = vector.extract_strided_slice %104 {offsets = [300, 0], sizes = [1, 64], strides = [1, 1]} : vector<313x64xf32> to vector<1x64xf32>
    %118 = vector.extract_strided_slice %104 {offsets = [304, 0], sizes = [1, 64], strides = [1, 1]} : vector<313x64xf32> to vector<1x64xf32>
    %119 = vector.extract_strided_slice %104 {offsets = [308, 0], sizes = [1, 64], strides = [1, 1]} : vector<313x64xf32> to vector<1x64xf32>
    %120 = vector.extract_strided_slice %104 {offsets = [312, 0], sizes = [1, 64], strides = [1, 1]} : vector<313x64xf32> to vector<1x64xf32>
    %121 = tpu.concatenate %105, %106, %107, %108, %109, %110, %111, %112, %113, %114, %115, %116, %117, %118, %119, %120 in 1 : vector<1x64xf32>, vector<1x64xf32>, vector<1x64xf32>, vector<1x64xf32>, vector<1x64xf32>, vector<1x64xf32>, vector<1x64xf32>, vector<1x64xf32>, vector<1x64xf32>, vector<1x64xf32>, vector<1x64xf32>, vector<1x64xf32>, vector<1x64xf32>, vector<1x64xf32>, vector<1x64xf32>, vector<1x64xf32> -> vector<1x1024xf32>
    %122 = arith.truncf %121 : vector<1x1024xf32> to vector<1x1024xbf16>
    %c0_29 = arith.constant 0 : index
    %c0_30 = arith.constant 0 : index
    %123 = vector.load %arg6[%c0_29, %c0_30] : memref<1024x32xbf16, #tpu.memory_space<vmem>>, vector<1024x32xbf16>
    %cst_31 = arith.constant dense<0.000000e+00> : vector<1x32xf32>
    %124 = tpu.matmul %122, %123, %cst_31 {dimension_numbers = #tpu.dot_dimension_numbers<[1], [0], [0], [1], [0, 0, 1, 1], [], []>} : vector<1x1024xbf16>, vector<1024x32xbf16>, vector<1x32xf32> -> vector<1x32xf32>
    %c0_32 = arith.constant 0 : index
    %c0_33 = arith.constant 0 : index
    %125 = vector.load %arg7[%c0_32, %c0_33] : memref<1x32xf32, #tpu.memory_space<vmem>>, vector<1x32xf32>
    %126 = arith.addf %124, %125 : vector<1x32xf32>
    %cst_34 = arith.constant 0.000000e+00 : f32
    %127 = vector.broadcast %cst_34 : f32 to vector<1x32xf32>
    %128 = arith.maximumf %126, %127 : vector<1x32xf32>
    %129 = arith.truncf %128 : vector<1x32xf32> to vector<1x32xbf16>
    %c0_35 = arith.constant 0 : index
    %c0_36 = arith.constant 0 : index
    %130 = vector.load %arg8[%c0_35, %c0_36] : memref<32x16xbf16, #tpu.memory_space<vmem>>, vector<32x16xbf16>
    %cst_37 = arith.constant dense<0.000000e+00> : vector<1x16xf32>
    %131 = tpu.matmul %129, %130, %cst_37 {dimension_numbers = #tpu.dot_dimension_numbers<[1], [0], [0], [1], [0, 0, 1, 1], [], []>} : vector<1x32xbf16>, vector<32x16xbf16>, vector<1x16xf32> -> vector<1x16xf32>
    %c0_38 = arith.constant 0 : index
    %c0_39 = arith.constant 0 : index
    %132 = vector.load %arg9[%c0_38, %c0_39] : memref<1x16xf32, #tpu.memory_space<vmem>>, vector<1x16xf32>
    %133 = arith.addf %131, %132 : vector<1x16xf32>
    %cst_40 = arith.constant 0.000000e+00 : f32
    %134 = vector.broadcast %cst_40 : f32 to vector<1x16xf32>
    %135 = arith.maximumf %133, %134 : vector<1x16xf32>
    %136 = arith.truncf %135 : vector<1x16xf32> to vector<1x16xbf16>
    %c0_41 = arith.constant 0 : index
    %c0_42 = arith.constant 0 : index
    %137 = vector.load %arg10[%c0_41, %c0_42] : memref<16x10xbf16, #tpu.memory_space<vmem>>, vector<16x10xbf16>
    %cst_43 = arith.constant dense<0.000000e+00> : vector<1x10xf32>
    %138 = tpu.matmul %136, %137, %cst_43 {dimension_numbers = #tpu.dot_dimension_numbers<[1], [0], [0], [1], [0, 0, 1, 1], [], []>} : vector<1x16xbf16>, vector<16x10xbf16>, vector<1x10xf32> -> vector<1x10xf32>
    %c0_44 = arith.constant 0 : index
    %c0_45 = arith.constant 0 : index
    %139 = vector.load %arg11[%c0_44, %c0_45] : memref<1x10xf32, #tpu.memory_space<vmem>>, vector<1x10xf32>
    %140 = arith.addf %138, %139 : vector<1x10xf32>
    %c0_46 = arith.constant 0 : index
    %c0_47 = arith.constant 0 : index
    %c0_48 = arith.constant 0 : index
    %141 = vector.load %arg12[%c0_46, %c0_47, %c0_48] : memref<1x1x10xf32, #tpu.memory_space<vmem>>, vector<1x1x10xf32>
    %142 = vector.shape_cast %141 : vector<1x1x10xf32> to vector<1x10xf32>
    %143 = vector.shape_cast %140 : vector<1x10xf32> to vector<1x1x10xf32>
    tpu.vector_store %arg12[%c0_46, %c0_47, %c0_48], %143 {strides = array<i32>} : memref<1x1x10xf32, #tpu.memory_space<vmem>>, vector<1x1x10xf32>,
    return
  }
  func.func @transform_0(%arg0: i32) -> (i32, i32, i32) {
    %c0_i32 = arith.constant 0 : i32
    %c0_i32_0 = arith.constant 0 : i32
    %c0_i32_1 = arith.constant 0 : i32
    return %arg0, %c0_i32, %c0_i32_0 : i32, i32, i32
  }
  func.func @transform_1(%arg0: i32) -> (i32, i32) {
    %c0_i32 = arith.constant 0 : i32
    %c0_i32_0 = arith.constant 0 : i32
    %c0_i32_1 = arith.constant 0 : i32
    return %c0_i32, %c0_i32_0 : i32, i32
  }
  func.func @transform_2(%arg0: i32) -> (i32, i32) {
    %c0_i32 = arith.constant 0 : i32
    %c0_i32_0 = arith.constant 0 : i32
    %c0_i32_1 = arith.constant 0 : i32
    return %c0_i32, %c0_i32_0 : i32, i32
  }
  func.func @transform_3(%arg0: i32) -> (i32, i32) {
    %c0_i32 = arith.constant 0 : i32
    %c0_i32_0 = arith.constant 0 : i32
    %c0_i32_1 = arith.constant 0 : i32
    return %c0_i32, %c0_i32_0 : i32, i32
  }
  func.func @transform_4(%arg0: i32) -> (i32, i32) {
    %c0_i32 = arith.constant 0 : i32
    %c0_i32_0 = arith.constant 0 : i32
    %c0_i32_1 = arith.constant 0 : i32
    return %c0_i32, %c0_i32_0 : i32, i32
  }
  func.func @transform_5(%arg0: i32) -> (i32, i32) {
    %c0_i32 = arith.constant 0 : i32
    %c0_i32_0 = arith.constant 0 : i32
    %c0_i32_1 = arith.constant 0 : i32
    return %c0_i32, %c0_i32_0 : i32, i32
  }
  func.func @transform_6(%arg0: i32) -> (i32, i32) {
    %c0_i32 = arith.constant 0 : i32
    %c0_i32_0 = arith.constant 0 : i32
    %c0_i32_1 = arith.constant 0 : i32
    return %c0_i32, %c0_i32_0 : i32, i32
  }
  func.func @transform_7(%arg0: i32) -> (i32, i32) {
    %c0_i32 = arith.constant 0 : i32
    %c0_i32_0 = arith.constant 0 : i32
    %c0_i32_1 = arith.constant 0 : i32
    return %c0_i32, %c0_i32_0 : i32, i32
  }
  func.func @transform_8(%arg0: i32) -> (i32, i32) {
    %c0_i32 = arith.constant 0 : i32
    %c0_i32_0 = arith.constant 0 : i32
    %c0_i32_1 = arith.constant 0 : i32
    return %c0_i32, %c0_i32_0 : i32, i32
  }
  func.func @transform_9(%arg0: i32) -> (i32, i32) {
    %c0_i32 = arith.constant 0 : i32
    %c0_i32_0 = arith.constant 0 : i32
    %c0_i32_1 = arith.constant 0 : i32
    return %c0_i32, %c0_i32_0 : i32, i32
  }
  func.func @transform_10(%arg0: i32) -> (i32, i32) {
    %c0_i32 = arith.constant 0 : i32
    %c0_i32_0 = arith.constant 0 : i32
    %c0_i32_1 = arith.constant 0 : i32
    return %c0_i32, %c0_i32_0 : i32, i32
  }
  func.func @transform_11(%arg0: i32) -> (i32, i32, i32) {
    %c0_i32 = arith.constant 0 : i32
    %c0_i32_0 = arith.constant 0 : i32
    %c0_i32_1 = arith.constant 0 : i32
    return %arg0, %c0_i32, %c0_i32_0 : i32, i32, i32
  }
}

</mosaic_0001>

<llo_original>
// kernel: conv_classification_forward.1
$region0: #{conv_classification_forward.1}
  #allocation0 [shape = 'u32[]', space=smem, size = 0x4, offset = 0x4, fixed_abs, tag = 'smem constant byte address 0x4 - core index']
  #allocation1 [shape = 'u32[144,128]{1,0:T(1,128)}', space=vmem, size = 0x12000, scoped, tag = 'internal scratch']
  %s0 = inlined_call_operand.vmem [shape: bf16[2,625,3], index: 0, kind: input, shape index: {}]
  %s1 = inlined_call_operand.vmem [shape: bf16[27,32], index: 1, kind: input, shape index: {}]
  %s2 = inlined_call_operand.vmem [shape: f32[1,32], index: 2, kind: input, shape index: {}]
  %s3 = inlined_call_operand.vmem [shape: bf16[288,64], index: 3, kind: input, shape index: {}]
  %s4 = inlined_call_operand.vmem [shape: f32[1,64], index: 4, kind: input, shape index: {}]
  %s5 = inlined_call_operand.vmem [shape: bf16[1024,32], index: 5, kind: input, shape index: {}]
  %s6 = inlined_call_operand.vmem [shape: f32[1,32], index: 6, kind: input, shape index: {}]
  %s7 = inlined_call_operand.vmem [shape: bf16[32,16], index: 7, kind: input, shape index: {}]
  %s8 = inlined_call_operand.vmem [shape: f32[1,16], index: 8, kind: input, shape index: {}]
  %s9 = inlined_call_operand.vmem [shape: bf16[16,10], index: 9, kind: input, shape index: {}]
  %s10 = inlined_call_operand.vmem [shape: f32[1,10], index: 10, kind: input, shape index: {}]
  %s11 = inlined_call_operand.hbm [shape: f32[2,1,10], index: 11, kind: output, shape index: {}]
  %s12 = sld [smem:[#allocation0]]
  $region77: #{conv_classification_forward.1} parent=0
    _
  %s14 = ssub.s32 1, %s12
  %s15 = scalar_select 0, %s14, %s12
  $region1: #{conv_classification_forward.1} parent=0
    #allocation2 [shape = 'u8[1024]{0}', space=vmem, size = 0x400, scoped, tag = 'output window, operand 0']
    #allocation3 [shape = 's32[2]{0}', space=sflag, size = 0x8, scoped, tag = 'scoped memory for conv_classification_forward.1']
    %16 = vsyncpa [#allocation3], 0
    %s17 = scalar_lea.sflag [#allocation3], 1
    %18 = vsyncpa %s17, 0
    loop: start=0, step=1, limit=4
    $region2: #{conv_classification_forward.1} parent=1 // loop_pre_header
      _
    $region3: #{conv_classification_forward.1} parent=1 // loop_header
      %s20 = sphi 0, %s24
      %p21 = scmp.ge.s32.totalorder %s20, 4
      %s30 = sphi 0, %s32
      %s33 = sphi 0, %s30
      %s34 = sphi 0, %s33
      %s50 = sphi 0, %s34
      %s54 = sphi 0, %s54
      %s56 = sphi 0, %s54
      %s57 = sphi 0, %s56
      %s71 = sphi 0, %s57
      %s75 = sphi 0, %s75
      %s77 = sphi 0, %s75
      %s78 = sphi 0, %s77
      %s92 = sphi 0, %s78
      %s96 = sphi 0, %s96
      %s98 = sphi 0, %s96
      %s99 = sphi 0, %s98
      %s113 = sphi 0, %s99
      %s117 = sphi 0, %s117
      %s119 = sphi 0, %s117
      %s120 = sphi 0, %s119
      %s134 = sphi 0, %s120
      %s138 = sphi 0, %s138
      %s140 = sphi 0, %s138
      %s141 = sphi 0, %s140
      %s155 = sphi 0, %s141
      %s159 = sphi 0, %s159
      %s161 = sphi 0, %s159
      %s162 = sphi 0, %s161
      %s176 = sphi 0, %s162
      %s180 = sphi 0, %s180
      %s182 = sphi 0, %s180
      %s183 = sphi 0, %s182
      %s197 = sphi 0, %s183
      %s201 = sphi 0, %s201
      %s203 = sphi 0, %s201
      %s204 = sphi 0, %s203
      %s218 = sphi 0, %s204
      %s222 = sphi 0, %s222
      %s224 = sphi 0, %s222
      %s225 = sphi 0, %s224
      %s239 = sphi 0, %s225
      %s243 = sphi 0, %s243
      %s245 = sphi 0, %s243
      %s246 = sphi 0, %s245
      %s260 = sphi 0, %s246
      %s266 = sphi 0, %s268
      %s269 = sphi 0, %s266
      %s270 = sphi 0, %s269
      %s286 = sphi 0, %s270
    $region4: #{conv_classification_forward.1} parent=1 // loop_header_branch
      %23 = sbr.rel (%p21) target = $region8
    $region5: #{conv_classification_forward.1} parent=1 // loop_body
      %s25 = ssub.s32 %s20, 1
      %s26 = ssub.s32 %s20, 2
      %s27 = sadd.s32 %s20, 1
      %s28 = ssub.s32 %s20, %s27
      %p29 = scmp.eq.s32.totalorder %s28, 0
      %s31 = sadd.s32 %s30, 1
      %s32 = scalar_select %p29, %s30, %s31
      %p35 = pneg %p29
      %p36 = scmp.eq.s32.totalorder %s20, 1
      %p37 = por %p35, %p36
      %p38 = scmp.ne.s32.totalorder %s30, %s33
      %p39 = scmp.eq.s32.totalorder %s20, 0
      %p40 = por %p38, %p39
      %p41 = scmp.ne.s32.totalorder %s30, %s33
      %p42 = scmp.eq.s32.totalorder %s25, 1
      %p43 = por %p41, %p42
      %p44 = scmp.ne.s32.totalorder %s33, %s34
      %p45 = scmp.eq.s32.totalorder %s25, 0
      %p46 = por %p44, %p45
      %p47 = scmp.ne.s32.totalorder %s33, %s34
      %p48 = scmp.eq.s32.totalorder %s26, 1
      %p49 = por %p47, %p48
      %p51 = scmp.ne.s32.totalorder %s34, %s50
      %p52 = scmp.eq.s32.totalorder %s26, 0
      %p53 = por %p51, %p52
      %s55 = sadd.s32 %s54, 1
      %p58 = scmp.eq.s32.totalorder %s20, 1
      %p59 = scmp.ne.s32.totalorder %s54, %s56
      %p60 = scmp.eq.s32.totalorder %s20, 0
      %p61 = por %p59, %p60
      %p62 = scmp.ne.s32.totalorder %s54, %s56
      %p63 = scmp.eq.s32.totalorder %s25, 1
      %p64 = por %p62, %p63
      %p65 = scmp.ne.s32.totalorder %s56, %s57
      %p66 = scmp.eq.s32.totalorder %s25, 0
      %p67 = por %p65, %p66
      %p68 = scmp.ne.s32.totalorder %s56, %s57
      %p69 = scmp.eq.s32.totalorder %s26, 1
      %p70 = por %p68, %p69
      %p72 = scmp.ne.s32.totalorder %s57, %s71
      %p73 = scmp.eq.s32.totalorder %s26, 0
      %p74 = por %p72, %p73
      %s76 = sadd.s32 %s75, 1
      %p79 = scmp.eq.s32.totalorder %s20, 1
      %p80 = scmp.ne.s32.totalorder %s75, %s77
      %p81 = scmp.eq.s32.totalorder %s20, 0
      %p82 = por %p80, %p81
      %p83 = scmp.ne.s32.totalorder %s75, %s77
      %p84 = scmp.eq.s32.totalorder %s25, 1
      %p85 = por %p83, %p84
      %p86 = scmp.ne.s32.totalorder %s77, %s78
      %p87 = scmp.eq.s32.totalorder %s25, 0
      %p88 = por %p86, %p87
      %p89 = scmp.ne.s32.totalorder %s77, %s78
      %p90 = scmp.eq.s32.totalorder %s26, 1
      %p91 = por %p89, %p90
      %p93 = scmp.ne.s32.totalorder %s78, %s92
      %p94 = scmp.eq.s32.totalorder %s26, 0
      %p95 = por %p93, %p94
      %s97 = sadd.s32 %s96, 1
      %p100 = scmp.eq.s32.totalorder %s20, 1
      %p101 = scmp.ne.s32.totalorder %s96, %s98
      %p102 = scmp.eq.s32.totalorder %s20, 0
      %p103 = por %p101, %p102
      %p104 = scmp.ne.s32.totalorder %s96, %s98
      %p105 = scmp.eq.s32.totalorder %s25, 1
      %p106 = por %p104, %p105
      %p107 = scmp.ne.s32.totalorder %s98, %s99
      %p108 = scmp.eq.s32.totalorder %s25, 0
      %p109 = por %p107, %p108
      %p110 = scmp.ne.s32.totalorder %s98, %s99
      %p111 = scmp.eq.s32.totalorder %s26, 1
      %p112 = por %p110, %p111
      %p114 = scmp.ne.s32.totalorder %s99, %s113
      %p115 = scmp.eq.s32.totalorder %s26, 0
      %p116 = por %p114, %p115
      %s118 = sadd.s32 %s117, 1
      %p121 = scmp.eq.s32.totalorder %s20, 1
      %p122 = scmp.ne.s32.totalorder %s117, %s119
      %p123 = scmp.eq.s32.totalorder %s20, 0
      %p124 = por %p122, %p123
      %p125 = scmp.ne.s32.totalorder %s117, %s119
      %p126 = scmp.eq.s32.totalorder %s25, 1
      %p127 = por %p125, %p126
      %p128 = scmp.ne.s32.totalorder %s119, %s120
      %p129 = scmp.eq.s32.totalorder %s25, 0
      %p130 = por %p128, %p129
      %p131 = scmp.ne.s32.totalorder %s119, %s120
      %p132 = scmp.eq.s32.totalorder %s26, 1
      %p133 = por %p131, %p132
      %p135 = scmp.ne.s32.totalorder %s120, %s134
      %p136 = scmp.eq.s32.totalorder %s26, 0
      %p137 = por %p135, %p136
      %s139 = sadd.s32 %s138, 1
      %p142 = scmp.eq.s32.totalorder %s20, 1
      %p143 = scmp.ne.s32.totalorder %s138, %s140
      %p144 = scmp.eq.s32.totalorder %s20, 0
      %p145 = por %p143, %p144
      %p146 = scmp.ne.s32.totalorder %s138, %s140
      %p147 = scmp.eq.s32.totalorder %s25, 1
      %p148 = por %p146, %p147
      %p149 = scmp.ne.s32.totalorder %s140, %s141
      %p150 = scmp.eq.s32.totalorder %s25, 0
      %p151 = por %p149, %p150
      %p152 = scmp.ne.s32.totalorder %s140, %s141
      %p153 = scmp.eq.s32.totalorder %s26, 1
      %p154 = por %p152, %p153
      %p156 = scmp.ne.s32.totalorder %s141, %s155
      %p157 = scmp.eq.s32.totalorder %s26, 0
      %p158 = por %p156, %p157
      %s160 = sadd.s32 %s159, 1
      %p163 = scmp.eq.s32.totalorder %s20, 1
      %p164 = scmp.ne.s32.totalorder %s159, %s161
      %p165 = scmp.eq.s32.totalorder %s20, 0
      %p166 = por %p164, %p165
      %p167 = scmp.ne.s32.totalorder %s159, %s161
      %p168 = scmp.eq.s32.totalorder %s25, 1
      %p169 = por %p167, %p168
      %p170 = scmp.ne.s32.totalorder %s161, %s162
      %p171 = scmp.eq.s32.totalorder %s25, 0
      %p172 = por %p170, %p171
      %p173 = scmp.ne.s32.totalorder %s161, %s162
      %p174 = scmp.eq.s32.totalorder %s26, 1
      %p175 = por %p173, %p174
      %p177 = scmp.ne.s32.totalorder %s162, %s176
      %p178 = scmp.eq.s32.totalorder %s26, 0
      %p179 = por %p177, %p178
      %s181 = sadd.s32 %s180, 1
      %p184 = scmp.eq.s32.totalorder %s20, 1
      %p185 = scmp.ne.s32.totalorder %s180, %s182
      %p186 = scmp.eq.s32.totalorder %s20, 0
      %p187 = por %p185, %p186
      %p188 = scmp.ne.s32.totalorder %s180, %s182
      %p189 = scmp.eq.s32.totalorder %s25, 1
      %p190 = por %p188, %p189
      %p191 = scmp.ne.s32.totalorder %s182, %s183
      %p192 = scmp.eq.s32.totalorder %s25, 0
      %p193 = por %p191, %p192
      %p194 = scmp.ne.s32.totalorder %s182, %s183
      %p195 = scmp.eq.s32.totalorder %s26, 1
      %p196 = por %p194, %p195
      %p198 = scmp.ne.s32.totalorder %s183, %s197
      %p199 = scmp.eq.s32.totalorder %s26, 0
      %p200 = por %p198, %p199
      %s202 = sadd.s32 %s201, 1
      %p205 = scmp.eq.s32.totalorder %s20, 1
      %p206 = scmp.ne.s32.totalorder %s201, %s203
      %p207 = scmp.eq.s32.totalorder %s20, 0
      %p208 = por %p206, %p207
      %p209 = scmp.ne.s32.totalorder %s201, %s203
      %p210 = scmp.eq.s32.totalorder %s25, 1
      %p211 = por %p209, %p210
      %p212 = scmp.ne.s32.totalorder %s203, %s204
      %p213 = scmp.eq.s32.totalorder %s25, 0
      %p214 = por %p212, %p213
      %p215 = scmp.ne.s32.totalorder %s203, %s204
      %p216 = scmp.eq.s32.totalorder %s26, 1
      %p217 = por %p215, %p216
      %p219 = scmp.ne.s32.totalorder %s204, %s218
      %p220 = scmp.eq.s32.totalorder %s26, 0
      %p221 = por %p219, %p220
      %s223 = sadd.s32 %s222, 1
      %p226 = scmp.eq.s32.totalorder %s20, 1
      %p227 = scmp.ne.s32.totalorder %s222, %s224
      %p228 = scmp.eq.s32.totalorder %s20, 0
      %p229 = por %p227, %p228
      %p230 = scmp.ne.s32.totalorder %s222, %s224
      %p231 = scmp.eq.s32.totalorder %s25, 1
      %p232 = por %p230, %p231
      %p233 = scmp.ne.s32.totalorder %s224, %s225
      %p234 = scmp.eq.s32.totalorder %s25, 0
      %p235 = por %p233, %p234
      %p236 = scmp.ne.s32.totalorder %s224, %s225
      %p237 = scmp.eq.s32.totalorder %s26, 1
      %p238 = por %p236, %p237
      %p240 = scmp.ne.s32.totalorder %s225, %s239
      %p241 = scmp.eq.s32.totalorder %s26, 0
      %p242 = por %p240, %p241
      %s244 = sadd.s32 %s243, 1
      %p247 = scmp.eq.s32.totalorder %s20, 1
      %p248 = scmp.ne.s32.totalorder %s243, %s245
      %p249 = scmp.eq.s32.totalorder %s20, 0
      %p250 = por %p248, %p249
      %p251 = scmp.ne.s32.totalorder %s243, %s245
      %p252 = scmp.eq.s32.totalorder %s25, 1
      %p253 = por %p251, %p252
      %p254 = scmp.ne.s32.totalorder %s245, %s246
      %p255 = scmp.eq.s32.totalorder %s25, 0
      %p256 = por %p254, %p255
      %p257 = scmp.ne.s32.totalorder %s245, %s246
      %p258 = scmp.eq.s32.totalorder %s26, 1
      %p259 = por %p257, %p258
      %p261 = scmp.ne.s32.totalorder %s246, %s260
      %p262 = scmp.eq.s32.totalorder %s26, 0
      %p263 = por %p261, %p262
      %s264 = ssub.s32 %s20, %s27
      %p265 = scmp.eq.s32.totalorder %s264, 0
      %s267 = sadd.s32 %s266, 1
      %s268 = scalar_select %p265, %s266, %s267
      %p271 = pneg %p265
      %p272 = scmp.eq.s32.totalorder %s20, 1
      %p273 = por %p271, %p272
      %p274 = scmp.ne.s32.totalorder %s266, %s269
      %p275 = scmp.eq.s32.totalorder %s20, 0
      %p276 = por %p274, %p275
      %p277 = scmp.ne.s32.totalorder %s266, %s269
      %p278 = scmp.eq.s32.totalorder %s25, 1
      %p279 = por %p277, %p278
      %p280 = scmp.ne.s32.totalorder %s269, %s270
      %p281 = scmp.eq.s32.totalorder %s25, 0
      %p282 = por %p280, %p281
      %p283 = scmp.ne.s32.totalorder %s269, %s270
      %p284 = scmp.eq.s32.totalorder %s26, 1
      %p285 = por %p283, %p284
      %p287 = scmp.ne.s32.totalorder %s270, %s286
      %p288 = scmp.eq.s32.totalorder %s26, 0
      %p289 = por %p287, %p288
      %p290 = scmp.le.s32.totalorder 1, %s20
      %p291 = scmp.lt.s32.totalorder %s20, 3
      %p292 = pnand %p290, %p291
      %p293 = pneg %p292
      // Predicated region
      $region9: #{conv_classification_forward.1} parent=5 // pred_check
        _
      $region10: #{conv_classification_forward.1} parent=5 // pred_check_branch
        %295 = sbr.rel (%p292) target = $region12
      $region11: #{conv_classification_forward.1} parent=5 // pred_region
        %s296 = ssub.s32 %s20, 1
        // Predicated region
        $region13: #{conv_classification_forward.1} parent=11 // pred_check
          %p297 = pneg %p67
        $region14: #{conv_classification_forward.1} parent=11 // pred_check_branch
          %299 = sbr.rel (%p297) target = $region16
        $region15: #{conv_classification_forward.1} parent=11 // pred_region
          _
        $region16: #{conv_classification_forward.1} parent=11 // pred_fallthru
          _
        // Predicated region
        $region17: #{conv_classification_forward.1} parent=11 // pred_check
          %p300 = pneg %p88
        $region18: #{conv_classification_forward.1} parent=11 // pred_check_branch
          %302 = sbr.rel (%p300) target = $region20
        $region19: #{conv_classification_forward.1} parent=11 // pred_region
          _
        $region20: #{conv_classification_forward.1} parent=11 // pred_fallthru
          _
        // Predicated region
        $region21: #{conv_classification_forward.1} parent=11 // pred_check
          %p303 = pneg %p109
        $region22: #{conv_classification_forward.1} parent=11 // pred_check_branch
          %305 = sbr.rel (%p303) target = $region24
        $region23: #{conv_classification_forward.1} parent=11 // pred_region
          _
        $region24: #{conv_classification_forward.1} parent=11 // pred_fallthru
          _
        // Predicated region
        $region25: #{conv_classification_forward.1} parent=11 // pred_check
          %p306 = pneg %p130
        $region26: #{conv_classification_forward.1} parent=11 // pred_check_branch
          %308 = sbr.rel (%p306) target = $region28
        $region27: #{conv_classification_forward.1} parent=11 // pred_region
          _
        $region28: #{conv_classification_forward.1} parent=11 // pred_fallthru
          _
        // Predicated region
        $region29: #{conv_classification_forward.1} parent=11 // pred_check
          %p309 = pneg %p151
        $region30: #{conv_classification_forward.1} parent=11 // pred_check_branch
          %311 = sbr.rel (%p309) target = $region32
        $region31: #{conv_classification_forward.1} parent=11 // pred_region
          _
        $region32: #{conv_classification_forward.1} parent=11 // pred_fallthru
          _
        // Predicated region
        $region33: #{conv_classification_forward.1} parent=11 // pred_check
          %p312 = pneg %p172
        $region34: #{conv_classification_forward.1} parent=11 // pred_check_branch
          %314 = sbr.rel (%p312) target = $region36
        $region35: #{conv_classification_forward.1} parent=11 // pred_region
          _
        $region36: #{conv_classification_forward.1} parent=11 // pred_fallthru
          _
        // Predicated region
        $region37: #{conv_classification_forward.1} parent=11 // pred_check
          %p315 = pneg %p193
        $region38: #{conv_classification_forward.1} parent=11 // pred_check_branch
          %317 = sbr.rel (%p315) target = $region40
        $region39: #{conv_classification_forward.1} parent=11 // pred_region
          _
        $region40: #{conv_classification_forward.1} parent=11 // pred_fallthru
          _
        // Predicated region
        $region41: #{conv_classification_forward.1} parent=11 // pred_check
          %p318 = pneg %p214
        $region42: #{conv_classification_forward.1} parent=11 // pred_check_branch
          %320 = sbr.rel (%p318) target = $region44
        $region43: #{conv_classification_forward.1} parent=11 // pred_region
          _
        $region44: #{conv_classification_forward.1} parent=11 // pred_fallthru
          _
        // Predicated region
        $region45: #{conv_classification_forward.1} parent=11 // pred_check
          %p321 = pneg %p235
        $region46: #{conv_classification_forward.1} parent=11 // pred_check_branch
          %323 = sbr.rel (%p321) target = $region48
        $region47: #{conv_classification_forward.1} parent=11 // pred_region
          _
        $region48: #{conv_classification_forward.1} parent=11 // pred_fallthru
          _
        // Predicated region
        $region49: #{conv_classification_forward.1} parent=11 // pred_check
          %p324 = pneg %p256
        $region50: #{conv_classification_forward.1} parent=11 // pred_check_branch
          %326 = sbr.rel (%p324) target = $region52
        $region51: #{conv_classification_forward.1} parent=11 // pred_region
          _
        $region52: #{conv_classification_forward.1} parent=11 // pred_fallthru
          _
      $region12: #{conv_classification_forward.1} parent=5 // pred_fallthru
        _
      %p327 = scmp.lt.s32.totalorder %s20, 2
      // Predicated region
      $region53: #{conv_classification_forward.1} parent=5 // pred_check
        %p328 = pneg %p327
      $region54: #{conv_classification_forward.1} parent=5 // pred_check_branch
        %330 = sbr.rel (%p328) target = $region56
      $region55: #{conv_classification_forward.1} parent=5 // pred_region
        // Predicated region
        $region57: #{conv_classification_forward.1} parent=55 // pred_check
          %p331 = pneg %p40
        $region58: #{conv_classification_forward.1} parent=55 // pred_check_branch
          %333 = sbr.rel (%p331) target = $region60
        $region59: #{conv_classification_forward.1} parent=55 // pred_region
          %p334 = scmp.lt.s32.totalorder %s20, 1
          %s335 = scalar_select %p334, %s20, 1
          %s336 = smul.addr %s335, 79
          %s337 = smul.addr %s336, 4
          %s338 = scalar_lea.vmem %s0, %s337
        $region60: #{conv_classification_forward.1} parent=55 // pred_fallthru
          _
      $region56: #{conv_classification_forward.1} parent=5 // pred_fallthru
        _
      %p339 = scmp.le.s32.totalorder 1, %s20
      %p340 = scmp.lt.s32.totalorder %s20, 3
      %p341 = pnand %p339, %p340
      %p342 = pneg %p341
      // Predicated region
      $region61: #{conv_classification_forward.1} parent=5 // pred_check
        _
      $region62: #{conv_classification_forward.1} parent=5 // pred_check_branch
        %344 = sbr.rel (%p341) target = $region64
      $region63: #{conv_classification_forward.1} parent=5 // pred_region
        %s345 = ssub.s32 %s20, 1
        %p346 = scmp.lt.s32.totalorder %s25, 1
        %s347 = scalar_select %p346, %s25, 1
        %s348 = smul.addr %s347, 79
        %s349 = smul.addr %s348, 4
        %s350 = scalar_lea.vmem %s0, %s349
        %p351 = pneg %p46
        %p352 = pneg %p43
        %p353 = pneg %p67
        %p354 = pneg %p64
        %p355 = pneg %p88
        %p356 = pneg %p85
        %p357 = pneg %p109
        %p358 = pneg %p106
        %p359 = pneg %p130
        %p360 = pneg %p127
        %p361 = pneg %p151
        %p362 = pneg %p148
        %p363 = pneg %p172
        %p364 = pneg %p169
        %p365 = pneg %p193
        %p366 = pneg %p190
        %p367 = pneg %p214
        %p368 = pneg %p211
        %p369 = pneg %p235
        %p370 = pneg %p232
        %p371 = pneg %p256
        %p372 = pneg %p253
        %p373 = pneg %p282
        %p374 = pneg %p279
        %s375 = sand.u32 %s269, 1
        %s376 = scalar_lea.sflag [#allocation3], %s375
        %s377 = sand.u32 %s269, 1
        %s378 = scalar_lea.vmem [#allocation2], %s377
        %p379 = scmp.lt.s32.totalorder %s25, 1
        %s380 = scalar_select %p379, %s25, 1
        %s381 = smul.addr %s380, 79
        %s382 = smul.addr %s381, 4
        %s383 = scalar_lea.vmem %s0, %s382
        %v385 = vld [vmem:[%s383] sm:$0xf]
        %v386 = vld [vmem:[%s383 + $0x4] sm:$0xf]
        %v387 = vld [vmem:[%s383 + $0x8] sm:$0xf]
        %v388 = vld [vmem:[%s383 + $0xc] sm:$0xf]
        %v389 = vld [vmem:[%s383 + $0x10] sm:$0xf]
        %v390 = vld [vmem:[%s383 + $0x14] sm:$0xf]
        %v391 = vld [vmem:[%s383 + $0x18] sm:$0xf]
        %v392 = vld [vmem:[%s383 + $0x1c] sm:$0xf]
        %v393 = vld [vmem:[%s383 + $0x20] sm:$0xf]
        %v394 = vld [vmem:[%s383 + $0x24] sm:$0xf]
        %v395 = vld [vmem:[%s383 + $0x28] sm:$0xf]
        %v396 = vld [vmem:[%s383 + $0x2c] sm:$0xf]
        %v397 = vld [vmem:[%s383 + $0x30] sm:$0xf]
        %v398 = vld [vmem:[%s383 + $0x34] sm:$0xf]
        %v399 = vld [vmem:[%s383 + $0x38] sm:$0xf]
        %v400 = vld [vmem:[%s383 + $0x3c] sm:$0xf]
        %v401 = vld [vmem:[%s383 + $0x40] sm:$0xf]
        %v402 = vld [vmem:[%s383 + $0x44] sm:$0xf]
        %v403 = vld [vmem:[%s383 + $0x48] sm:$0xf]
        %v404 = vld [vmem:[%s383 + $0x4c] sm:$0xf]
        %v405 = vld [vmem:[%s383 + $0x50] sm:$0xf]
        %v406 = vld [vmem:[%s383 + $0x54] sm:$0xf]
        %v407 = vld [vmem:[%s383 + $0x58] sm:$0xf]
        %v408 = vld [vmem:[%s383 + $0x5c] sm:$0xf]
        %v409 = vld [vmem:[%s383 + $0x60] sm:$0xf]
        %v410 = vld [vmem:[%s383 + $0x64] sm:$0xf]
        %v411 = vld [vmem:[%s383 + $0x68] sm:$0xf]
        %v412 = vld [vmem:[%s383 + $0x6c] sm:$0xf]
        %v413 = vld [vmem:[%s383 + $0x70] sm:$0xf]
        %v414 = vld [vmem:[%s383 + $0x74] sm:$0xf]
        %v415 = vld [vmem:[%s383 + $0x78] sm:$0xf]
        %v416 = vld [vmem:[%s383 + $0x7c] sm:$0xf]
        %v417 = vld [vmem:[%s383 + $0x80] sm:$0xf]
        %v418 = vld [vmem:[%s383 + $0x84] sm:$0xf]
        %v419 = vld [vmem:[%s383 + $0x88] sm:$0xf]
        %v420 = vld [vmem:[%s383 + $0x8c] sm:$0xf]
        %v421 = vld [vmem:[%s383 + $0x90] sm:$0xf]
        %v422 = vld [vmem:[%s383 + $0x94] sm:$0xf]
        %v423 = vld [vmem:[%s383 + $0x98] sm:$0xf]
        %v424 = vld [vmem:[%s383 + $0x9c] sm:$0xf]
        %v425 = vld [vmem:[%s383 + $0xa0] sm:$0xf]
        %v426 = vld [vmem:[%s383 + $0xa4] sm:$0xf]
        %v427 = vld [vmem:[%s383 + $0xa8] sm:$0xf]
        %v428 = vld [vmem:[%s383 + $0xac] sm:$0xf]
        %v429 = vld [vmem:[%s383 + $0xb0] sm:$0xf]
        %v430 = vld [vmem:[%s383 + $0xb4] sm:$0xf]
        %v431 = vld [vmem:[%s383 + $0xb8] sm:$0xf]
        %v432 = vld [vmem:[%s383 + $0xbc] sm:$0xf]
        %v433 = vld [vmem:[%s383 + $0xc0] sm:$0xf]
        %v434 = vld [vmem:[%s383 + $0xc4] sm:$0xf]
        %v435 = vld [vmem:[%s383 + $0xc8] sm:$0xf]
        %v436 = vld [vmem:[%s383 + $0xcc] sm:$0xf]
        %v437 = vld [vmem:[%s383 + $0xd0] sm:$0xf]
        %v438 = vld [vmem:[%s383 + $0xd4] sm:$0xf]
        %v439 = vld [vmem:[%s383 + $0xd8] sm:$0xf]
        %v440 = vld [vmem:[%s383 + $0xdc] sm:$0xf]
        %v441 = vld [vmem:[%s383 + $0xe0] sm:$0xf]
        %v442 = vld [vmem:[%s383 + $0xe4] sm:$0xf]
        %v443 = vld [vmem:[%s383 + $0xe8] sm:$0xf]
        %v444 = vld [vmem:[%s383 + $0xec] sm:$0xf]
        %v445 = vld [vmem:[%s383 + $0xf0] sm:$0xf]
        %v446 = vld [vmem:[%s383 + $0xf4] sm:$0xf]
        %v447 = vld [vmem:[%s383 + $0xf8] sm:$0xf]
        %v448 = vld [vmem:[%s383 + $0xfc] sm:$0xf]
        %v449 = vld [vmem:[%s383 + $0x100] sm:$0xf]
        %v450 = vld [vmem:[%s383 + $0x104] sm:$0xf]
        %v451 = vld [vmem:[%s383 + $0x108] sm:$0xf]
        %v452 = vld [vmem:[%s383 + $0x10c] sm:$0xf]
        %v453 = vld [vmem:[%s383 + $0x110] sm:$0xf]
        %v454 = vld [vmem:[%s383 + $0x114] sm:$0xf]
        %v455 = vld [vmem:[%s383 + $0x118] sm:$0xf]
        %v456 = vld [vmem:[%s383 + $0x11c] sm:$0xf]
        %v457 = vld [vmem:[%s383 + $0x120] sm:$0xf]
        %v458 = vld [vmem:[%s383 + $0x124] sm:$0xf]
        %v459 = vld [vmem:[%s383 + $0x128] sm:$0xf]
        %v460 = vld [vmem:[%s383 + $0x12c] sm:$0xf]
        %v461 = vld [vmem:[%s383 + $0x130] sm:$0xf]
        %v462 = vld [vmem:[%s383 + $0x134] sm:$0xf]
        %v463 = vld [vmem:[%s383 + $0x138] sm:$0x1]
        %v464 = vld [vmem:[%s1] sm:$0xf]
        %v465 = vld [vmem:[%s1 + $0x4] sm:$0xf]
        %v466 = vld [vmem:[%s1 + $0x8] sm:$0xf]
        %v467 = vld [vmem:[%s1 + $0xc] sm:$0x3]
        %v540 = vunpack.c.l.b16 %v385
        %v541 = vunpack.c.l.b16 %v386
        %v542 = vunpack.c.l.b16 %v387
        %v543 = vunpack.c.l.b16 %v388
        %v544 = vunpack.c.l.b16 %v389
        %v545 = vunpack.c.l.b16 %v390
        %v546 = vunpack.c.l.b16 %v391
        %v547 = vunpack.c.l.b16 %v392
        %v548 = vunpack.c.l.b16 %v393
        %v549 = vunpack.c.l.b16 %v394
        %v550 = vunpack.c.l.b16 %v395
        %v551 = vunpack.c.l.b16 %v396
        %v552 = vunpack.c.l.b16 %v397
        %v553 = vunpack.c.l.b16 %v398
        %v554 = vunpack.c.l.b16 %v399
        %v555 = vunpack.c.l.b16 %v400
        %v556 = vunpack.c.l.b16 %v401
        %v557 = vunpack.c.l.b16 %v402
        %v558 = vunpack.c.l.b16 %v403
        %v559 = vunpack.c.l.b16 %v404
        %v560 = vunpack.c.l.b16 %v405
        %v561 = vunpack.c.l.b16 %v406
        %v562 = vunpack.c.l.b16 %v407
        %v563 = vunpack.c.l.b16 %v408
        %v564 = vunpack.c.l.b16 %v409
        %v565 = vunpack.c.l.b16 %v410
        %v566 = vunpack.c.l.b16 %v411
        %v567 = vunpack.c.l.b16 %v412
        %v568 = vunpack.c.l.b16 %v413
        %v569 = vunpack.c.l.b16 %v414
        %v570 = vunpack.c.l.b16 %v415
        %v571 = vunpack.c.l.b16 %v416
        %v572 = vunpack.c.l.b16 %v417
        %v573 = vunpack.c.l.b16 %v418
        %v574 = vunpack.c.l.b16 %v419
        %v575 = vunpack.c.l.b16 %v420
        %v576 = vunpack.c.l.b16 %v421
        %v577 = vunpack.c.l.b16 %v422
        %v578 = vunpack.c.l.b16 %v423
        %v579 = vunpack.c.l.b16 %v424
        %v580 = vunpack.c.l.b16 %v425
        %v581 = vunpack.c.l.b16 %v426
        %v582 = vunpack.c.l.b16 %v427
        %v583 = vunpack.c.l.b16 %v428
        %v584 = vunpack.c.l.b16 %v429
        %v585 = vunpack.c.l.b16 %v430
        %v586 = vunpack.c.l.b16 %v431
        %v587 = vunpack.c.l.b16 %v432
        %v588 = vunpack.c.l.b16 %v433
        %v589 = vunpack.c.l.b16 %v434
        %v590 = vunpack.c.l.b16 %v435
        %v591 = vunpack.c.l.b16 %v436
        %v592 = vunpack.c.l.b16 %v437
        %v593 = vunpack.c.l.b16 %v438
        %v594 = vunpack.c.l.b16 %v439
        %v595 = vunpack.c.l.b16 %v440
        %v596 = vunpack.c.l.b16 %v441
        %v597 = vunpack.c.l.b16 %v442
        %v598 = vunpack.c.l.b16 %v443
        %v599 = vunpack.c.l.b16 %v444
        %v600 = vunpack.c.l.b16 %v445
        %v601 = vunpack.c.l.b16 %v446
        %v602 = vunpack.c.l.b16 %v447
        %v603 = vunpack.c.l.b16 %v448
        %v604 = vunpack.c.l.b16 %v449
        %v605 = vunpack.c.l.b16 %v450
        %v606 = vunpack.c.l.b16 %v451
        %v607 = vunpack.c.l.b16 %v452
        %v608 = vunpack.c.l.b16 %v453
        %v609 = vunpack.c.l.b16 %v454
        %v610 = vunpack.c.l.b16 %v455
        %v611 = vunpack.c.l.b16 %v456
        %v612 = vpack.c.b16 %v541, %v540
        %v613 = vpack.c.b16 %v543, %v542
        %v614 = vpack.c.b16 %v545, %v544
        %v615 = vpack.c.b16 %v547, %v546
        %v616 = vpack.c.b16 %v549, %v548
        %v617 = vpack.c.b16 %v551, %v550
        %v618 = vpack.c.b16 %v553, %v552
        %v619 = vpack.c.b16 %v555, %v554
        %v620 = vpack.c.b16 %v557, %v556
        %v621 = vpack.c.b16 %v559, %v558
        %v622 = vpack.c.b16 %v561, %v560
        %v623 = vpack.c.b16 %v563, %v562
        %v624 = vpack.c.b16 %v565, %v564
        %v625 = vpack.c.b16 %v567, %v566
        %v626 = vpack.c.b16 %v569, %v568
        %v627 = vpack.c.b16 %v571, %v570
        %v628 = vpack.c.b16 %v573, %v572
        %v629 = vpack.c.b16 %v575, %v574
        %v630 = vpack.c.b16 %v577, %v576
        %v631 = vpack.c.b16 %v579, %v578
        %v632 = vpack.c.b16 %v581, %v580
        %v633 = vpack.c.b16 %v583, %v582
        %v634 = vpack.c.b16 %v585, %v584
        %v635 = vpack.c.b16 %v587, %v586
        %v636 = vpack.c.b16 %v589, %v588
        %v637 = vpack.c.b16 %v591, %v590
        %v638 = vpack.c.b16 %v593, %v592
        %v639 = vpack.c.b16 %v595, %v594
        %v640 = vpack.c.b16 %v597, %v596
        %v641 = vpack.c.b16 %v599, %v598
        %v642 = vpack.c.b16 %v601, %v600
        %v643 = vpack.c.b16 %v603, %v602
        %v644 = vpack.c.b16 %v605, %v604
        %v645 = vpack.c.b16 %v607, %v606
        %v646 = vpack.c.b16 %v609, %v608
        %v647 = vpack.c.b16 %v611, %v610
        %vm648 = vsmask.f32 7424
        %v650 = vshrl.u32 %v612, 16
        %v652 = vshll.u32 %v612, 16
        %v654 = vrot.slane %v652, 1
        %v655 = vor.u32 %v650, %v654
        %v657 = vshll.u32 %v613, 16
        %v659 = vrot.slane %v657, 1
        %v660 = vsel %vm648, %v655, %v659
        %v661 = vshrl.u32 %v613, 16
        %v663 = vor.u32 %v661, %v659
        %v665 = vshll.u32 %v614, 16
        %v667 = vrot.slane %v665, 1
        %v668 = vsel %vm648, %v663, %v667
        %v669 = vshrl.u32 %v614, 16
        %v671 = vor.u32 %v669, %v667
        %v673 = vshll.u32 %v615, 16
        %v675 = vrot.slane %v673, 1
        %v676 = vsel %vm648, %v671, %v675
        %v677 = vshrl.u32 %v615, 16
        %v679 = vor.u32 %v677, %v675
        %v681 = vshll.u32 %v616, 16
        %v683 = vrot.slane %v681, 1
        %v684 = vsel %vm648, %v679, %v683
        %v685 = vshrl.u32 %v616, 16
        %v687 = vor.u32 %v685, %v683
        %v689 = vshll.u32 %v617, 16
        %v691 = vrot.slane %v689, 1
        %v692 = vsel %vm648, %v687, %v691
        %v693 = vshrl.u32 %v617, 16
        %v695 = vor.u32 %v693, %v691
        %v697 = vshll.u32 %v618, 16
        %v699 = vrot.slane %v697, 1
        %v700 = vsel %vm648, %v695, %v699
        %v701 = vshrl.u32 %v618, 16
        %v703 = vor.u32 %v701, %v699
        %v705 = vshll.u32 %v619, 16
        %v707 = vrot.slane %v705, 1
        %v708 = vsel %vm648, %v703, %v707
        %v709 = vshrl.u32 %v619, 16
        %v711 = vor.u32 %v709, %v707
        %v713 = vshll.u32 %v620, 16
        %v715 = vrot.slane %v713, 1
        %v716 = vsel %vm648, %v711, %v715
        %v717 = vshrl.u32 %v620, 16
        %v719 = vor.u32 %v717, %v715
        %v721 = vshll.u32 %v621, 16
        %v723 = vrot.slane %v721, 1
        %v724 = vsel %vm648, %v719, %v723
        %v725 = vshrl.u32 %v621, 16
        %v727 = vor.u32 %v725, %v723
        %v729 = vshll.u32 %v622, 16
        %v731 = vrot.slane %v729, 1
        %v732 = vsel %vm648, %v727, %v731
        %v733 = vshrl.u32 %v622, 16
        %v735 = vor.u32 %v733, %v731
        %v737 = vshll.u32 %v623, 16
        %v739 = vrot.slane %v737, 1
        %v740 = vsel %vm648, %v735, %v739
        %v741 = vshrl.u32 %v623, 16
        %v743 = vor.u32 %v741, %v739
        %v745 = vshll.u32 %v624, 16
        %v747 = vrot.slane %v745, 1
        %v748 = vsel %vm648, %v743, %v747
        %v749 = vshrl.u32 %v624, 16
        %v751 = vor.u32 %v749, %v747
        %v753 = vshll.u32 %v625, 16
        %v755 = vrot.slane %v753, 1
        %v756 = vsel %vm648, %v751, %v755
        %v757 = vshrl.u32 %v625, 16
        %v759 = vor.u32 %v757, %v755
        %v761 = vshll.u32 %v626, 16
        %v763 = vrot.slane %v761, 1
        %v764 = vsel %vm648, %v759, %v763
        %v765 = vshrl.u32 %v626, 16
        %v767 = vor.u32 %v765, %v763
        %v769 = vshll.u32 %v627, 16
        %v771 = vrot.slane %v769, 1
        %v772 = vsel %vm648, %v767, %v771
        %v773 = vshrl.u32 %v627, 16
        %v775 = vor.u32 %v773, %v771
        %v777 = vshll.u32 %v628, 16
        %v779 = vrot.slane %v777, 1
        %v780 = vsel %vm648, %v775, %v779
        %v781 = vshrl.u32 %v628, 16
        %v783 = vor.u32 %v781, %v779
        %v785 = vshll.u32 %v629, 16
        %v787 = vrot.slane %v785, 1
        %v788 = vsel %vm648, %v783, %v787
        %v789 = vshrl.u32 %v629, 16
        %v791 = vor.u32 %v789, %v787
        %v793 = vshll.u32 %v630, 16
        %v795 = vrot.slane %v793, 1
        %v796 = vsel %vm648, %v791, %v795
        %v797 = vshrl.u32 %v630, 16
        %v799 = vor.u32 %v797, %v795
        %v801 = vshll.u32 %v631, 16
        %v803 = vrot.slane %v801, 1
        %v804 = vsel %vm648, %v799, %v803
        %v805 = vshrl.u32 %v631, 16
        %v807 = vor.u32 %v805, %v803
        %v809 = vshll.u32 %v632, 16
        %v811 = vrot.slane %v809, 1
        %v812 = vsel %vm648, %v807, %v811
        %v813 = vshrl.u32 %v632, 16
        %v815 = vor.u32 %v813, %v811
        %v817 = vshll.u32 %v633, 16
        %v819 = vrot.slane %v817, 1
        %v820 = vsel %vm648, %v815, %v819
        %v821 = vshrl.u32 %v633, 16
        %v823 = vor.u32 %v821, %v819
        %v825 = vshll.u32 %v634, 16
        %v827 = vrot.slane %v825, 1
        %v828 = vsel %vm648, %v823, %v827
        %v829 = vshrl.u32 %v634, 16
        %v831 = vor.u32 %v829, %v827
        %v833 = vshll.u32 %v635, 16
        %v835 = vrot.slane %v833, 1
        %v836 = vsel %vm648, %v831, %v835
        %v837 = vshrl.u32 %v635, 16
        %v839 = vor.u32 %v837, %v835
        %v841 = vshll.u32 %v636, 16
        %v843 = vrot.slane %v841, 1
        %v844 = vsel %vm648, %v839, %v843
        %v845 = vshrl.u32 %v636, 16
        %v847 = vor.u32 %v845, %v843
        %v849 = vshll.u32 %v637, 16
        %v851 = vrot.slane %v849, 1
        %v852 = vsel %vm648, %v847, %v851
        %v853 = vshrl.u32 %v637, 16
        %v855 = vor.u32 %v853, %v851
        %v857 = vshll.u32 %v638, 16
        %v859 = vrot.slane %v857, 1
        %v860 = vsel %vm648, %v855, %v859
        %v861 = vshrl.u32 %v638, 16
        %v863 = vor.u32 %v861, %v859
        %v865 = vshll.u32 %v639, 16
        %v867 = vrot.slane %v865, 1
        %v868 = vsel %vm648, %v863, %v867
        %v869 = vshrl.u32 %v639, 16
        %v871 = vor.u32 %v869, %v867
        %v873 = vshll.u32 %v640, 16
        %v875 = vrot.slane %v873, 1
        %v876 = vsel %vm648, %v871, %v875
        %v877 = vshrl.u32 %v640, 16
        %v879 = vor.u32 %v877, %v875
        %v881 = vshll.u32 %v641, 16
        %v883 = vrot.slane %v881, 1
        %v884 = vsel %vm648, %v879, %v883
        %v885 = vshrl.u32 %v641, 16
        %v887 = vor.u32 %v885, %v883
        %v889 = vshll.u32 %v642, 16
        %v891 = vrot.slane %v889, 1
        %v892 = vsel %vm648, %v887, %v891
        %v893 = vshrl.u32 %v642, 16
        %v895 = vor.u32 %v893, %v891
        %v897 = vshll.u32 %v643, 16
        %v899 = vrot.slane %v897, 1
        %v900 = vsel %vm648, %v895, %v899
        %v901 = vshrl.u32 %v643, 16
        %v903 = vor.u32 %v901, %v899
        %v905 = vshll.u32 %v644, 16
        %v907 = vrot.slane %v905, 1
        %v908 = vsel %vm648, %v903, %v907
        %v909 = vshrl.u32 %v644, 16
        %v911 = vor.u32 %v909, %v907
        %v913 = vshll.u32 %v645, 16
        %v915 = vrot.slane %v913, 1
        %v916 = vsel %vm648, %v911, %v915
        %v917 = vshrl.u32 %v645, 16
        %v919 = vor.u32 %v917, %v915
        %v921 = vshll.u32 %v646, 16
        %v923 = vrot.slane %v921, 1
        %v924 = vsel %vm648, %v919, %v923
        %v925 = vshrl.u32 %v646, 16
        %v927 = vor.u32 %v925, %v923
        %v929 = vshll.u32 %v647, 16
        %v931 = vrot.slane %v929, 1
        %v932 = vsel %vm648, %v927, %v931
        %v933 = vshrl.u32 %v647, 16
        %v935 = vor.u32 %v933, %v931
        %v937 = vunpack.c.l.b16 %v464
        %v938 = vpack.c.b16 %v937, %v937
        %v940 = vshrl.u32 %v938, 16
        %v942 = vrot.slane %v940, 1
        %v943 = vshll.u32 %v938, 16
        %v945 = vrot.slane %v943, 2
        %v946 = vor.u32 %v942, %v945
        %vm947 = vcmask 23552
        %v949 = vsel %vm947, %v660, 0
        %v952 = vsel %vm947, %v668, 0
        %v955 = vsel %vm947, %v676, 0
        %v958 = vsel %vm947, %v684, 0
        %v961 = vsel %vm947, %v692, 0
        %v964 = vsel %vm947, %v700, 0
        %v967 = vsel %vm947, %v708, 0
        %v970 = vsel %vm947, %v716, 0
        %v973 = vsel %vm947, %v724, 0
        %v976 = vsel %vm947, %v732, 0
        %v979 = vsel %vm947, %v740, 0
        %v982 = vsel %vm947, %v748, 0
        %v985 = vsel %vm947, %v756, 0
        %v988 = vsel %vm947, %v764, 0
        %v991 = vsel %vm947, %v772, 0
        %v994 = vsel %vm947, %v780, 0
        %v997 = vsel %vm947, %v788, 0
        %v1000 = vsel %vm947, %v796, 0
        %v1003 = vsel %vm947, %v804, 0
        %v1006 = vsel %vm947, %v812, 0
        %v1009 = vsel %vm947, %v820, 0
        %v1012 = vsel %vm947, %v828, 0
        %v1015 = vsel %vm947, %v836, 0
        %v1018 = vsel %vm947, %v844, 0
        %v1021 = vsel %vm947, %v852, 0
        %v1024 = vsel %vm947, %v860, 0
        %v1027 = vsel %vm947, %v868, 0
        %v1030 = vsel %vm947, %v876, 0
        %v1033 = vsel %vm947, %v884, 0
        %v1036 = vsel %vm947, %v892, 0
        %v1039 = vsel %vm947, %v900, 0
        %v1042 = vsel %vm947, %v908, 0
        %v1045 = vsel %vm947, %v916, 0
        %v1048 = vsel %vm947, %v924, 0
        %v1051 = vsel %vm947, %v932, 0
        %v1054 = vsel %vm947, %v935, 0
        %vm1056 = vcmask 1040384
        %vm1057 = vcmask 1041408
        %v1058 = vsel %vm1056, 4294967295, 65535
        %v1059 = vsel %vm1057, %v1058, 0
        %v1061 = vand.u32 %v946, %v1059
        %1063 = vmatprep.subr.bf16.mxu0 0
        %1064 = vmatpush1.bf16.msra.mxu0 %v1061
        %1065 = vmatprep.subr.bf16.mxu0 0
        %1066 = vmatpush1.bf16.msra.mxu0 0
        %1067 = vmatprep.subr.bf16.mxu0 0
        %1068 = vmatpush1.bf16.msra.mxu0 0
        %1069 = vmatprep.subr.bf16.mxu0 0
        %1070 = vmatpush1.bf16.msra.mxu0 0
        %1071 = vmatprep.subr.bf16.mxu0 0
        %1072 = vmatpush1.bf16.msra.mxu0 0
        %1073 = vmatprep.subr.bf16.mxu0 0
        %1074 = vmatpush1.bf16.msra.mxu0 0
        %1075 = vmatprep.subr.bf16.mxu0 0
        %1076 = vmatpush1.bf16.msra.mxu0 0
        %1077 = vmatprep.subr.bf16.mxu0 0
        %1078 = vmatpush1.bf16.msra.mxu0 0
        %1079 = vmatprep.subr.bf16.mxu0 0
        %1080 = vmatpush1.bf16.msra.mxu0 0
        %1081 = vmatprep.subr.bf16.mxu0 0
        %1082 = vmatpush1.bf16.msra.mxu0 0
        %1083 = vmatprep.subr.bf16.mxu0 0
        %1084 = vmatpush1.bf16.msra.mxu0 0
        %1085 = vmatprep.subr.bf16.mxu0 0
        %1086 = vmatpush1.bf16.msra.mxu0 0
        %1087 = vmatprep.subr.bf16.mxu0 0
        %1088 = vmatpush1.bf16.msra.mxu0 0
        %1089 = vmatprep.subr.bf16.mxu0 0
        %1090 = vmatpush1.bf16.msra.mxu0 0
        %1091 = vmatprep.subr.bf16.mxu0 0
        %1092 = vmatpush1.bf16.msra.mxu0 0
        %1093 = vmatprep.subr.bf16.mxu0 0
        %1094 = vmatpush1.bf16.msra.mxu0 0
        %1095 = vmatprep.mubr.bf16.mxu0 0
        %1096 = vmatmul.mubr.bf16.gmra.mrb[0].mxu0 %v949
        %v1097 = vpop.f32.mrb[0].mxu0
        %v1098 = vadd.f32 0.0, %v1097
        %v1099 = vpop.f32.mrb[0].mxu0
        %v1100 = vpop.f32.mrb[0].mxu0
        %v1101 = vadd.f32 0.0, %v1100
        %v1102 = vpop.f32.mrb[0].mxu0
        %1103 = vmatprep.mubr.bf16.mxu0 0
        %1104 = vmatmul.mubr.bf16.gmra.mrb[0].mxu0 %v952
        %v1105 = vpop.f32.mrb[0].mxu0
        %v1106 = vadd.f32 0.0, %v1105
        %v1107 = vpop.f32.mrb[0].mxu0
        %v1108 = vpop.f32.mrb[0].mxu0
        %v1109 = vadd.f32 0.0, %v1108
        %v1110 = vpop.f32.mrb[0].mxu0
        %1111 = vmatprep.mubr.bf16.mxu0 0
        %1112 = vmatmul.mubr.bf16.gmra.mrb[0].mxu0 %v955
        %v1113 = vpop.f32.mrb[0].mxu0
        %v1114 = vadd.f32 0.0, %v1113
        %v1115 = vpop.f32.mrb[0].mxu0
        %v1116 = vpop.f32.mrb[0].mxu0
        %v1117 = vadd.f32 0.0, %v1116
        %v1118 = vpop.f32.mrb[0].mxu0
        %1119 = vmatprep.mubr.bf16.mxu0 0
        %1120 = vmatmul.mubr.bf16.gmra.mrb[0].mxu0 %v958
        %v1121 = vpop.f32.mrb[0].mxu0
        %v1122 = vadd.f32 0.0, %v1121
        %v1123 = vpop.f32.mrb[0].mxu0
        %v1124 = vpop.f32.mrb[0].mxu0
        %v1125 = vadd.f32 0.0, %v1124
        %v1126 = vpop.f32.mrb[0].mxu0
        %1127 = vmatprep.mubr.bf16.mxu0 0
        %1128 = vmatmul.mubr.bf16.gmra.mrb[0].mxu0 %v961
        %v1129 = vpop.f32.mrb[0].mxu0
        %v1130 = vadd.f32 0.0, %v1129
        %v1131 = vpop.f32.mrb[0].mxu0
        %v1132 = vpop.f32.mrb[0].mxu0
        %v1133 = vadd.f32 0.0, %v1132
        %v1134 = vpop.f32.mrb[0].mxu0
        %1135 = vmatprep.mubr.bf16.mxu0 0
        %1136 = vmatmul.mubr.bf16.gmra.mrb[0].mxu0 %v964
        %v1137 = vpop.f32.mrb[0].mxu0
        %v1138 = vadd.f32 0.0, %v1137
        %v1139 = vpop.f32.mrb[0].mxu0
        %v1140 = vpop.f32.mrb[0].mxu0
        %v1141 = vadd.f32 0.0, %v1140
        %v1142 = vpop.f32.mrb[0].mxu0
        %1143 = vmatprep.mubr.bf16.mxu0 0
        %1144 = vmatmul.mubr.bf16.gmra.mrb[0].mxu0 %v967
        %v1145 = vpop.f32.mrb[0].mxu0
        %v1146 = vadd.f32 0.0, %v1145
        %v1147 = vpop.f32.mrb[0].mxu0
        %v1148 = vpop.f32.mrb[0].mxu0
        %v1149 = vadd.f32 0.0, %v1148
        %v1150 = vpop.f32.mrb[0].mxu0
        %1151 = vmatprep.mubr.bf16.mxu0 0
        %1152 = vmatmul.mubr.bf16.gmra.mrb[0].mxu0 %v970
        %v1153 = vpop.f32.mrb[0].mxu0
        %v1154 = vadd.f32 0.0, %v1153
        %v1155 = vpop.f32.mrb[0].mxu0
        %v1156 = vpop.f32.mrb[0].mxu0
        %v1157 = vadd.f32 0.0, %v1156
        %v1158 = vpop.f32.mrb[0].mxu0
        %1159 = vmatprep.mubr.bf16.mxu0 0
        %1160 = vmatmul.mubr.bf16.gmra.mrb[0].mxu0 %v973
        %v1161 = vpop.f32.mrb[0].mxu0
        %v1162 = vadd.f32 0.0, %v1161
        %v1163 = vpop.f32.mrb[0].mxu0
        %v1164 = vpop.f32.mrb[0].mxu0
        %v1165 = vadd.f32 0.0, %v1164
        %v1166 = vpop.f32.mrb[0].mxu0
        %1167 = vmatprep.mubr.bf16.mxu0 0
        %1168 = vmatmul.mubr.bf16.gmra.mrb[0].mxu0 %v976
        %v1169 = vpop.f32.mrb[0].mxu0
        %v1170 = vadd.f32 0.0, %v1169
        %v1171 = vpop.f32.mrb[0].mxu0
        %v1172 = vpop.f32.mrb[0].mxu0
        %v1173 = vadd.f32 0.0, %v1172
        %v1174 = vpop.f32.mrb[0].mxu0
        %1175 = vmatprep.mubr.bf16.mxu0 0
        %1176 = vmatmul.mubr.bf16.gmra.mrb[0].mxu0 %v979
        %v1177 = vpop.f32.mrb[0].mxu0
        %v1178 = vadd.f32 0.0, %v1177
        %v1179 = vpop.f32.mrb[0].mxu0
        %v1180 = vpop.f32.mrb[0].mxu0
        %v1181 = vadd.f32 0.0, %v1180
        %v1182 = vpop.f32.mrb[0].mxu0
        %1183 = vmatprep.mubr.bf16.mxu0 0
        %1184 = vmatmul.mubr.bf16.gmra.mrb[0].mxu0 %v982
        %v1185 = vpop.f32.mrb[0].mxu0
        %v1186 = vadd.f32 0.0, %v1185
        %v1187 = vpop.f32.mrb[0].mxu0
        %v1188 = vpop.f32.mrb[0].mxu0
        %v1189 = vadd.f32 0.0, %v1188
        %v1190 = vpop.f32.mrb[0].mxu0
        %1191 = vmatprep.mubr.bf16.mxu0 0
        %1192 = vmatmul.mubr.bf16.gmra.mrb[0].mxu0 %v985
        %v1193 = vpop.f32.mrb[0].mxu0
        %v1194 = vadd.f32 0.0, %v1193
        %v1195 = vpop.f32.mrb[0].mxu0
        %v1196 = vpop.f32.mrb[0].mxu0
        %v1197 = vadd.f32 0.0, %v1196
        %v1198 = vpop.f32.mrb[0].mxu0
        %1199 = vmatprep.mubr.bf16.mxu0 0
        %1200 = vmatmul.mubr.bf16.gmra.mrb[0].mxu0 %v988
        %v1201 = vpop.f32.mrb[0].mxu0
        %v1202 = vadd.f32 0.0, %v1201
        %v1203 = vpop.f32.mrb[0].mxu0
        %v1204 = vpop.f32.mrb[0].mxu0
        %v1205 = vadd.f32 0.0, %v1204
        %v1206 = vpop.f32.mrb[0].mxu0
        %1207 = vmatprep.mubr.bf16.mxu0 0
        %1208 = vmatmul.mubr.bf16.gmra.mrb[0].mxu0 %v991
        %v1209 = vpop.f32.mrb[0].mxu0
        %v1210 = vadd.f32 0.0, %v1209
        %v1211 = vpop.f32.mrb[0].mxu0
        %v1212 = vpop.f32.mrb[0].mxu0
        %v1213 = vadd.f32 0.0, %v1212
        %v1214 = vpop.f32.mrb[0].mxu0
        %1215 = vmatprep.mubr.bf16.mxu0 0
        %1216 = vmatmul.mubr.bf16.gmra.mrb[0].mxu0 %v994
        %v1217 = vpop.f32.mrb[0].mxu0
        %v1218 = vadd.f32 0.0, %v1217
        %v1219 = vpop.f32.mrb[0].mxu0
        %v1220 = vpop.f32.mrb[0].mxu0
        %v1221 = vadd.f32 0.0, %v1220
        %v1222 = vpop.f32.mrb[0].mxu0
        %1223 = vmatprep.mubr.bf16.mxu0 0
        %1224 = vmatmul.mubr.bf16.gmra.mrb[0].mxu0 %v997
        %v1225 = vpop.f32.mrb[0].mxu0
        %v1226 = vadd.f32 0.0, %v1225
        %v1227 = vpop.f32.mrb[0].mxu0
        %v1228 = vpop.f32.mrb[0].mxu0
        %v1229 = vadd.f32 0.0, %v1228
        %v1230 = vpop.f32.mrb[0].mxu0
        %1231 = vmatprep.mubr.bf16.mxu0 0
        %1232 = vmatmul.mubr.bf16.gmra.mrb[0].mxu0 %v1000
        %v1233 = vpop.f32.mrb[0].mxu0
        %v1234 = vadd.f32 0.0, %v1233
        %v1235 = vpop.f32.mrb[0].mxu0
        %v1236 = vpop.f32.mrb[0].mxu0
        %v1237 = vadd.f32 0.0, %v1236
        %v1238 = vpop.f32.mrb[0].mxu0
        %1239 = vmatprep.mubr.bf16.mxu0 0
        %1240 = vmatmul.mubr.bf16.gmra.mrb[0].mxu0 %v1003
        %v1241 = vpop.f32.mrb[0].mxu0
        %v1242 = vadd.f32 0.0, %v1241
        %v1243 = vpop.f32.mrb[0].mxu0
        %v1244 = vpop.f32.mrb[0].mxu0
        %v1245 = vadd.f32 0.0, %v1244
        %v1246 = vpop.f32.mrb[0].mxu0
        %1247 = vmatprep.mubr.bf16.mxu0 0
        %1248 = vmatmul.mubr.bf16.gmra.mrb[0].mxu0 %v1006
        %v1249 = vpop.f32.mrb[0].mxu0
        %v1250 = vadd.f32 0.0, %v1249
        %v1251 = vpop.f32.mrb[0].mxu0
        %v1252 = vpop.f32.mrb[0].mxu0
        %v1253 = vadd.f32 0.0, %v1252
        %v1254 = vpop.f32.mrb[0].mxu0
        %1255 = vmatprep.mubr.bf16.mxu0 0
        %1256 = vmatmul.mubr.bf16.gmra.mrb[0].mxu0 %v1009
        %v1257 = vpop.f32.mrb[0].mxu0
        %v1258 = vadd.f32 0.0, %v1257
        %v1259 = vpop.f32.mrb[0].mxu0
        %v1260 = vpop.f32.mrb[0].mxu0
        %v1261 = vadd.f32 0.0, %v1260
        %v1262 = vpop.f32.mrb[0].mxu0
        %1263 = vmatprep.mubr.bf16.mxu0 0
        %1264 = vmatmul.mubr.bf16.gmra.mrb[0].mxu0 %v1012
        %v1265 = vpop.f32.mrb[0].mxu0
        %v1266 = vadd.f32 0.0, %v1265
        %v1267 = vpop.f32.mrb[0].mxu0
        %v1268 = vpop.f32.mrb[0].mxu0
        %v1269 = vadd.f32 0.0, %v1268
        %v1270 = vpop.f32.mrb[0].mxu0
        %1271 = vmatprep.mubr.bf16.mxu0 0
        %1272 = vmatmul.mubr.bf16.gmra.mrb[0].mxu0 %v1015
        %v1273 = vpop.f32.mrb[0].mxu0
        %v1274 = vadd.f32 0.0, %v1273
        %v1275 = vpop.f32.mrb[0].mxu0
        %v1276 = vpop.f32.mrb[0].mxu0
        %v1277 = vadd.f32 0.0, %v1276
        %v1278 = vpop.f32.mrb[0].mxu0
        %1279 = vmatprep.mubr.bf16.mxu0 0
        %1280 = vmatmul.mubr.bf16.gmra.mrb[0].mxu0 %v1018
        %v1281 = vpop.f32.mrb[0].mxu0
        %v1282 = vadd.f32 0.0, %v1281
        %v1283 = vpop.f32.mrb[0].mxu0
        %v1284 = vpop.f32.mrb[0].mxu0
        %v1285 = vadd.f32 0.0, %v1284
        %v1286 = vpop.f32.mrb[0].mxu0
        %1287 = vmatprep.mubr.bf16.mxu0 0
        %1288 = vmatmul.mubr.bf16.gmra.mrb[0].mxu0 %v1021
        %v1289 = vpop.f32.mrb[0].mxu0
        %v1290 = vadd.f32 0.0, %v1289
        %v1291 = vpop.f32.mrb[0].mxu0
        %v1292 = vpop.f32.mrb[0].mxu0
        %v1293 = vadd.f32 0.0, %v1292
        %v1294 = vpop.f32.mrb[0].mxu0
        %1295 = vmatprep.mubr.bf16.mxu0 0
        %1296 = vmatmul.mubr.bf16.gmra.mrb[0].mxu0 %v1024
        %v1297 = vpop.f32.mrb[0].mxu0
        %v1298 = vadd.f32 0.0, %v1297
        %v1299 = vpop.f32.mrb[0].mxu0
        %v1300 = vpop.f32.mrb[0].mxu0
        %v1301 = vadd.f32 0.0, %v1300
        %v1302 = vpop.f32.mrb[0].mxu0
        %1303 = vmatprep.mubr.bf16.mxu0 0
        %1304 = vmatmul.mubr.bf16.gmra.mrb[0].mxu0 %v1027
        %v1305 = vpop.f32.mrb[0].mxu0
        %v1306 = vadd.f32 0.0, %v1305
        %v1307 = vpop.f32.mrb[0].mxu0
        %v1308 = vpop.f32.mrb[0].mxu0
        %v1309 = vadd.f32 0.0, %v1308
        %v1310 = vpop.f32.mrb[0].mxu0
        %1311 = vmatprep.mubr.bf16.mxu0 0
        %1312 = vmatmul.mubr.bf16.gmra.mrb[0].mxu0 %v1030
        %v1313 = vpop.f32.mrb[0].mxu0
        %v1314 = vadd.f32 0.0, %v1313
        %v1315 = vpop.f32.mrb[0].mxu0
        %v1316 = vpop.f32.mrb[0].mxu0
        %v1317 = vadd.f32 0.0, %v1316
        %v1318 = vpop.f32.mrb[0].mxu0
        %1319 = vmatprep.mubr.bf16.mxu0 0
        %1320 = vmatmul.mubr.bf16.gmra.mrb[0].mxu0 %v1033
        %v1321 = vpop.f32.mrb[0].mxu0
        %v1322 = vadd.f32 0.0, %v1321
        %v1323 = vpop.f32.mrb[0].mxu0
        %v1324 = vpop.f32.mrb[0].mxu0
        %v1325 = vadd.f32 0.0, %v1324
        %v1326 = vpop.f32.mrb[0].mxu0
        %1327 = vmatprep.mubr.bf16.mxu0 0
        %1328 = vmatmul.mubr.bf16.gmra.mrb[0].mxu0 %v1036
        %v1329 = vpop.f32.mrb[0].mxu0
        %v1330 = vadd.f32 0.0, %v1329
        %v1331 = vpop.f32.mrb[0].mxu0
        %v1332 = vpop.f32.mrb[0].mxu0
        %v1333 = vadd.f32 0.0, %v1332
        %v1334 = vpop.f32.mrb[0].mxu0
        %1335 = vmatprep.mubr.bf16.mxu0 0
        %1336 = vmatmul.mubr.bf16.gmra.mrb[0].mxu0 %v1039
        %v1337 = vpop.f32.mrb[0].mxu0
        %v1338 = vadd.f32 0.0, %v1337
        %v1339 = vpop.f32.mrb[0].mxu0
        %v1340 = vpop.f32.mrb[0].mxu0
        %v1341 = vadd.f32 0.0, %v1340
        %v1342 = vpop.f32.mrb[0].mxu0
        %1343 = vmatprep.mubr.bf16.mxu0 0
        %1344 = vmatmul.mubr.bf16.gmra.mrb[0].mxu0 %v1042
        %v1345 = vpop.f32.mrb[0].mxu0
        %v1346 = vadd.f32 0.0, %v1345
        %v1347 = vpop.f32.mrb[0].mxu0
        %v1348 = vpop.f32.mrb[0].mxu0
        %v1349 = vadd.f32 0.0, %v1348
        %v1350 = vpop.f32.mrb[0].mxu0
        %1351 = vmatprep.mubr.bf16.mxu0 0
        %1352 = vmatmul.mubr.bf16.gmra.mrb[0].mxu0 %v1045
        %v1353 = vpop.f32.mrb[0].mxu0
        %v1354 = vadd.f32 0.0, %v1353
        %v1355 = vpop.f32.mrb[0].mxu0
        %v1356 = vpop.f32.mrb[0].mxu0
        %v1357 = vadd.f32 0.0, %v1356
        %v1358 = vpop.f32.mrb[0].mxu0
        %1359 = vmatprep.mubr.bf16.mxu0 0
        %1360 = vmatmul.mubr.bf16.gmra.mrb[0].mxu0 %v1048
        %v1361 = vpop.f32.mrb[0].mxu0
        %v1362 = vadd.f32 0.0, %v1361
        %v1363 = vpop.f32.mrb[0].mxu0
        %v1364 = vpop.f32.mrb[0].mxu0
        %v1365 = vadd.f32 0.0, %v1364
        %v1366 = vpop.f32.mrb[0].mxu0
        %1367 = vmatprep.mubr.bf16.mxu0 0
        %1368 = vmatmul.mubr.bf16.gmra.mrb[0].mxu0 %v1051
        %v1369 = vpop.f32.mrb[0].mxu0
        %v1370 = vadd.f32 0.0, %v1369
        %v1371 = vpop.f32.mrb[0].mxu0
        %v1372 = vpop.f32.mrb[0].mxu0
        %v1373 = vadd.f32 0.0, %v1372
        %v1374 = vpop.f32.mrb[0].mxu0
        %1375 = vmatprep.mubr.bf16.mxu0 0
        %1376 = vmatmul.mubr.bf16.gmra.mrb[0].mxu0 %v1054
        %v1377 = vpop.f32.mrb[0].mxu0
        %v1378 = vadd.f32 0.0, %v1377
        %v1379 = vpop.f32.mrb[0].mxu0
        %v1380 = vpop.f32.mrb[0].mxu0
        %v1381 = vadd.f32 0.0, %v1380
        %v1382 = vpop.f32.mrb[0].mxu0
        %1383 = vdwg.mxu0
        %v1384 = vsel %vm947, %v612, 0
        %v1386 = vsel %vm947, %v613, 0
        %v1388 = vsel %vm947, %v614, 0
        %v1390 = vsel %vm947, %v615, 0
        %v1392 = vsel %vm947, %v616, 0
        %v1394 = vsel %vm947, %v617, 0
        %v1396 = vsel %vm947, %v618, 0
        %v1398 = vsel %vm947, %v619, 0
        %v1400 = vsel %vm947, %v620, 0
        %v1402 = vsel %vm947, %v621, 0
        %v1404 = vsel %vm947, %v622, 0
        %v1406 = vsel %vm947, %v623, 0
        %v1408 = vsel %vm947, %v624, 0
        %v1410 = vsel %vm947, %v625, 0
        %v1412 = vsel %vm947, %v626, 0
        %v1414 = vsel %vm947, %v627, 0
        %v1416 = vsel %vm947, %v628, 0
        %v1418 = vsel %vm947, %v629, 0
        %v1420 = vsel %vm947, %v630, 0
        %v1422 = vsel %vm947, %v631, 0
        %v1424 = vsel %vm947, %v632, 0
        %v1426 = vsel %vm947, %v633, 0
        %v1428 = vsel %vm947, %v634, 0
        %v1430 = vsel %vm947, %v635, 0
        %v1432 = vsel %vm947, %v636, 0
        %v1434 = vsel %vm947, %v637, 0
        %v1436 = vsel %vm947, %v638, 0
        %v1438 = vsel %vm947, %v639, 0
        %v1440 = vsel %vm947, %v640, 0
        %v1442 = vsel %vm947, %v641, 0
        %v1444 = vsel %vm947, %v642, 0
        %v1446 = vsel %vm947, %v643, 0
        %v1448 = vsel %vm947, %v644, 0
        %v1450 = vsel %vm947, %v645, 0
        %v1452 = vsel %vm947, %v646, 0
        %v1454 = vsel %vm947, %v647, 0
        %v1457 = vand.u32 %v464, %v1059
        %1459 = vmatprep.subr.bf16.mxu0 0
        %1460 = vmatpush1.bf16.msra.mxu0 %v1457
        %1461 = vmatprep.subr.bf16.mxu0 0
        %1462 = vmatpush1.bf16.msra.mxu0 0
        %1463 = vmatprep.subr.bf16.mxu0 0
        %1464 = vmatpush1.bf16.msra.mxu0 0
        %1465 = vmatprep.subr.bf16.mxu0 0
        %1466 = vmatpush1.bf16.msra.mxu0 0
        %1467 = vmatprep.subr.bf16.mxu0 0
        %1468 = vmatpush1.bf16.msra.mxu0 0
        %1469 = vmatprep.subr.bf16.mxu0 0
        %1470 = vmatpush1.bf16.msra.mxu0 0
        %1471 = vmatprep.subr.bf16.mxu0 0
        %1472 = vmatpush1.bf16.msra.mxu0 0
        %1473 = vmatprep.subr.bf16.mxu0 0
        %1474 = vmatpush1.bf16.msra.mxu0 0
        %1475 = vmatprep.subr.bf16.mxu0 0
        %1476 = vmatpush1.bf16.msra.mxu0 0
        %1477 = vmatprep.subr.bf16.mxu0 0
        %1478 = vmatpush1.bf16.msra.mxu0 0
        %1479 = vmatprep.subr.bf16.mxu0 0
        %1480 = vmatpush1.bf16.msra.mxu0 0
        %1481 = vmatprep.subr.bf16.mxu0 0
        %1482 = vmatpush1.bf16.msra.mxu0 0
        %1483 = vmatprep.subr.bf16.mxu0 0
        %1484 = vmatpush1.bf16.msra.mxu0 0
        %1485 = vmatprep.subr.bf16.mxu0 0
        %1486 = vmatpush1.bf16.msra.mxu0 0
        %1487 = vmatprep.subr.bf16.mxu0 0
        %1488 = vmatpush1.bf16.msra.mxu0 0
        %1489 = vmatprep.subr.bf16.mxu0 0
        %1490 = vmatpush1.bf16.msra.mxu0 0
        %1491 = vmatprep.mubr.bf16.mxu0 0
        %1492 = vmatmul.mubr.bf16.gmra.mrb[0].mxu0 %v1384
        %v1493 = vpop.f32.mrb[0].mxu0
        %v1494 = vadd.f32 %v1098, %v1493
        %v1495 = vpop.f32.mrb[0].mxu0
        %v1496 = vpop.f32.mrb[0].mxu0
        %v1497 = vadd.f32 %v1101, %v1496
        %v1498 = vpop.f32.mrb[0].mxu0
        %1499 = vmatprep.mubr.bf16.mxu0 0
        %1500 = vmatmul.mubr.bf16.gmra.mrb[0].mxu0 %v1386
        %v1501 = vpop.f32.mrb[0].mxu0
        %v1502 = vadd.f32 %v1106, %v1501
        %v1503 = vpop.f32.mrb[0].mxu0
        %v1504 = vpop.f32.mrb[0].mxu0
        %v1505 = vadd.f32 %v1109, %v1504
        %v1506 = vpop.f32.mrb[0].mxu0
        %1507 = vmatprep.mubr.bf16.mxu0 0
        %1508 = vmatmul.mubr.bf16.gmra.mrb[0].mxu0 %v1388
        %v1509 = vpop.f32.mrb[0].mxu0
        %v1510 = vadd.f32 %v1114, %v1509
        %v1511 = vpop.f32.mrb[0].mxu0
        %v1512 = vpop.f32.mrb[0].mxu0
        %v1513 = vadd.f32 %v1117, %v1512
        %v1514 = vpop.f32.mrb[0].mxu0
        %1515 = vmatprep.mubr.bf16.mxu0 0
        %1516 = vmatmul.mubr.bf16.gmra.mrb[0].mxu0 %v1390
        %v1517 = vpop.f32.mrb[0].mxu0
        %v1518 = vadd.f32 %v1122, %v1517
        %v1519 = vpop.f32.mrb[0].mxu0
        %v1520 = vpop.f32.mrb[0].mxu0
        %v1521 = vadd.f32 %v1125, %v1520
        %v1522 = vpop.f32.mrb[0].mxu0
        %1523 = vmatprep.mubr.bf16.mxu0 0
        %1524 = vmatmul.mubr.bf16.gmra.mrb[0].mxu0 %v1392
        %v1525 = vpop.f32.mrb[0].mxu0
        %v1526 = vadd.f32 %v1130, %v1525
        %v1527 = vpop.f32.mrb[0].mxu0
        %v1528 = vpop.f32.mrb[0].mxu0
        %v1529 = vadd.f32 %v1133, %v1528
        %v1530 = vpop.f32.mrb[0].mxu0
        %1531 = vmatprep.mubr.bf16.mxu0 0
        %1532 = vmatmul.mubr.bf16.gmra.mrb[0].mxu0 %v1394
        %v1533 = vpop.f32.mrb[0].mxu0
        %v1534 = vadd.f32 %v1138, %v1533
        %v1535 = vpop.f32.mrb[0].mxu0
        %v1536 = vpop.f32.mrb[0].mxu0
        %v1537 = vadd.f32 %v1141, %v1536
        %v1538 = vpop.f32.mrb[0].mxu0
        %1539 = vmatprep.mubr.bf16.mxu0 0
        %1540 = vmatmul.mubr.bf16.gmra.mrb[0].mxu0 %v1396
        %v1541 = vpop.f32.mrb[0].mxu0
        %v1542 = vadd.f32 %v1146, %v1541
        %v1543 = vpop.f32.mrb[0].mxu0
        %v1544 = vpop.f32.mrb[0].mxu0
        %v1545 = vadd.f32 %v1149, %v1544
        %v1546 = vpop.f32.mrb[0].mxu0
        %1547 = vmatprep.mubr.bf16.mxu0 0
        %1548 = vmatmul.mubr.bf16.gmra.mrb[0].mxu0 %v1398
        %v1549 = vpop.f32.mrb[0].mxu0
        %v1550 = vadd.f32 %v1154, %v1549
        %v1551 = vpop.f32.mrb[0].mxu0
        %v1552 = vpop.f32.mrb[0].mxu0
        %v1553 = vadd.f32 %v1157, %v1552
        %v1554 = vpop.f32.mrb[0].mxu0
        %1555 = vmatprep.mubr.bf16.mxu0 0
        %1556 = vmatmul.mubr.bf16.gmra.mrb[0].mxu0 %v1400
        %v1557 = vpop.f32.mrb[0].mxu0
        %v1558 = vadd.f32 %v1162, %v1557
        %v1559 = vpop.f32.mrb[0].mxu0
        %v1560 = vpop.f32.mrb[0].mxu0
        %v1561 = vadd.f32 %v1165, %v1560
        %v1562 = vpop.f32.mrb[0].mxu0
        %1563 = vmatprep.mubr.bf16.mxu0 0
        %1564 = vmatmul.mubr.bf16.gmra.mrb[0].mxu0 %v1402
        %v1565 = vpop.f32.mrb[0].mxu0
        %v1566 = vadd.f32 %v1170, %v1565
        %v1567 = vpop.f32.mrb[0].mxu0
        %v1568 = vpop.f32.mrb[0].mxu0
        %v1569 = vadd.f32 %v1173, %v1568
        %v1570 = vpop.f32.mrb[0].mxu0
        %1571 = vmatprep.mubr.bf16.mxu0 0
        %1572 = vmatmul.mubr.bf16.gmra.mrb[0].mxu0 %v1404
        %v1573 = vpop.f32.mrb[0].mxu0
        %v1574 = vadd.f32 %v1178, %v1573
        %v1575 = vpop.f32.mrb[0].mxu0
        %v1576 = vpop.f32.mrb[0].mxu0
        %v1577 = vadd.f32 %v1181, %v1576
        %v1578 = vpop.f32.mrb[0].mxu0
        %1579 = vmatprep.mubr.bf16.mxu0 0
        %1580 = vmatmul.mubr.bf16.gmra.mrb[0].mxu0 %v1406
        %v1581 = vpop.f32.mrb[0].mxu0
        %v1582 = vadd.f32 %v1186, %v1581
        %v1583 = vpop.f32.mrb[0].mxu0
        %v1584 = vpop.f32.mrb[0].mxu0
        %v1585 = vadd.f32 %v1189, %v1584
        %v1586 = vpop.f32.mrb[0].mxu0
        %1587 = vmatprep.mubr.bf16.mxu0 0
        %1588 = vmatmul.mubr.bf16.gmra.mrb[0].mxu0 %v1408
        %v1589 = vpop.f32.mrb[0].mxu0
        %v1590 = vadd.f32 %v1194, %v1589
        %v1591 = vpop.f32.mrb[0].mxu0
        %v1592 = vpop.f32.mrb[0].mxu0
        %v1593 = vadd.f32 %v1197, %v1592
        %v1594 = vpop.f32.mrb[0].mxu0
        %1595 = vmatprep.mubr.bf16.mxu0 0
        %1596 = vmatmul.mubr.bf16.gmra.mrb[0].mxu0 %v1410
        %v1597 = vpop.f32.mrb[0].mxu0
        %v1598 = vadd.f32 %v1202, %v1597
        %v1599 = vpop.f32.mrb[0].mxu0
        %v1600 = vpop.f32.mrb[0].mxu0
        %v1601 = vadd.f32 %v1205, %v1600
        %v1602 = vpop.f32.mrb[0].mxu0
        %1603 = vmatprep.mubr.bf16.mxu0 0
        %1604 = vmatmul.mubr.bf16.gmra.mrb[0].mxu0 %v1412
        %v1605 = vpop.f32.mrb[0].mxu0
        %v1606 = vadd.f32 %v1210, %v1605
        %v1607 = vpop.f32.mrb[0].mxu0
        %v1608 = vpop.f32.mrb[0].mxu0
        %v1609 = vadd.f32 %v1213, %v1608
        %v1610 = vpop.f32.mrb[0].mxu0
        %1611 = vmatprep.mubr.bf16.mxu0 0
        %1612 = vmatmul.mubr.bf16.gmra.mrb[0].mxu0 %v1414
        %v1613 = vpop.f32.mrb[0].mxu0
        %v1614 = vadd.f32 %v1218, %v1613
        %v1615 = vpop.f32.mrb[0].mxu0
        %v1616 = vpop.f32.mrb[0].mxu0
        %v1617 = vadd.f32 %v1221, %v1616
        %v1618 = vpop.f32.mrb[0].mxu0
        %1619 = vmatprep.mubr.bf16.mxu0 0
        %1620 = vmatmul.mubr.bf16.gmra.mrb[0].mxu0 %v1416
        %v1621 = vpop.f32.mrb[0].mxu0
        %v1622 = vadd.f32 %v1226, %v1621
        %v1623 = vpop.f32.mrb[0].mxu0
        %v1624 = vpop.f32.mrb[0].mxu0
        %v1625 = vadd.f32 %v1229, %v1624
        %v1626 = vpop.f32.mrb[0].mxu0
        %1627 = vmatprep.mubr.bf16.mxu0 0
        %1628 = vmatmul.mubr.bf16.gmra.mrb[0].mxu0 %v1418
        %v1629 = vpop.f32.mrb[0].mxu0
        %v1630 = vadd.f32 %v1234, %v1629
        %v1631 = vpop.f32.mrb[0].mxu0
        %v1632 = vpop.f32.mrb[0].mxu0
        %v1633 = vadd.f32 %v1237, %v1632
        %v1634 = vpop.f32.mrb[0].mxu0
        %1635 = vmatprep.mubr.bf16.mxu0 0
        %1636 = vmatmul.mubr.bf16.gmra.mrb[0].mxu0 %v1420
        %v1637 = vpop.f32.mrb[0].mxu0
        %v1638 = vadd.f32 %v1242, %v1637
        %v1639 = vpop.f32.mrb[0].mxu0
        %v1640 = vpop.f32.mrb[0].mxu0
        %v1641 = vadd.f32 %v1245, %v1640
        %v1642 = vpop.f32.mrb[0].mxu0
        %1643 = vmatprep.mubr.bf16.mxu0 0
        %1644 = vmatmul.mubr.bf16.gmra.mrb[0].mxu0 %v1422
        %v1645 = vpop.f32.mrb[0].mxu0
        %v1646 = vadd.f32 %v1250, %v1645
        %v1647 = vpop.f32.mrb[0].mxu0
        %v1648 = vpop.f32.mrb[0].mxu0
        %v1649 = vadd.f32 %v1253, %v1648
        %v1650 = vpop.f32.mrb[0].mxu0
        %1651 = vmatprep.mubr.bf16.mxu0 0
        %1652 = vmatmul.mubr.bf16.gmra.mrb[0].mxu0 %v1424
        %v1653 = vpop.f32.mrb[0].mxu0
        %v1654 = vadd.f32 %v1258, %v1653
        %v1655 = vpop.f32.mrb[0].mxu0
        %v1656 = vpop.f32.mrb[0].mxu0
        %v1657 = vadd.f32 %v1261, %v1656
        %v1658 = vpop.f32.mrb[0].mxu0
        %1659 = vmatprep.mubr.bf16.mxu0 0
        %1660 = vmatmul.mubr.bf16.gmra.mrb[0].mxu0 %v1426
        %v1661 = vpop.f32.mrb[0].mxu0
        %v1662 = vadd.f32 %v1266, %v1661
        %v1663 = vpop.f32.mrb[0].mxu0
        %v1664 = vpop.f32.mrb[0].mxu0
        %v1665 = vadd.f32 %v1269, %v1664
        %v1666 = vpop.f32.mrb[0].mxu0
        %1667 = vmatprep.mubr.bf16.mxu0 0
        %1668 = vmatmul.mubr.bf16.gmra.mrb[0].mxu0 %v1428
        %v1669 = vpop.f32.mrb[0].mxu0
        %v1670 = vadd.f32 %v1274, %v1669
        %v1671 = vpop.f32.mrb[0].mxu0
        %v1672 = vpop.f32.mrb[0].mxu0
        %v1673 = vadd.f32 %v1277, %v1672
        %v1674 = vpop.f32.mrb[0].mxu0
        %1675 = vmatprep.mubr.bf16.mxu0 0
        %1676 = vmatmul.mubr.bf16.gmra.mrb[0].mxu0 %v1430
        %v1677 = vpop.f32.mrb[0].mxu0
        %v1678 = vadd.f32 %v1282, %v1677
        %v1679 = vpop.f32.mrb[0].mxu0
        %v1680 = vpop.f32.mrb[0].mxu0
        %v1681 = vadd.f32 %v1285, %v1680
        %v1682 = vpop.f32.mrb[0].mxu0
        %1683 = vmatprep.mubr.bf16.mxu0 0
        %1684 = vmatmul.mubr.bf16.gmra.mrb[0].mxu0 %v1432
        %v1685 = vpop.f32.mrb[0].mxu0
        %v1686 = vadd.f32 %v1290, %v1685
        %v1687 = vpop.f32.mrb[0].mxu0
        %v1688 = vpop.f32.mrb[0].mxu0
        %v1689 = vadd.f32 %v1293, %v1688
        %v1690 = vpop.f32.mrb[0].mxu0
        %1691 = vmatprep.mubr.bf16.mxu0 0
        %1692 = vmatmul.mubr.bf16.gmra.mrb[0].mxu0 %v1434
        %v1693 = vpop.f32.mrb[0].mxu0
        %v1694 = vadd.f32 %v1298, %v1693
        %v1695 = vpop.f32.mrb[0].mxu0
        %v1696 = vpop.f32.mrb[0].mxu0
        %v1697 = vadd.f32 %v1301, %v1696
        %v1698 = vpop.f32.mrb[0].mxu0
        %1699 = vmatprep.mubr.bf16.mxu0 0
        %1700 = vmatmul.mubr.bf16.gmra.mrb[0].mxu0 %v1436
        %v1701 = vpop.f32.mrb[0].mxu0
        %v1702 = vadd.f32 %v1306, %v1701
        %v1703 = vpop.f32.mrb[0].mxu0
        %v1704 = vpop.f32.mrb[0].mxu0
        %v1705 = vadd.f32 %v1309, %v1704
        %v1706 = vpop.f32.mrb[0].mxu0
        %1707 = vmatprep.mubr.bf16.mxu0 0
        %1708 = vmatmul.mubr.bf16.gmra.mrb[0].mxu0 %v1438
        %v1709 = vpop.f32.mrb[0].mxu0
        %v1710 = vadd.f32 %v1314, %v1709
        %v1711 = vpop.f32.mrb[0].mxu0
        %v1712 = vpop.f32.mrb[0].mxu0
        %v1713 = vadd.f32 %v1317, %v1712
        %v1714 = vpop.f32.mrb[0].mxu0
        %1715 = vmatprep.mubr.bf16.mxu0 0
        %1716 = vmatmul.mubr.bf16.gmra.mrb[0].mxu0 %v1440
        %v1717 = vpop.f32.mrb[0].mxu0
        %v1718 = vadd.f32 %v1322, %v1717
        %v1719 = vpop.f32.mrb[0].mxu0
        %v1720 = vpop.f32.mrb[0].mxu0
        %v1721 = vadd.f32 %v1325, %v1720
        %v1722 = vpop.f32.mrb[0].mxu0
        %1723 = vmatprep.mubr.bf16.mxu0 0
        %1724 = vmatmul.mubr.bf16.gmra.mrb[0].mxu0 %v1442
        %v1725 = vpop.f32.mrb[0].mxu0
        %v1726 = vadd.f32 %v1330, %v1725
        %v1727 = vpop.f32.mrb[0].mxu0
        %v1728 = vpop.f32.mrb[0].mxu0
        %v1729 = vadd.f32 %v1333, %v1728
        %v1730 = vpop.f32.mrb[0].mxu0
        %1731 = vmatprep.mubr.bf16.mxu0 0
        %1732 = vmatmul.mubr.bf16.gmra.mrb[0].mxu0 %v1444
        %v1733 = vpop.f32.mrb[0].mxu0
        %v1734 = vadd.f32 %v1338, %v1733
        %v1735 = vpop.f32.mrb[0].mxu0
        %v1736 = vpop.f32.mrb[0].mxu0
        %v1737 = vadd.f32 %v1341, %v1736
        %v1738 = vpop.f32.mrb[0].mxu0
        %1739 = vmatprep.mubr.bf16.mxu0 0
        %1740 = vmatmul.mubr.bf16.gmra.mrb[0].mxu0 %v1446
        %v1741 = vpop.f32.mrb[0].mxu0
        %v1742 = vadd.f32 %v1346, %v1741
        %v1743 = vpop.f32.mrb[0].mxu0
        %v1744 = vpop.f32.mrb[0].mxu0
        %v1745 = vadd.f32 %v1349, %v1744
        %v1746 = vpop.f32.mrb[0].mxu0
        %1747 = vmatprep.mubr.bf16.mxu0 0
        %1748 = vmatmul.mubr.bf16.gmra.mrb[0].mxu0 %v1448
        %v1749 = vpop.f32.mrb[0].mxu0
        %v1750 = vadd.f32 %v1354, %v1749
        %v1751 = vpop.f32.mrb[0].mxu0
        %v1752 = vpop.f32.mrb[0].mxu0
        %v1753 = vadd.f32 %v1357, %v1752
        %v1754 = vpop.f32.mrb[0].mxu0
        %1755 = vmatprep.mubr.bf16.mxu0 0
        %1756 = vmatmul.mubr.bf16.gmra.mrb[0].mxu0 %v1450
        %v1757 = vpop.f32.mrb[0].mxu0
        %v1758 = vadd.f32 %v1362, %v1757
        %v1759 = vpop.f32.mrb[0].mxu0
        %v1760 = vpop.f32.mrb[0].mxu0
        %v1761 = vadd.f32 %v1365, %v1760
        %v1762 = vpop.f32.mrb[0].mxu0
        %1763 = vmatprep.mubr.bf16.mxu0 0
        %1764 = vmatmul.mubr.bf16.gmra.mrb[0].mxu0 %v1452
        %v1765 = vpop.f32.mrb[0].mxu0
        %v1766 = vadd.f32 %v1370, %v1765
        %v1767 = vpop.f32.mrb[0].mxu0
        %v1768 = vpop.f32.mrb[0].mxu0
        %v1769 = vadd.f32 %v1373, %v1768
        %v1770 = vpop.f32.mrb[0].mxu0
        %1771 = vmatprep.mubr.bf16.mxu0 0
        %1772 = vmatmul.mubr.bf16.gmra.mrb[0].mxu0 %v1454
        %v1773 = vpop.f32.mrb[0].mxu0
        %v1774 = vadd.f32 %v1378, %v1773
        %v1775 = vpop.f32.mrb[0].mxu0
        %v1776 = vpop.f32.mrb[0].mxu0
        %v1777 = vadd.f32 %v1381, %v1776
        %v1778 = vpop.f32.mrb[0].mxu0
        %1779 = vdwg.mxu0
        %vm1780 = vcmask 1046528
        %v1781 = vrot.slane %v612, 1
        %v1782 = vrot.slane %v613, 1
        %v1783 = vsel %vm1780, %v1781, %v1782
        %v1784 = vrot.slane %v614, 1
        %v1785 = vsel %vm1780, %v1782, %v1784
        %v1786 = vrot.slane %v615, 1
        %v1787 = vsel %vm1780, %v1784, %v1786
        %v1788 = vrot.slane %v616, 1
        %v1789 = vsel %vm1780, %v1786, %v1788
        %v1790 = vrot.slane %v617, 1
        %v1791 = vsel %vm1780, %v1788, %v1790
        %v1792 = vrot.slane %v618, 1
        %v1793 = vsel %vm1780, %v1790, %v1792
        %v1794 = vrot.slane %v619, 1
        %v1795 = vsel %vm1780, %v1792, %v1794
        %v1796 = vrot.slane %v620, 1
        %v1797 = vsel %vm1780, %v1794, %v1796
        %v1798 = vrot.slane %v621, 1
        %v1799 = vsel %vm1780, %v1796, %v1798
        %v1800 = vrot.slane %v622, 1
        %v1801 = vsel %vm1780, %v1798, %v1800
        %v1802 = vrot.slane %v623, 1
        %v1803 = vsel %vm1780, %v1800, %v1802
        %v1804 = vrot.slane %v624, 1
        %v1805 = vsel %vm1780, %v1802, %v1804
        %v1806 = vrot.slane %v625, 1
        %v1807 = vsel %vm1780, %v1804, %v1806
        %v1808 = vrot.slane %v626, 1
        %v1809 = vsel %vm1780, %v1806, %v1808
        %v1810 = vrot.slane %v627, 1
        %v1811 = vsel %vm1780, %v1808, %v1810
        %v1812 = vrot.slane %v628, 1
        %v1813 = vsel %vm1780, %v1810, %v1812
        %v1814 = vrot.slane %v629, 1
        %v1815 = vsel %vm1780, %v1812, %v1814
        %v1816 = vrot.slane %v630, 1
        %v1817 = vsel %vm1780, %v1814, %v1816
        %v1818 = vrot.slane %v631, 1
        %v1819 = vsel %vm1780, %v1816, %v1818
        %v1820 = vrot.slane %v632, 1
        %v1821 = vsel %vm1780, %v1818, %v1820
        %v1822 = vrot.slane %v633, 1
        %v1823 = vsel %vm1780, %v1820, %v1822
        %v1824 = vrot.slane %v634, 1
        %v1825 = vsel %vm1780, %v1822, %v1824
        %v1826 = vrot.slane %v635, 1
        %v1827 = vsel %vm1780, %v1824, %v1826
        %v1828 = vrot.slane %v636, 1
        %v1829 = vsel %vm1780, %v1826, %v1828
        %v1830 = vrot.slane %v637, 1
        %v1831 = vsel %vm1780, %v1828, %v1830
        %v1832 = vrot.slane %v638, 1
        %v1833 = vsel %vm1780, %v1830, %v1832
        %v1834 = vrot.slane %v639, 1
        %v1835 = vsel %vm1780, %v1832, %v1834
        %v1836 = vrot.slane %v640, 1
        %v1837 = vsel %vm1780, %v1834, %v1836
        %v1838 = vrot.slane %v641, 1
        %v1839 = vsel %vm1780, %v1836, %v1838
        %v1840 = vrot.slane %v642, 1
        %v1841 = vsel %vm1780, %v1838, %v1840
        %v1842 = vrot.slane %v643, 1
        %v1843 = vsel %vm1780, %v1840, %v1842
        %v1844 = vrot.slane %v644, 1
        %v1845 = vsel %vm1780, %v1842, %v1844
        %v1846 = vrot.slane %v645, 1
        %v1847 = vsel %vm1780, %v1844, %v1846
        %v1848 = vrot.slane %v646, 1
        %v1849 = vsel %vm1780, %v1846, %v1848
        %v1850 = vrot.slane %v647, 1
        %v1851 = vsel %vm1780, %v1848, %v1850
        %v1853 = vunpack.c.l.b16 %v465
        %v1854 = vpack.c.b16 %v1853, %v937
        %v1855 = vrot.slane %v1854, 3
        %v1857 = vsel %vm947, %v1783, 0
        %v1860 = vsel %vm947, %v1785, 0
        %v1863 = vsel %vm947, %v1787, 0
        %v1866 = vsel %vm947, %v1789, 0
        %v1869 = vsel %vm947, %v1791, 0
        %v1872 = vsel %vm947, %v1793, 0
        %v1875 = vsel %vm947, %v1795, 0
        %v1878 = vsel %vm947, %v1797, 0
        %v1881 = vsel %vm947, %v1799, 0
        %v1884 = vsel %vm947, %v1801, 0
        %v1887 = vsel %vm947, %v1803, 0
        %v1890 = vsel %vm947, %v1805, 0
        %v1893 = vsel %vm947, %v1807, 0
        %v1896 = vsel %vm947, %v1809, 0
        %v1899 = vsel %vm947, %v1811, 0
        %v1902 = vsel %vm947, %v1813, 0
        %v1905 = vsel %vm947, %v1815, 0
        %v1908 = vsel %vm947, %v1817, 0
        %v1911 = vsel %vm947, %v1819, 0
        %v1914 = vsel %vm947, %v1821, 0
        %v1917 = vsel %vm947, %v1823, 0
        %v1920 = vsel %vm947, %v1825, 0
        %v1923 = vsel %vm947, %v1827, 0
        %v1926 = vsel %vm947, %v1829, 0
        %v1929 = vsel %vm947, %v1831, 0
        %v1932 = vsel %vm947, %v1833, 0
        %v1935 = vsel %vm947, %v1835, 0
        %v1938 = vsel %vm947, %v1837, 0
        %v1941 = vsel %vm947, %v1839, 0
        %v1944 = vsel %vm947, %v1841, 0
        %v1947 = vsel %vm947, %v1843, 0
        %v1950 = vsel %vm947, %v1845, 0
        %v1953 = vsel %vm947, %v1847, 0
        %v1956 = vsel %vm947, %v1849, 0
        %v1959 = vsel %vm947, %v1851, 0
        %v1962 = vsel %vm947, %v1850, 0
        %v1965 = vand.u32 %v1855, %v1059
        %1967 = vmatprep.subr.bf16.mxu0 0
        %1968 = vmatpush1.bf16.msra.mxu0 %v1965
        %1969 = vmatprep.subr.bf16.mxu0 0
        %1970 = vmatpush1.bf16.msra.mxu0 0
        %1971 = vmatprep.subr.bf16.mxu0 0
        %1972 = vmatpush1.bf16.msra.mxu0 0
        %1973 = vmatprep.subr.bf16.mxu0 0
        %1974 = vmatpush1.bf16.msra.mxu0 0
        %1975 = vmatprep.subr.bf16.mxu0 0
        %1976 = vmatpush1.bf16.msra.mxu0 0
        %1977 = vmatprep.subr.bf16.mxu0 0
        %1978 = vmatpush1.bf16.msra.mxu0 0
        %1979 = vmatprep.subr.bf16.mxu0 0
        %1980 = vmatpush1.bf16.msra.mxu0 0
        %1981 = vmatprep.subr.bf16.mxu0 0
        %1982 = vmatpush1.bf16.msra.mxu0 0
        %1983 = vmatprep.subr.bf16.mxu0 0
        %1984 = vmatpush1.bf16.msra.mxu0 0
        %1985 = vmatprep.subr.bf16.mxu0 0
        %1986 = vmatpush1.bf16.msra.mxu0 0
        %1987 = vmatprep.subr.bf16.mxu0 0
        %1988 = vmatpush1.bf16.msra.mxu0 0
        %1989 = vmatprep.subr.bf16.mxu0 0
        %1990 = vmatpush1.bf16.msra.mxu0 0
        %1991 = vmatprep.subr.bf16.mxu0 0
        %1992 = vmatpush1.bf16.msra.mxu0 0
        %1993 = vmatprep.subr.bf16.mxu0 0
        %1994 = vmatpush1.bf16.msra.mxu0 0
        %1995 = vmatprep.subr.bf16.mxu0 0
        %1996 = vmatpush1.bf16.msra.mxu0 0
        %1997 = vmatprep.subr.bf16.mxu0 0
        %1998 = vmatpush1.bf16.msra.mxu0 0
        %1999 = vmatprep.mubr.bf16.mxu0 0
        %2000 = vmatmul.mubr.bf16.gmra.mrb[0].mxu0 %v1857
        %v2001 = vpop.f32.mrb[0].mxu0
        %v2002 = vadd.f32 0.0, %v2001
        %v2003 = vpop.f32.mrb[0].mxu0
        %v2004 = vpop.f32.mrb[0].mxu0
        %v2005 = vadd.f32 0.0, %v2004
        %v2006 = vpop.f32.mrb[0].mxu0
        %2007 = vmatprep.mubr.bf16.mxu0 0
        %2008 = vmatmul.mubr.bf16.gmra.mrb[0].mxu0 %v1860
        %v2009 = vpop.f32.mrb[0].mxu0
        %v2010 = vadd.f32 0.0, %v2009
        %v2011 = vpop.f32.mrb[0].mxu0
        %v2012 = vpop.f32.mrb[0].mxu0
        %v2013 = vadd.f32 0.0, %v2012
        %v2014 = vpop.f32.mrb[0].mxu0
        %2015 = vmatprep.mubr.bf16.mxu0 0
        %2016 = vmatmul.mubr.bf16.gmra.mrb[0].mxu0 %v1863
        %v2017 = vpop.f32.mrb[0].mxu0
        %v2018 = vadd.f32 0.0, %v2017
        %v2019 = vpop.f32.mrb[0].mxu0
        %v2020 = vpop.f32.mrb[0].mxu0
        %v2021 = vadd.f32 0.0, %v2020
        %v2022 = vpop.f32.mrb[0].mxu0
        %2023 = vmatprep.mubr.bf16.mxu0 0
        %2024 = vmatmul.mubr.bf16.gmra.mrb[0].mxu0 %v1866
        %v2025 = vpop.f32.mrb[0].mxu0
        %v2026 = vadd.f32 0.0, %v2025
        %v2027 = vpop.f32.mrb[0].mxu0
        %v2028 = vpop.f32.mrb[0].mxu0
        %v2029 = vadd.f32 0.0, %v2028
        %v2030 = vpop.f32.mrb[0].mxu0
        %2031 = vmatprep.mubr.bf16.mxu0 0
        %2032 = vmatmul.mubr.bf16.gmra.mrb[0].mxu0 %v1869
        %v2033 = vpop.f32.mrb[0].mxu0
        %v2034 = vadd.f32 0.0, %v2033
        %v2035 = vpop.f32.mrb[0].mxu0
        %v2036 = vpop.f32.mrb[0].mxu0
        %v2037 = vadd.f32 0.0, %v2036
        %v2038 = vpop.f32.mrb[0].mxu0
        %2039 = vmatprep.mubr.bf16.mxu0 0
        %2040 = vmatmul.mubr.bf16.gmra.mrb[0].mxu0 %v1872
        %v2041 = vpop.f32.mrb[0].mxu0
        %v2042 = vadd.f32 0.0, %v2041
        %v2043 = vpop.f32.mrb[0].mxu0
        %v2044 = vpop.f32.mrb[0].mxu0
        %v2045 = vadd.f32 0.0, %v2044
        %v2046 = vpop.f32.mrb[0].mxu0
        %2047 = vmatprep.mubr.bf16.mxu0 0
        %2048 = vmatmul.mubr.bf16.gmra.mrb[0].mxu0 %v1875
        %v2049 = vpop.f32.mrb[0].mxu0
        %v2050 = vadd.f32 0.0, %v2049
        %v2051 = vpop.f32.mrb[0].mxu0
        %v2052 = vpop.f32.mrb[0].mxu0
        %v2053 = vadd.f32 0.0, %v2052
        %v2054 = vpop.f32.mrb[0].mxu0
        %2055 = vmatprep.mubr.bf16.mxu0 0
        %2056 = vmatmul.mubr.bf16.gmra.mrb[0].mxu0 %v1878
        %v2057 = vpop.f32.mrb[0].mxu0
        %v2058 = vadd.f32 0.0, %v2057
        %v2059 = vpop.f32.mrb[0].mxu0
        %v2060 = vpop.f32.mrb[0].mxu0
        %v2061 = vadd.f32 0.0, %v2060
        %v2062 = vpop.f32.mrb[0].mxu0
        %2063 = vmatprep.mubr.bf16.mxu0 0
        %2064 = vmatmul.mubr.bf16.gmra.mrb[0].mxu0 %v1881
        %v2065 = vpop.f32.mrb[0].mxu0
        %v2066 = vadd.f32 0.0, %v2065
        %v2067 = vpop.f32.mrb[0].mxu0
        %v2068 = vpop.f32.mrb[0].mxu0
        %v2069 = vadd.f32 0.0, %v2068
        %v2070 = vpop.f32.mrb[0].mxu0
        %2071 = vmatprep.mubr.bf16.mxu0 0
        %2072 = vmatmul.mubr.bf16.gmra.mrb[0].mxu0 %v1884
        %v2073 = vpop.f32.mrb[0].mxu0
        %v2074 = vadd.f32 0.0, %v2073
        %v2075 = vpop.f32.mrb[0].mxu0
        %v2076 = vpop.f32.mrb[0].mxu0
        %v2077 = vadd.f32 0.0, %v2076
        %v2078 = vpop.f32.mrb[0].mxu0
        %2079 = vmatprep.mubr.bf16.mxu0 0
        %2080 = vmatmul.mubr.bf16.gmra.mrb[0].mxu0 %v1887
        %v2081 = vpop.f32.mrb[0].mxu0
        %v2082 = vadd.f32 0.0, %v2081
        %v2083 = vpop.f32.mrb[0].mxu0
        %v2084 = vpop.f32.mrb[0].mxu0
        %v2085 = vadd.f32 0.0, %v2084
        %v2086 = vpop.f32.mrb[0].mxu0
        %2087 = vmatprep.mubr.bf16.mxu0 0
        %2088 = vmatmul.mubr.bf16.gmra.mrb[0].mxu0 %v1890
        %v2089 = vpop.f32.mrb[0].mxu0
        %v2090 = vadd.f32 0.0, %v2089
        %v2091 = vpop.f32.mrb[0].mxu0
        %v2092 = vpop.f32.mrb[0].mxu0
        %v2093 = vadd.f32 0.0, %v2092
        %v2094 = vpop.f32.mrb[0].mxu0
        %2095 = vmatprep.mubr.bf16.mxu0 0
        %2096 = vmatmul.mubr.bf16.gmra.mrb[0].mxu0 %v1893
        %v2097 = vpop.f32.mrb[0].mxu0
        %v2098 = vadd.f32 0.0, %v2097
        %v2099 = vpop.f32.mrb[0].mxu0
        %v2100 = vpop.f32.mrb[0].mxu0
        %v2101 = vadd.f32 0.0, %v2100
        %v2102 = vpop.f32.mrb[0].mxu0
        %2103 = vmatprep.mubr.bf16.mxu0 0
        %2104 = vmatmul.mubr.bf16.gmra.mrb[0].mxu0 %v1896
        %v2105 = vpop.f32.mrb[0].mxu0
        %v2106 = vadd.f32 0.0, %v2105
        %v2107 = vpop.f32.mrb[0].mxu0
        %v2108 = vpop.f32.mrb[0].mxu0
        %v2109 = vadd.f32 0.0, %v2108
        %v2110 = vpop.f32.mrb[0].mxu0
        %2111 = vmatprep.mubr.bf16.mxu0 0
        %2112 = vmatmul.mubr.bf16.gmra.mrb[0].mxu0 %v1899
        %v2113 = vpop.f32.mrb[0].mxu0
        %v2114 = vadd.f32 0.0, %v2113
        %v2115 = vpop.f32.mrb[0].mxu0
        %v2116 = vpop.f32.mrb[0].mxu0
        %v2117 = vadd.f32 0.0, %v2116
        %v2118 = vpop.f32.mrb[0].mxu0
        %2119 = vmatprep.mubr.bf16.mxu0 0
        %2120 = vmatmul.mubr.bf16.gmra.mrb[0].mxu0 %v1902
        %v2121 = vpop.f32.mrb[0].mxu0
        %v2122 = vadd.f32 0.0, %v2121
        %v2123 = vpop.f32.mrb[0].mxu0
        %v2124 = vpop.f32.mrb[0].mxu0
        %v2125 = vadd.f32 0.0, %v2124
        %v2126 = vpop.f32.mrb[0].mxu0
        %2127 = vmatprep.mubr.bf16.mxu0 0
        %2128 = vmatmul.mubr.bf16.gmra.mrb[0].mxu0 %v1905
        %v2129 = vpop.f32.mrb[0].mxu0
        %v2130 = vadd.f32 0.0, %v2129
        %v2131 = vpop.f32.mrb[0].mxu0
        %v2132 = vpop.f32.mrb[0].mxu0
        %v2133 = vadd.f32 0.0, %v2132
        %v2134 = vpop.f32.mrb[0].mxu0
        %2135 = vmatprep.mubr.bf16.mxu0 0
        %2136 = vmatmul.mubr.bf16.gmra.mrb[0].mxu0 %v1908
        %v2137 = vpop.f32.mrb[0].mxu0
        %v2138 = vadd.f32 0.0, %v2137
        %v2139 = vpop.f32.mrb[0].mxu0
        %v2140 = vpop.f32.mrb[0].mxu0
        %v2141 = vadd.f32 0.0, %v2140
        %v2142 = vpop.f32.mrb[0].mxu0
        %2143 = vmatprep.mubr.bf16.mxu0 0
        %2144 = vmatmul.mubr.bf16.gmra.mrb[0].mxu0 %v1911
        %v2145 = vpop.f32.mrb[0].mxu0
        %v2146 = vadd.f32 0.0, %v2145
        %v2147 = vpop.f32.mrb[0].mxu0
        %v2148 = vpop.f32.mrb[0].mxu0
        %v2149 = vadd.f32 0.0, %v2148
        %v2150 = vpop.f32.mrb[0].mxu0
        %2151 = vmatprep.mubr.bf16.mxu0 0
        %2152 = vmatmul.mubr.bf16.gmra.mrb[0].mxu0 %v1914
        %v2153 = vpop.f32.mrb[0].mxu0
        %v2154 = vadd.f32 0.0, %v2153
        %v2155 = vpop.f32.mrb[0].mxu0
        %v2156 = vpop.f32.mrb[0].mxu0
        %v2157 = vadd.f32 0.0, %v2156
        %v2158 = vpop.f32.mrb[0].mxu0
        %2159 = vmatprep.mubr.bf16.mxu0 0
        %2160 = vmatmul.mubr.bf16.gmra.mrb[0].mxu0 %v1917
        %v2161 = vpop.f32.mrb[0].mxu0
        %v2162 = vadd.f32 0.0, %v2161
        %v2163 = vpop.f32.mrb[0].mxu0
        %v2164 = vpop.f32.mrb[0].mxu0
        %v2165 = vadd.f32 0.0, %v2164
        %v2166 = vpop.f32.mrb[0].mxu0
        %2167 = vmatprep.mubr.bf16.mxu0 0
        %2168 = vmatmul.mubr.bf16.gmra.mrb[0].mxu0 %v1920
        %v2169 = vpop.f32.mrb[0].mxu0
        %v2170 = vadd.f32 0.0, %v2169
        %v2171 = vpop.f32.mrb[0].mxu0
        %v2172 = vpop.f32.mrb[0].mxu0
        %v2173 = vadd.f32 0.0, %v2172
        %v2174 = vpop.f32.mrb[0].mxu0
        %2175 = vmatprep.mubr.bf16.mxu0 0
        %2176 = vmatmul.mubr.bf16.gmra.mrb[0].mxu0 %v1923
        %v2177 = vpop.f32.mrb[0].mxu0
        %v2178 = vadd.f32 0.0, %v2177
        %v2179 = vpop.f32.mrb[0].mxu0
        %v2180 = vpop.f32.mrb[0].mxu0
        %v2181 = vadd.f32 0.0, %v2180
        %v2182 = vpop.f32.mrb[0].mxu0
        %2183 = vmatprep.mubr.bf16.mxu0 0
        %2184 = vmatmul.mubr.bf16.gmra.mrb[0].mxu0 %v1926
        %v2185 = vpop.f32.mrb[0].mxu0
        %v2186 = vadd.f32 0.0, %v2185
        %v2187 = vpop.f32.mrb[0].mxu0
        %v2188 = vpop.f32.mrb[0].mxu0
        %v2189 = vadd.f32 0.0, %v2188
        %v2190 = vpop.f32.mrb[0].mxu0
        %2191 = vmatprep.mubr.bf16.mxu0 0
        %2192 = vmatmul.mubr.bf16.gmra.mrb[0].mxu0 %v1929
        %v2193 = vpop.f32.mrb[0].mxu0
        %v2194 = vadd.f32 0.0, %v2193
        %v2195 = vpop.f32.mrb[0].mxu0
        %v2196 = vpop.f32.mrb[0].mxu0
        %v2197 = vadd.f32 0.0, %v2196
        %v2198 = vpop.f32.mrb[0].mxu0
        %2199 = vmatprep.mubr.bf16.mxu0 0
        %2200 = vmatmul.mubr.bf16.gmra.mrb[0].mxu0 %v1932
        %v2201 = vpop.f32.mrb[0].mxu0
        %v2202 = vadd.f32 0.0, %v2201
        %v2203 = vpop.f32.mrb[0].mxu0
        %v2204 = vpop.f32.mrb[0].mxu0
        %v2205 = vadd.f32 0.0, %v2204
        %v2206 = vpop.f32.mrb[0].mxu0
        %2207 = vmatprep.mubr.bf16.mxu0 0
        %2208 = vmatmul.mubr.bf16.gmra.mrb[0].mxu0 %v1935
        %v2209 = vpop.f32.mrb[0].mxu0
        %v2210 = vadd.f32 0.0, %v2209
        %v2211 = vpop.f32.mrb[0].mxu0
        %v2212 = vpop.f32.mrb[0].mxu0
        %v2213 = vadd.f32 0.0, %v2212
        %v2214 = vpop.f32.mrb[0].mxu0
        %2215 = vmatprep.mubr.bf16.mxu0 0
        %2216 = vmatmul.mubr.bf16.gmra.mrb[0].mxu0 %v1938
        %v2217 = vpop.f32.mrb[0].mxu0
        %v2218 = vadd.f32 0.0, %v2217
        %v2219 = vpop.f32.mrb[0].mxu0
        %v2220 = vpop.f32.mrb[0].mxu0
        %v2221 = vadd.f32 0.0, %v2220
        %v2222 = vpop.f32.mrb[0].mxu0
        %2223 = vmatprep.mubr.bf16.mxu0 0
        %2224 = vmatmul.mubr.bf16.gmra.mrb[0].mxu0 %v1941
        %v2225 = vpop.f32.mrb[0].mxu0
        %v2226 = vadd.f32 0.0, %v2225
        %v2227 = vpop.f32.mrb[0].mxu0
        %v2228 = vpop.f32.mrb[0].mxu0
        %v2229 = vadd.f32 0.0, %v2228
        %v2230 = vpop.f32.mrb[0].mxu0
        %2231 = vmatprep.mubr.bf16.mxu0 0
        %2232 = vmatmul.mubr.bf16.gmra.mrb[0].mxu0 %v1944
        %v2233 = vpop.f32.mrb[0].mxu0
        %v2234 = vadd.f32 0.0, %v2233
        %v2235 = vpop.f32.mrb[0].mxu0
        %v2236 = vpop.f32.mrb[0].mxu0
        %v2237 = vadd.f32 0.0, %v2236
        %v2238 = vpop.f32.mrb[0].mxu0
        %2239 = vmatprep.mubr.bf16.mxu0 0
        %2240 = vmatmul.mubr.bf16.gmra.mrb[0].mxu0 %v1947
        %v2241 = vpop.f32.mrb[0].mxu0
        %v2242 = vadd.f32 0.0, %v2241
        %v2243 = vpop.f32.mrb[0].mxu0
        %v2244 = vpop.f32.mrb[0].mxu0
        %v2245 = vadd.f32 0.0, %v2244
        %v2246 = vpop.f32.mrb[0].mxu0
        %2247 = vmatprep.mubr.bf16.mxu0 0
        %2248 = vmatmul.mubr.bf16.gmra.mrb[0].mxu0 %v1950
        %v2249 = vpop.f32.mrb[0].mxu0
        %v2250 = vadd.f32 0.0, %v2249
        %v2251 = vpop.f32.mrb[0].mxu0
        %v2252 = vpop.f32.mrb[0].mxu0
        %v2253 = vadd.f32 0.0, %v2252
        %v2254 = vpop.f32.mrb[0].mxu0
        %2255 = vmatprep.mubr.bf16.mxu0 0
        %2256 = vmatmul.mubr.bf16.gmra.mrb[0].mxu0 %v1953
        %v2257 = vpop.f32.mrb[0].mxu0
        %v2258 = vadd.f32 0.0, %v2257
        %v2259 = vpop.f32.mrb[0].mxu0
        %v2260 = vpop.f32.mrb[0].mxu0
        %v2261 = vadd.f32 0.0, %v2260
        %v2262 = vpop.f32.mrb[0].mxu0
        %2263 = vmatprep.mubr.bf16.mxu0 0
        %2264 = vmatmul.mubr.bf16.gmra.mrb[0].mxu0 %v1956
        %v2265 = vpop.f32.mrb[0].mxu0
        %v2266 = vadd.f32 0.0, %v2265
        %v2267 = vpop.f32.mrb[0].mxu0
        %v2268 = vpop.f32.mrb[0].mxu0
        %v2269 = vadd.f32 0.0, %v2268
        %v2270 = vpop.f32.mrb[0].mxu0
        %2271 = vmatprep.mubr.bf16.mxu0 0
        %2272 = vmatmul.mubr.bf16.gmra.mrb[0].mxu0 %v1959
        %v2273 = vpop.f32.mrb[0].mxu0
        %v2274 = vadd.f32 0.0, %v2273
        %v2275 = vpop.f32.mrb[0].mxu0
        %v2276 = vpop.f32.mrb[0].mxu0
        %v2277 = vadd.f32 0.0, %v2276
        %v2278 = vpop.f32.mrb[0].mxu0
        %2279 = vmatprep.mubr.bf16.mxu0 0
        %2280 = vmatmul.mubr.bf16.gmra.mrb[0].mxu0 %v1962
        %v2281 = vpop.f32.mrb[0].mxu0
        %v2282 = vadd.f32 0.0, %v2281
        %v2283 = vpop.f32.mrb[0].mxu0
        %v2284 = vpop.f32.mrb[0].mxu0
        %v2285 = vadd.f32 0.0, %v2284
        %v2286 = vpop.f32.mrb[0].mxu0
        %2287 = vdwg.mxu0
        %v2288 = vadd.f32 %v1494, %v2002
        %v2289 = vadd.f32 %v1497, %v2005
        %v2290 = vadd.f32 %v1502, %v2010
        %v2291 = vadd.f32 %v1505, %v2013
        %v2292 = vadd.f32 %v1510, %v2018
        %v2293 = vadd.f32 %v1513, %v2021
        %v2294 = vadd.f32 %v1518, %v2026
        %v2295 = vadd.f32 %v1521, %v2029
        %v2296 = vadd.f32 %v1526, %v2034
        %v2297 = vadd.f32 %v1529, %v2037
        %v2298 = vadd.f32 %v1534, %v2042
        %v2299 = vadd.f32 %v1537, %v2045
        %v2300 = vadd.f32 %v1542, %v2050
        %v2301 = vadd.f32 %v1545, %v2053
        %v2302 = vadd.f32 %v1550, %v2058
        %v2303 = vadd.f32 %v1553, %v2061
        %v2304 = vadd.f32 %v1558, %v2066
        %v2305 = vadd.f32 %v1561, %v2069
        %v2306 = vadd.f32 %v1566, %v2074
        %v2307 = vadd.f32 %v1569, %v2077
        %v2308 = vadd.f32 %v1574, %v2082
        %v2309 = vadd.f32 %v1577, %v2085
        %v2310 = vadd.f32 %v1582, %v2090
        %v2311 = vadd.f32 %v1585, %v2093
        %v2312 = vadd.f32 %v1590, %v2098
        %v2313 = vadd.f32 %v1593, %v2101
        %v2314 = vadd.f32 %v1598, %v2106
        %v2315 = vadd.f32 %v1601, %v2109
        %v2316 = vadd.f32 %v1606, %v2114
        %v2317 = vadd.f32 %v1609, %v2117
        %v2318 = vadd.f32 %v1614, %v2122
        %v2319 = vadd.f32 %v1617, %v2125
        %v2320 = vadd.f32 %v1622, %v2130
        %v2321 = vadd.f32 %v1625, %v2133
        %v2322 = vadd.f32 %v1630, %v2138
        %v2323 = vadd.f32 %v1633, %v2141
        %v2324 = vadd.f32 %v1638, %v2146
        %v2325 = vadd.f32 %v1641, %v2149
        %v2326 = vadd.f32 %v1646, %v2154
        %v2327 = vadd.f32 %v1649, %v2157
        %v2328 = vadd.f32 %v1654, %v2162
        %v2329 = vadd.f32 %v1657, %v2165
        %v2330 = vadd.f32 %v1662, %v2170
        %v2331 = vadd.f32 %v1665, %v2173
        %v2332 = vadd.f32 %v1670, %v2178
        %v2333 = vadd.f32 %v1673, %v2181
        %v2334 = vadd.f32 %v1678, %v2186
        %v2335 = vadd.f32 %v1681, %v2189
        %v2336 = vadd.f32 %v1686, %v2194
        %v2337 = vadd.f32 %v1689, %v2197
        %v2338 = vadd.f32 %v1694, %v2202
        %v2339 = vadd.f32 %v1697, %v2205
        %v2340 = vadd.f32 %v1702, %v2210
        %v2341 = vadd.f32 %v1705, %v2213
        %v2342 = vadd.f32 %v1710, %v2218
        %v2343 = vadd.f32 %v1713, %v2221
        %v2344 = vadd.f32 %v1718, %v2226
        %v2345 = vadd.f32 %v1721, %v2229
        %v2346 = vadd.f32 %v1726, %v2234
        %v2347 = vadd.f32 %v1729, %v2237
        %v2348 = vadd.f32 %v1734, %v2242
        %v2349 = vadd.f32 %v1737, %v2245
        %v2350 = vadd.f32 %v1742, %v2250
        %v2351 = vadd.f32 %v1745, %v2253
        %v2352 = vadd.f32 %v1750, %v2258
        %v2353 = vadd.f32 %v1753, %v2261
        %v2354 = vadd.f32 %v1758, %v2266
        %v2355 = vadd.f32 %v1761, %v2269
        %v2356 = vadd.f32 %v1766, %v2274
        %v2357 = vadd.f32 %v1769, %v2277
        %v2358 = vadd.f32 %v1774, %v2282
        %v2359 = vadd.f32 %v1777, %v2285
        %v2363 = vunpack.c.l.b16 %v457
        %v2364 = vunpack.c.l.b16 %v458
        %v2365 = vunpack.c.l.b16 %v459
        %v2366 = vpack.c.b16 %v544, %v543
        %v2367 = vpack.c.b16 %v546, %v545
        %v2368 = vpack.c.b16 %v548, %v547
        %v2369 = vpack.c.b16 %v550, %v549
        %v2370 = vpack.c.b16 %v552, %v551
        %v2371 = vpack.c.b16 %v554, %v553
        %v2372 = vpack.c.b16 %v556, %v555
        %v2373 = vpack.c.b16 %v558, %v557
        %v2374 = vpack.c.b16 %v560, %v559
        %v2375 = vpack.c.b16 %v562, %v561
        %v2376 = vpack.c.b16 %v564, %v563
        %v2377 = vpack.c.b16 %v566, %v565
        %v2378 = vpack.c.b16 %v568, %v567
        %v2379 = vpack.c.b16 %v570, %v569
        %v2380 = vpack.c.b16 %v572, %v571
        %v2381 = vpack.c.b16 %v574, %v573
        %v2382 = vpack.c.b16 %v576, %v575
        %v2383 = vpack.c.b16 %v578, %v577
        %v2384 = vpack.c.b16 %v580, %v579
        %v2385 = vpack.c.b16 %v582, %v581
        %v2386 = vpack.c.b16 %v584, %v583
        %v2387 = vpack.c.b16 %v586, %v585
        %v2388 = vpack.c.b16 %v588, %v587
        %v2389 = vpack.c.b16 %v590, %v589
        %v2390 = vpack.c.b16 %v592, %v591
        %v2391 = vpack.c.b16 %v594, %v593
        %v2392 = vpack.c.b16 %v596, %v595
        %v2393 = vpack.c.b16 %v598, %v597
        %v2394 = vpack.c.b16 %v600, %v599
        %v2395 = vpack.c.b16 %v602, %v601
        %v2396 = vpack.c.b16 %v604, %v603
        %v2397 = vpack.c.b16 %v606, %v605
        %v2398 = vpack.c.b16 %v608, %v607
        %v2399 = vpack.c.b16 %v610, %v609
        %v2400 = vpack.c.b16 %v2363, %v611
        %v2401 = vpack.c.b16 %v2365, %v2364
        %v2403 = vshrl.u32 %v2366, 16
        %v2405 = vshll.u32 %v2366, 16
        %v2407 = vrot.slane %v2405, 1
        %v2408 = vor.u32 %v2403, %v2407
        %v2410 = vshll.u32 %v2367, 16
        %v2412 = vrot.slane %v2410, 1
        %v2413 = vsel %vm648, %v2408, %v2412
        %v2414 = vshrl.u32 %v2367, 16
        %v2416 = vor.u32 %v2414, %v2412
        %v2418 = vshll.u32 %v2368, 16
        %v2420 = vrot.slane %v2418, 1
        %v2421 = vsel %vm648, %v2416, %v2420
        %v2422 = vshrl.u32 %v2368, 16
        %v2424 = vor.u32 %v2422, %v2420
        %v2426 = vshll.u32 %v2369, 16
        %v2428 = vrot.slane %v2426, 1
        %v2429 = vsel %vm648, %v2424, %v2428
        %v2430 = vshrl.u32 %v2369, 16
        %v2432 = vor.u32 %v2430, %v2428
        %v2434 = vshll.u32 %v2370, 16
        %v2436 = vrot.slane %v2434, 1
        %v2437 = vsel %vm648, %v2432, %v2436
        %v2438 = vshrl.u32 %v2370, 16
        %v2440 = vor.u32 %v2438, %v2436
        %v2442 = vshll.u32 %v2371, 16
        %v2444 = vrot.slane %v2442, 1
        %v2445 = vsel %vm648, %v2440, %v2444
        %v2446 = vshrl.u32 %v2371, 16
        %v2448 = vor.u32 %v2446, %v2444
        %v2450 = vshll.u32 %v2372, 16
        %v2452 = vrot.slane %v2450, 1
        %v2453 = vsel %vm648, %v2448, %v2452
        %v2454 = vshrl.u32 %v2372, 16
        %v2456 = vor.u32 %v2454, %v2452
        %v2458 = vshll.u32 %v2373, 16
        %v2460 = vrot.slane %v2458, 1
        %v2461 = vsel %vm648, %v2456, %v2460
        %v2462 = vshrl.u32 %v2373, 16
        %v2464 = vor.u32 %v2462, %v2460
        %v2466 = vshll.u32 %v2374, 16
        %v2468 = vrot.slane %v2466, 1
        %v2469 = vsel %vm648, %v2464, %v2468
        %v2470 = vshrl.u32 %v2374, 16
        %v2472 = vor.u32 %v2470, %v2468
        %v2474 = vshll.u32 %v2375, 16
        %v2476 = vrot.slane %v2474, 1
        %v2477 = vsel %vm648, %v2472, %v2476
        %v2478 = vshrl.u32 %v2375, 16
        %v2480 = vor.u32 %v2478, %v2476
        %v2482 = vshll.u32 %v2376, 16
        %v2484 = vrot.slane %v2482, 1
        %v2485 = vsel %vm648, %v2480, %v2484
        %v2486 = vshrl.u32 %v2376, 16
        %v2488 = vor.u32 %v2486, %v2484
        %v2490 = vshll.u32 %v2377, 16
        %v2492 = vrot.slane %v2490, 1
        %v2493 = vsel %vm648, %v2488, %v2492
        %v2494 = vshrl.u32 %v2377, 16
        %v2496 = vor.u32 %v2494, %v2492
        %v2498 = vshll.u32 %v2378, 16
        %v2500 = vrot.slane %v2498, 1
        %v2501 = vsel %vm648, %v2496, %v2500
        %v2502 = vshrl.u32 %v2378, 16
        %v2504 = vor.u32 %v2502, %v2500
        %v2506 = vshll.u32 %v2379, 16
        %v2508 = vrot.slane %v2506, 1
        %v2509 = vsel %vm648, %v2504, %v2508
        %v2510 = vshrl.u32 %v2379, 16
        %v2512 = vor.u32 %v2510, %v2508
        %v2514 = vshll.u32 %v2380, 16
        %v2516 = vrot.slane %v2514, 1
        %v2517 = vsel %vm648, %v2512, %v2516
        %v2518 = vshrl.u32 %v2380, 16
        %v2520 = vor.u32 %v2518, %v2516
        %v2522 = vshll.u32 %v2381, 16
        %v2524 = vrot.slane %v2522, 1
        %v2525 = vsel %vm648, %v2520, %v2524
        %v2526 = vshrl.u32 %v2381, 16
        %v2528 = vor.u32 %v2526, %v2524
        %v2530 = vshll.u32 %v2382, 16
        %v2532 = vrot.slane %v2530, 1
        %v2533 = vsel %vm648, %v2528, %v2532
        %v2534 = vshrl.u32 %v2382, 16
        %v2536 = vor.u32 %v2534, %v2532
        %v2538 = vshll.u32 %v2383, 16
        %v2540 = vrot.slane %v2538, 1
        %v2541 = vsel %vm648, %v2536, %v2540
        %v2542 = vshrl.u32 %v2383, 16
        %v2544 = vor.u32 %v2542, %v2540
        %v2546 = vshll.u32 %v2384, 16
        %v2548 = vrot.slane %v2546, 1
        %v2549 = vsel %vm648, %v2544, %v2548
        %v2550 = vshrl.u32 %v2384, 16
        %v2552 = vor.u32 %v2550, %v2548
        %v2554 = vshll.u32 %v2385, 16
        %v2556 = vrot.slane %v2554, 1
        %v2557 = vsel %vm648, %v2552, %v2556
        %v2558 = vshrl.u32 %v2385, 16
        %v2560 = vor.u32 %v2558, %v2556
        %v2562 = vshll.u32 %v2386, 16
        %v2564 = vrot.slane %v2562, 1
        %v2565 = vsel %vm648, %v2560, %v2564
        %v2566 = vshrl.u32 %v2386, 16
        %v2568 = vor.u32 %v2566, %v2564
        %v2570 = vshll.u32 %v2387, 16
        %v2572 = vrot.slane %v2570, 1
        %v2573 = vsel %vm648, %v2568, %v2572
        %v2574 = vshrl.u32 %v2387, 16
        %v2576 = vor.u32 %v2574, %v2572
        %v2578 = vshll.u32 %v2388, 16
        %v2580 = vrot.slane %v2578, 1
        %v2581 = vsel %vm648, %v2576, %v2580
        %v2582 = vshrl.u32 %v2388, 16
        %v2584 = vor.u32 %v2582, %v2580
        %v2586 = vshll.u32 %v2389, 16
        %v2588 = vrot.slane %v2586, 1
        %v2589 = vsel %vm648, %v2584, %v2588
        %v2590 = vshrl.u32 %v2389, 16
        %v2592 = vor.u32 %v2590, %v2588
        %v2594 = vshll.u32 %v2390, 16
        %v2596 = vrot.slane %v2594, 1
        %v2597 = vsel %vm648, %v2592, %v2596
        %v2598 = vshrl.u32 %v2390, 16
        %v2600 = vor.u32 %v2598, %v2596
        %v2602 = vshll.u32 %v2391, 16
        %v2604 = vrot.slane %v2602, 1
        %v2605 = vsel %vm648, %v2600, %v2604
        %v2606 = vshrl.u32 %v2391, 16
        %v2608 = vor.u32 %v2606, %v2604
        %v2610 = vshll.u32 %v2392, 16
        %v2612 = vrot.slane %v2610, 1
        %v2613 = vsel %vm648, %v2608, %v2612
        %v2614 = vshrl.u32 %v2392, 16
        %v2616 = vor.u32 %v2614, %v2612
        %v2618 = vshll.u32 %v2393, 16
        %v2620 = vrot.slane %v2618, 1
        %v2621 = vsel %vm648, %v2616, %v2620
        %v2622 = vshrl.u32 %v2393, 16
        %v2624 = vor.u32 %v2622, %v2620
        %v2626 = vshll.u32 %v2394, 16
        %v2628 = vrot.slane %v2626, 1
        %v2629 = vsel %vm648, %v2624, %v2628
        %v2630 = vshrl.u32 %v2394, 16
        %v2632 = vor.u32 %v2630, %v2628
        %v2634 = vshll.u32 %v2395, 16
        %v2636 = vrot.slane %v2634, 1
        %v2637 = vsel %vm648, %v2632, %v2636
        %v2638 = vshrl.u32 %v2395, 16
        %v2640 = vor.u32 %v2638, %v2636
        %v2642 = vshll.u32 %v2396, 16
        %v2644 = vrot.slane %v2642, 1
        %v2645 = vsel %vm648, %v2640, %v2644
        %v2646 = vshrl.u32 %v2396, 16
        %v2648 = vor.u32 %v2646, %v2644
        %v2650 = vshll.u32 %v2397, 16
        %v2652 = vrot.slane %v2650, 1
        %v2653 = vsel %vm648, %v2648, %v2652
        %v2654 = vshrl.u32 %v2397, 16
        %v2656 = vor.u32 %v2654, %v2652
        %v2658 = vshll.u32 %v2398, 16
        %v2660 = vrot.slane %v2658, 1
        %v2661 = vsel %vm648, %v2656, %v2660
        %v2662 = vshrl.u32 %v2398, 16
        %v2664 = vor.u32 %v2662, %v2660
        %v2666 = vshll.u32 %v2399, 16
        %v2668 = vrot.slane %v2666, 1
        %v2669 = vsel %vm648, %v2664, %v2668
        %v2670 = vshrl.u32 %v2399, 16
        %v2672 = vor.u32 %v2670, %v2668
        %v2674 = vshll.u32 %v2400, 16
        %v2676 = vrot.slane %v2674, 1
        %v2677 = vsel %vm648, %v2672, %v2676
        %v2678 = vshrl.u32 %v2400, 16
        %v2680 = vor.u32 %v2678, %v2676
        %v2682 = vshll.u32 %v2401, 16
        %v2684 = vrot.slane %v2682, 1
        %v2685 = vsel %vm648, %v2680, %v2684
        %v2686 = vshrl.u32 %v2401, 16
        %v2688 = vor.u32 %v2686, %v2684
        %v2689 = vpack.c.b16 %v1853, %v1853
        %v2691 = vshrl.u32 %v2689, 16
        %v2693 = vshll.u32 %v2689, 16
        %v2695 = vrot.slane %v2693, 1
        %v2696 = vor.u32 %v2691, %v2695
        %v2698 = vsel %vm947, %v2413, 0
        %v2701 = vsel %vm947, %v2421, 0
        %v2704 = vsel %vm947, %v2429, 0
        %v2707 = vsel %vm947, %v2437, 0
        %v2710 = vsel %vm947, %v2445, 0
        %v2713 = vsel %vm947, %v2453, 0
        %v2716 = vsel %vm947, %v2461, 0
        %v2719 = vsel %vm947, %v2469, 0
        %v2722 = vsel %vm947, %v2477, 0
        %v2725 = vsel %vm947, %v2485, 0
        %v2728 = vsel %vm947, %v2493, 0
        %v2731 = vsel %vm947, %v2501, 0
        %v2734 = vsel %vm947, %v2509, 0
        %v2737 = vsel %vm947, %v2517, 0
        %v2740 = vsel %vm947, %v2525, 0
        %v2743 = vsel %vm947, %v2533, 0
        %v2746 = vsel %vm947, %v2541, 0
        %v2749 = vsel %vm947, %v2549, 0
        %v2752 = vsel %vm947, %v2557, 0
        %v2755 = vsel %vm947, %v2565, 0
        %v2758 = vsel %vm947, %v2573, 0
        %v2761 = vsel %vm947, %v2581, 0
        %v2764 = vsel %vm947, %v2589, 0
        %v2767 = vsel %vm947, %v2597, 0
        %v2770 = vsel %vm947, %v2605, 0
        %v2773 = vsel %vm947, %v2613, 0
        %v2776 = vsel %vm947, %v2621, 0
        %v2779 = vsel %vm947, %v2629, 0
        %v2782 = vsel %vm947, %v2637, 0
        %v2785 = vsel %vm947, %v2645, 0
        %v2788 = vsel %vm947, %v2653, 0
        %v2791 = vsel %vm947, %v2661, 0
        %v2794 = vsel %vm947, %v2669, 0
        %v2797 = vsel %vm947, %v2677, 0
        %v2800 = vsel %vm947, %v2685, 0
        %v2803 = vsel %vm947, %v2688, 0
        %v2806 = vand.u32 %v2696, %v1059
        %2808 = vmatprep.subr.bf16.mxu0 0
        %2809 = vmatpush1.bf16.msra.mxu0 %v2806
        %2810 = vmatprep.subr.bf16.mxu0 0
        %2811 = vmatpush1.bf16.msra.mxu0 0
        %2812 = vmatprep.subr.bf16.mxu0 0
        %2813 = vmatpush1.bf16.msra.mxu0 0
        %2814 = vmatprep.subr.bf16.mxu0 0
        %2815 = vmatpush1.bf16.msra.mxu0 0
        %2816 = vmatprep.subr.bf16.mxu0 0
        %2817 = vmatpush1.bf16.msra.mxu0 0
        %2818 = vmatprep.subr.bf16.mxu0 0
        %2819 = vmatpush1.bf16.msra.mxu0 0
        %2820 = vmatprep.subr.bf16.mxu0 0
        %2821 = vmatpush1.bf16.msra.mxu0 0
        %2822 = vmatprep.subr.bf16.mxu0 0
        %2823 = vmatpush1.bf16.msra.mxu0 0
        %2824 = vmatprep.subr.bf16.mxu0 0
        %2825 = vmatpush1.bf16.msra.mxu0 0
        %2826 = vmatprep.subr.bf16.mxu0 0
        %2827 = vmatpush1.bf16.msra.mxu0 0
        %2828 = vmatprep.subr.bf16.mxu0 0
        %2829 = vmatpush1.bf16.msra.mxu0 0
        %2830 = vmatprep.subr.bf16.mxu0 0
        %2831 = vmatpush1.bf16.msra.mxu0 0
        %2832 = vmatprep.subr.bf16.mxu0 0
        %2833 = vmatpush1.bf16.msra.mxu0 0
        %2834 = vmatprep.subr.bf16.mxu0 0
        %2835 = vmatpush1.bf16.msra.mxu0 0
        %2836 = vmatprep.subr.bf16.mxu0 0
        %2837 = vmatpush1.bf16.msra.mxu0 0
        %2838 = vmatprep.subr.bf16.mxu0 0
        %2839 = vmatpush1.bf16.msra.mxu0 0
        %2840 = vmatprep.mubr.bf16.mxu0 0
        %2841 = vmatmul.mubr.bf16.gmra.mrb[0].mxu0 %v2698
        %v2842 = vpop.f32.mrb[0].mxu0
        %v2843 = vadd.f32 0.0, %v2842
        %v2844 = vpop.f32.mrb[0].mxu0
        %v2845 = vpop.f32.mrb[0].mxu0
        %v2846 = vadd.f32 0.0, %v2845
        %v2847 = vpop.f32.mrb[0].mxu0
        %2848 = vmatprep.mubr.bf16.mxu0 0
        %2849 = vmatmul.mubr.bf16.gmra.mrb[0].mxu0 %v2701
        %v2850 = vpop.f32.mrb[0].mxu0
        %v2851 = vadd.f32 0.0, %v2850
        %v2852 = vpop.f32.mrb[0].mxu0
        %v2853 = vpop.f32.mrb[0].mxu0
        %v2854 = vadd.f32 0.0, %v2853
        %v2855 = vpop.f32.mrb[0].mxu0
        %2856 = vmatprep.mubr.bf16.mxu0 0
        %2857 = vmatmul.mubr.bf16.gmra.mrb[0].mxu0 %v2704
        %v2858 = vpop.f32.mrb[0].mxu0
        %v2859 = vadd.f32 0.0, %v2858
        %v2860 = vpop.f32.mrb[0].mxu0
        %v2861 = vpop.f32.mrb[0].mxu0
        %v2862 = vadd.f32 0.0, %v2861
        %v2863 = vpop.f32.mrb[0].mxu0
        %2864 = vmatprep.mubr.bf16.mxu0 0
        %2865 = vmatmul.mubr.bf16.gmra.mrb[0].mxu0 %v2707
        %v2866 = vpop.f32.mrb[0].mxu0
        %v2867 = vadd.f32 0.0, %v2866
        %v2868 = vpop.f32.mrb[0].mxu0
        %v2869 = vpop.f32.mrb[0].mxu0
        %v2870 = vadd.f32 0.0, %v2869
        %v2871 = vpop.f32.mrb[0].mxu0
        %2872 = vmatprep.mubr.bf16.mxu0 0
        %2873 = vmatmul.mubr.bf16.gmra.mrb[0].mxu0 %v2710
        %v2874 = vpop.f32.mrb[0].mxu0
        %v2875 = vadd.f32 0.0, %v2874
        %v2876 = vpop.f32.mrb[0].mxu0
        %v2877 = vpop.f32.mrb[0].mxu0
        %v2878 = vadd.f32 0.0, %v2877
        %v2879 = vpop.f32.mrb[0].mxu0
        %2880 = vmatprep.mubr.bf16.mxu0 0
        %2881 = vmatmul.mubr.bf16.gmra.mrb[0].mxu0 %v2713
        %v2882 = vpop.f32.mrb[0].mxu0
        %v2883 = vadd.f32 0.0, %v2882
        %v2884 = vpop.f32.mrb[0].mxu0
        %v2885 = vpop.f32.mrb[0].mxu0
        %v2886 = vadd.f32 0.0, %v2885
        %v2887 = vpop.f32.mrb[0].mxu0
        %2888 = vmatprep.mubr.bf16.mxu0 0
        %2889 = vmatmul.mubr.bf16.gmra.mrb[0].mxu0 %v2716
        %v2890 = vpop.f32.mrb[0].mxu0
        %v2891 = vadd.f32 0.0, %v2890
        %v2892 = vpop.f32.mrb[0].mxu0
        %v2893 = vpop.f32.mrb[0].mxu0
        %v2894 = vadd.f32 0.0, %v2893
        %v2895 = vpop.f32.mrb[0].mxu0
        %2896 = vmatprep.mubr.bf16.mxu0 0
        %2897 = vmatmul.mubr.bf16.gmra.mrb[0].mxu0 %v2719
        %v2898 = vpop.f32.mrb[0].mxu0
        %v2899 = vadd.f32 0.0, %v2898
        %v2900 = vpop.f32.mrb[0].mxu0
        %v2901 = vpop.f32.mrb[0].mxu0
        %v2902 = vadd.f32 0.0, %v2901
        %v2903 = vpop.f32.mrb[0].mxu0
        %2904 = vmatprep.mubr.bf16.mxu0 0
        %2905 = vmatmul.mubr.bf16.gmra.mrb[0].mxu0 %v2722
        %v2906 = vpop.f32.mrb[0].mxu0
        %v2907 = vadd.f32 0.0, %v2906
        %v2908 = vpop.f32.mrb[0].mxu0
        %v2909 = vpop.f32.mrb[0].mxu0
        %v2910 = vadd.f32 0.0, %v2909
        %v2911 = vpop.f32.mrb[0].mxu0
        %2912 = vmatprep.mubr.bf16.mxu0 0
        %2913 = vmatmul.mubr.bf16.gmra.mrb[0].mxu0 %v2725
        %v2914 = vpop.f32.mrb[0].mxu0
        %v2915 = vadd.f32 0.0, %v2914
        %v2916 = vpop.f32.mrb[0].mxu0
        %v2917 = vpop.f32.mrb[0].mxu0
        %v2918 = vadd.f32 0.0, %v2917
        %v2919 = vpop.f32.mrb[0].mxu0
        %2920 = vmatprep.mubr.bf16.mxu0 0
        %2921 = vmatmul.mubr.bf16.gmra.mrb[0].mxu0 %v2728
        %v2922 = vpop.f32.mrb[0].mxu0
        %v2923 = vadd.f32 0.0, %v2922
        %v2924 = vpop.f32.mrb[0].mxu0
        %v2925 = vpop.f32.mrb[0].mxu0
        %v2926 = vadd.f32 0.0, %v2925
        %v2927 = vpop.f32.mrb[0].mxu0
        %2928 = vmatprep.mubr.bf16.mxu0 0
        %2929 = vmatmul.mubr.bf16.gmra.mrb[0].mxu0 %v2731
        %v2930 = vpop.f32.mrb[0].mxu0
        %v2931 = vadd.f32 0.0, %v2930
        %v2932 = vpop.f32.mrb[0].mxu0
        %v2933 = vpop.f32.mrb[0].mxu0
        %v2934 = vadd.f32 0.0, %v2933
        %v2935 = vpop.f32.mrb[0].mxu0
        %2936 = vmatprep.mubr.bf16.mxu0 0
        %2937 = vmatmul.mubr.bf16.gmra.mrb[0].mxu0 %v2734
        %v2938 = vpop.f32.mrb[0].mxu0
        %v2939 = vadd.f32 0.0, %v2938
        %v2940 = vpop.f32.mrb[0].mxu0
        %v2941 = vpop.f32.mrb[0].mxu0
        %v2942 = vadd.f32 0.0, %v2941
        %v2943 = vpop.f32.mrb[0].mxu0
        %2944 = vmatprep.mubr.bf16.mxu0 0
        %2945 = vmatmul.mubr.bf16.gmra.mrb[0].mxu0 %v2737
        %v2946 = vpop.f32.mrb[0].mxu0
        %v2947 = vadd.f32 0.0, %v2946
        %v2948 = vpop.f32.mrb[0].mxu0
        %v2949 = vpop.f32.mrb[0].mxu0
        %v2950 = vadd.f32 0.0, %v2949
        %v2951 = vpop.f32.mrb[0].mxu0
        %2952 = vmatprep.mubr.bf16.mxu0 0
        %2953 = vmatmul.mubr.bf16.gmra.mrb[0].mxu0 %v2740
        %v2954 = vpop.f32.mrb[0].mxu0
        %v2955 = vadd.f32 0.0, %v2954
        %v2956 = vpop.f32.mrb[0].mxu0
        %v2957 = vpop.f32.mrb[0].mxu0
        %v2958 = vadd.f32 0.0, %v2957
        %v2959 = vpop.f32.mrb[0].mxu0
        %2960 = vmatprep.mubr.bf16.mxu0 0
        %2961 = vmatmul.mubr.bf16.gmra.mrb[0].mxu0 %v2743
        %v2962 = vpop.f32.mrb[0].mxu0
        %v2963 = vadd.f32 0.0, %v2962
        %v2964 = vpop.f32.mrb[0].mxu0
        %v2965 = vpop.f32.mrb[0].mxu0
        %v2966 = vadd.f32 0.0, %v2965
        %v2967 = vpop.f32.mrb[0].mxu0
        %2968 = vmatprep.mubr.bf16.mxu0 0
        %2969 = vmatmul.mubr.bf16.gmra.mrb[0].mxu0 %v2746
        %v2970 = vpop.f32.mrb[0].mxu0
        %v2971 = vadd.f32 0.0, %v2970
        %v2972 = vpop.f32.mrb[0].mxu0
        %v2973 = vpop.f32.mrb[0].mxu0
        %v2974 = vadd.f32 0.0, %v2973
        %v2975 = vpop.f32.mrb[0].mxu0
        %2976 = vmatprep.mubr.bf16.mxu0 0
        %2977 = vmatmul.mubr.bf16.gmra.mrb[0].mxu0 %v2749
        %v2978 = vpop.f32.mrb[0].mxu0
        %v2979 = vadd.f32 0.0, %v2978
        %v2980 = vpop.f32.mrb[0].mxu0
        %v2981 = vpop.f32.mrb[0].mxu0
        %v2982 = vadd.f32 0.0, %v2981
        %v2983 = vpop.f32.mrb[0].mxu0
        %2984 = vmatprep.mubr.bf16.mxu0 0
        %2985 = vmatmul.mubr.bf16.gmra.mrb[0].mxu0 %v2752
        %v2986 = vpop.f32.mrb[0].mxu0
        %v2987 = vadd.f32 0.0, %v2986
        %v2988 = vpop.f32.mrb[0].mxu0
        %v2989 = vpop.f32.mrb[0].mxu0
        %v2990 = vadd.f32 0.0, %v2989
        %v2991 = vpop.f32.mrb[0].mxu0
        %2992 = vmatprep.mubr.bf16.mxu0 0
        %2993 = vmatmul.mubr.bf16.gmra.mrb[0].mxu0 %v2755
        %v2994 = vpop.f32.mrb[0].mxu0
        %v2995 = vadd.f32 0.0, %v2994
        %v2996 = vpop.f32.mrb[0].mxu0
        %v2997 = vpop.f32.mrb[0].mxu0
        %v2998 = vadd.f32 0.0, %v2997
        %v2999 = vpop.f32.mrb[0].mxu0
        %3000 = vmatprep.mubr.bf16.mxu0 0
        %3001 = vmatmul.mubr.bf16.gmra.mrb[0].mxu0 %v2758
        %v3002 = vpop.f32.mrb[0].mxu0
        %v3003 = vadd.f32 0.0, %v3002
        %v3004 = vpop.f32.mrb[0].mxu0
        %v3005 = vpop.f32.mrb[0].mxu0
        %v3006 = vadd.f32 0.0, %v3005
        %v3007 = vpop.f32.mrb[0].mxu0
        %3008 = vmatprep.mubr.bf16.mxu0 0
        %3009 = vmatmul.mubr.bf16.gmra.mrb[0].mxu0 %v2761
        %v3010 = vpop.f32.mrb[0].mxu0
        %v3011 = vadd.f32 0.0, %v3010
        %v3012 = vpop.f32.mrb[0].mxu0
        %v3013 = vpop.f32.mrb[0].mxu0
        %v3014 = vadd.f32 0.0, %v3013
        %v3015 = vpop.f32.mrb[0].mxu0
        %3016 = vmatprep.mubr.bf16.mxu0 0
        %3017 = vmatmul.mubr.bf16.gmra.mrb[0].mxu0 %v2764
        %v3018 = vpop.f32.mrb[0].mxu0
        %v3019 = vadd.f32 0.0, %v3018
        %v3020 = vpop.f32.mrb[0].mxu0
        %v3021 = vpop.f32.mrb[0].mxu0
        %v3022 = vadd.f32 0.0, %v3021
        %v3023 = vpop.f32.mrb[0].mxu0
        %3024 = vmatprep.mubr.bf16.mxu0 0
        %3025 = vmatmul.mubr.bf16.gmra.mrb[0].mxu0 %v2767
        %v3026 = vpop.f32.mrb[0].mxu0
        %v3027 = vadd.f32 0.0, %v3026
        %v3028 = vpop.f32.mrb[0].mxu0
        %v3029 = vpop.f32.mrb[0].mxu0
        %v3030 = vadd.f32 0.0, %v3029
        %v3031 = vpop.f32.mrb[0].mxu0
        %3032 = vmatprep.mubr.bf16.mxu0 0
        %3033 = vmatmul.mubr.bf16.gmra.mrb[0].mxu0 %v2770
        %v3034 = vpop.f32.mrb[0].mxu0
        %v3035 = vadd.f32 0.0, %v3034
        %v3036 = vpop.f32.mrb[0].mxu0
        %v3037 = vpop.f32.mrb[0].mxu0
        %v3038 = vadd.f32 0.0, %v3037
        %v3039 = vpop.f32.mrb[0].mxu0
        %3040 = vmatprep.mubr.bf16.mxu0 0
        %3041 = vmatmul.mubr.bf16.gmra.mrb[0].mxu0 %v2773
        %v3042 = vpop.f32.mrb[0].mxu0
        %v3043 = vadd.f32 0.0, %v3042
        %v3044 = vpop.f32.mrb[0].mxu0
        %v3045 = vpop.f32.mrb[0].mxu0
        %v3046 = vadd.f32 0.0, %v3045
        %v3047 = vpop.f32.mrb[0].mxu0
        %3048 = vmatprep.mubr.bf16.mxu0 0
        %3049 = vmatmul.mubr.bf16.gmra.mrb[0].mxu0 %v2776
        %v3050 = vpop.f32.mrb[0].mxu0
        %v3051 = vadd.f32 0.0, %v3050
        %v3052 = vpop.f32.mrb[0].mxu0
        %v3053 = vpop.f32.mrb[0].mxu0
        %v3054 = vadd.f32 0.0, %v3053
        %v3055 = vpop.f32.mrb[0].mxu0
        %3056 = vmatprep.mubr.bf16.mxu0 0
        %3057 = vmatmul.mubr.bf16.gmra.mrb[0].mxu0 %v2779
        %v3058 = vpop.f32.mrb[0].mxu0
        %v3059 = vadd.f32 0.0, %v3058
        %v3060 = vpop.f32.mrb[0].mxu0
        %v3061 = vpop.f32.mrb[0].mxu0
        %v3062 = vadd.f32 0.0, %v3061
        %v3063 = vpop.f32.mrb[0].mxu0
        %3064 = vmatprep.mubr.bf16.mxu0 0
        %3065 = vmatmul.mubr.bf16.gmra.mrb[0].mxu0 %v2782
        %v3066 = vpop.f32.mrb[0].mxu0
        %v3067 = vadd.f32 0.0, %v3066
        %v3068 = vpop.f32.mrb[0].mxu0
        %v3069 = vpop.f32.mrb[0].mxu0
        %v3070 = vadd.f32 0.0, %v3069
        %v3071 = vpop.f32.mrb[0].mxu0
        %3072 = vmatprep.mubr.bf16.mxu0 0
        %3073 = vmatmul.mubr.bf16.gmra.mrb[0].mxu0 %v2785
        %v3074 = vpop.f32.mrb[0].mxu0
        %v3075 = vadd.f32 0.0, %v3074
        %v3076 = vpop.f32.mrb[0].mxu0
        %v3077 = vpop.f32.mrb[0].mxu0
        %v3078 = vadd.f32 0.0, %v3077
        %v3079 = vpop.f32.mrb[0].mxu0
        %3080 = vmatprep.mubr.bf16.mxu0 0
        %3081 = vmatmul.mubr.bf16.gmra.mrb[0].mxu0 %v2788
        %v3082 = vpop.f32.mrb[0].mxu0
        %v3083 = vadd.f32 0.0, %v3082
        %v3084 = vpop.f32.mrb[0].mxu0
        %v3085 = vpop.f32.mrb[0].mxu0
        %v3086 = vadd.f32 0.0, %v3085
        %v3087 = vpop.f32.mrb[0].mxu0
        %3088 = vmatprep.mubr.bf16.mxu0 0
        %3089 = vmatmul.mubr.bf16.gmra.mrb[0].mxu0 %v2791
        %v3090 = vpop.f32.mrb[0].mxu0
        %v3091 = vadd.f32 0.0, %v3090
        %v3092 = vpop.f32.mrb[0].mxu0
        %v3093 = vpop.f32.mrb[0].mxu0
        %v3094 = vadd.f32 0.0, %v3093
        %v3095 = vpop.f32.mrb[0].mxu0
        %3096 = vmatprep.mubr.bf16.mxu0 0
        %3097 = vmatmul.mubr.bf16.gmra.mrb[0].mxu0 %v2794
        %v3098 = vpop.f32.mrb[0].mxu0
        %v3099 = vadd.f32 0.0, %v3098
        %v3100 = vpop.f32.mrb[0].mxu0
        %v3101 = vpop.f32.mrb[0].mxu0
        %v3102 = vadd.f32 0.0, %v3101
        %v3103 = vpop.f32.mrb[0].mxu0
        %3104 = vmatprep.mubr.bf16.mxu0 0
        %3105 = vmatmul.mubr.bf16.gmra.mrb[0].mxu0 %v2797
        %v3106 = vpop.f32.mrb[0].mxu0
        %v3107 = vadd.f32 0.0, %v3106
        %v3108 = vpop.f32.mrb[0].mxu0
        %v3109 = vpop.f32.mrb[0].mxu0
        %v3110 = vadd.f32 0.0, %v3109
        %v3111 = vpop.f32.mrb[0].mxu0
        %3112 = vmatprep.mubr.bf16.mxu0 0
        %3113 = vmatmul.mubr.bf16.gmra.mrb[0].mxu0 %v2800
        %v3114 = vpop.f32.mrb[0].mxu0
        %v3115 = vadd.f32 0.0, %v3114
        %v3116 = vpop.f32.mrb[0].mxu0
        %v3117 = vpop.f32.mrb[0].mxu0
        %v3118 = vadd.f32 0.0, %v3117
        %v3119 = vpop.f32.mrb[0].mxu0
        %3120 = vmatprep.mubr.bf16.mxu0 0
        %3121 = vmatmul.mubr.bf16.gmra.mrb[0].mxu0 %v2803
        %v3122 = vpop.f32.mrb[0].mxu0
        %v3123 = vadd.f32 0.0, %v3122
        %v3124 = vpop.f32.mrb[0].mxu0
        %v3125 = vpop.f32.mrb[0].mxu0
        %v3126 = vadd.f32 0.0, %v3125
        %v3127 = vpop.f32.mrb[0].mxu0
        %3128 = vdwg.mxu0
        %v3129 = vadd.f32 %v2288, %v2843
        %v3130 = vadd.f32 %v2289, %v2846
        %v3131 = vadd.f32 %v2290, %v2851
        %v3132 = vadd.f32 %v2291, %v2854
        %v3133 = vadd.f32 %v2292, %v2859
        %v3134 = vadd.f32 %v2293, %v2862
        %v3135 = vadd.f32 %v2294, %v2867
        %v3136 = vadd.f32 %v2295, %v2870
        %v3137 = vadd.f32 %v2296, %v2875
        %v3138 = vadd.f32 %v2297, %v2878
        %v3139 = vadd.f32 %v2298, %v2883
        %v3140 = vadd.f32 %v2299, %v2886
        %v3141 = vadd.f32 %v2300, %v2891
        %v3142 = vadd.f32 %v2301, %v2894
        %v3143 = vadd.f32 %v2302, %v2899
        %v3144 = vadd.f32 %v2303, %v2902
        %v3145 = vadd.f32 %v2304, %v2907
        %v3146 = vadd.f32 %v2305, %v2910
        %v3147 = vadd.f32 %v2306, %v2915
        %v3148 = vadd.f32 %v2307, %v2918
        %v3149 = vadd.f32 %v2308, %v2923
        %v3150 = vadd.f32 %v2309, %v2926
        %v3151 = vadd.f32 %v2310, %v2931
        %v3152 = vadd.f32 %v2311, %v2934
        %v3153 = vadd.f32 %v2312, %v2939
        %v3154 = vadd.f32 %v2313, %v2942
        %v3155 = vadd.f32 %v2314, %v2947
        %v3156 = vadd.f32 %v2315, %v2950
        %v3157 = vadd.f32 %v2316, %v2955
        %v3158 = vadd.f32 %v2317, %v2958
        %v3159 = vadd.f32 %v2318, %v2963
        %v3160 = vadd.f32 %v2319, %v2966
        %v3161 = vadd.f32 %v2320, %v2971
        %v3162 = vadd.f32 %v2321, %v2974
        %v3163 = vadd.f32 %v2322, %v2979
        %v3164 = vadd.f32 %v2323, %v2982
        %v3165 = vadd.f32 %v2324, %v2987
        %v3166 = vadd.f32 %v2325, %v2990
        %v3167 = vadd.f32 %v2326, %v2995
        %v3168 = vadd.f32 %v2327, %v2998
        %v3169 = vadd.f32 %v2328, %v3003
        %v3170 = vadd.f32 %v2329, %v3006
        %v3171 = vadd.f32 %v2330, %v3011
        %v3172 = vadd.f32 %v2331, %v3014
        %v3173 = vadd.f32 %v2332, %v3019
        %v3174 = vadd.f32 %v2333, %v3022
        %v3175 = vadd.f32 %v2334, %v3027
        %v3176 = vadd.f32 %v2335, %v3030
        %v3177 = vadd.f32 %v2336, %v3035
        %v3178 = vadd.f32 %v2337, %v3038
        %v3179 = vadd.f32 %v2338, %v3043
        %v3180 = vadd.f32 %v2339, %v3046
        %v3181 = vadd.f32 %v2340, %v3051
        %v3182 = vadd.f32 %v2341, %v3054
        %v3183 = vadd.f32 %v2342, %v3059
        %v3184 = vadd.f32 %v2343, %v3062
        %v3185 = vadd.f32 %v2344, %v3067
        %v3186 = vadd.f32 %v2345, %v3070
        %v3187 = vadd.f32 %v2346, %v3075
        %v3188 = vadd.f32 %v2347, %v3078
        %v3189 = vadd.f32 %v2348, %v3083
        %v3190 = vadd.f32 %v2349, %v3086
        %v3191 = vadd.f32 %v2350, %v3091
        %v3192 = vadd.f32 %v2351, %v3094
        %v3193 = vadd.f32 %v2352, %v3099
        %v3194 = vadd.f32 %v2353, %v3102
        %v3195 = vadd.f32 %v2354, %v3107
        %v3196 = vadd.f32 %v2355, %v3110
        %v3197 = vadd.f32 %v2356, %v3115
        %v3198 = vadd.f32 %v2357, %v3118
        %v3199 = vadd.f32 %v2358, %v3123
        %v3200 = vadd.f32 %v2359, %v3126
        %v3201 = vrot.slane %v2366, 1
        %v3202 = vrot.slane %v2367, 1
        %v3203 = vsel %vm1780, %v3201, %v3202
        %v3204 = vrot.slane %v2368, 1
        %v3205 = vsel %vm1780, %v3202, %v3204
        %v3206 = vrot.slane %v2369, 1
        %v3207 = vsel %vm1780, %v3204, %v3206
        %v3208 = vrot.slane %v2370, 1
        %v3209 = vsel %vm1780, %v3206, %v3208
        %v3210 = vrot.slane %v2371, 1
        %v3211 = vsel %vm1780, %v3208, %v3210
        %v3212 = vrot.slane %v2372, 1
        %v3213 = vsel %vm1780, %v3210, %v3212
        %v3214 = vrot.slane %v2373, 1
        %v3215 = vsel %vm1780, %v3212, %v3214
        %v3216 = vrot.slane %v2374, 1
        %v3217 = vsel %vm1780, %v3214, %v3216
        %v3218 = vrot.slane %v2375, 1
        %v3219 = vsel %vm1780, %v3216, %v3218
        %v3220 = vrot.slane %v2376, 1
        %v3221 = vsel %vm1780, %v3218, %v3220
        %v3222 = vrot.slane %v2377, 1
        %v3223 = vsel %vm1780, %v3220, %v3222
        %v3224 = vrot.slane %v2378, 1
        %v3225 = vsel %vm1780, %v3222, %v3224
        %v3226 = vrot.slane %v2379, 1
        %v3227 = vsel %vm1780, %v3224, %v3226
        %v3228 = vrot.slane %v2380, 1
        %v3229 = vsel %vm1780, %v3226, %v3228
        %v3230 = vrot.slane %v2381, 1
        %v3231 = vsel %vm1780, %v3228, %v3230
        %v3232 = vrot.slane %v2382, 1
        %v3233 = vsel %vm1780, %v3230, %v3232
        %v3234 = vrot.slane %v2383, 1
        %v3235 = vsel %vm1780, %v3232, %v3234
        %v3236 = vrot.slane %v2384, 1
        %v3237 = vsel %vm1780, %v3234, %v3236
        %v3238 = vrot.slane %v2385, 1
        %v3239 = vsel %vm1780, %v3236, %v3238
        %v3240 = vrot.slane %v2386, 1
        %v3241 = vsel %vm1780, %v3238, %v3240
        %v3242 = vrot.slane %v2387, 1
        %v3243 = vsel %vm1780, %v3240, %v3242
        %v3244 = vrot.slane %v2388, 1
        %v3245 = vsel %vm1780, %v3242, %v3244
        %v3246 = vrot.slane %v2389, 1
        %v3247 = vsel %vm1780, %v3244, %v3246
        %v3248 = vrot.slane %v2390, 1
        %v3249 = vsel %vm1780, %v3246, %v3248
        %v3250 = vrot.slane %v2391, 1
        %v3251 = vsel %vm1780, %v3248, %v3250
        %v3252 = vrot.slane %v2392, 1
        %v3253 = vsel %vm1780, %v3250, %v3252
        %v3254 = vrot.slane %v2393, 1
        %v3255 = vsel %vm1780, %v3252, %v3254
        %v3256 = vrot.slane %v2394, 1
        %v3257 = vsel %vm1780, %v3254, %v3256
        %v3258 = vrot.slane %v2395, 1
        %v3259 = vsel %vm1780, %v3256, %v3258
        %v3260 = vrot.slane %v2396, 1
        %v3261 = vsel %vm1780, %v3258, %v3260
        %v3262 = vrot.slane %v2397, 1
        %v3263 = vsel %vm1780, %v3260, %v3262
        %v3264 = vrot.slane %v2398, 1
        %v3265 = vsel %vm1780, %v3262, %v3264
        %v3266 = vrot.slane %v2399, 1
        %v3267 = vsel %vm1780, %v3264, %v3266
        %v3268 = vrot.slane %v2400, 1
        %v3269 = vsel %vm1780, %v3266, %v3268
        %v3270 = vrot.slane %v2401, 1
        %v3271 = vsel %vm1780, %v3268, %v3270
        %v3272 = vrot.slane %v2689, 2
        %v3274 = vsel %vm947, %v3203, 0
        %v3277 = vsel %vm947, %v3205, 0
        %v3280 = vsel %vm947, %v3207, 0
        %v3283 = vsel %vm947, %v3209, 0
        %v3286 = vsel %vm947, %v3211, 0
        %v3289 = vsel %vm947, %v3213, 0
        %v3292 = vsel %vm947, %v3215, 0
        %v3295 = vsel %vm947, %v3217, 0
        %v3298 = vsel %vm947, %v3219, 0
        %v3301 = vsel %vm947, %v3221, 0
        %v3304 = vsel %vm947, %v3223, 0
        %v3307 = vsel %vm947, %v3225, 0
        %v3310 = vsel %vm947, %v3227, 0
        %v3313 = vsel %vm947, %v3229, 0
        %v3316 = vsel %vm947, %v3231, 0
        %v3319 = vsel %vm947, %v3233, 0
        %v3322 = vsel %vm947, %v3235, 0
        %v3325 = vsel %vm947, %v3237, 0
        %v3328 = vsel %vm947, %v3239, 0
        %v3331 = vsel %vm947, %v3241, 0
        %v3334 = vsel %vm947, %v3243, 0
        %v3337 = vsel %vm947, %v3245, 0
        %v3340 = vsel %vm947, %v3247, 0
        %v3343 = vsel %vm947, %v3249, 0
        %v3346 = vsel %vm947, %v3251, 0
        %v3349 = vsel %vm947, %v3253, 0
        %v3352 = vsel %vm947, %v3255, 0
        %v3355 = vsel %vm947, %v3257, 0
        %v3358 = vsel %vm947, %v3259, 0
        %v3361 = vsel %vm947, %v3261, 0
        %v3364 = vsel %vm947, %v3263, 0
        %v3367 = vsel %vm947, %v3265, 0
        %v3370 = vsel %vm947, %v3267, 0
        %v3373 = vsel %vm947, %v3269, 0
        %v3376 = vsel %vm947, %v3271, 0
        %v3379 = vsel %vm947, %v3270, 0
        %v3382 = vand.u32 %v3272, %v1059
        %3384 = vmatprep.subr.bf16.mxu0 0
        %3385 = vmatpush1.bf16.msra.mxu0 %v3382
        %3386 = vmatprep.subr.bf16.mxu0 0
        %3387 = vmatpush1.bf16.msra.mxu0 0
        %3388 = vmatprep.subr.bf16.mxu0 0
        %3389 = vmatpush1.bf16.msra.mxu0 0
        %3390 = vmatprep.subr.bf16.mxu0 0
        %3391 = vmatpush1.bf16.msra.mxu0 0
        %3392 = vmatprep.subr.bf16.mxu0 0
        %3393 = vmatpush1.bf16.msra.mxu0 0
        %3394 = vmatprep.subr.bf16.mxu0 0
        %3395 = vmatpush1.bf16.msra.mxu0 0
        %3396 = vmatprep.subr.bf16.mxu0 0
        %3397 = vmatpush1.bf16.msra.mxu0 0
        %3398 = vmatprep.subr.bf16.mxu0 0
        %3399 = vmatpush1.bf16.msra.mxu0 0
        %3400 = vmatprep.subr.bf16.mxu0 0
        %3401 = vmatpush1.bf16.msra.mxu0 0
        %3402 = vmatprep.subr.bf16.mxu0 0
        %3403 = vmatpush1.bf16.msra.mxu0 0
        %3404 = vmatprep.subr.bf16.mxu0 0
        %3405 = vmatpush1.bf16.msra.mxu0 0
        %3406 = vmatprep.subr.bf16.mxu0 0
        %3407 = vmatpush1.bf16.msra.mxu0 0
        %3408 = vmatprep.subr.bf16.mxu0 0
        %3409 = vmatpush1.bf16.msra.mxu0 0
        %3410 = vmatprep.subr.bf16.mxu0 0
        %3411 = vmatpush1.bf16.msra.mxu0 0
        %3412 = vmatprep.subr.bf16.mxu0 0
        %3413 = vmatpush1.bf16.msra.mxu0 0
        %3414 = vmatprep.subr.bf16.mxu0 0
        %3415 = vmatpush1.bf16.msra.mxu0 0
        %3416 = vmatprep.mubr.bf16.mxu0 0
        %3417 = vmatmul.mubr.bf16.gmra.mrb[0].mxu0 %v3274
        %v3418 = vpop.f32.mrb[0].mxu0
        %v3419 = vadd.f32 0.0, %v3418
        %v3420 = vpop.f32.mrb[0].mxu0
        %v3421 = vpop.f32.mrb[0].mxu0
        %v3422 = vadd.f32 0.0, %v3421
        %v3423 = vpop.f32.mrb[0].mxu0
        %3424 = vmatprep.mubr.bf16.mxu0 0
        %3425 = vmatmul.mubr.bf16.gmra.mrb[0].mxu0 %v3277
        %v3426 = vpop.f32.mrb[0].mxu0
        %v3427 = vadd.f32 0.0, %v3426
        %v3428 = vpop.f32.mrb[0].mxu0
        %v3429 = vpop.f32.mrb[0].mxu0
        %v3430 = vadd.f32 0.0, %v3429
        %v3431 = vpop.f32.mrb[0].mxu0
        %3432 = vmatprep.mubr.bf16.mxu0 0
        %3433 = vmatmul.mubr.bf16.gmra.mrb[0].mxu0 %v3280
        %v3434 = vpop.f32.mrb[0].mxu0
        %v3435 = vadd.f32 0.0, %v3434
        %v3436 = vpop.f32.mrb[0].mxu0
        %v3437 = vpop.f32.mrb[0].mxu0
        %v3438 = vadd.f32 0.0, %v3437
        %v3439 = vpop.f32.mrb[0].mxu0
        %3440 = vmatprep.mubr.bf16.mxu0 0
        %3441 = vmatmul.mubr.bf16.gmra.mrb[0].mxu0 %v3283
        %v3442 = vpop.f32.mrb[0].mxu0
        %v3443 = vadd.f32 0.0, %v3442
        %v3444 = vpop.f32.mrb[0].mxu0
        %v3445 = vpop.f32.mrb[0].mxu0
        %v3446 = vadd.f32 0.0, %v3445
        %v3447 = vpop.f32.mrb[0].mxu0
        %3448 = vmatprep.mubr.bf16.mxu0 0
        %3449 = vmatmul.mubr.bf16.gmra.mrb[0].mxu0 %v3286
        %v3450 = vpop.f32.mrb[0].mxu0
        %v3451 = vadd.f32 0.0, %v3450
        %v3452 = vpop.f32.mrb[0].mxu0
        %v3453 = vpop.f32.mrb[0].mxu0
        %v3454 = vadd.f32 0.0, %v3453
        %v3455 = vpop.f32.mrb[0].mxu0
        %3456 = vmatprep.mubr.bf16.mxu0 0
        %3457 = vmatmul.mubr.bf16.gmra.mrb[0].mxu0 %v3289
        %v3458 = vpop.f32.mrb[0].mxu0
        %v3459 = vadd.f32 0.0, %v3458
        %v3460 = vpop.f32.mrb[0].mxu0
        %v3461 = vpop.f32.mrb[0].mxu0
        %v3462 = vadd.f32 0.0, %v3461
        %v3463 = vpop.f32.mrb[0].mxu0
        %3464 = vmatprep.mubr.bf16.mxu0 0
        %3465 = vmatmul.mubr.bf16.gmra.mrb[0].mxu0 %v3292
        %v3466 = vpop.f32.mrb[0].mxu0
        %v3467 = vadd.f32 0.0, %v3466
        %v3468 = vpop.f32.mrb[0].mxu0
        %v3469 = vpop.f32.mrb[0].mxu0
        %v3470 = vadd.f32 0.0, %v3469
        %v3471 = vpop.f32.mrb[0].mxu0
        %3472 = vmatprep.mubr.bf16.mxu0 0
        %3473 = vmatmul.mubr.bf16.gmra.mrb[0].mxu0 %v3295
        %v3474 = vpop.f32.mrb[0].mxu0
        %v3475 = vadd.f32 0.0, %v3474
        %v3476 = vpop.f32.mrb[0].mxu0
        %v3477 = vpop.f32.mrb[0].mxu0
        %v3478 = vadd.f32 0.0, %v3477
        %v3479 = vpop.f32.mrb[0].mxu0
        %3480 = vmatprep.mubr.bf16.mxu0 0
        %3481 = vmatmul.mubr.bf16.gmra.mrb[0].mxu0 %v3298
        %v3482 = vpop.f32.mrb[0].mxu0
        %v3483 = vadd.f32 0.0, %v3482
        %v3484 = vpop.f32.mrb[0].mxu0
        %v3485 = vpop.f32.mrb[0].mxu0
        %v3486 = vadd.f32 0.0, %v3485
        %v3487 = vpop.f32.mrb[0].mxu0
        %3488 = vmatprep.mubr.bf16.mxu0 0
        %3489 = vmatmul.mubr.bf16.gmra.mrb[0].mxu0 %v3301
        %v3490 = vpop.f32.mrb[0].mxu0
        %v3491 = vadd.f32 0.0, %v3490
        %v3492 = vpop.f32.mrb[0].mxu0
        %v3493 = vpop.f32.mrb[0].mxu0
        %v3494 = vadd.f32 0.0, %v3493
        %v3495 = vpop.f32.mrb[0].mxu0
        %3496 = vmatprep.mubr.bf16.mxu0 0
        %3497 = vmatmul.mubr.bf16.gmra.mrb[0].mxu0 %v3304
        %v3498 = vpop.f32.mrb[0].mxu0
        %v3499 = vadd.f32 0.0, %v3498
        %v3500 = vpop.f32.mrb[0].mxu0
        %v3501 = vpop.f32.mrb[0].mxu0
        %v3502 = vadd.f32 0.0, %v3501
        %v3503 = vpop.f32.mrb[0].mxu0
        %3504 = vmatprep.mubr.bf16.mxu0 0
        %3505 = vmatmul.mubr.bf16.gmra.mrb[0].mxu0 %v3307
        %v3506 = vpop.f32.mrb[0].mxu0
        %v3507 = vadd.f32 0.0, %v3506
        %v3508 = vpop.f32.mrb[0].mxu0
        %v3509 = vpop.f32.mrb[0].mxu0
        %v3510 = vadd.f32 0.0, %v3509
        %v3511 = vpop.f32.mrb[0].mxu0
        %3512 = vmatprep.mubr.bf16.mxu0 0
        %3513 = vmatmul.mubr.bf16.gmra.mrb[0].mxu0 %v3310
        %v3514 = vpop.f32.mrb[0].mxu0
        %v3515 = vadd.f32 0.0, %v3514
        %v3516 = vpop.f32.mrb[0].mxu0
        %v3517 = vpop.f32.mrb[0].mxu0
        %v3518 = vadd.f32 0.0, %v3517
        %v3519 = vpop.f32.mrb[0].mxu0
        %3520 = vmatprep.mubr.bf16.mxu0 0
        %3521 = vmatmul.mubr.bf16.gmra.mrb[0].mxu0 %v3313
        %v3522 = vpop.f32.mrb[0].mxu0
        %v3523 = vadd.f32 0.0, %v3522
        %v3524 = vpop.f32.mrb[0].mxu0
        %v3525 = vpop.f32.mrb[0].mxu0
        %v3526 = vadd.f32 0.0, %v3525
        %v3527 = vpop.f32.mrb[0].mxu0
        %3528 = vmatprep.mubr.bf16.mxu0 0
        %3529 = vmatmul.mubr.bf16.gmra.mrb[0].mxu0 %v3316
        %v3530 = vpop.f32.mrb[0].mxu0
        %v3531 = vadd.f32 0.0, %v3530
        %v3532 = vpop.f32.mrb[0].mxu0
        %v3533 = vpop.f32.mrb[0].mxu0
        %v3534 = vadd.f32 0.0, %v3533
        %v3535 = vpop.f32.mrb[0].mxu0
        %3536 = vmatprep.mubr.bf16.mxu0 0
        %3537 = vmatmul.mubr.bf16.gmra.mrb[0].mxu0 %v3319
        %v3538 = vpop.f32.mrb[0].mxu0
        %v3539 = vadd.f32 0.0, %v3538
        %v3540 = vpop.f32.mrb[0].mxu0
        %v3541 = vpop.f32.mrb[0].mxu0
        %v3542 = vadd.f32 0.0, %v3541
        %v3543 = vpop.f32.mrb[0].mxu0
        %3544 = vmatprep.mubr.bf16.mxu0 0
        %3545 = vmatmul.mubr.bf16.gmra.mrb[0].mxu0 %v3322
        %v3546 = vpop.f32.mrb[0].mxu0
        %v3547 = vadd.f32 0.0, %v3546
        %v3548 = vpop.f32.mrb[0].mxu0
        %v3549 = vpop.f32.mrb[0].mxu0
        %v3550 = vadd.f32 0.0, %v3549
        %v3551 = vpop.f32.mrb[0].mxu0
        %3552 = vmatprep.mubr.bf16.mxu0 0
        %3553 = vmatmul.mubr.bf16.gmra.mrb[0].mxu0 %v3325
        %v3554 = vpop.f32.mrb[0].mxu0
        %v3555 = vadd.f32 0.0, %v3554
        %v3556 = vpop.f32.mrb[0].mxu0
        %v3557 = vpop.f32.mrb[0].mxu0
        %v3558 = vadd.f32 0.0, %v3557
        %v3559 = vpop.f32.mrb[0].mxu0
        %3560 = vmatprep.mubr.bf16.mxu0 0
        %3561 = vmatmul.mubr.bf16.gmra.mrb[0].mxu0 %v3328
        %v3562 = vpop.f32.mrb[0].mxu0
        %v3563 = vadd.f32 0.0, %v3562
        %v3564 = vpop.f32.mrb[0].mxu0
        %v3565 = vpop.f32.mrb[0].mxu0
        %v3566 = vadd.f32 0.0, %v3565
        %v3567 = vpop.f32.mrb[0].mxu0
        %3568 = vmatprep.mubr.bf16.mxu0 0
        %3569 = vmatmul.mubr.bf16.gmra.mrb[0].mxu0 %v3331
        %v3570 = vpop.f32.mrb[0].mxu0
        %v3571 = vadd.f32 0.0, %v3570
        %v3572 = vpop.f32.mrb[0].mxu0
        %v3573 = vpop.f32.mrb[0].mxu0
        %v3574 = vadd.f32 0.0, %v3573
        %v3575 = vpop.f32.mrb[0].mxu0
        %3576 = vmatprep.mubr.bf16.mxu0 0
        %3577 = vmatmul.mubr.bf16.gmra.mrb[0].mxu0 %v3334
        %v3578 = vpop.f32.mrb[0].mxu0
        %v3579 = vadd.f32 0.0, %v3578
        %v3580 = vpop.f32.mrb[0].mxu0
        %v3581 = vpop.f32.mrb[0].mxu0
        %v3582 = vadd.f32 0.0, %v3581
        %v3583 = vpop.f32.mrb[0].mxu0
        %3584 = vmatprep.mubr.bf16.mxu0 0
        %3585 = vmatmul.mubr.bf16.gmra.mrb[0].mxu0 %v3337
        %v3586 = vpop.f32.mrb[0].mxu0
        %v3587 = vadd.f32 0.0, %v3586
        %v3588 = vpop.f32.mrb[0].mxu0
        %v3589 = vpop.f32.mrb[0].mxu0
        %v3590 = vadd.f32 0.0, %v3589
        %v3591 = vpop.f32.mrb[0].mxu0
        %3592 = vmatprep.mubr.bf16.mxu0 0
        %3593 = vmatmul.mubr.bf16.gmra.mrb[0].mxu0 %v3340
        %v3594 = vpop.f32.mrb[0].mxu0
        %v3595 = vadd.f32 0.0, %v3594
        %v3596 = vpop.f32.mrb[0].mxu0
        %v3597 = vpop.f32.mrb[0].mxu0
        %v3598 = vadd.f32 0.0, %v3597
        %v3599 = vpop.f32.mrb[0].mxu0
        %3600 = vmatprep.mubr.bf16.mxu0 0
        %3601 = vmatmul.mubr.bf16.gmra.mrb[0].mxu0 %v3343
        %v3602 = vpop.f32.mrb[0].mxu0
        %v3603 = vadd.f32 0.0, %v3602
        %v3604 = vpop.f32.mrb[0].mxu0
        %v3605 = vpop.f32.mrb[0].mxu0
        %v3606 = vadd.f32 0.0, %v3605
        %v3607 = vpop.f32.mrb[0].mxu0
        %3608 = vmatprep.mubr.bf16.mxu0 0
        %3609 = vmatmul.mubr.bf16.gmra.mrb[0].mxu0 %v3346
        %v3610 = vpop.f32.mrb[0].mxu0
        %v3611 = vadd.f32 0.0, %v3610
        %v3612 = vpop.f32.mrb[0].mxu0
        %v3613 = vpop.f32.mrb[0].mxu0
        %v3614 = vadd.f32 0.0, %v3613
        %v3615 = vpop.f32.mrb[0].mxu0
        %3616 = vmatprep.mubr.bf16.mxu0 0
        %3617 = vmatmul.mubr.bf16.gmra.mrb[0].mxu0 %v3349
        %v3618 = vpop.f32.mrb[0].mxu0
        %v3619 = vadd.f32 0.0, %v3618
        %v3620 = vpop.f32.mrb[0].mxu0
        %v3621 = vpop.f32.mrb[0].mxu0
        %v3622 = vadd.f32 0.0, %v3621
        %v3623 = vpop.f32.mrb[0].mxu0
        %3624 = vmatprep.mubr.bf16.mxu0 0
        %3625 = vmatmul.mubr.bf16.gmra.mrb[0].mxu0 %v3352
        %v3626 = vpop.f32.mrb[0].mxu0
        %v3627 = vadd.f32 0.0, %v3626
        %v3628 = vpop.f32.mrb[0].mxu0
        %v3629 = vpop.f32.mrb[0].mxu0
        %v3630 = vadd.f32 0.0, %v3629
        %v3631 = vpop.f32.mrb[0].mxu0
        %3632 = vmatprep.mubr.bf16.mxu0 0
        %3633 = vmatmul.mubr.bf16.gmra.mrb[0].mxu0 %v3355
        %v3634 = vpop.f32.mrb[0].mxu0
        %v3635 = vadd.f32 0.0, %v3634
        %v3636 = vpop.f32.mrb[0].mxu0
        %v3637 = vpop.f32.mrb[0].mxu0
        %v3638 = vadd.f32 0.0, %v3637
        %v3639 = vpop.f32.mrb[0].mxu0
        %3640 = vmatprep.mubr.bf16.mxu0 0
        %3641 = vmatmul.mubr.bf16.gmra.mrb[0].mxu0 %v3358
        %v3642 = vpop.f32.mrb[0].mxu0
        %v3643 = vadd.f32 0.0, %v3642
        %v3644 = vpop.f32.mrb[0].mxu0
        %v3645 = vpop.f32.mrb[0].mxu0
        %v3646 = vadd.f32 0.0, %v3645
        %v3647 = vpop.f32.mrb[0].mxu0
        %3648 = vmatprep.mubr.bf16.mxu0 0
        %3649 = vmatmul.mubr.bf16.gmra.mrb[0].mxu0 %v3361
        %v3650 = vpop.f32.mrb[0].mxu0
        %v3651 = vadd.f32 0.0, %v3650
        %v3652 = vpop.f32.mrb[0].mxu0
        %v3653 = vpop.f32.mrb[0].mxu0
        %v3654 = vadd.f32 0.0, %v3653
        %v3655 = vpop.f32.mrb[0].mxu0
        %3656 = vmatprep.mubr.bf16.mxu0 0
        %3657 = vmatmul.mubr.bf16.gmra.mrb[0].mxu0 %v3364
        %v3658 = vpop.f32.mrb[0].mxu0
        %v3659 = vadd.f32 0.0, %v3658
        %v3660 = vpop.f32.mrb[0].mxu0
        %v3661 = vpop.f32.mrb[0].mxu0
        %v3662 = vadd.f32 0.0, %v3661
        %v3663 = vpop.f32.mrb[0].mxu0
        %3664 = vmatprep.mubr.bf16.mxu0 0
        %3665 = vmatmul.mubr.bf16.gmra.mrb[0].mxu0 %v3367
        %v3666 = vpop.f32.mrb[0].mxu0
        %v3667 = vadd.f32 0.0, %v3666
        %v3668 = vpop.f32.mrb[0].mxu0
        %v3669 = vpop.f32.mrb[0].mxu0
        %v3670 = vadd.f32 0.0, %v3669
        %v3671 = vpop.f32.mrb[0].mxu0
        %3672 = vmatprep.mubr.bf16.mxu0 0
        %3673 = vmatmul.mubr.bf16.gmra.mrb[0].mxu0 %v3370
        %v3674 = vpop.f32.mrb[0].mxu0
        %v3675 = vadd.f32 0.0, %v3674
        %v3676 = vpop.f32.mrb[0].mxu0
        %v3677 = vpop.f32.mrb[0].mxu0
        %v3678 = vadd.f32 0.0, %v3677
        %v3679 = vpop.f32.mrb[0].mxu0
        %3680 = vmatprep.mubr.bf16.mxu0 0
        %3681 = vmatmul.mubr.bf16.gmra.mrb[0].mxu0 %v3373
        %v3682 = vpop.f32.mrb[0].mxu0
        %v3683 = vadd.f32 0.0, %v3682
        %v3684 = vpop.f32.mrb[0].mxu0
        %v3685 = vpop.f32.mrb[0].mxu0
        %v3686 = vadd.f32 0.0, %v3685
        %v3687 = vpop.f32.mrb[0].mxu0
        %3688 = vmatprep.mubr.bf16.mxu0 0
        %3689 = vmatmul.mubr.bf16.gmra.mrb[0].mxu0 %v3376
        %v3690 = vpop.f32.mrb[0].mxu0
        %v3691 = vadd.f32 0.0, %v3690
        %v3692 = vpop.f32.mrb[0].mxu0
        %v3693 = vpop.f32.mrb[0].mxu0
        %v3694 = vadd.f32 0.0, %v3693
        %v3695 = vpop.f32.mrb[0].mxu0
        %3696 = vmatprep.mubr.bf16.mxu0 0
        %3697 = vmatmul.mubr.bf16.gmra.mrb[0].mxu0 %v3379
        %v3698 = vpop.f32.mrb[0].mxu0
        %v3699 = vadd.f32 0.0, %v3698
        %v3700 = vpop.f32.mrb[0].mxu0
        %v3701 = vpop.f32.mrb[0].mxu0
        %v3702 = vadd.f32 0.0, %v3701
        %v3703 = vpop.f32.mrb[0].mxu0
        %3704 = vdwg.mxu0
        %v3705 = vadd.f32 %v3129, %v3419
        %v3706 = vadd.f32 %v3130, %v3422
        %v3707 = vadd.f32 %v3131, %v3427
        %v3708 = vadd.f32 %v3132, %v3430
        %v3709 = vadd.f32 %v3133, %v3435
        %v3710 = vadd.f32 %v3134, %v3438
        %v3711 = vadd.f32 %v3135, %v3443
        %v3712 = vadd.f32 %v3136, %v3446
        %v3713 = vadd.f32 %v3137, %v3451
        %v3714 = vadd.f32 %v3138, %v3454
        %v3715 = vadd.f32 %v3139, %v3459
        %v3716 = vadd.f32 %v3140, %v3462
        %v3717 = vadd.f32 %v3141, %v3467
        %v3718 = vadd.f32 %v3142, %v3470
        %v3719 = vadd.f32 %v3143, %v3475
        %v3720 = vadd.f32 %v3144, %v3478
        %v3721 = vadd.f32 %v3145, %v3483
        %v3722 = vadd.f32 %v3146, %v3486
        %v3723 = vadd.f32 %v3147, %v3491
        %v3724 = vadd.f32 %v3148, %v3494
        %v3725 = vadd.f32 %v3149, %v3499
        %v3726 = vadd.f32 %v3150, %v3502
        %v3727 = vadd.f32 %v3151, %v3507
        %v3728 = vadd.f32 %v3152, %v3510
        %v3729 = vadd.f32 %v3153, %v3515
        %v3730 = vadd.f32 %v3154, %v3518
        %v3731 = vadd.f32 %v3155, %v3523
        %v3732 = vadd.f32 %v3156, %v3526
        %v3733 = vadd.f32 %v3157, %v3531
        %v3734 = vadd.f32 %v3158, %v3534
        %v3735 = vadd.f32 %v3159, %v3539
        %v3736 = vadd.f32 %v3160, %v3542
        %v3737 = vadd.f32 %v3161, %v3547
        %v3738 = vadd.f32 %v3162, %v3550
        %v3739 = vadd.f32 %v3163, %v3555
        %v3740 = vadd.f32 %v3164, %v3558
        %v3741 = vadd.f32 %v3165, %v3563
        %v3742 = vadd.f32 %v3166, %v3566
        %v3743 = vadd.f32 %v3167, %v3571
        %v3744 = vadd.f32 %v3168, %v3574
        %v3745 = vadd.f32 %v3169, %v3579
        %v3746 = vadd.f32 %v3170, %v3582
        %v3747 = vadd.f32 %v3171, %v3587
        %v3748 = vadd.f32 %v3172, %v3590
        %v3749 = vadd.f32 %v3173, %v3595
        %v3750 = vadd.f32 %v3174, %v3598
        %v3751 = vadd.f32 %v3175, %v3603
        %v3752 = vadd.f32 %v3176, %v3606
        %v3753 = vadd.f32 %v3177, %v3611
        %v3754 = vadd.f32 %v3178, %v3614
        %v3755 = vadd.f32 %v3179, %v3619
        %v3756 = vadd.f32 %v3180, %v3622
        %v3757 = vadd.f32 %v3181, %v3627
        %v3758 = vadd.f32 %v3182, %v3630
        %v3759 = vadd.f32 %v3183, %v3635
        %v3760 = vadd.f32 %v3184, %v3638
        %v3761 = vadd.f32 %v3185, %v3643
        %v3762 = vadd.f32 %v3186, %v3646
        %v3763 = vadd.f32 %v3187, %v3651
        %v3764 = vadd.f32 %v3188, %v3654
        %v3765 = vadd.f32 %v3189, %v3659
        %v3766 = vadd.f32 %v3190, %v3662
        %v3767 = vadd.f32 %v3191, %v3667
        %v3768 = vadd.f32 %v3192, %v3670
        %v3769 = vadd.f32 %v3193, %v3675
        %v3770 = vadd.f32 %v3194, %v3678
        %v3771 = vadd.f32 %v3195, %v3683
        %v3772 = vadd.f32 %v3196, %v3686
        %v3773 = vadd.f32 %v3197, %v3691
        %v3774 = vadd.f32 %v3198, %v3694
        %v3775 = vadd.f32 %v3199, %v3699
        %v3776 = vadd.f32 %v3200, %v3702
        %vm3777 = vsmask.f32 6400
        %v3778 = vrot.slane %v2403, 1
        %v3779 = vrot.slane %v2405, 2
        %v3780 = vor.u32 %v3778, %v3779
        %v3781 = vrot.slane %v2414, 1
        %v3782 = vrot.slane %v2410, 2
        %v3783 = vor.u32 %v3781, %v3782
        %v3784 = vsel %vm3777, %v3780, %v3783
        %v3785 = vrot.slane %v2422, 1
        %v3786 = vrot.slane %v2418, 2
        %v3787 = vor.u32 %v3785, %v3786
        %v3788 = vsel %vm3777, %v3783, %v3787
        %v3789 = vrot.slane %v2430, 1
        %v3790 = vrot.slane %v2426, 2
        %v3791 = vor.u32 %v3789, %v3790
        %v3792 = vsel %vm3777, %v3787, %v3791
        %v3793 = vrot.slane %v2438, 1
        %v3794 = vrot.slane %v2434, 2
        %v3795 = vor.u32 %v3793, %v3794
        %v3796 = vsel %vm3777, %v3791, %v3795
        %v3797 = vrot.slane %v2446, 1
        %v3798 = vrot.slane %v2442, 2
        %v3799 = vor.u32 %v3797, %v3798
        %v3800 = vsel %vm3777, %v3795, %v3799
        %v3801 = vrot.slane %v2454, 1
        %v3802 = vrot.slane %v2450, 2
        %v3803 = vor.u32 %v3801, %v3802
        %v3804 = vsel %vm3777, %v3799, %v3803
        %v3805 = vrot.slane %v2462, 1
        %v3806 = vrot.slane %v2458, 2
        %v3807 = vor.u32 %v3805, %v3806
        %v3808 = vsel %vm3777, %v3803, %v3807
        %v3809 = vrot.slane %v2470, 1
        %v3810 = vrot.slane %v2466, 2
        %v3811 = vor.u32 %v3809, %v3810
        %v3812 = vsel %vm3777, %v3807, %v3811
        %v3813 = vrot.slane %v2478, 1
        %v3814 = vrot.slane %v2474, 2
        %v3815 = vor.u32 %v3813, %v3814
        %v3816 = vsel %vm3777, %v3811, %v3815
        %v3817 = vrot.slane %v2486, 1
        %v3818 = vrot.slane %v2482, 2
        %v3819 = vor.u32 %v3817, %v3818
        %v3820 = vsel %vm3777, %v3815, %v3819
        %v3821 = vrot.slane %v2494, 1
        %v3822 = vrot.slane %v2490, 2
        %v3823 = vor.u32 %v3821, %v3822
        %v3824 = vsel %vm3777, %v3819, %v3823
        %v3825 = vrot.slane %v2502, 1
        %v3826 = vrot.slane %v2498, 2
        %v3827 = vor.u32 %v3825, %v3826
        %v3828 = vsel %vm3777, %v3823, %v3827
        %v3829 = vrot.slane %v2510, 1
        %v3830 = vrot.slane %v2506, 2
        %v3831 = vor.u32 %v3829, %v3830
        %v3832 = vsel %vm3777, %v3827, %v3831
        %v3833 = vrot.slane %v2518, 1
        %v3834 = vrot.slane %v2514, 2
        %v3835 = vor.u32 %v3833, %v3834
        %v3836 = vsel %vm3777, %v3831, %v3835
        %v3837 = vrot.slane %v2526, 1
        %v3838 = vrot.slane %v2522, 2
        %v3839 = vor.u32 %v3837, %v3838
        %v3840 = vsel %vm3777, %v3835, %v3839
        %v3841 = vrot.slane %v2534, 1
        %v3842 = vrot.slane %v2530, 2
        %v3843 = vor.u32 %v3841, %v3842
        %v3844 = vsel %vm3777, %v3839, %v3843
        %v3845 = vrot.slane %v2542, 1
        %v3846 = vrot.slane %v2538, 2
        %v3847 = vor.u32 %v3845, %v3846
        %v3848 = vsel %vm3777, %v3843, %v3847
        %v3849 = vrot.slane %v2550, 1
        %v3850 = vrot.slane %v2546, 2
        %v3851 = vor.u32 %v3849, %v3850
        %v3852 = vsel %vm3777, %v3847, %v3851
        %v3853 = vrot.slane %v2558, 1
        %v3854 = vrot.slane %v2554, 2
        %v3855 = vor.u32 %v3853, %v3854
        %v3856 = vsel %vm3777, %v3851, %v3855
        %v3857 = vrot.slane %v2566, 1
        %v3858 = vrot.slane %v2562, 2
        %v3859 = vor.u32 %v3857, %v3858
        %v3860 = vsel %vm3777, %v3855, %v3859
        %v3861 = vrot.slane %v2574, 1
        %v3862 = vrot.slane %v2570, 2
        %v3863 = vor.u32 %v3861, %v3862
        %v3864 = vsel %vm3777, %v3859, %v3863
        %v3865 = vrot.slane %v2582, 1
        %v3866 = vrot.slane %v2578, 2
        %v3867 = vor.u32 %v3865, %v3866
        %v3868 = vsel %vm3777, %v3863, %v3867
        %v3869 = vrot.slane %v2590, 1
        %v3870 = vrot.slane %v2586, 2
        %v3871 = vor.u32 %v3869, %v3870
        %v3872 = vsel %vm3777, %v3867, %v3871
        %v3873 = vrot.slane %v2598, 1
        %v3874 = vrot.slane %v2594, 2
        %v3875 = vor.u32 %v3873, %v3874
        %v3876 = vsel %vm3777, %v3871, %v3875
        %v3877 = vrot.slane %v2606, 1
        %v3878 = vrot.slane %v2602, 2
        %v3879 = vor.u32 %v3877, %v3878
        %v3880 = vsel %vm3777, %v3875, %v3879
        %v3881 = vrot.slane %v2614, 1
        %v3882 = vrot.slane %v2610, 2
        %v3883 = vor.u32 %v3881, %v3882
        %v3884 = vsel %vm3777, %v3879, %v3883
        %v3885 = vrot.slane %v2622, 1
        %v3886 = vrot.slane %v2618, 2
        %v3887 = vor.u32 %v3885, %v3886
        %v3888 = vsel %vm3777, %v3883, %v3887
        %v3889 = vrot.slane %v2630, 1
        %v3890 = vrot.slane %v2626, 2
        %v3891 = vor.u32 %v3889, %v3890
        %v3892 = vsel %vm3777, %v3887, %v3891
        %v3893 = vrot.slane %v2638, 1
        %v3894 = vrot.slane %v2634, 2
        %v3895 = vor.u32 %v3893, %v3894
        %v3896 = vsel %vm3777, %v3891, %v3895
        %v3897 = vrot.slane %v2646, 1
        %v3898 = vrot.slane %v2642, 2
        %v3899 = vor.u32 %v3897, %v3898
        %v3900 = vsel %vm3777, %v3895, %v3899
        %v3901 = vrot.slane %v2654, 1
        %v3902 = vrot.slane %v2650, 2
        %v3903 = vor.u32 %v3901, %v3902
        %v3904 = vsel %vm3777, %v3899, %v3903
        %v3905 = vrot.slane %v2662, 1
        %v3906 = vrot.slane %v2658, 2
        %v3907 = vor.u32 %v3905, %v3906
        %v3908 = vsel %vm3777, %v3903, %v3907
        %v3909 = vrot.slane %v2670, 1
        %v3910 = vrot.slane %v2666, 2
        %v3911 = vor.u32 %v3909, %v3910
        %v3912 = vsel %vm3777, %v3907, %v3911
        %v3913 = vrot.slane %v2678, 1
        %v3914 = vrot.slane %v2674, 2
        %v3915 = vor.u32 %v3913, %v3914
        %v3916 = vsel %vm3777, %v3911, %v3915
        %v3917 = vrot.slane %v2686, 1
        %v3918 = vrot.slane %v2682, 2
        %v3919 = vor.u32 %v3917, %v3918
        %v3920 = vsel %vm3777, %v3915, %v3919
        %v3922 = vunpack.c.l.b16 %v466
        %v3923 = vpack.c.b16 %v3922, %v1853
        %v3925 = vshrl.u32 %v3923, 16
        %v3927 = vrot.slane %v3925, 3
        %v3928 = vshll.u32 %v3923, 16
        %v3930 = vrot.slane %v3928, 4
        %v3931 = vor.u32 %v3927, %v3930
        %v3933 = vsel %vm947, %v3784, 0
        %v3936 = vsel %vm947, %v3788, 0
        %v3939 = vsel %vm947, %v3792, 0
        %v3942 = vsel %vm947, %v3796, 0
        %v3945 = vsel %vm947, %v3800, 0
        %v3948 = vsel %vm947, %v3804, 0
        %v3951 = vsel %vm947, %v3808, 0
        %v3954 = vsel %vm947, %v3812, 0
        %v3957 = vsel %vm947, %v3816, 0
        %v3960 = vsel %vm947, %v3820, 0
        %v3963 = vsel %vm947, %v3824, 0
        %v3966 = vsel %vm947, %v3828, 0
        %v3969 = vsel %vm947, %v3832, 0
        %v3972 = vsel %vm947, %v3836, 0
        %v3975 = vsel %vm947, %v3840, 0
        %v3978 = vsel %vm947, %v3844, 0
        %v3981 = vsel %vm947, %v3848, 0
        %v3984 = vsel %vm947, %v3852, 0
        %v3987 = vsel %vm947, %v3856, 0
        %v3990 = vsel %vm947, %v3860, 0
        %v3993 = vsel %vm947, %v3864, 0
        %v3996 = vsel %vm947, %v3868, 0
        %v3999 = vsel %vm947, %v3872, 0
        %v4002 = vsel %vm947, %v3876, 0
        %v4005 = vsel %vm947, %v3880, 0
        %v4008 = vsel %vm947, %v3884, 0
        %v4011 = vsel %vm947, %v3888, 0
        %v4014 = vsel %vm947, %v3892, 0
        %v4017 = vsel %vm947, %v3896, 0
        %v4020 = vsel %vm947, %v3900, 0
        %v4023 = vsel %vm947, %v3904, 0
        %v4026 = vsel %vm947, %v3908, 0
        %v4029 = vsel %vm947, %v3912, 0
        %v4032 = vsel %vm947, %v3916, 0
        %v4035 = vsel %vm947, %v3920, 0
        %v4038 = vsel %vm947, %v3919, 0
        %v4041 = vand.u32 %v3931, %v1059
        %4043 = vmatprep.subr.bf16.mxu0 0
        %4044 = vmatpush1.bf16.msra.mxu0 %v4041
        %4045 = vmatprep.subr.bf16.mxu0 0
        %4046 = vmatpush1.bf16.msra.mxu0 0
        %4047 = vmatprep.subr.bf16.mxu0 0
        %4048 = vmatpush1.bf16.msra.mxu0 0
        %4049 = vmatprep.subr.bf16.mxu0 0
        %4050 = vmatpush1.bf16.msra.mxu0 0
        %4051 = vmatprep.subr.bf16.mxu0 0
        %4052 = vmatpush1.bf16.msra.mxu0 0
        %4053 = vmatprep.subr.bf16.mxu0 0
        %4054 = vmatpush1.bf16.msra.mxu0 0
        %4055 = vmatprep.subr.bf16.mxu0 0
        %4056 = vmatpush1.bf16.msra.mxu0 0
        %4057 = vmatprep.subr.bf16.mxu0 0
        %4058 = vmatpush1.bf16.msra.mxu0 0
        %4059 = vmatprep.subr.bf16.mxu0 0
        %4060 = vmatpush1.bf16.msra.mxu0 0
        %4061 = vmatprep.subr.bf16.mxu0 0
        %4062 = vmatpush1.bf16.msra.mxu0 0
        %4063 = vmatprep.subr.bf16.mxu0 0
        %4064 = vmatpush1.bf16.msra.mxu0 0
        %4065 = vmatprep.subr.bf16.mxu0 0
        %4066 = vmatpush1.bf16.msra.mxu0 0
        %4067 = vmatprep.subr.bf16.mxu0 0
        %4068 = vmatpush1.bf16.msra.mxu0 0
        %4069 = vmatprep.subr.bf16.mxu0 0
        %4070 = vmatpush1.bf16.msra.mxu0 0
        %4071 = vmatprep.subr.bf16.mxu0 0
        %4072 = vmatpush1.bf16.msra.mxu0 0
        %4073 = vmatprep.subr.bf16.mxu0 0
        %4074 = vmatpush1.bf16.msra.mxu0 0
        %4075 = vmatprep.mubr.bf16.mxu0 0
        %4076 = vmatmul.mubr.bf16.gmra.mrb[0].mxu0 %v3933
        %v4077 = vpop.f32.mrb[0].mxu0
        %v4078 = vadd.f32 0.0, %v4077
        %v4079 = vpop.f32.mrb[0].mxu0
        %v4080 = vpop.f32.mrb[0].mxu0
        %v4081 = vadd.f32 0.0, %v4080
        %v4082 = vpop.f32.mrb[0].mxu0
        %4083 = vmatprep.mubr.bf16.mxu0 0
        %4084 = vmatmul.mubr.bf16.gmra.mrb[0].mxu0 %v3936
        %v4085 = vpop.f32.mrb[0].mxu0
        %v4086 = vadd.f32 0.0, %v4085
        %v4087 = vpop.f32.mrb[0].mxu0
        %v4088 = vpop.f32.mrb[0].mxu0
        %v4089 = vadd.f32 0.0, %v4088
        %v4090 = vpop.f32.mrb[0].mxu0
        %4091 = vmatprep.mubr.bf16.mxu0 0
        %4092 = vmatmul.mubr.bf16.gmra.mrb[0].mxu0 %v3939
        %v4093 = vpop.f32.mrb[0].mxu0
        %v4094 = vadd.f32 0.0, %v4093
        %v4095 = vpop.f32.mrb[0].mxu0
        %v4096 = vpop.f32.mrb[0].mxu0
        %v4097 = vadd.f32 0.0, %v4096
        %v4098 = vpop.f32.mrb[0].mxu0
        %4099 = vmatprep.mubr.bf16.mxu0 0
        %4100 = vmatmul.mubr.bf16.gmra.mrb[0].mxu0 %v3942
        %v4101 = vpop.f32.mrb[0].mxu0
        %v4102 = vadd.f32 0.0, %v4101
        %v4103 = vpop.f32.mrb[0].mxu0
        %v4104 = vpop.f32.mrb[0].mxu0
        %v4105 = vadd.f32 0.0, %v4104
        %v4106 = vpop.f32.mrb[0].mxu0
        %4107 = vmatprep.mubr.bf16.mxu0 0
        %4108 = vmatmul.mubr.bf16.gmra.mrb[0].mxu0 %v3945
        %v4109 = vpop.f32.mrb[0].mxu0
        %v4110 = vadd.f32 0.0, %v4109
        %v4111 = vpop.f32.mrb[0].mxu0
        %v4112 = vpop.f32.mrb[0].mxu0
        %v4113 = vadd.f32 0.0, %v4112
        %v4114 = vpop.f32.mrb[0].mxu0
        %4115 = vmatprep.mubr.bf16.mxu0 0
        %4116 = vmatmul.mubr.bf16.gmra.mrb[0].mxu0 %v3948
        %v4117 = vpop.f32.mrb[0].mxu0
        %v4118 = vadd.f32 0.0, %v4117
        %v4119 = vpop.f32.mrb[0].mxu0
        %v4120 = vpop.f32.mrb[0].mxu0
        %v4121 = vadd.f32 0.0, %v4120
        %v4122 = vpop.f32.mrb[0].mxu0
        %4123 = vmatprep.mubr.bf16.mxu0 0
        %4124 = vmatmul.mubr.bf16.gmra.mrb[0].mxu0 %v3951
        %v4125 = vpop.f32.mrb[0].mxu0
        %v4126 = vadd.f32 0.0, %v4125
        %v4127 = vpop.f32.mrb[0].mxu0
        %v4128 = vpop.f32.mrb[0].mxu0
        %v4129 = vadd.f32 0.0, %v4128
        %v4130 = vpop.f32.mrb[0].mxu0
        %4131 = vmatprep.mubr.bf16.mxu0 0
        %4132 = vmatmul.mubr.bf16.gmra.mrb[0].mxu0 %v3954
        %v4133 = vpop.f32.mrb[0].mxu0
        %v4134 = vadd.f32 0.0, %v4133
        %v4135 = vpop.f32.mrb[0].mxu0
        %v4136 = vpop.f32.mrb[0].mxu0
        %v4137 = vadd.f32 0.0, %v4136
        %v4138 = vpop.f32.mrb[0].mxu0
        %4139 = vmatprep.mubr.bf16.mxu0 0
        %4140 = vmatmul.mubr.bf16.gmra.mrb[0].mxu0 %v3957
        %v4141 = vpop.f32.mrb[0].mxu0
        %v4142 = vadd.f32 0.0, %v4141
        %v4143 = vpop.f32.mrb[0].mxu0
        %v4144 = vpop.f32.mrb[0].mxu0
        %v4145 = vadd.f32 0.0, %v4144
        %v4146 = vpop.f32.mrb[0].mxu0
        %4147 = vmatprep.mubr.bf16.mxu0 0
        %4148 = vmatmul.mubr.bf16.gmra.mrb[0].mxu0 %v3960
        %v4149 = vpop.f32.mrb[0].mxu0
        %v4150 = vadd.f32 0.0, %v4149
        %v4151 = vpop.f32.mrb[0].mxu0
        %v4152 = vpop.f32.mrb[0].mxu0
        %v4153 = vadd.f32 0.0, %v4152
        %v4154 = vpop.f32.mrb[0].mxu0
        %4155 = vmatprep.mubr.bf16.mxu0 0
        %4156 = vmatmul.mubr.bf16.gmra.mrb[0].mxu0 %v3963
        %v4157 = vpop.f32.mrb[0].mxu0
        %v4158 = vadd.f32 0.0, %v4157
        %v4159 = vpop.f32.mrb[0].mxu0
        %v4160 = vpop.f32.mrb[0].mxu0
        %v4161 = vadd.f32 0.0, %v4160
        %v4162 = vpop.f32.mrb[0].mxu0
        %4163 = vmatprep.mubr.bf16.mxu0 0
        %4164 = vmatmul.mubr.bf16.gmra.mrb[0].mxu0 %v3966
        %v4165 = vpop.f32.mrb[0].mxu0
        %v4166 = vadd.f32 0.0, %v4165
        %v4167 = vpop.f32.mrb[0].mxu0
        %v4168 = vpop.f32.mrb[0].mxu0
        %v4169 = vadd.f32 0.0, %v4168
        %v4170 = vpop.f32.mrb[0].mxu0
        %4171 = vmatprep.mubr.bf16.mxu0 0
        %4172 = vmatmul.mubr.bf16.gmra.mrb[0].mxu0 %v3969
        %v4173 = vpop.f32.mrb[0].mxu0
        %v4174 = vadd.f32 0.0, %v4173
        %v4175 = vpop.f32.mrb[0].mxu0
        %v4176 = vpop.f32.mrb[0].mxu0
        %v4177 = vadd.f32 0.0, %v4176
        %v4178 = vpop.f32.mrb[0].mxu0
        %4179 = vmatprep.mubr.bf16.mxu0 0
        %4180 = vmatmul.mubr.bf16.gmra.mrb[0].mxu0 %v3972
        %v4181 = vpop.f32.mrb[0].mxu0
        %v4182 = vadd.f32 0.0, %v4181
        %v4183 = vpop.f32.mrb[0].mxu0
        %v4184 = vpop.f32.mrb[0].mxu0
        %v4185 = vadd.f32 0.0, %v4184
        %v4186 = vpop.f32.mrb[0].mxu0
        %4187 = vmatprep.mubr.bf16.mxu0 0
        %4188 = vmatmul.mubr.bf16.gmra.mrb[0].mxu0 %v3975
        %v4189 = vpop.f32.mrb[0].mxu0
        %v4190 = vadd.f32 0.0, %v4189
        %v4191 = vpop.f32.mrb[0].mxu0
        %v4192 = vpop.f32.mrb[0].mxu0
        %v4193 = vadd.f32 0.0, %v4192
        %v4194 = vpop.f32.mrb[0].mxu0
        %4195 = vmatprep.mubr.bf16.mxu0 0
        %4196 = vmatmul.mubr.bf16.gmra.mrb[0].mxu0 %v3978
        %v4197 = vpop.f32.mrb[0].mxu0
        %v4198 = vadd.f32 0.0, %v4197
        %v4199 = vpop.f32.mrb[0].mxu0
        %v4200 = vpop.f32.mrb[0].mxu0
        %v4201 = vadd.f32 0.0, %v4200
        %v4202 = vpop.f32.mrb[0].mxu0
        %4203 = vmatprep.mubr.bf16.mxu0 0
        %4204 = vmatmul.mubr.bf16.gmra.mrb[0].mxu0 %v3981
        %v4205 = vpop.f32.mrb[0].mxu0
        %v4206 = vadd.f32 0.0, %v4205
        %v4207 = vpop.f32.mrb[0].mxu0
        %v4208 = vpop.f32.mrb[0].mxu0
        %v4209 = vadd.f32 0.0, %v4208
        %v4210 = vpop.f32.mrb[0].mxu0
        %4211 = vmatprep.mubr.bf16.mxu0 0
        %4212 = vmatmul.mubr.bf16.gmra.mrb[0].mxu0 %v3984
        %v4213 = vpop.f32.mrb[0].mxu0
        %v4214 = vadd.f32 0.0, %v4213
        %v4215 = vpop.f32.mrb[0].mxu0
        %v4216 = vpop.f32.mrb[0].mxu0
        %v4217 = vadd.f32 0.0, %v4216
        %v4218 = vpop.f32.mrb[0].mxu0
        %4219 = vmatprep.mubr.bf16.mxu0 0
        %4220 = vmatmul.mubr.bf16.gmra.mrb[0].mxu0 %v3987
        %v4221 = vpop.f32.mrb[0].mxu0
        %v4222 = vadd.f32 0.0, %v4221
        %v4223 = vpop.f32.mrb[0].mxu0
        %v4224 = vpop.f32.mrb[0].mxu0
        %v4225 = vadd.f32 0.0, %v4224
        %v4226 = vpop.f32.mrb[0].mxu0
        %4227 = vmatprep.mubr.bf16.mxu0 0
        %4228 = vmatmul.mubr.bf16.gmra.mrb[0].mxu0 %v3990
        %v4229 = vpop.f32.mrb[0].mxu0
        %v4230 = vadd.f32 0.0, %v4229
        %v4231 = vpop.f32.mrb[0].mxu0
        %v4232 = vpop.f32.mrb[0].mxu0
        %v4233 = vadd.f32 0.0, %v4232
        %v4234 = vpop.f32.mrb[0].mxu0
        %4235 = vmatprep.mubr.bf16.mxu0 0
        %4236 = vmatmul.mubr.bf16.gmra.mrb[0].mxu0 %v3993
        %v4237 = vpop.f32.mrb[0].mxu0
        %v4238 = vadd.f32 0.0, %v4237
        %v4239 = vpop.f32.mrb[0].mxu0
        %v4240 = vpop.f32.mrb[0].mxu0
        %v4241 = vadd.f32 0.0, %v4240
        %v4242 = vpop.f32.mrb[0].mxu0
        %4243 = vmatprep.mubr.bf16.mxu0 0
        %4244 = vmatmul.mubr.bf16.gmra.mrb[0].mxu0 %v3996
        %v4245 = vpop.f32.mrb[0].mxu0
        %v4246 = vadd.f32 0.0, %v4245
        %v4247 = vpop.f32.mrb[0].mxu0
        %v4248 = vpop.f32.mrb[0].mxu0
        %v4249 = vadd.f32 0.0, %v4248
        %v4250 = vpop.f32.mrb[0].mxu0
        %4251 = vmatprep.mubr.bf16.mxu0 0
        %4252 = vmatmul.mubr.bf16.gmra.mrb[0].mxu0 %v3999
        %v4253 = vpop.f32.mrb[0].mxu0
        %v4254 = vadd.f32 0.0, %v4253
        %v4255 = vpop.f32.mrb[0].mxu0
        %v4256 = vpop.f32.mrb[0].mxu0
        %v4257 = vadd.f32 0.0, %v4256
        %v4258 = vpop.f32.mrb[0].mxu0
        %4259 = vmatprep.mubr.bf16.mxu0 0
        %4260 = vmatmul.mubr.bf16.gmra.mrb[0].mxu0 %v4002
        %v4261 = vpop.f32.mrb[0].mxu0
        %v4262 = vadd.f32 0.0, %v4261
        %v4263 = vpop.f32.mrb[0].mxu0
        %v4264 = vpop.f32.mrb[0].mxu0
        %v4265 = vadd.f32 0.0, %v4264
        %v4266 = vpop.f32.mrb[0].mxu0
        %4267 = vmatprep.mubr.bf16.mxu0 0
        %4268 = vmatmul.mubr.bf16.gmra.mrb[0].mxu0 %v4005
        %v4269 = vpop.f32.mrb[0].mxu0
        %v4270 = vadd.f32 0.0, %v4269
        %v4271 = vpop.f32.mrb[0].mxu0
        %v4272 = vpop.f32.mrb[0].mxu0
        %v4273 = vadd.f32 0.0, %v4272
        %v4274 = vpop.f32.mrb[0].mxu0
        %4275 = vmatprep.mubr.bf16.mxu0 0
        %4276 = vmatmul.mubr.bf16.gmra.mrb[0].mxu0 %v4008
        %v4277 = vpop.f32.mrb[0].mxu0
        %v4278 = vadd.f32 0.0, %v4277
        %v4279 = vpop.f32.mrb[0].mxu0
        %v4280 = vpop.f32.mrb[0].mxu0
        %v4281 = vadd.f32 0.0, %v4280
        %v4282 = vpop.f32.mrb[0].mxu0
        %4283 = vmatprep.mubr.bf16.mxu0 0
        %4284 = vmatmul.mubr.bf16.gmra.mrb[0].mxu0 %v4011
        %v4285 = vpop.f32.mrb[0].mxu0
        %v4286 = vadd.f32 0.0, %v4285
        %v4287 = vpop.f32.mrb[0].mxu0
        %v4288 = vpop.f32.mrb[0].mxu0
        %v4289 = vadd.f32 0.0, %v4288
        %v4290 = vpop.f32.mrb[0].mxu0
        %4291 = vmatprep.mubr.bf16.mxu0 0
        %4292 = vmatmul.mubr.bf16.gmra.mrb[0].mxu0 %v4014
        %v4293 = vpop.f32.mrb[0].mxu0
        %v4294 = vadd.f32 0.0, %v4293
        %v4295 = vpop.f32.mrb[0].mxu0
        %v4296 = vpop.f32.mrb[0].mxu0
        %v4297 = vadd.f32 0.0, %v4296
        %v4298 = vpop.f32.mrb[0].mxu0
        %4299 = vmatprep.mubr.bf16.mxu0 0
        %4300 = vmatmul.mubr.bf16.gmra.mrb[0].mxu0 %v4017
        %v4301 = vpop.f32.mrb[0].mxu0
        %v4302 = vadd.f32 0.0, %v4301
        %v4303 = vpop.f32.mrb[0].mxu0
        %v4304 = vpop.f32.mrb[0].mxu0
        %v4305 = vadd.f32 0.0, %v4304
        %v4306 = vpop.f32.mrb[0].mxu0
        %4307 = vmatprep.mubr.bf16.mxu0 0
        %4308 = vmatmul.mubr.bf16.gmra.mrb[0].mxu0 %v4020
        %v4309 = vpop.f32.mrb[0].mxu0
        %v4310 = vadd.f32 0.0, %v4309
        %v4311 = vpop.f32.mrb[0].mxu0
        %v4312 = vpop.f32.mrb[0].mxu0
        %v4313 = vadd.f32 0.0, %v4312
        %v4314 = vpop.f32.mrb[0].mxu0
        %4315 = vmatprep.mubr.bf16.mxu0 0
        %4316 = vmatmul.mubr.bf16.gmra.mrb[0].mxu0 %v4023
        %v4317 = vpop.f32.mrb[0].mxu0
        %v4318 = vadd.f32 0.0, %v4317
        %v4319 = vpop.f32.mrb[0].mxu0
        %v4320 = vpop.f32.mrb[0].mxu0
        %v4321 = vadd.f32 0.0, %v4320
        %v4322 = vpop.f32.mrb[0].mxu0
        %4323 = vmatprep.mubr.bf16.mxu0 0
        %4324 = vmatmul.mubr.bf16.gmra.mrb[0].mxu0 %v4026
        %v4325 = vpop.f32.mrb[0].mxu0
        %v4326 = vadd.f32 0.0, %v4325
        %v4327 = vpop.f32.mrb[0].mxu0
        %v4328 = vpop.f32.mrb[0].mxu0
        %v4329 = vadd.f32 0.0, %v4328
        %v4330 = vpop.f32.mrb[0].mxu0
        %4331 = vmatprep.mubr.bf16.mxu0 0
        %4332 = vmatmul.mubr.bf16.gmra.mrb[0].mxu0 %v4029
        %v4333 = vpop.f32.mrb[0].mxu0
        %v4334 = vadd.f32 0.0, %v4333
        %v4335 = vpop.f32.mrb[0].mxu0
        %v4336 = vpop.f32.mrb[0].mxu0
        %v4337 = vadd.f32 0.0, %v4336
        %v4338 = vpop.f32.mrb[0].mxu0
        %4339 = vmatprep.mubr.bf16.mxu0 0
        %4340 = vmatmul.mubr.bf16.gmra.mrb[0].mxu0 %v4032
        %v4341 = vpop.f32.mrb[0].mxu0
        %v4342 = vadd.f32 0.0, %v4341
        %v4343 = vpop.f32.mrb[0].mxu0
        %v4344 = vpop.f32.mrb[0].mxu0
        %v4345 = vadd.f32 0.0, %v4344
        %v4346 = vpop.f32.mrb[0].mxu0
        %4347 = vmatprep.mubr.bf16.mxu0 0
        %4348 = vmatmul.mubr.bf16.gmra.mrb[0].mxu0 %v4035
        %v4349 = vpop.f32.mrb[0].mxu0
        %v4350 = vadd.f32 0.0, %v4349
        %v4351 = vpop.f32.mrb[0].mxu0
        %v4352 = vpop.f32.mrb[0].mxu0
        %v4353 = vadd.f32 0.0, %v4352
        %v4354 = vpop.f32.mrb[0].mxu0
        %4355 = vmatprep.mubr.bf16.mxu0 0
        %4356 = vmatmul.mubr.bf16.gmra.mrb[0].mxu0 %v4038
        %v4357 = vpop.f32.mrb[0].mxu0
        %v4358 = vadd.f32 0.0, %v4357
        %v4359 = vpop.f32.mrb[0].mxu0
        %v4360 = vpop.f32.mrb[0].mxu0
        %v4361 = vadd.f32 0.0, %v4360
        %v4362 = vpop.f32.mrb[0].mxu0
        %4363 = vdwg.mxu0
        %v4364 = vadd.f32 %v3705, %v4078
        %v4365 = vadd.f32 %v3706, %v4081
        %v4366 = vadd.f32 %v3707, %v4086
        %v4367 = vadd.f32 %v3708, %v4089
        %v4368 = vadd.f32 %v3709, %v4094
        %v4369 = vadd.f32 %v3710, %v4097
        %v4370 = vadd.f32 %v3711, %v4102
        %v4371 = vadd.f32 %v3712, %v4105
        %v4372 = vadd.f32 %v3713, %v4110
        %v4373 = vadd.f32 %v3714, %v4113
        %v4374 = vadd.f32 %v3715, %v4118
        %v4375 = vadd.f32 %v3716, %v4121
        %v4376 = vadd.f32 %v3717, %v4126
        %v4377 = vadd.f32 %v3718, %v4129
        %v4378 = vadd.f32 %v3719, %v4134
        %v4379 = vadd.f32 %v3720, %v4137
        %v4380 = vadd.f32 %v3721, %v4142
        %v4381 = vadd.f32 %v3722, %v4145
        %v4382 = vadd.f32 %v3723, %v4150
        %v4383 = vadd.f32 %v3724, %v4153
        %v4384 = vadd.f32 %v3725, %v4158
        %v4385 = vadd.f32 %v3726, %v4161
        %v4386 = vadd.f32 %v3727, %v4166
        %v4387 = vadd.f32 %v3728, %v4169
        %v4388 = vadd.f32 %v3729, %v4174
        %v4389 = vadd.f32 %v3730, %v4177
        %v4390 = vadd.f32 %v3731, %v4182
        %v4391 = vadd.f32 %v3732, %v4185
        %v4392 = vadd.f32 %v3733, %v4190
        %v4393 = vadd.f32 %v3734, %v4193
        %v4394 = vadd.f32 %v3735, %v4198
        %v4395 = vadd.f32 %v3736, %v4201
        %v4396 = vadd.f32 %v3737, %v4206
        %v4397 = vadd.f32 %v3738, %v4209
        %v4398 = vadd.f32 %v3739, %v4214
        %v4399 = vadd.f32 %v3740, %v4217
        %v4400 = vadd.f32 %v3741, %v4222
        %v4401 = vadd.f32 %v3742, %v4225
        %v4402 = vadd.f32 %v3743, %v4230
        %v4403 = vadd.f32 %v3744, %v4233
        %v4404 = vadd.f32 %v3745, %v4238
        %v4405 = vadd.f32 %v3746, %v4241
        %v4406 = vadd.f32 %v3747, %v4246
        %v4407 = vadd.f32 %v3748, %v4249
        %v4408 = vadd.f32 %v3749, %v4254
        %v4409 = vadd.f32 %v3750, %v4257
        %v4410 = vadd.f32 %v3751, %v4262
        %v4411 = vadd.f32 %v3752, %v4265
        %v4412 = vadd.f32 %v3753, %v4270
        %v4413 = vadd.f32 %v3754, %v4273
        %v4414 = vadd.f32 %v3755, %v4278
        %v4415 = vadd.f32 %v3756, %v4281
        %v4416 = vadd.f32 %v3757, %v4286
        %v4417 = vadd.f32 %v3758, %v4289
        %v4418 = vadd.f32 %v3759, %v4294
        %v4419 = vadd.f32 %v3760, %v4297
        %v4420 = vadd.f32 %v3761, %v4302
        %v4421 = vadd.f32 %v3762, %v4305
        %v4422 = vadd.f32 %v3763, %v4310
        %v4423 = vadd.f32 %v3764, %v4313
        %v4424 = vadd.f32 %v3765, %v4318
        %v4425 = vadd.f32 %v3766, %v4321
        %v4426 = vadd.f32 %v3767, %v4326
        %v4427 = vadd.f32 %v3768, %v4329
        %v4428 = vadd.f32 %v3769, %v4334
        %v4429 = vadd.f32 %v3770, %v4337
        %v4430 = vadd.f32 %v3771, %v4342
        %v4431 = vadd.f32 %v3772, %v4345
        %v4432 = vadd.f32 %v3773, %v4350
        %v4433 = vadd.f32 %v3774, %v4353
        %v4434 = vadd.f32 %v3775, %v4358
        %v4435 = vadd.f32 %v3776, %v4361
        %v4439 = vunpack.c.l.b16 %v460
        %v4440 = vunpack.c.l.b16 %v461
        %v4441 = vunpack.c.l.b16 %v462
        %v4442 = vpack.c.b16 %v2364, %v2363
        %v4443 = vpack.c.b16 %v4439, %v2365
        %v4444 = vpack.c.b16 %v4441, %v4440
        %v4445 = vrot.slane %v4442, 1
        %v4446 = vsel %vm1780, %v1850, %v4445
        %v4447 = vrot.slane %v4443, 1
        %v4448 = vsel %vm1780, %v4445, %v4447
        %v4449 = vrot.slane %v4444, 1
        %v4450 = vsel %vm1780, %v4447, %v4449
        %v4451 = vpack.c.b16 %v3922, %v3922
        %v4452 = vrot.slane %v4451, 1
        %v4454 = vsel %vm947, %v4446, 0
        %v4457 = vsel %vm947, %v4448, 0
        %v4460 = vsel %vm947, %v4450, 0
        %v4463 = vsel %vm947, %v4449, 0
        %v4466 = vand.u32 %v4452, %v1059
        %4468 = vmatprep.subr.bf16.mxu0 0
        %4469 = vmatpush1.bf16.msra.mxu0 %v4466
        %4470 = vmatprep.subr.bf16.mxu0 0
        %4471 = vmatpush1.bf16.msra.mxu0 0
        %4472 = vmatprep.subr.bf16.mxu0 0
        %4473 = vmatpush1.bf16.msra.mxu0 0
        %4474 = vmatprep.subr.bf16.mxu0 0
        %4475 = vmatpush1.bf16.msra.mxu0 0
        %4476 = vmatprep.subr.bf16.mxu0 0
        %4477 = vmatpush1.bf16.msra.mxu0 0
        %4478 = vmatprep.subr.bf16.mxu0 0
        %4479 = vmatpush1.bf16.msra.mxu0 0
        %4480 = vmatprep.subr.bf16.mxu0 0
        %4481 = vmatpush1.bf16.msra.mxu0 0
        %4482 = vmatprep.subr.bf16.mxu0 0
        %4483 = vmatpush1.bf16.msra.mxu0 0
        %4484 = vmatprep.subr.bf16.mxu0 0
        %4485 = vmatpush1.bf16.msra.mxu0 0
        %4486 = vmatprep.subr.bf16.mxu0 0
        %4487 = vmatpush1.bf16.msra.mxu0 0
        %4488 = vmatprep.subr.bf16.mxu0 0
        %4489 = vmatpush1.bf16.msra.mxu0 0
        %4490 = vmatprep.subr.bf16.mxu0 0
        %4491 = vmatpush1.bf16.msra.mxu0 0
        %4492 = vmatprep.subr.bf16.mxu0 0
        %4493 = vmatpush1.bf16.msra.mxu0 0
        %4494 = vmatprep.subr.bf16.mxu0 0
        %4495 = vmatpush1.bf16.msra.mxu0 0
        %4496 = vmatprep.subr.bf16.mxu0 0
        %4497 = vmatpush1.bf16.msra.mxu0 0
        %4498 = vmatprep.subr.bf16.mxu0 0
        %4499 = vmatpush1.bf16.msra.mxu0 0
        %4500 = vmatprep.mubr.bf16.mxu0 0
        %4501 = vmatmul.mubr.bf16.gmra.mrb[0].mxu0 %v1866
        %v4502 = vpop.f32.mrb[0].mxu0
        %v4503 = vadd.f32 0.0, %v4502
        %v4504 = vpop.f32.mrb[0].mxu0
        %v4505 = vpop.f32.mrb[0].mxu0
        %v4506 = vadd.f32 0.0, %v4505
        %v4507 = vpop.f32.mrb[0].mxu0
        %4508 = vmatprep.mubr.bf16.mxu0 0
        %4509 = vmatmul.mubr.bf16.gmra.mrb[0].mxu0 %v1869
        %v4510 = vpop.f32.mrb[0].mxu0
        %v4511 = vadd.f32 0.0, %v4510
        %v4512 = vpop.f32.mrb[0].mxu0
        %v4513 = vpop.f32.mrb[0].mxu0
        %v4514 = vadd.f32 0.0, %v4513
        %v4515 = vpop.f32.mrb[0].mxu0
        %4516 = vmatprep.mubr.bf16.mxu0 0
        %4517 = vmatmul.mubr.bf16.gmra.mrb[0].mxu0 %v1872
        %v4518 = vpop.f32.mrb[0].mxu0
        %v4519 = vadd.f32 0.0, %v4518
        %v4520 = vpop.f32.mrb[0].mxu0
        %v4521 = vpop.f32.mrb[0].mxu0
        %v4522 = vadd.f32 0.0, %v4521
        %v4523 = vpop.f32.mrb[0].mxu0
        %4524 = vmatprep.mubr.bf16.mxu0 0
        %4525 = vmatmul.mubr.bf16.gmra.mrb[0].mxu0 %v1875
        %v4526 = vpop.f32.mrb[0].mxu0
        %v4527 = vadd.f32 0.0, %v4526
        %v4528 = vpop.f32.mrb[0].mxu0
        %v4529 = vpop.f32.mrb[0].mxu0
        %v4530 = vadd.f32 0.0, %v4529
        %v4531 = vpop.f32.mrb[0].mxu0
        %4532 = vmatprep.mubr.bf16.mxu0 0
        %4533 = vmatmul.mubr.bf16.gmra.mrb[0].mxu0 %v1878
        %v4534 = vpop.f32.mrb[0].mxu0
        %v4535 = vadd.f32 0.0, %v4534
        %v4536 = vpop.f32.mrb[0].mxu0
        %v4537 = vpop.f32.mrb[0].mxu0
        %v4538 = vadd.f32 0.0, %v4537
        %v4539 = vpop.f32.mrb[0].mxu0
        %4540 = vmatprep.mubr.bf16.mxu0 0
        %4541 = vmatmul.mubr.bf16.gmra.mrb[0].mxu0 %v1881
        %v4542 = vpop.f32.mrb[0].mxu0
        %v4543 = vadd.f32 0.0, %v4542
        %v4544 = vpop.f32.mrb[0].mxu0
        %v4545 = vpop.f32.mrb[0].mxu0
        %v4546 = vadd.f32 0.0, %v4545
        %v4547 = vpop.f32.mrb[0].mxu0
        %4548 = vmatprep.mubr.bf16.mxu0 0
        %4549 = vmatmul.mubr.bf16.gmra.mrb[0].mxu0 %v1884
        %v4550 = vpop.f32.mrb[0].mxu0
        %v4551 = vadd.f32 0.0, %v4550
        %v4552 = vpop.f32.mrb[0].mxu0
        %v4553 = vpop.f32.mrb[0].mxu0
        %v4554 = vadd.f32 0.0, %v4553
        %v4555 = vpop.f32.mrb[0].mxu0
        %4556 = vmatprep.mubr.bf16.mxu0 0
        %4557 = vmatmul.mubr.bf16.gmra.mrb[0].mxu0 %v1887
        %v4558 = vpop.f32.mrb[0].mxu0
        %v4559 = vadd.f32 0.0, %v4558
        %v4560 = vpop.f32.mrb[0].mxu0
        %v4561 = vpop.f32.mrb[0].mxu0
        %v4562 = vadd.f32 0.0, %v4561
        %v4563 = vpop.f32.mrb[0].mxu0
        %4564 = vmatprep.mubr.bf16.mxu0 0
        %4565 = vmatmul.mubr.bf16.gmra.mrb[0].mxu0 %v1890
        %v4566 = vpop.f32.mrb[0].mxu0
        %v4567 = vadd.f32 0.0, %v4566
        %v4568 = vpop.f32.mrb[0].mxu0
        %v4569 = vpop.f32.mrb[0].mxu0
        %v4570 = vadd.f32 0.0, %v4569
        %v4571 = vpop.f32.mrb[0].mxu0
        %4572 = vmatprep.mubr.bf16.mxu0 0
        %4573 = vmatmul.mubr.bf16.gmra.mrb[0].mxu0 %v1893
        %v4574 = vpop.f32.mrb[0].mxu0
        %v4575 = vadd.f32 0.0, %v4574
        %v4576 = vpop.f32.mrb[0].mxu0
        %v4577 = vpop.f32.mrb[0].mxu0
        %v4578 = vadd.f32 0.0, %v4577
        %v4579 = vpop.f32.mrb[0].mxu0
        %4580 = vmatprep.mubr.bf16.mxu0 0
        %4581 = vmatmul.mubr.bf16.gmra.mrb[0].mxu0 %v1896
        %v4582 = vpop.f32.mrb[0].mxu0
        %v4583 = vadd.f32 0.0, %v4582
        %v4584 = vpop.f32.mrb[0].mxu0
        %v4585 = vpop.f32.mrb[0].mxu0
        %v4586 = vadd.f32 0.0, %v4585
        %v4587 = vpop.f32.mrb[0].mxu0
        %4588 = vmatprep.mubr.bf16.mxu0 0
        %4589 = vmatmul.mubr.bf16.gmra.mrb[0].mxu0 %v1899
        %v4590 = vpop.f32.mrb[0].mxu0
        %v4591 = vadd.f32 0.0, %v4590
        %v4592 = vpop.f32.mrb[0].mxu0
        %v4593 = vpop.f32.mrb[0].mxu0
        %v4594 = vadd.f32 0.0, %v4593
        %v4595 = vpop.f32.mrb[0].mxu0
        %4596 = vmatprep.mubr.bf16.mxu0 0
        %4597 = vmatmul.mubr.bf16.gmra.mrb[0].mxu0 %v1902
        %v4598 = vpop.f32.mrb[0].mxu0
        %v4599 = vadd.f32 0.0, %v4598
        %v4600 = vpop.f32.mrb[0].mxu0
        %v4601 = vpop.f32.mrb[0].mxu0
        %v4602 = vadd.f32 0.0, %v4601
        %v4603 = vpop.f32.mrb[0].mxu0
        %4604 = vmatprep.mubr.bf16.mxu0 0
        %4605 = vmatmul.mubr.bf16.gmra.mrb[0].mxu0 %v1905
        %v4606 = vpop.f32.mrb[0].mxu0
        %v4607 = vadd.f32 0.0, %v4606
        %v4608 = vpop.f32.mrb[0].mxu0
        %v4609 = vpop.f32.mrb[0].mxu0
        %v4610 = vadd.f32 0.0, %v4609
        %v4611 = vpop.f32.mrb[0].mxu0
        %4612 = vmatprep.mubr.bf16.mxu0 0
        %4613 = vmatmul.mubr.bf16.gmra.mrb[0].mxu0 %v1908
        %v4614 = vpop.f32.mrb[0].mxu0
        %v4615 = vadd.f32 0.0, %v4614
        %v4616 = vpop.f32.mrb[0].mxu0
        %v4617 = vpop.f32.mrb[0].mxu0
        %v4618 = vadd.f32 0.0, %v4617
        %v4619 = vpop.f32.mrb[0].mxu0
        %4620 = vmatprep.mubr.bf16.mxu0 0
        %4621 = vmatmul.mubr.bf16.gmra.mrb[0].mxu0 %v1911
        %v4622 = vpop.f32.mrb[0].mxu0
        %v4623 = vadd.f32 0.0, %v4622
        %v4624 = vpop.f32.mrb[0].mxu0
        %v4625 = vpop.f32.mrb[0].mxu0
        %v4626 = vadd.f32 0.0, %v4625
        %v4627 = vpop.f32.mrb[0].mxu0
        %4628 = vmatprep.mubr.bf16.mxu0 0
        %4629 = vmatmul.mubr.bf16.gmra.mrb[0].mxu0 %v1914
        %v4630 = vpop.f32.mrb[0].mxu0
        %v4631 = vadd.f32 0.0, %v4630
        %v4632 = vpop.f32.mrb[0].mxu0
        %v4633 = vpop.f32.mrb[0].mxu0
        %v4634 = vadd.f32 0.0, %v4633
        %v4635 = vpop.f32.mrb[0].mxu0
        %4636 = vmatprep.mubr.bf16.mxu0 0
        %4637 = vmatmul.mubr.bf16.gmra.mrb[0].mxu0 %v1917
        %v4638 = vpop.f32.mrb[0].mxu0
        %v4639 = vadd.f32 0.0, %v4638
        %v4640 = vpop.f32.mrb[0].mxu0
        %v4641 = vpop.f32.mrb[0].mxu0
        %v4642 = vadd.f32 0.0, %v4641
        %v4643 = vpop.f32.mrb[0].mxu0
        %4644 = vmatprep.mubr.bf16.mxu0 0
        %4645 = vmatmul.mubr.bf16.gmra.mrb[0].mxu0 %v1920
        %v4646 = vpop.f32.mrb[0].mxu0
        %v4647 = vadd.f32 0.0, %v4646
        %v4648 = vpop.f32.mrb[0].mxu0
        %v4649 = vpop.f32.mrb[0].mxu0
        %v4650 = vadd.f32 0.0, %v4649
        %v4651 = vpop.f32.mrb[0].mxu0
        %4652 = vmatprep.mubr.bf16.mxu0 0
        %4653 = vmatmul.mubr.bf16.gmra.mrb[0].mxu0 %v1923
        %v4654 = vpop.f32.mrb[0].mxu0
        %v4655 = vadd.f32 0.0, %v4654
        %v4656 = vpop.f32.mrb[0].mxu0
        %v4657 = vpop.f32.mrb[0].mxu0
        %v4658 = vadd.f32 0.0, %v4657
        %v4659 = vpop.f32.mrb[0].mxu0
        %4660 = vmatprep.mubr.bf16.mxu0 0
        %4661 = vmatmul.mubr.bf16.gmra.mrb[0].mxu0 %v1926
        %v4662 = vpop.f32.mrb[0].mxu0
        %v4663 = vadd.f32 0.0, %v4662
        %v4664 = vpop.f32.mrb[0].mxu0
        %v4665 = vpop.f32.mrb[0].mxu0
        %v4666 = vadd.f32 0.0, %v4665
        %v4667 = vpop.f32.mrb[0].mxu0
        %4668 = vmatprep.mubr.bf16.mxu0 0
        %4669 = vmatmul.mubr.bf16.gmra.mrb[0].mxu0 %v1929
        %v4670 = vpop.f32.mrb[0].mxu0
        %v4671 = vadd.f32 0.0, %v4670
        %v4672 = vpop.f32.mrb[0].mxu0
        %v4673 = vpop.f32.mrb[0].mxu0
        %v4674 = vadd.f32 0.0, %v4673
        %v4675 = vpop.f32.mrb[0].mxu0
        %4676 = vmatprep.mubr.bf16.mxu0 0
        %4677 = vmatmul.mubr.bf16.gmra.mrb[0].mxu0 %v1932
        %v4678 = vpop.f32.mrb[0].mxu0
        %v4679 = vadd.f32 0.0, %v4678
        %v4680 = vpop.f32.mrb[0].mxu0
        %v4681 = vpop.f32.mrb[0].mxu0
        %v4682 = vadd.f32 0.0, %v4681
        %v4683 = vpop.f32.mrb[0].mxu0
        %4684 = vmatprep.mubr.bf16.mxu0 0
        %4685 = vmatmul.mubr.bf16.gmra.mrb[0].mxu0 %v1935
        %v4686 = vpop.f32.mrb[0].mxu0
        %v4687 = vadd.f32 0.0, %v4686
        %v4688 = vpop.f32.mrb[0].mxu0
        %v4689 = vpop.f32.mrb[0].mxu0
        %v4690 = vadd.f32 0.0, %v4689
        %v4691 = vpop.f32.mrb[0].mxu0
        %4692 = vmatprep.mubr.bf16.mxu0 0
        %4693 = vmatmul.mubr.bf16.gmra.mrb[0].mxu0 %v1938
        %v4694 = vpop.f32.mrb[0].mxu0
        %v4695 = vadd.f32 0.0, %v4694
        %v4696 = vpop.f32.mrb[0].mxu0
        %v4697 = vpop.f32.mrb[0].mxu0
        %v4698 = vadd.f32 0.0, %v4697
        %v4699 = vpop.f32.mrb[0].mxu0
        %4700 = vmatprep.mubr.bf16.mxu0 0
        %4701 = vmatmul.mubr.bf16.gmra.mrb[0].mxu0 %v1941
        %v4702 = vpop.f32.mrb[0].mxu0
        %v4703 = vadd.f32 0.0, %v4702
        %v4704 = vpop.f32.mrb[0].mxu0
        %v4705 = vpop.f32.mrb[0].mxu0
        %v4706 = vadd.f32 0.0, %v4705
        %v4707 = vpop.f32.mrb[0].mxu0
        %4708 = vmatprep.mubr.bf16.mxu0 0
        %4709 = vmatmul.mubr.bf16.gmra.mrb[0].mxu0 %v1944
        %v4710 = vpop.f32.mrb[0].mxu0
        %v4711 = vadd.f32 0.0, %v4710
        %v4712 = vpop.f32.mrb[0].mxu0
        %v4713 = vpop.f32.mrb[0].mxu0
        %v4714 = vadd.f32 0.0, %v4713
        %v4715 = vpop.f32.mrb[0].mxu0
        %4716 = vmatprep.mubr.bf16.mxu0 0
        %4717 = vmatmul.mubr.bf16.gmra.mrb[0].mxu0 %v1947
        %v4718 = vpop.f32.mrb[0].mxu0
        %v4719 = vadd.f32 0.0, %v4718
        %v4720 = vpop.f32.mrb[0].mxu0
        %v4721 = vpop.f32.mrb[0].mxu0
        %v4722 = vadd.f32 0.0, %v4721
        %v4723 = vpop.f32.mrb[0].mxu0
        %4724 = vmatprep.mubr.bf16.mxu0 0
        %4725 = vmatmul.mubr.bf16.gmra.mrb[0].mxu0 %v1950
        %v4726 = vpop.f32.mrb[0].mxu0
        %v4727 = vadd.f32 0.0, %v4726
        %v4728 = vpop.f32.mrb[0].mxu0
        %v4729 = vpop.f32.mrb[0].mxu0
        %v4730 = vadd.f32 0.0, %v4729
        %v4731 = vpop.f32.mrb[0].mxu0
        %4732 = vmatprep.mubr.bf16.mxu0 0
        %4733 = vmatmul.mubr.bf16.gmra.mrb[0].mxu0 %v1953
        %v4734 = vpop.f32.mrb[0].mxu0
        %v4735 = vadd.f32 0.0, %v4734
        %v4736 = vpop.f32.mrb[0].mxu0
        %v4737 = vpop.f32.mrb[0].mxu0
        %v4738 = vadd.f32 0.0, %v4737
        %v4739 = vpop.f32.mrb[0].mxu0
        %4740 = vmatprep.mubr.bf16.mxu0 0
        %4741 = vmatmul.mubr.bf16.gmra.mrb[0].mxu0 %v1956
        %v4742 = vpop.f32.mrb[0].mxu0
        %v4743 = vadd.f32 0.0, %v4742
        %v4744 = vpop.f32.mrb[0].mxu0
        %v4745 = vpop.f32.mrb[0].mxu0
        %v4746 = vadd.f32 0.0, %v4745
        %v4747 = vpop.f32.mrb[0].mxu0
        %4748 = vmatprep.mubr.bf16.mxu0 0
        %4749 = vmatmul.mubr.bf16.gmra.mrb[0].mxu0 %v1959
        %v4750 = vpop.f32.mrb[0].mxu0
        %v4751 = vadd.f32 0.0, %v4750
        %v4752 = vpop.f32.mrb[0].mxu0
        %v4753 = vpop.f32.mrb[0].mxu0
        %v4754 = vadd.f32 0.0, %v4753
        %v4755 = vpop.f32.mrb[0].mxu0
        %4756 = vmatprep.mubr.bf16.mxu0 0
        %4757 = vmatmul.mubr.bf16.gmra.mrb[0].mxu0 %v4454
        %v4758 = vpop.f32.mrb[0].mxu0
        %v4759 = vadd.f32 0.0, %v4758
        %v4760 = vpop.f32.mrb[0].mxu0
        %v4761 = vpop.f32.mrb[0].mxu0
        %v4762 = vadd.f32 0.0, %v4761
        %v4763 = vpop.f32.mrb[0].mxu0
        %4764 = vmatprep.mubr.bf16.mxu0 0
        %4765 = vmatmul.mubr.bf16.gmra.mrb[0].mxu0 %v4457
        %v4766 = vpop.f32.mrb[0].mxu0
        %v4767 = vadd.f32 0.0, %v4766
        %v4768 = vpop.f32.mrb[0].mxu0
        %v4769 = vpop.f32.mrb[0].mxu0
        %v4770 = vadd.f32 0.0, %v4769
        %v4771 = vpop.f32.mrb[0].mxu0
        %4772 = vmatprep.mubr.bf16.mxu0 0
        %4773 = vmatmul.mubr.bf16.gmra.mrb[0].mxu0 %v4460
        %v4774 = vpop.f32.mrb[0].mxu0
        %v4775 = vadd.f32 0.0, %v4774
        %v4776 = vpop.f32.mrb[0].mxu0
        %v4777 = vpop.f32.mrb[0].mxu0
        %v4778 = vadd.f32 0.0, %v4777
        %v4779 = vpop.f32.mrb[0].mxu0
        %4780 = vmatprep.mubr.bf16.mxu0 0
        %4781 = vmatmul.mubr.bf16.gmra.mrb[0].mxu0 %v4463
        %v4782 = vpop.f32.mrb[0].mxu0
        %v4783 = vadd.f32 0.0, %v4782
        %v4784 = vpop.f32.mrb[0].mxu0
        %v4785 = vpop.f32.mrb[0].mxu0
        %v4786 = vadd.f32 0.0, %v4785
        %v4787 = vpop.f32.mrb[0].mxu0
        %4788 = vdwg.mxu0
        %v4789 = vadd.f32 %v4364, %v4503
        %v4790 = vadd.f32 %v4365, %v4506
        %v4791 = vadd.f32 %v4366, %v4511
        %v4792 = vadd.f32 %v4367, %v4514
        %v4793 = vadd.f32 %v4368, %v4519
        %v4794 = vadd.f32 %v4369, %v4522
        %v4795 = vadd.f32 %v4370, %v4527
        %v4796 = vadd.f32 %v4371, %v4530
        %v4797 = vadd.f32 %v4372, %v4535
        %v4798 = vadd.f32 %v4373, %v4538
        %v4799 = vadd.f32 %v4374, %v4543
        %v4800 = vadd.f32 %v4375, %v4546
        %v4801 = vadd.f32 %v4376, %v4551
        %v4802 = vadd.f32 %v4377, %v4554
        %v4803 = vadd.f32 %v4378, %v4559
        %v4804 = vadd.f32 %v4379, %v4562
        %v4805 = vadd.f32 %v4380, %v4567
        %v4806 = vadd.f32 %v4381, %v4570
        %v4807 = vadd.f32 %v4382, %v4575
        %v4808 = vadd.f32 %v4383, %v4578
        %v4809 = vadd.f32 %v4384, %v4583
        %v4810 = vadd.f32 %v4385, %v4586
        %v4811 = vadd.f32 %v4386, %v4591
        %v4812 = vadd.f32 %v4387, %v4594
        %v4813 = vadd.f32 %v4388, %v4599
        %v4814 = vadd.f32 %v4389, %v4602
        %v4815 = vadd.f32 %v4390, %v4607
        %v4816 = vadd.f32 %v4391, %v4610
        %v4817 = vadd.f32 %v4392, %v4615
        %v4818 = vadd.f32 %v4393, %v4618
        %v4819 = vadd.f32 %v4394, %v4623
        %v4820 = vadd.f32 %v4395, %v4626
        %v4821 = vadd.f32 %v4396, %v4631
        %v4822 = vadd.f32 %v4397, %v4634
        %v4823 = vadd.f32 %v4398, %v4639
        %v4824 = vadd.f32 %v4399, %v4642
        %v4825 = vadd.f32 %v4400, %v4647
        %v4826 = vadd.f32 %v4401, %v4650
        %v4827 = vadd.f32 %v4402, %v4655
        %v4828 = vadd.f32 %v4403, %v4658
        %v4829 = vadd.f32 %v4404, %v4663
        %v4830 = vadd.f32 %v4405, %v4666
        %v4831 = vadd.f32 %v4406, %v4671
        %v4832 = vadd.f32 %v4407, %v4674
        %v4833 = vadd.f32 %v4408, %v4679
        %v4834 = vadd.f32 %v4409, %v4682
        %v4835 = vadd.f32 %v4410, %v4687
        %v4836 = vadd.f32 %v4411, %v4690
        %v4837 = vadd.f32 %v4412, %v4695
        %v4838 = vadd.f32 %v4413, %v4698
        %v4839 = vadd.f32 %v4414, %v4703
        %v4840 = vadd.f32 %v4415, %v4706
        %v4841 = vadd.f32 %v4416, %v4711
        %v4842 = vadd.f32 %v4417, %v4714
        %v4843 = vadd.f32 %v4418, %v4719
        %v4844 = vadd.f32 %v4419, %v4722
        %v4845 = vadd.f32 %v4420, %v4727
        %v4846 = vadd.f32 %v4421, %v4730
        %v4847 = vadd.f32 %v4422, %v4735
        %v4848 = vadd.f32 %v4423, %v4738
        %v4849 = vadd.f32 %v4424, %v4743
        %v4850 = vadd.f32 %v4425, %v4746
        %v4851 = vadd.f32 %v4426, %v4751
        %v4852 = vadd.f32 %v4427, %v4754
        %v4853 = vadd.f32 %v4428, %v4759
        %v4854 = vadd.f32 %v4429, %v4762
        %v4855 = vadd.f32 %v4430, %v4767
        %v4856 = vadd.f32 %v4431, %v4770
        %v4857 = vadd.f32 %v4432, %v4775
        %v4858 = vadd.f32 %v4433, %v4778
        %v4859 = vadd.f32 %v4434, %v4783
        %v4860 = vadd.f32 %v4435, %v4786
        %v4861 = vrot.slane %v677, 1
        %v4862 = vrot.slane %v673, 2
        %v4863 = vor.u32 %v4861, %v4862
        %v4864 = vrot.slane %v685, 1
        %v4865 = vrot.slane %v681, 2
        %v4866 = vor.u32 %v4864, %v4865
        %v4867 = vsel %vm3777, %v4863, %v4866
        %v4868 = vrot.slane %v693, 1
        %v4869 = vrot.slane %v689, 2
        %v4870 = vor.u32 %v4868, %v4869
        %v4871 = vsel %vm3777, %v4866, %v4870
        %v4872 = vrot.slane %v701, 1
        %v4873 = vrot.slane %v697, 2
        %v4874 = vor.u32 %v4872, %v4873
        %v4875 = vsel %vm3777, %v4870, %v4874
        %v4876 = vrot.slane %v709, 1
        %v4877 = vrot.slane %v705, 2
        %v4878 = vor.u32 %v4876, %v4877
        %v4879 = vsel %vm3777, %v4874, %v4878
        %v4880 = vrot.slane %v717, 1
        %v4881 = vrot.slane %v713, 2
        %v4882 = vor.u32 %v4880, %v4881
        %v4883 = vsel %vm3777, %v4878, %v4882
        %v4884 = vrot.slane %v725, 1
        %v4885 = vrot.slane %v721, 2
        %v4886 = vor.u32 %v4884, %v4885
        %v4887 = vsel %vm3777, %v4882, %v4886
        %v4888 = vrot.slane %v733, 1
        %v4889 = vrot.slane %v729, 2
        %v4890 = vor.u32 %v4888, %v4889
        %v4891 = vsel %vm3777, %v4886, %v4890
        %v4892 = vrot.slane %v741, 1
        %v4893 = vrot.slane %v737, 2
        %v4894 = vor.u32 %v4892, %v4893
        %v4895 = vsel %vm3777, %v4890, %v4894
        %v4896 = vrot.slane %v749, 1
        %v4897 = vrot.slane %v745, 2
        %v4898 = vor.u32 %v4896, %v4897
        %v4899 = vsel %vm3777, %v4894, %v4898
        %v4900 = vrot.slane %v757, 1
        %v4901 = vrot.slane %v753, 2
        %v4902 = vor.u32 %v4900, %v4901
        %v4903 = vsel %vm3777, %v4898, %v4902
        %v4904 = vrot.slane %v765, 1
        %v4905 = vrot.slane %v761, 2
        %v4906 = vor.u32 %v4904, %v4905
        %v4907 = vsel %vm3777, %v4902, %v4906
        %v4908 = vrot.slane %v773, 1
        %v4909 = vrot.slane %v769, 2
        %v4910 = vor.u32 %v4908, %v4909
        %v4911 = vsel %vm3777, %v4906, %v4910
        %v4912 = vrot.slane %v781, 1
        %v4913 = vrot.slane %v777, 2
        %v4914 = vor.u32 %v4912, %v4913
        %v4915 = vsel %vm3777, %v4910, %v4914
        %v4916 = vrot.slane %v789, 1
        %v4917 = vrot.slane %v785, 2
        %v4918 = vor.u32 %v4916, %v4917
        %v4919 = vsel %vm3777, %v4914, %v4918
        %v4920 = vrot.slane %v797, 1
        %v4921 = vrot.slane %v793, 2
        %v4922 = vor.u32 %v4920, %v4921
        %v4923 = vsel %vm3777, %v4918, %v4922
        %v4924 = vrot.slane %v805, 1
        %v4925 = vrot.slane %v801, 2
        %v4926 = vor.u32 %v4924, %v4925
        %v4927 = vsel %vm3777, %v4922, %v4926
        %v4928 = vrot.slane %v813, 1
        %v4929 = vrot.slane %v809, 2
        %v4930 = vor.u32 %v4928, %v4929
        %v4931 = vsel %vm3777, %v4926, %v4930
        %v4932 = vrot.slane %v821, 1
        %v4933 = vrot.slane %v817, 2
        %v4934 = vor.u32 %v4932, %v4933
        %v4935 = vsel %vm3777, %v4930, %v4934
        %v4936 = vrot.slane %v829, 1
        %v4937 = vrot.slane %v825, 2
        %v4938 = vor.u32 %v4936, %v4937
        %v4939 = vsel %vm3777, %v4934, %v4938
        %v4940 = vrot.slane %v837, 1
        %v4941 = vrot.slane %v833, 2
        %v4942 = vor.u32 %v4940, %v4941
        %v4943 = vsel %vm3777, %v4938, %v4942
        %v4944 = vrot.slane %v845, 1
        %v4945 = vrot.slane %v841, 2
        %v4946 = vor.u32 %v4944, %v4945
        %v4947 = vsel %vm3777, %v4942, %v4946
        %v4948 = vrot.slane %v853, 1
        %v4949 = vrot.slane %v849, 2
        %v4950 = vor.u32 %v4948, %v4949
        %v4951 = vsel %vm3777, %v4946, %v4950
        %v4952 = vrot.slane %v861, 1
        %v4953 = vrot.slane %v857, 2
        %v4954 = vor.u32 %v4952, %v4953
        %v4955 = vsel %vm3777, %v4950, %v4954
        %v4956 = vrot.slane %v869, 1
        %v4957 = vrot.slane %v865, 2
        %v4958 = vor.u32 %v4956, %v4957
        %v4959 = vsel %vm3777, %v4954, %v4958
        %v4960 = vrot.slane %v877, 1
        %v4961 = vrot.slane %v873, 2
        %v4962 = vor.u32 %v4960, %v4961
        %v4963 = vsel %vm3777, %v4958, %v4962
        %v4964 = vrot.slane %v885, 1
        %v4965 = vrot.slane %v881, 2
        %v4966 = vor.u32 %v4964, %v4965
        %v4967 = vsel %vm3777, %v4962, %v4966
        %v4968 = vrot.slane %v893, 1
        %v4969 = vrot.slane %v889, 2
        %v4970 = vor.u32 %v4968, %v4969
        %v4971 = vsel %vm3777, %v4966, %v4970
        %v4972 = vrot.slane %v901, 1
        %v4973 = vrot.slane %v897, 2
        %v4974 = vor.u32 %v4972, %v4973
        %v4975 = vsel %vm3777, %v4970, %v4974
        %v4976 = vrot.slane %v909, 1
        %v4977 = vrot.slane %v905, 2
        %v4978 = vor.u32 %v4976, %v4977
        %v4979 = vsel %vm3777, %v4974, %v4978
        %v4980 = vrot.slane %v917, 1
        %v4981 = vrot.slane %v913, 2
        %v4982 = vor.u32 %v4980, %v4981
        %v4983 = vsel %vm3777, %v4978, %v4982
        %v4984 = vrot.slane %v925, 1
        %v4985 = vrot.slane %v921, 2
        %v4986 = vor.u32 %v4984, %v4985
        %v4987 = vsel %vm3777, %v4982, %v4986
        %v4988 = vrot.slane %v933, 1
        %v4989 = vrot.slane %v929, 2
        %v4990 = vor.u32 %v4988, %v4989
        %v4991 = vsel %vm3777, %v4986, %v4990
        %v4993 = vshrl.u32 %v4442, 16
        %v4995 = vrot.slane %v4993, 1
        %v4996 = vshll.u32 %v4442, 16
        %v4998 = vrot.slane %v4996, 2
        %v4999 = vor.u32 %v4995, %v4998
        %v5000 = vsel %vm3777, %v4990, %v4999
        %v5002 = vshrl.u32 %v4443, 16
        %v5004 = vrot.slane %v5002, 1
        %v5005 = vshll.u32 %v4443, 16
        %v5007 = vrot.slane %v5005, 2
        %v5008 = vor.u32 %v5004, %v5007
        %v5009 = vsel %vm3777, %v4999, %v5008
        %v5011 = vshrl.u32 %v4444, 16
        %v5013 = vrot.slane %v5011, 1
        %v5014 = vshll.u32 %v4444, 16
        %v5016 = vrot.slane %v5014, 2
        %v5017 = vor.u32 %v5013, %v5016
        %v5018 = vsel %vm3777, %v5008, %v5017
        %v5020 = vshrl.u32 %v4451, 16
        %v5022 = vrot.slane %v5020, 2
        %v5023 = vshll.u32 %v4451, 16
        %v5025 = vrot.slane %v5023, 3
        %v5026 = vor.u32 %v5022, %v5025
        %v5028 = vsel %vm947, %v4867, 0
        %v5031 = vsel %vm947, %v4871, 0
        %v5034 = vsel %vm947, %v4875, 0
        %v5037 = vsel %vm947, %v4879, 0
        %v5040 = vsel %vm947, %v4883, 0
        %v5043 = vsel %vm947, %v4887, 0
        %v5046 = vsel %vm947, %v4891, 0
        %v5049 = vsel %vm947, %v4895, 0
        %v5052 = vsel %vm947, %v4899, 0
        %v5055 = vsel %vm947, %v4903, 0
        %v5058 = vsel %vm947, %v4907, 0
        %v5061 = vsel %vm947, %v4911, 0
        %v5064 = vsel %vm947, %v4915, 0
        %v5067 = vsel %vm947, %v4919, 0
        %v5070 = vsel %vm947, %v4923, 0
        %v5073 = vsel %vm947, %v4927, 0
        %v5076 = vsel %vm947, %v4931, 0
        %v5079 = vsel %vm947, %v4935, 0
        %v5082 = vsel %vm947, %v4939, 0
        %v5085 = vsel %vm947, %v4943, 0
        %v5088 = vsel %vm947, %v4947, 0
        %v5091 = vsel %vm947, %v4951, 0
        %v5094 = vsel %vm947, %v4955, 0
        %v5097 = vsel %vm947, %v4959, 0
        %v5100 = vsel %vm947, %v4963, 0
        %v5103 = vsel %vm947, %v4967, 0
        %v5106 = vsel %vm947, %v4971, 0
        %v5109 = vsel %vm947, %v4975, 0
        %v5112 = vsel %vm947, %v4979, 0
        %v5115 = vsel %vm947, %v4983, 0
        %v5118 = vsel %vm947, %v4987, 0
        %v5121 = vsel %vm947, %v4991, 0
        %v5124 = vsel %vm947, %v5000, 0
        %v5127 = vsel %vm947, %v5009, 0
        %v5130 = vsel %vm947, %v5018, 0
        %v5133 = vsel %vm947, %v5017, 0
        %v5136 = vand.u32 %v5026, %v1059
        %5138 = vmatprep.subr.bf16.mxu0 0
        %5139 = vmatpush1.bf16.msra.mxu0 %v5136
        %5140 = vmatprep.subr.bf16.mxu0 0
        %5141 = vmatpush1.bf16.msra.mxu0 0
        %5142 = vmatprep.subr.bf16.mxu0 0
        %5143 = vmatpush1.bf16.msra.mxu0 0
        %5144 = vmatprep.subr.bf16.mxu0 0
        %5145 = vmatpush1.bf16.msra.mxu0 0
        %5146 = vmatprep.subr.bf16.mxu0 0
        %5147 = vmatpush1.bf16.msra.mxu0 0
        %5148 = vmatprep.subr.bf16.mxu0 0
        %5149 = vmatpush1.bf16.msra.mxu0 0
        %5150 = vmatprep.subr.bf16.mxu0 0
        %5151 = vmatpush1.bf16.msra.mxu0 0
        %5152 = vmatprep.subr.bf16.mxu0 0
        %5153 = vmatpush1.bf16.msra.mxu0 0
        %5154 = vmatprep.subr.bf16.mxu0 0
        %5155 = vmatpush1.bf16.msra.mxu0 0
        %5156 = vmatprep.subr.bf16.mxu0 0
        %5157 = vmatpush1.bf16.msra.mxu0 0
        %5158 = vmatprep.subr.bf16.mxu0 0
        %5159 = vmatpush1.bf16.msra.mxu0 0
        %5160 = vmatprep.subr.bf16.mxu0 0
        %5161 = vmatpush1.bf16.msra.mxu0 0
        %5162 = vmatprep.subr.bf16.mxu0 0
        %5163 = vmatpush1.bf16.msra.mxu0 0
        %5164 = vmatprep.subr.bf16.mxu0 0
        %5165 = vmatpush1.bf16.msra.mxu0 0
        %5166 = vmatprep.subr.bf16.mxu0 0
        %5167 = vmatpush1.bf16.msra.mxu0 0
        %5168 = vmatprep.subr.bf16.mxu0 0
        %5169 = vmatpush1.bf16.msra.mxu0 0
        %5170 = vmatprep.mubr.bf16.mxu0 0
        %5171 = vmatmul.mubr.bf16.gmra.mrb[0].mxu0 %v5028
        %v5172 = vpop.f32.mrb[0].mxu0
        %v5173 = vadd.f32 0.0, %v5172
        %v5174 = vpop.f32.mrb[0].mxu0
        %v5175 = vpop.f32.mrb[0].mxu0
        %v5176 = vadd.f32 0.0, %v5175
        %v5177 = vpop.f32.mrb[0].mxu0
        %5178 = vmatprep.mubr.bf16.mxu0 0
        %5179 = vmatmul.mubr.bf16.gmra.mrb[0].mxu0 %v5031
        %v5180 = vpop.f32.mrb[0].mxu0
        %v5181 = vadd.f32 0.0, %v5180
        %v5182 = vpop.f32.mrb[0].mxu0
        %v5183 = vpop.f32.mrb[0].mxu0
        %v5184 = vadd.f32 0.0, %v5183
        %v5185 = vpop.f32.mrb[0].mxu0
        %5186 = vmatprep.mubr.bf16.mxu0 0
        %5187 = vmatmul.mubr.bf16.gmra.mrb[0].mxu0 %v5034
        %v5188 = vpop.f32.mrb[0].mxu0
        %v5189 = vadd.f32 0.0, %v5188
        %v5190 = vpop.f32.mrb[0].mxu0
        %v5191 = vpop.f32.mrb[0].mxu0
        %v5192 = vadd.f32 0.0, %v5191
        %v5193 = vpop.f32.mrb[0].mxu0
        %5194 = vmatprep.mubr.bf16.mxu0 0
        %5195 = vmatmul.mubr.bf16.gmra.mrb[0].mxu0 %v5037
        %v5196 = vpop.f32.mrb[0].mxu0
        %v5197 = vadd.f32 0.0, %v5196
        %v5198 = vpop.f32.mrb[0].mxu0
        %v5199 = vpop.f32.mrb[0].mxu0
        %v5200 = vadd.f32 0.0, %v5199
        %v5201 = vpop.f32.mrb[0].mxu0
        %5202 = vmatprep.mubr.bf16.mxu0 0
        %5203 = vmatmul.mubr.bf16.gmra.mrb[0].mxu0 %v5040
        %v5204 = vpop.f32.mrb[0].mxu0
        %v5205 = vadd.f32 0.0, %v5204
        %v5206 = vpop.f32.mrb[0].mxu0
        %v5207 = vpop.f32.mrb[0].mxu0
        %v5208 = vadd.f32 0.0, %v5207
        %v5209 = vpop.f32.mrb[0].mxu0
        %5210 = vmatprep.mubr.bf16.mxu0 0
        %5211 = vmatmul.mubr.bf16.gmra.mrb[0].mxu0 %v5043
        %v5212 = vpop.f32.mrb[0].mxu0
        %v5213 = vadd.f32 0.0, %v5212
        %v5214 = vpop.f32.mrb[0].mxu0
        %v5215 = vpop.f32.mrb[0].mxu0
        %v5216 = vadd.f32 0.0, %v5215
        %v5217 = vpop.f32.mrb[0].mxu0
        %5218 = vmatprep.mubr.bf16.mxu0 0
        %5219 = vmatmul.mubr.bf16.gmra.mrb[0].mxu0 %v5046
        %v5220 = vpop.f32.mrb[0].mxu0
        %v5221 = vadd.f32 0.0, %v5220
        %v5222 = vpop.f32.mrb[0].mxu0
        %v5223 = vpop.f32.mrb[0].mxu0
        %v5224 = vadd.f32 0.0, %v5223
        %v5225 = vpop.f32.mrb[0].mxu0
        %5226 = vmatprep.mubr.bf16.mxu0 0
        %5227 = vmatmul.mubr.bf16.gmra.mrb[0].mxu0 %v5049
        %v5228 = vpop.f32.mrb[0].mxu0
        %v5229 = vadd.f32 0.0, %v5228
        %v5230 = vpop.f32.mrb[0].mxu0
        %v5231 = vpop.f32.mrb[0].mxu0
        %v5232 = vadd.f32 0.0, %v5231
        %v5233 = vpop.f32.mrb[0].mxu0
        %5234 = vmatprep.mubr.bf16.mxu0 0
        %5235 = vmatmul.mubr.bf16.gmra.mrb[0].mxu0 %v5052
        %v5236 = vpop.f32.mrb[0].mxu0
        %v5237 = vadd.f32 0.0, %v5236
        %v5238 = vpop.f32.mrb[0].mxu0
        %v5239 = vpop.f32.mrb[0].mxu0
        %v5240 = vadd.f32 0.0, %v5239
        %v5241 = vpop.f32.mrb[0].mxu0
        %5242 = vmatprep.mubr.bf16.mxu0 0
        %5243 = vmatmul.mubr.bf16.gmra.mrb[0].mxu0 %v5055
        %v5244 = vpop.f32.mrb[0].mxu0
        %v5245 = vadd.f32 0.0, %v5244
        %v5246 = vpop.f32.mrb[0].mxu0
        %v5247 = vpop.f32.mrb[0].mxu0
        %v5248 = vadd.f32 0.0, %v5247
        %v5249 = vpop.f32.mrb[0].mxu0
        %5250 = vmatprep.mubr.bf16.mxu0 0
        %5251 = vmatmul.mubr.bf16.gmra.mrb[0].mxu0 %v5058
        %v5252 = vpop.f32.mrb[0].mxu0
        %v5253 = vadd.f32 0.0, %v5252
        %v5254 = vpop.f32.mrb[0].mxu0
        %v5255 = vpop.f32.mrb[0].mxu0
        %v5256 = vadd.f32 0.0, %v5255
        %v5257 = vpop.f32.mrb[0].mxu0
        %5258 = vmatprep.mubr.bf16.mxu0 0
        %5259 = vmatmul.mubr.bf16.gmra.mrb[0].mxu0 %v5061
        %v5260 = vpop.f32.mrb[0].mxu0
        %v5261 = vadd.f32 0.0, %v5260
        %v5262 = vpop.f32.mrb[0].mxu0
        %v5263 = vpop.f32.mrb[0].mxu0
        %v5264 = vadd.f32 0.0, %v5263
        %v5265 = vpop.f32.mrb[0].mxu0
        %5266 = vmatprep.mubr.bf16.mxu0 0
        %5267 = vmatmul.mubr.bf16.gmra.mrb[0].mxu0 %v5064
        %v5268 = vpop.f32.mrb[0].mxu0
        %v5269 = vadd.f32 0.0, %v5268
        %v5270 = vpop.f32.mrb[0].mxu0
        %v5271 = vpop.f32.mrb[0].mxu0
        %v5272 = vadd.f32 0.0, %v5271
        %v5273 = vpop.f32.mrb[0].mxu0
        %5274 = vmatprep.mubr.bf16.mxu0 0
        %5275 = vmatmul.mubr.bf16.gmra.mrb[0].mxu0 %v5067
        %v5276 = vpop.f32.mrb[0].mxu0
        %v5277 = vadd.f32 0.0, %v5276
        %v5278 = vpop.f32.mrb[0].mxu0
        %v5279 = vpop.f32.mrb[0].mxu0
        %v5280 = vadd.f32 0.0, %v5279
        %v5281 = vpop.f32.mrb[0].mxu0
        %5282 = vmatprep.mubr.bf16.mxu0 0
        %5283 = vmatmul.mubr.bf16.gmra.mrb[0].mxu0 %v5070
        %v5284 = vpop.f32.mrb[0].mxu0
        %v5285 = vadd.f32 0.0, %v5284
        %v5286 = vpop.f32.mrb[0].mxu0
        %v5287 = vpop.f32.mrb[0].mxu0
        %v5288 = vadd.f32 0.0, %v5287
        %v5289 = vpop.f32.mrb[0].mxu0
        %5290 = vmatprep.mubr.bf16.mxu0 0
        %5291 = vmatmul.mubr.bf16.gmra.mrb[0].mxu0 %v5073
        %v5292 = vpop.f32.mrb[0].mxu0
        %v5293 = vadd.f32 0.0, %v5292
        %v5294 = vpop.f32.mrb[0].mxu0
        %v5295 = vpop.f32.mrb[0].mxu0
        %v5296 = vadd.f32 0.0, %v5295
        %v5297 = vpop.f32.mrb[0].mxu0
        %5298 = vmatprep.mubr.bf16.mxu0 0
        %5299 = vmatmul.mubr.bf16.gmra.mrb[0].mxu0 %v5076
        %v5300 = vpop.f32.mrb[0].mxu0
        %v5301 = vadd.f32 0.0, %v5300
        %v5302 = vpop.f32.mrb[0].mxu0
        %v5303 = vpop.f32.mrb[0].mxu0
        %v5304 = vadd.f32 0.0, %v5303
        %v5305 = vpop.f32.mrb[0].mxu0
        %5306 = vmatprep.mubr.bf16.mxu0 0
        %5307 = vmatmul.mubr.bf16.gmra.mrb[0].mxu0 %v5079
        %v5308 = vpop.f32.mrb[0].mxu0
        %v5309 = vadd.f32 0.0, %v5308
        %v5310 = vpop.f32.mrb[0].mxu0
        %v5311 = vpop.f32.mrb[0].mxu0
        %v5312 = vadd.f32 0.0, %v5311
        %v5313 = vpop.f32.mrb[0].mxu0
        %5314 = vmatprep.mubr.bf16.mxu0 0
        %5315 = vmatmul.mubr.bf16.gmra.mrb[0].mxu0 %v5082
        %v5316 = vpop.f32.mrb[0].mxu0
        %v5317 = vadd.f32 0.0, %v5316
        %v5318 = vpop.f32.mrb[0].mxu0
        %v5319 = vpop.f32.mrb[0].mxu0
        %v5320 = vadd.f32 0.0, %v5319
        %v5321 = vpop.f32.mrb[0].mxu0
        %5322 = vmatprep.mubr.bf16.mxu0 0
        %5323 = vmatmul.mubr.bf16.gmra.mrb[0].mxu0 %v5085
        %v5324 = vpop.f32.mrb[0].mxu0
        %v5325 = vadd.f32 0.0, %v5324
        %v5326 = vpop.f32.mrb[0].mxu0
        %v5327 = vpop.f32.mrb[0].mxu0
        %v5328 = vadd.f32 0.0, %v5327
        %v5329 = vpop.f32.mrb[0].mxu0
        %5330 = vmatprep.mubr.bf16.mxu0 0
        %5331 = vmatmul.mubr.bf16.gmra.mrb[0].mxu0 %v5088
        %v5332 = vpop.f32.mrb[0].mxu0
        %v5333 = vadd.f32 0.0, %v5332
        %v5334 = vpop.f32.mrb[0].mxu0
        %v5335 = vpop.f32.mrb[0].mxu0
        %v5336 = vadd.f32 0.0, %v5335
        %v5337 = vpop.f32.mrb[0].mxu0
        %5338 = vmatprep.mubr.bf16.mxu0 0
        %5339 = vmatmul.mubr.bf16.gmra.mrb[0].mxu0 %v5091
        %v5340 = vpop.f32.mrb[0].mxu0
        %v5341 = vadd.f32 0.0, %v5340
        %v5342 = vpop.f32.mrb[0].mxu0
        %v5343 = vpop.f32.mrb[0].mxu0
        %v5344 = vadd.f32 0.0, %v5343
        %v5345 = vpop.f32.mrb[0].mxu0
        %5346 = vmatprep.mubr.bf16.mxu0 0
        %5347 = vmatmul.mubr.bf16.gmra.mrb[0].mxu0 %v5094
        %v5348 = vpop.f32.mrb[0].mxu0
        %v5349 = vadd.f32 0.0, %v5348
        %v5350 = vpop.f32.mrb[0].mxu0
        %v5351 = vpop.f32.mrb[0].mxu0
        %v5352 = vadd.f32 0.0, %v5351
        %v5353 = vpop.f32.mrb[0].mxu0
        %5354 = vmatprep.mubr.bf16.mxu0 0
        %5355 = vmatmul.mubr.bf16.gmra.mrb[0].mxu0 %v5097
        %v5356 = vpop.f32.mrb[0].mxu0
        %v5357 = vadd.f32 0.0, %v5356
        %v5358 = vpop.f32.mrb[0].mxu0
        %v5359 = vpop.f32.mrb[0].mxu0
        %v5360 = vadd.f32 0.0, %v5359
        %v5361 = vpop.f32.mrb[0].mxu0
        %5362 = vmatprep.mubr.bf16.mxu0 0
        %5363 = vmatmul.mubr.bf16.gmra.mrb[0].mxu0 %v5100
        %v5364 = vpop.f32.mrb[0].mxu0
        %v5365 = vadd.f32 0.0, %v5364
        %v5366 = vpop.f32.mrb[0].mxu0
        %v5367 = vpop.f32.mrb[0].mxu0
        %v5368 = vadd.f32 0.0, %v5367
        %v5369 = vpop.f32.mrb[0].mxu0
        %5370 = vmatprep.mubr.bf16.mxu0 0
        %5371 = vmatmul.mubr.bf16.gmra.mrb[0].mxu0 %v5103
        %v5372 = vpop.f32.mrb[0].mxu0
        %v5373 = vadd.f32 0.0, %v5372
        %v5374 = vpop.f32.mrb[0].mxu0
        %v5375 = vpop.f32.mrb[0].mxu0
        %v5376 = vadd.f32 0.0, %v5375
        %v5377 = vpop.f32.mrb[0].mxu0
        %5378 = vmatprep.mubr.bf16.mxu0 0
        %5379 = vmatmul.mubr.bf16.gmra.mrb[0].mxu0 %v5106
        %v5380 = vpop.f32.mrb[0].mxu0
        %v5381 = vadd.f32 0.0, %v5380
        %v5382 = vpop.f32.mrb[0].mxu0
        %v5383 = vpop.f32.mrb[0].mxu0
        %v5384 = vadd.f32 0.0, %v5383
        %v5385 = vpop.f32.mrb[0].mxu0
        %5386 = vmatprep.mubr.bf16.mxu0 0
        %5387 = vmatmul.mubr.bf16.gmra.mrb[0].mxu0 %v5109
        %v5388 = vpop.f32.mrb[0].mxu0
        %v5389 = vadd.f32 0.0, %v5388
        %v5390 = vpop.f32.mrb[0].mxu0
        %v5391 = vpop.f32.mrb[0].mxu0
        %v5392 = vadd.f32 0.0, %v5391
        %v5393 = vpop.f32.mrb[0].mxu0
        %5394 = vmatprep.mubr.bf16.mxu0 0
        %5395 = vmatmul.mubr.bf16.gmra.mrb[0].mxu0 %v5112
        %v5396 = vpop.f32.mrb[0].mxu0
        %v5397 = vadd.f32 0.0, %v5396
        %v5398 = vpop.f32.mrb[0].mxu0
        %v5399 = vpop.f32.mrb[0].mxu0
        %v5400 = vadd.f32 0.0, %v5399
        %v5401 = vpop.f32.mrb[0].mxu0
        %5402 = vmatprep.mubr.bf16.mxu0 0
        %5403 = vmatmul.mubr.bf16.gmra.mrb[0].mxu0 %v5115
        %v5404 = vpop.f32.mrb[0].mxu0
        %v5405 = vadd.f32 0.0, %v5404
        %v5406 = vpop.f32.mrb[0].mxu0
        %v5407 = vpop.f32.mrb[0].mxu0
        %v5408 = vadd.f32 0.0, %v5407
        %v5409 = vpop.f32.mrb[0].mxu0
        %5410 = vmatprep.mubr.bf16.mxu0 0
        %5411 = vmatmul.mubr.bf16.gmra.mrb[0].mxu0 %v5118
        %v5412 = vpop.f32.mrb[0].mxu0
        %v5413 = vadd.f32 0.0, %v5412
        %v5414 = vpop.f32.mrb[0].mxu0
        %v5415 = vpop.f32.mrb[0].mxu0
        %v5416 = vadd.f32 0.0, %v5415
        %v5417 = vpop.f32.mrb[0].mxu0
        %5418 = vmatprep.mubr.bf16.mxu0 0
        %5419 = vmatmul.mubr.bf16.gmra.mrb[0].mxu0 %v5121
        %v5420 = vpop.f32.mrb[0].mxu0
        %v5421 = vadd.f32 0.0, %v5420
        %v5422 = vpop.f32.mrb[0].mxu0
        %v5423 = vpop.f32.mrb[0].mxu0
        %v5424 = vadd.f32 0.0, %v5423
        %v5425 = vpop.f32.mrb[0].mxu0
        %5426 = vmatprep.mubr.bf16.mxu0 0
        %5427 = vmatmul.mubr.bf16.gmra.mrb[0].mxu0 %v5124
        %v5428 = vpop.f32.mrb[0].mxu0
        %v5429 = vadd.f32 0.0, %v5428
        %v5430 = vpop.f32.mrb[0].mxu0
        %v5431 = vpop.f32.mrb[0].mxu0
        %v5432 = vadd.f32 0.0, %v5431
        %v5433 = vpop.f32.mrb[0].mxu0
        %5434 = vmatprep.mubr.bf16.mxu0 0
        %5435 = vmatmul.mubr.bf16.gmra.mrb[0].mxu0 %v5127
        %v5436 = vpop.f32.mrb[0].mxu0
        %v5437 = vadd.f32 0.0, %v5436
        %v5438 = vpop.f32.mrb[0].mxu0
        %v5439 = vpop.f32.mrb[0].mxu0
        %v5440 = vadd.f32 0.0, %v5439
        %v5441 = vpop.f32.mrb[0].mxu0
        %5442 = vmatprep.mubr.bf16.mxu0 0
        %5443 = vmatmul.mubr.bf16.gmra.mrb[0].mxu0 %v5130
        %v5444 = vpop.f32.mrb[0].mxu0
        %v5445 = vadd.f32 0.0, %v5444
        %v5446 = vpop.f32.mrb[0].mxu0
        %v5447 = vpop.f32.mrb[0].mxu0
        %v5448 = vadd.f32 0.0, %v5447
        %v5449 = vpop.f32.mrb[0].mxu0
        %5450 = vmatprep.mubr.bf16.mxu0 0
        %5451 = vmatmul.mubr.bf16.gmra.mrb[0].mxu0 %v5133
        %v5452 = vpop.f32.mrb[0].mxu0
        %v5453 = vadd.f32 0.0, %v5452
        %v5454 = vpop.f32.mrb[0].mxu0
        %v5455 = vpop.f32.mrb[0].mxu0
        %v5456 = vadd.f32 0.0, %v5455
        %v5457 = vpop.f32.mrb[0].mxu0
        %5458 = vdwg.mxu0
        %v5459 = vadd.f32 %v4789, %v5173
        %v5460 = vadd.f32 %v4790, %v5176
        %v5461 = vadd.f32 %v4791, %v5181
        %v5462 = vadd.f32 %v4792, %v5184
        %v5463 = vadd.f32 %v4793, %v5189
        %v5464 = vadd.f32 %v4794, %v5192
        %v5465 = vadd.f32 %v4795, %v5197
        %v5466 = vadd.f32 %v4796, %v5200
        %v5467 = vadd.f32 %v4797, %v5205
        %v5468 = vadd.f32 %v4798, %v5208
        %v5469 = vadd.f32 %v4799, %v5213
        %v5470 = vadd.f32 %v4800, %v5216
        %v5471 = vadd.f32 %v4801, %v5221
        %v5472 = vadd.f32 %v4802, %v5224
        %v5473 = vadd.f32 %v4803, %v5229
        %v5474 = vadd.f32 %v4804, %v5232
        %v5475 = vadd.f32 %v4805, %v5237
        %v5476 = vadd.f32 %v4806, %v5240
        %v5477 = vadd.f32 %v4807, %v5245
        %v5478 = vadd.f32 %v4808, %v5248
        %v5479 = vadd.f32 %v4809, %v5253
        %v5480 = vadd.f32 %v4810, %v5256
        %v5481 = vadd.f32 %v4811, %v5261
        %v5482 = vadd.f32 %v4812, %v5264
        %v5483 = vadd.f32 %v4813, %v5269
        %v5484 = vadd.f32 %v4814, %v5272
        %v5485 = vadd.f32 %v4815, %v5277
        %v5486 = vadd.f32 %v4816, %v5280
        %v5487 = vadd.f32 %v4817, %v5285
        %v5488 = vadd.f32 %v4818, %v5288
        %v5489 = vadd.f32 %v4819, %v5293
        %v5490 = vadd.f32 %v4820, %v5296
        %v5491 = vadd.f32 %v4821, %v5301
        %v5492 = vadd.f32 %v4822, %v5304
        %v5493 = vadd.f32 %v4823, %v5309
        %v5494 = vadd.f32 %v4824, %v5312
        %v5495 = vadd.f32 %v4825, %v5317
        %v5496 = vadd.f32 %v4826, %v5320
        %v5497 = vadd.f32 %v4827, %v5325
        %v5498 = vadd.f32 %v4828, %v5328
        %v5499 = vadd.f32 %v4829, %v5333
        %v5500 = vadd.f32 %v4830, %v5336
        %v5501 = vadd.f32 %v4831, %v5341
        %v5502 = vadd.f32 %v4832, %v5344
        %v5503 = vadd.f32 %v4833, %v5349
        %v5504 = vadd.f32 %v4834, %v5352
        %v5505 = vadd.f32 %v4835, %v5357
        %v5506 = vadd.f32 %v4836, %v5360
        %v5507 = vadd.f32 %v4837, %v5365
        %v5508 = vadd.f32 %v4838, %v5368
        %v5509 = vadd.f32 %v4839, %v5373
        %v5510 = vadd.f32 %v4840, %v5376
        %v5511 = vadd.f32 %v4841, %v5381
        %v5512 = vadd.f32 %v4842, %v5384
        %v5513 = vadd.f32 %v4843, %v5389
        %v5514 = vadd.f32 %v4844, %v5392
        %v5515 = vadd.f32 %v4845, %v5397
        %v5516 = vadd.f32 %v4846, %v5400
        %v5517 = vadd.f32 %v4847, %v5405
        %v5518 = vadd.f32 %v4848, %v5408
        %v5519 = vadd.f32 %v4849, %v5413
        %v5520 = vadd.f32 %v4850, %v5416
        %v5521 = vadd.f32 %v4851, %v5421
        %v5522 = vadd.f32 %v4852, %v5424
        %v5523 = vadd.f32 %v4853, %v5429
        %v5524 = vadd.f32 %v4854, %v5432
        %v5525 = vadd.f32 %v4855, %v5437
        %v5526 = vadd.f32 %v4856, %v5440
        %v5527 = vadd.f32 %v4857, %v5445
        %v5528 = vadd.f32 %v4858, %v5448
        %v5529 = vadd.f32 %v4859, %v5453
        %v5530 = vadd.f32 %v4860, %v5456
        %v5532 = vunpack.c.l.b16 %v463
        %v5533 = vpack.c.b16 %v5532, %v5532
        %vm5534 = vcmask 1045504
        %v5535 = vrot.slane %v615, 2
        %v5536 = vrot.slane %v616, 2
        %v5537 = vsel %vm5534, %v5535, %v5536
        %v5538 = vrot.slane %v617, 2
        %v5539 = vsel %vm5534, %v5536, %v5538
        %v5540 = vrot.slane %v618, 2
        %v5541 = vsel %vm5534, %v5538, %v5540
        %v5542 = vrot.slane %v619, 2
        %v5543 = vsel %vm5534, %v5540, %v5542
        %v5544 = vrot.slane %v620, 2
        %v5545 = vsel %vm5534, %v5542, %v5544
        %v5546 = vrot.slane %v621, 2
        %v5547 = vsel %vm5534, %v5544, %v5546
        %v5548 = vrot.slane %v622, 2
        %v5549 = vsel %vm5534, %v5546, %v5548
        %v5550 = vrot.slane %v623, 2
        %v5551 = vsel %vm5534, %v5548, %v5550
        %v5552 = vrot.slane %v624, 2
        %v5553 = vsel %vm5534, %v5550, %v5552
        %v5554 = vrot.slane %v625, 2
        %v5555 = vsel %vm5534, %v5552, %v5554
        %v5556 = vrot.slane %v626, 2
        %v5557 = vsel %vm5534, %v5554, %v5556
        %v5558 = vrot.slane %v627, 2
        %v5559 = vsel %vm5534, %v5556, %v5558
        %v5560 = vrot.slane %v628, 2
        %v5561 = vsel %vm5534, %v5558, %v5560
        %v5562 = vrot.slane %v629, 2
        %v5563 = vsel %vm5534, %v5560, %v5562
        %v5564 = vrot.slane %v630, 2
        %v5565 = vsel %vm5534, %v5562, %v5564
        %v5566 = vrot.slane %v631, 2
        %v5567 = vsel %vm5534, %v5564, %v5566
        %v5568 = vrot.slane %v632, 2
        %v5569 = vsel %vm5534, %v5566, %v5568
        %v5570 = vrot.slane %v633, 2
        %v5571 = vsel %vm5534, %v5568, %v5570
        %v5572 = vrot.slane %v634, 2
        %v5573 = vsel %vm5534, %v5570, %v5572
        %v5574 = vrot.slane %v635, 2
        %v5575 = vsel %vm5534, %v5572, %v5574
        %v5576 = vrot.slane %v636, 2
        %v5577 = vsel %vm5534, %v5574, %v5576
        %v5578 = vrot.slane %v637, 2
        %v5579 = vsel %vm5534, %v5576, %v5578
        %v5580 = vrot.slane %v638, 2
        %v5581 = vsel %vm5534, %v5578, %v5580
        %v5582 = vrot.slane %v639, 2
        %v5583 = vsel %vm5534, %v5580, %v5582
        %v5584 = vrot.slane %v640, 2
        %v5585 = vsel %vm5534, %v5582, %v5584
        %v5586 = vrot.slane %v641, 2
        %v5587 = vsel %vm5534, %v5584, %v5586
        %v5588 = vrot.slane %v642, 2
        %v5589 = vsel %vm5534, %v5586, %v5588
        %v5590 = vrot.slane %v643, 2
        %v5591 = vsel %vm5534, %v5588, %v5590
        %v5592 = vrot.slane %v644, 2
        %v5593 = vsel %vm5534, %v5590, %v5592
        %v5594 = vrot.slane %v645, 2
        %v5595 = vsel %vm5534, %v5592, %v5594
        %v5596 = vrot.slane %v646, 2
        %v5597 = vsel %vm5534, %v5594, %v5596
        %v5598 = vrot.slane %v647, 2
        %v5599 = vsel %vm5534, %v5596, %v5598
        %v5600 = vrot.slane %v4442, 2
        %v5601 = vsel %vm5534, %v5598, %v5600
        %v5602 = vrot.slane %v4443, 2
        %v5603 = vsel %vm5534, %v5600, %v5602
        %v5604 = vrot.slane %v4444, 2
        %v5605 = vsel %vm5534, %v5602, %v5604
        %v5606 = vrot.slane %v5533, 2
        %v5607 = vsel %vm5534, %v5604, %v5606
        %v5609 = vsel %vm947, %v5537, 0
        %v5612 = vsel %vm947, %v5539, 0
        %v5615 = vsel %vm947, %v5541, 0
        %v5618 = vsel %vm947, %v5543, 0
        %v5621 = vsel %vm947, %v5545, 0
        %v5624 = vsel %vm947, %v5547, 0
        %v5627 = vsel %vm947, %v5549, 0
        %v5630 = vsel %vm947, %v5551, 0
        %v5633 = vsel %vm947, %v5553, 0
        %v5636 = vsel %vm947, %v5555, 0
        %v5639 = vsel %vm947, %v5557, 0
        %v5642 = vsel %vm947, %v5559, 0
        %v5645 = vsel %vm947, %v5561, 0
        %v5648 = vsel %vm947, %v5563, 0
        %v5651 = vsel %vm947, %v5565, 0
        %v5654 = vsel %vm947, %v5567, 0
        %v5657 = vsel %vm947, %v5569, 0
        %v5660 = vsel %vm947, %v5571, 0
        %v5663 = vsel %vm947, %v5573, 0
        %v5666 = vsel %vm947, %v5575, 0
        %v5669 = vsel %vm947, %v5577, 0
        %v5672 = vsel %vm947, %v5579, 0
        %v5675 = vsel %vm947, %v5581, 0
        %v5678 = vsel %vm947, %v5583, 0
        %v5681 = vsel %vm947, %v5585, 0
        %v5684 = vsel %vm947, %v5587, 0
        %v5687 = vsel %vm947, %v5589, 0
        %v5690 = vsel %vm947, %v5591, 0
        %v5693 = vsel %vm947, %v5593, 0
        %v5696 = vsel %vm947, %v5595, 0
        %v5699 = vsel %vm947, %v5597, 0
        %v5702 = vsel %vm947, %v5599, 0
        %v5705 = vsel %vm947, %v5601, 0
        %v5708 = vsel %vm947, %v5603, 0
        %v5711 = vsel %vm947, %v5605, 0
        %v5714 = vsel %vm947, %v5607, 0
        %v5717 = vand.u32 %v467, %v1059
        %5719 = vmatprep.subr.bf16.mxu0 0
        %5720 = vmatpush1.bf16.msra.mxu0 %v5717
        %5721 = vmatprep.subr.bf16.mxu0 0
        %5722 = vmatpush1.bf16.msra.mxu0 0
        %5723 = vmatprep.subr.bf16.mxu0 0
        %5724 = vmatpush1.bf16.msra.mxu0 0
        %5725 = vmatprep.subr.bf16.mxu0 0
        %5726 = vmatpush1.bf16.msra.mxu0 0
        %5727 = vmatprep.subr.bf16.mxu0 0
        %5728 = vmatpush1.bf16.msra.mxu0 0
        %5729 = vmatprep.subr.bf16.mxu0 0
        %5730 = vmatpush1.bf16.msra.mxu0 0
        %5731 = vmatprep.subr.bf16.mxu0 0
        %5732 = vmatpush1.bf16.msra.mxu0 0
        %5733 = vmatprep.subr.bf16.mxu0 0
        %5734 = vmatpush1.bf16.msra.mxu0 0
        %5735 = vmatprep.subr.bf16.mxu0 0
        %5736 = vmatpush1.bf16.msra.mxu0 0
        %5737 = vmatprep.subr.bf16.mxu0 0
        %5738 = vmatpush1.bf16.msra.mxu0 0
        %5739 = vmatprep.subr.bf16.mxu0 0
        %5740 = vmatpush1.bf16.msra.mxu0 0
        %5741 = vmatprep.subr.bf16.mxu0 0
        %5742 = vmatpush1.bf16.msra.mxu0 0
        %5743 = vmatprep.subr.bf16.mxu0 0
        %5744 = vmatpush1.bf16.msra.mxu0 0
        %5745 = vmatprep.subr.bf16.mxu0 0
        %5746 = vmatpush1.bf16.msra.mxu0 0
        %5747 = vmatprep.subr.bf16.mxu0 0
        %5748 = vmatpush1.bf16.msra.mxu0 0
        %5749 = vmatprep.subr.bf16.mxu0 0
        %5750 = vmatpush1.bf16.msra.mxu0 0
        %5751 = vmatprep.mubr.bf16.mxu0 0
        %5752 = vmatmul.mubr.bf16.gmra.mrb[0].mxu0 %v5609
        %v5753 = vpop.f32.mrb[0].mxu0
        %v5754 = vadd.f32 0.0, %v5753
        %v5755 = vpop.f32.mrb[0].mxu0
        %v5756 = vpop.f32.mrb[0].mxu0
        %v5757 = vadd.f32 0.0, %v5756
        %v5758 = vpop.f32.mrb[0].mxu0
        %5759 = vmatprep.mubr.bf16.mxu0 0
        %5760 = vmatmul.mubr.bf16.gmra.mrb[0].mxu0 %v5612
        %v5761 = vpop.f32.mrb[0].mxu0
        %v5762 = vadd.f32 0.0, %v5761
        %v5763 = vpop.f32.mrb[0].mxu0
        %v5764 = vpop.f32.mrb[0].mxu0
        %v5765 = vadd.f32 0.0, %v5764
        %v5766 = vpop.f32.mrb[0].mxu0
        %5767 = vmatprep.mubr.bf16.mxu0 0
        %5768 = vmatmul.mubr.bf16.gmra.mrb[0].mxu0 %v5615
        %v5769 = vpop.f32.mrb[0].mxu0
        %v5770 = vadd.f32 0.0, %v5769
        %v5771 = vpop.f32.mrb[0].mxu0
        %v5772 = vpop.f32.mrb[0].mxu0
        %v5773 = vadd.f32 0.0, %v5772
        %v5774 = vpop.f32.mrb[0].mxu0
        %5775 = vmatprep.mubr.bf16.mxu0 0
        %5776 = vmatmul.mubr.bf16.gmra.mrb[0].mxu0 %v5618
        %v5777 = vpop.f32.mrb[0].mxu0
        %v5778 = vadd.f32 0.0, %v5777
        %v5779 = vpop.f32.mrb[0].mxu0
        %v5780 = vpop.f32.mrb[0].mxu0
        %v5781 = vadd.f32 0.0, %v5780
        %v5782 = vpop.f32.mrb[0].mxu0
        %5783 = vmatprep.mubr.bf16.mxu0 0
        %5784 = vmatmul.mubr.bf16.gmra.mrb[0].mxu0 %v5621
        %v5785 = vpop.f32.mrb[0].mxu0
        %v5786 = vadd.f32 0.0, %v5785
        %v5787 = vpop.f32.mrb[0].mxu0
        %v5788 = vpop.f32.mrb[0].mxu0
        %v5789 = vadd.f32 0.0, %v5788
        %v5790 = vpop.f32.mrb[0].mxu0
        %5791 = vmatprep.mubr.bf16.mxu0 0
        %5792 = vmatmul.mubr.bf16.gmra.mrb[0].mxu0 %v5624
        %v5793 = vpop.f32.mrb[0].mxu0
        %v5794 = vadd.f32 0.0, %v5793
        %v5795 = vpop.f32.mrb[0].mxu0
        %v5796 = vpop.f32.mrb[0].mxu0
        %v5797 = vadd.f32 0.0, %v5796
        %v5798 = vpop.f32.mrb[0].mxu0
        %5799 = vmatprep.mubr.bf16.mxu0 0
        %5800 = vmatmul.mubr.bf16.gmra.mrb[0].mxu0 %v5627
        %v5801 = vpop.f32.mrb[0].mxu0
        %v5802 = vadd.f32 0.0, %v5801
        %v5803 = vpop.f32.mrb[0].mxu0
        %v5804 = vpop.f32.mrb[0].mxu0
        %v5805 = vadd.f32 0.0, %v5804
        %v5806 = vpop.f32.mrb[0].mxu0
        %5807 = vmatprep.mubr.bf16.mxu0 0
        %5808 = vmatmul.mubr.bf16.gmra.mrb[0].mxu0 %v5630
        %v5809 = vpop.f32.mrb[0].mxu0
        %v5810 = vadd.f32 0.0, %v5809
        %v5811 = vpop.f32.mrb[0].mxu0
        %v5812 = vpop.f32.mrb[0].mxu0
        %v5813 = vadd.f32 0.0, %v5812
        %v5814 = vpop.f32.mrb[0].mxu0
        %5815 = vmatprep.mubr.bf16.mxu0 0
        %5816 = vmatmul.mubr.bf16.gmra.mrb[0].mxu0 %v5633
        %v5817 = vpop.f32.mrb[0].mxu0
        %v5818 = vadd.f32 0.0, %v5817
        %v5819 = vpop.f32.mrb[0].mxu0
        %v5820 = vpop.f32.mrb[0].mxu0
        %v5821 = vadd.f32 0.0, %v5820
        %v5822 = vpop.f32.mrb[0].mxu0
        %5823 = vmatprep.mubr.bf16.mxu0 0
        %5824 = vmatmul.mubr.bf16.gmra.mrb[0].mxu0 %v5636
        %v5825 = vpop.f32.mrb[0].mxu0
        %v5826 = vadd.f32 0.0, %v5825
        %v5827 = vpop.f32.mrb[0].mxu0
        %v5828 = vpop.f32.mrb[0].mxu0
        %v5829 = vadd.f32 0.0, %v5828
        %v5830 = vpop.f32.mrb[0].mxu0
        %5831 = vmatprep.mubr.bf16.mxu0 0
        %5832 = vmatmul.mubr.bf16.gmra.mrb[0].mxu0 %v5639
        %v5833 = vpop.f32.mrb[0].mxu0
        %v5834 = vadd.f32 0.0, %v5833
        %v5835 = vpop.f32.mrb[0].mxu0
        %v5836 = vpop.f32.mrb[0].mxu0
        %v5837 = vadd.f32 0.0, %v5836
        %v5838 = vpop.f32.mrb[0].mxu0
        %5839 = vmatprep.mubr.bf16.mxu0 0
        %5840 = vmatmul.mubr.bf16.gmra.mrb[0].mxu0 %v5642
        %v5841 = vpop.f32.mrb[0].mxu0
        %v5842 = vadd.f32 0.0, %v5841
        %v5843 = vpop.f32.mrb[0].mxu0
        %v5844 = vpop.f32.mrb[0].mxu0
        %v5845 = vadd.f32 0.0, %v5844
        %v5846 = vpop.f32.mrb[0].mxu0
        %5847 = vmatprep.mubr.bf16.mxu0 0
        %5848 = vmatmul.mubr.bf16.gmra.mrb[0].mxu0 %v5645
        %v5849 = vpop.f32.mrb[0].mxu0
        %v5850 = vadd.f32 0.0, %v5849
        %v5851 = vpop.f32.mrb[0].mxu0
        %v5852 = vpop.f32.mrb[0].mxu0
        %v5853 = vadd.f32 0.0, %v5852
        %v5854 = vpop.f32.mrb[0].mxu0
        %5855 = vmatprep.mubr.bf16.mxu0 0
        %5856 = vmatmul.mubr.bf16.gmra.mrb[0].mxu0 %v5648
        %v5857 = vpop.f32.mrb[0].mxu0
        %v5858 = vadd.f32 0.0, %v5857
        %v5859 = vpop.f32.mrb[0].mxu0
        %v5860 = vpop.f32.mrb[0].mxu0
        %v5861 = vadd.f32 0.0, %v5860
        %v5862 = vpop.f32.mrb[0].mxu0
        %5863 = vmatprep.mubr.bf16.mxu0 0
        %5864 = vmatmul.mubr.bf16.gmra.mrb[0].mxu0 %v5651
        %v5865 = vpop.f32.mrb[0].mxu0
        %v5866 = vadd.f32 0.0, %v5865
        %v5867 = vpop.f32.mrb[0].mxu0
        %v5868 = vpop.f32.mrb[0].mxu0
        %v5869 = vadd.f32 0.0, %v5868
        %v5870 = vpop.f32.mrb[0].mxu0
        %5871 = vmatprep.mubr.bf16.mxu0 0
        %5872 = vmatmul.mubr.bf16.gmra.mrb[0].mxu0 %v5654
        %v5873 = vpop.f32.mrb[0].mxu0
        %v5874 = vadd.f32 0.0, %v5873
        %v5875 = vpop.f32.mrb[0].mxu0
        %v5876 = vpop.f32.mrb[0].mxu0
        %v5877 = vadd.f32 0.0, %v5876
        %v5878 = vpop.f32.mrb[0].mxu0
        %5879 = vmatprep.mubr.bf16.mxu0 0
        %5880 = vmatmul.mubr.bf16.gmra.mrb[0].mxu0 %v5657
        %v5881 = vpop.f32.mrb[0].mxu0
        %v5882 = vadd.f32 0.0, %v5881
        %v5883 = vpop.f32.mrb[0].mxu0
        %v5884 = vpop.f32.mrb[0].mxu0
        %v5885 = vadd.f32 0.0, %v5884
        %v5886 = vpop.f32.mrb[0].mxu0
        %5887 = vmatprep.mubr.bf16.mxu0 0
        %5888 = vmatmul.mubr.bf16.gmra.mrb[0].mxu0 %v5660
        %v5889 = vpop.f32.mrb[0].mxu0
        %v5890 = vadd.f32 0.0, %v5889
        %v5891 = vpop.f32.mrb[0].mxu0
        %v5892 = vpop.f32.mrb[0].mxu0
        %v5893 = vadd.f32 0.0, %v5892
        %v5894 = vpop.f32.mrb[0].mxu0
        %5895 = vmatprep.mubr.bf16.mxu0 0
        %5896 = vmatmul.mubr.bf16.gmra.mrb[0].mxu0 %v5663
        %v5897 = vpop.f32.mrb[0].mxu0
        %v5898 = vadd.f32 0.0, %v5897
        %v5899 = vpop.f32.mrb[0].mxu0
        %v5900 = vpop.f32.mrb[0].mxu0
        %v5901 = vadd.f32 0.0, %v5900
        %v5902 = vpop.f32.mrb[0].mxu0
        %5903 = vmatprep.mubr.bf16.mxu0 0
        %5904 = vmatmul.mubr.bf16.gmra.mrb[0].mxu0 %v5666
        %v5905 = vpop.f32.mrb[0].mxu0
        %v5906 = vadd.f32 0.0, %v5905
        %v5907 = vpop.f32.mrb[0].mxu0
        %v5908 = vpop.f32.mrb[0].mxu0
        %v5909 = vadd.f32 0.0, %v5908
        %v5910 = vpop.f32.mrb[0].mxu0
        %5911 = vmatprep.mubr.bf16.mxu0 0
        %5912 = vmatmul.mubr.bf16.gmra.mrb[0].mxu0 %v5669
        %v5913 = vpop.f32.mrb[0].mxu0
        %v5914 = vadd.f32 0.0, %v5913
        %v5915 = vpop.f32.mrb[0].mxu0
        %v5916 = vpop.f32.mrb[0].mxu0
        %v5917 = vadd.f32 0.0, %v5916
        %v5918 = vpop.f32.mrb[0].mxu0
        %5919 = vmatprep.mubr.bf16.mxu0 0
        %5920 = vmatmul.mubr.bf16.gmra.mrb[0].mxu0 %v5672
        %v5921 = vpop.f32.mrb[0].mxu0
        %v5922 = vadd.f32 0.0, %v5921
        %v5923 = vpop.f32.mrb[0].mxu0
        %v5924 = vpop.f32.mrb[0].mxu0
        %v5925 = vadd.f32 0.0, %v5924
        %v5926 = vpop.f32.mrb[0].mxu0
        %5927 = vmatprep.mubr.bf16.mxu0 0
        %5928 = vmatmul.mubr.bf16.gmra.mrb[0].mxu0 %v5675
        %v5929 = vpop.f32.mrb[0].mxu0
        %v5930 = vadd.f32 0.0, %v5929
        %v5931 = vpop.f32.mrb[0].mxu0
        %v5932 = vpop.f32.mrb[0].mxu0
        %v5933 = vadd.f32 0.0, %v5932
        %v5934 = vpop.f32.mrb[0].mxu0
        %5935 = vmatprep.mubr.bf16.mxu0 0
        %5936 = vmatmul.mubr.bf16.gmra.mrb[0].mxu0 %v5678
        %v5937 = vpop.f32.mrb[0].mxu0
        %v5938 = vadd.f32 0.0, %v5937
        %v5939 = vpop.f32.mrb[0].mxu0
        %v5940 = vpop.f32.mrb[0].mxu0
        %v5941 = vadd.f32 0.0, %v5940
        %v5942 = vpop.f32.mrb[0].mxu0
        %5943 = vmatprep.mubr.bf16.mxu0 0
        %5944 = vmatmul.mubr.bf16.gmra.mrb[0].mxu0 %v5681
        %v5945 = vpop.f32.mrb[0].mxu0
        %v5946 = vadd.f32 0.0, %v5945
        %v5947 = vpop.f32.mrb[0].mxu0
        %v5948 = vpop.f32.mrb[0].mxu0
        %v5949 = vadd.f32 0.0, %v5948
        %v5950 = vpop.f32.mrb[0].mxu0
        %5951 = vmatprep.mubr.bf16.mxu0 0
        %5952 = vmatmul.mubr.bf16.gmra.mrb[0].mxu0 %v5684
        %v5953 = vpop.f32.mrb[0].mxu0
        %v5954 = vadd.f32 0.0, %v5953
        %v5955 = vpop.f32.mrb[0].mxu0
        %v5956 = vpop.f32.mrb[0].mxu0
        %v5957 = vadd.f32 0.0, %v5956
        %v5958 = vpop.f32.mrb[0].mxu0
        %5959 = vmatprep.mubr.bf16.mxu0 0
        %5960 = vmatmul.mubr.bf16.gmra.mrb[0].mxu0 %v5687
        %v5961 = vpop.f32.mrb[0].mxu0
        %v5962 = vadd.f32 0.0, %v5961
        %v5963 = vpop.f32.mrb[0].mxu0
        %v5964 = vpop.f32.mrb[0].mxu0
        %v5965 = vadd.f32 0.0, %v5964
        %v5966 = vpop.f32.mrb[0].mxu0
        %5967 = vmatprep.mubr.bf16.mxu0 0
        %5968 = vmatmul.mubr.bf16.gmra.mrb[0].mxu0 %v5690
        %v5969 = vpop.f32.mrb[0].mxu0
        %v5970 = vadd.f32 0.0, %v5969
        %v5971 = vpop.f32.mrb[0].mxu0
        %v5972 = vpop.f32.mrb[0].mxu0
        %v5973 = vadd.f32 0.0, %v5972
        %v5974 = vpop.f32.mrb[0].mxu0
        %5975 = vmatprep.mubr.bf16.mxu0 0
        %5976 = vmatmul.mubr.bf16.gmra.mrb[0].mxu0 %v5693
        %v5977 = vpop.f32.mrb[0].mxu0
        %v5978 = vadd.f32 0.0, %v5977
        %v5979 = vpop.f32.mrb[0].mxu0
        %v5980 = vpop.f32.mrb[0].mxu0
        %v5981 = vadd.f32 0.0, %v5980
        %v5982 = vpop.f32.mrb[0].mxu0
        %5983 = vmatprep.mubr.bf16.mxu0 0
        %5984 = vmatmul.mubr.bf16.gmra.mrb[0].mxu0 %v5696
        %v5985 = vpop.f32.mrb[0].mxu0
        %v5986 = vadd.f32 0.0, %v5985
        %v5987 = vpop.f32.mrb[0].mxu0
        %v5988 = vpop.f32.mrb[0].mxu0
        %v5989 = vadd.f32 0.0, %v5988
        %v5990 = vpop.f32.mrb[0].mxu0
        %5991 = vmatprep.mubr.bf16.mxu0 0
        %5992 = vmatmul.mubr.bf16.gmra.mrb[0].mxu0 %v5699
        %v5993 = vpop.f32.mrb[0].mxu0
        %v5994 = vadd.f32 0.0, %v5993
        %v5995 = vpop.f32.mrb[0].mxu0
        %v5996 = vpop.f32.mrb[0].mxu0
        %v5997 = vadd.f32 0.0, %v5996
        %v5998 = vpop.f32.mrb[0].mxu0
        %5999 = vmatprep.mubr.bf16.mxu0 0
        %6000 = vmatmul.mubr.bf16.gmra.mrb[0].mxu0 %v5702
        %v6001 = vpop.f32.mrb[0].mxu0
        %v6002 = vadd.f32 0.0, %v6001
        %v6003 = vpop.f32.mrb[0].mxu0
        %v6004 = vpop.f32.mrb[0].mxu0
        %v6005 = vadd.f32 0.0, %v6004
        %v6006 = vpop.f32.mrb[0].mxu0
        %6007 = vmatprep.mubr.bf16.mxu0 0
        %6008 = vmatmul.mubr.bf16.gmra.mrb[0].mxu0 %v5705
        %v6009 = vpop.f32.mrb[0].mxu0
        %v6010 = vadd.f32 0.0, %v6009
        %v6011 = vpop.f32.mrb[0].mxu0
        %v6012 = vpop.f32.mrb[0].mxu0
        %v6013 = vadd.f32 0.0, %v6012
        %v6014 = vpop.f32.mrb[0].mxu0
        %6015 = vmatprep.mubr.bf16.mxu0 0
        %6016 = vmatmul.mubr.bf16.gmra.mrb[0].mxu0 %v5708
        %v6017 = vpop.f32.mrb[0].mxu0
        %v6018 = vadd.f32 0.0, %v6017
        %v6019 = vpop.f32.mrb[0].mxu0
        %v6020 = vpop.f32.mrb[0].mxu0
        %v6021 = vadd.f32 0.0, %v6020
        %v6022 = vpop.f32.mrb[0].mxu0
        %6023 = vmatprep.mubr.bf16.mxu0 0
        %6024 = vmatmul.mubr.bf16.gmra.mrb[0].mxu0 %v5711
        %v6025 = vpop.f32.mrb[0].mxu0
        %v6026 = vadd.f32 0.0, %v6025
        %v6027 = vpop.f32.mrb[0].mxu0
        %v6028 = vpop.f32.mrb[0].mxu0
        %v6029 = vadd.f32 0.0, %v6028
        %v6030 = vpop.f32.mrb[0].mxu0
        %6031 = vmatprep.mubr.bf16.mxu0 0
        %6032 = vmatmul.mubr.bf16.gmra.mrb[0].mxu0 %v5714
        %v6033 = vpop.f32.mrb[0].mxu0
        %v6034 = vadd.f32 0.0, %v6033
        %v6035 = vpop.f32.mrb[0].mxu0
        %v6036 = vpop.f32.mrb[0].mxu0
        %v6037 = vadd.f32 0.0, %v6036
        %v6038 = vpop.f32.mrb[0].mxu0
        %6039 = vdwg.mxu0
        %v6040 = vadd.f32 %v5459, %v5754
        %v6041 = vadd.f32 %v5460, %v5757
        %v6042 = vadd.f32 %v5461, %v5762
        %v6043 = vadd.f32 %v5462, %v5765
        %v6044 = vadd.f32 %v5463, %v5770
        %v6045 = vadd.f32 %v5464, %v5773
        %v6046 = vadd.f32 %v5465, %v5778
        %v6047 = vadd.f32 %v5466, %v5781
        %v6048 = vadd.f32 %v5467, %v5786
        %v6049 = vadd.f32 %v5468, %v5789
        %v6050 = vadd.f32 %v5469, %v5794
        %v6051 = vadd.f32 %v5470, %v5797
        %v6052 = vadd.f32 %v5471, %v5802
        %v6053 = vadd.f32 %v5472, %v5805
        %v6054 = vadd.f32 %v5473, %v5810
        %v6055 = vadd.f32 %v5474, %v5813
        %v6056 = vadd.f32 %v5475, %v5818
        %v6057 = vadd.f32 %v5476, %v5821
        %v6058 = vadd.f32 %v5477, %v5826
        %v6059 = vadd.f32 %v5478, %v5829
        %v6060 = vadd.f32 %v5479, %v5834
        %v6061 = vadd.f32 %v5480, %v5837
        %v6062 = vadd.f32 %v5481, %v5842
        %v6063 = vadd.f32 %v5482, %v5845
        %v6064 = vadd.f32 %v5483, %v5850
        %v6065 = vadd.f32 %v5484, %v5853
        %v6066 = vadd.f32 %v5485, %v5858
        %v6067 = vadd.f32 %v5486, %v5861
        %v6068 = vadd.f32 %v5487, %v5866
        %v6069 = vadd.f32 %v5488, %v5869
        %v6070 = vadd.f32 %v5489, %v5874
        %v6071 = vadd.f32 %v5490, %v5877
        %v6072 = vadd.f32 %v5491, %v5882
        %v6073 = vadd.f32 %v5492, %v5885
        %v6074 = vadd.f32 %v5493, %v5890
        %v6075 = vadd.f32 %v5494, %v5893
        %v6076 = vadd.f32 %v5495, %v5898
        %v6077 = vadd.f32 %v5496, %v5901
        %v6078 = vadd.f32 %v5497, %v5906
        %v6079 = vadd.f32 %v5498, %v5909
        %v6080 = vadd.f32 %v5499, %v5914
        %v6081 = vadd.f32 %v5500, %v5917
        %v6082 = vadd.f32 %v5501, %v5922
        %v6083 = vadd.f32 %v5502, %v5925
        %v6084 = vadd.f32 %v5503, %v5930
        %v6085 = vadd.f32 %v5504, %v5933
        %v6086 = vadd.f32 %v5505, %v5938
        %v6087 = vadd.f32 %v5506, %v5941
        %v6088 = vadd.f32 %v5507, %v5946
        %v6089 = vadd.f32 %v5508, %v5949
        %v6090 = vadd.f32 %v5509, %v5954
        %v6091 = vadd.f32 %v5510, %v5957
        %v6092 = vadd.f32 %v5511, %v5962
        %v6093 = vadd.f32 %v5512, %v5965
        %v6094 = vadd.f32 %v5513, %v5970
        %v6095 = vadd.f32 %v5514, %v5973
        %v6096 = vadd.f32 %v5515, %v5978
        %v6097 = vadd.f32 %v5516, %v5981
        %v6098 = vadd.f32 %v5517, %v5986
        %v6099 = vadd.f32 %v5518, %v5989
        %v6100 = vadd.f32 %v5519, %v5994
        %v6101 = vadd.f32 %v5520, %v5997
        %v6102 = vadd.f32 %v5521, %v6002
        %v6103 = vadd.f32 %v5522, %v6005
        %v6104 = vadd.f32 %v5523, %v6010
        %v6105 = vadd.f32 %v5524, %v6013
        %v6106 = vadd.f32 %v5525, %v6018
        %v6107 = vadd.f32 %v5526, %v6021
        %v6108 = vadd.f32 %v5527, %v6026
        %v6109 = vadd.f32 %v5528, %v6029
        %v6110 = vadd.f32 %v5529, %v6034
        %v6111 = vadd.f32 %v5530, %v6037
        %v6112 = vld [vmem:[%s2] sm:$0x1]
        %v6114 = vlaneseq
        %v6115 = vshrl.u32 %v6114, 7
        %v6116 = vsub.s32 0, %v6115
        %v6117 = vrot.slane %v6112, %v6116
        %v6119 = vadd.f32 %v6040, %v6117
        %v6120 = vadd.f32 %v6041, %v6117
        %v6121 = vadd.f32 %v6042, %v6117
        %v6122 = vadd.f32 %v6043, %v6117
        %v6123 = vadd.f32 %v6044, %v6117
        %v6124 = vadd.f32 %v6045, %v6117
        %v6125 = vadd.f32 %v6046, %v6117
        %v6126 = vadd.f32 %v6047, %v6117
        %v6127 = vadd.f32 %v6048, %v6117
        %v6128 = vadd.f32 %v6049, %v6117
        %v6129 = vadd.f32 %v6050, %v6117
        %v6130 = vadd.f32 %v6051, %v6117
        %v6131 = vadd.f32 %v6052, %v6117
        %v6132 = vadd.f32 %v6053, %v6117
        %v6133 = vadd.f32 %v6054, %v6117
        %v6134 = vadd.f32 %v6055, %v6117
        %v6135 = vadd.f32 %v6056, %v6117
        %v6136 = vadd.f32 %v6057, %v6117
        %v6137 = vadd.f32 %v6058, %v6117
        %v6138 = vadd.f32 %v6059, %v6117
        %v6139 = vadd.f32 %v6060, %v6117
        %v6140 = vadd.f32 %v6061, %v6117
        %v6141 = vadd.f32 %v6062, %v6117
        %v6142 = vadd.f32 %v6063, %v6117
        %v6143 = vadd.f32 %v6064, %v6117
        %v6144 = vadd.f32 %v6065, %v6117
        %v6145 = vadd.f32 %v6066, %v6117
        %v6146 = vadd.f32 %v6067, %v6117
        %v6147 = vadd.f32 %v6068, %v6117
        %v6148 = vadd.f32 %v6069, %v6117
        %v6149 = vadd.f32 %v6070, %v6117
        %v6150 = vadd.f32 %v6071, %v6117
        %v6151 = vadd.f32 %v6072, %v6117
        %v6152 = vadd.f32 %v6073, %v6117
        %v6153 = vadd.f32 %v6074, %v6117
        %v6154 = vadd.f32 %v6075, %v6117
        %v6155 = vadd.f32 %v6076, %v6117
        %v6156 = vadd.f32 %v6077, %v6117
        %v6157 = vadd.f32 %v6078, %v6117
        %v6158 = vadd.f32 %v6079, %v6117
        %v6159 = vadd.f32 %v6080, %v6117
        %v6160 = vadd.f32 %v6081, %v6117
        %v6161 = vadd.f32 %v6082, %v6117
        %v6162 = vadd.f32 %v6083, %v6117
        %v6163 = vadd.f32 %v6084, %v6117
        %v6164 = vadd.f32 %v6085, %v6117
        %v6165 = vadd.f32 %v6086, %v6117
        %v6166 = vadd.f32 %v6087, %v6117
        %v6167 = vadd.f32 %v6088, %v6117
        %v6168 = vadd.f32 %v6089, %v6117
        %v6169 = vadd.f32 %v6090, %v6117
        %v6170 = vadd.f32 %v6091, %v6117
        %v6171 = vadd.f32 %v6092, %v6117
        %v6172 = vadd.f32 %v6093, %v6117
        %v6173 = vadd.f32 %v6094, %v6117
        %v6174 = vadd.f32 %v6095, %v6117
        %v6175 = vadd.f32 %v6096, %v6117
        %v6176 = vadd.f32 %v6097, %v6117
        %v6177 = vadd.f32 %v6098, %v6117
        %v6178 = vadd.f32 %v6099, %v6117
        %v6179 = vadd.f32 %v6100, %v6117
        %v6180 = vadd.f32 %v6101, %v6117
        %v6181 = vadd.f32 %v6102, %v6117
        %v6182 = vadd.f32 %v6103, %v6117
        %v6183 = vadd.f32 %v6104, %v6117
        %v6184 = vadd.f32 %v6105, %v6117
        %v6185 = vadd.f32 %v6106, %v6117
        %v6186 = vadd.f32 %v6107, %v6117
        %v6187 = vadd.f32 %v6108, %v6117
        %v6188 = vadd.f32 %v6109, %v6117
        %v6189 = vadd.f32 %v6110, %v6117
        %v6190 = vadd.f32 %v6111, %v6117
        %v6191 = vmax.f32 %v6119, 0.0
        %v6192 = vmax.f32 %v6120, 0.0
        %v6193 = vmax.f32 %v6121, 0.0
        %v6194 = vmax.f32 %v6122, 0.0
        %v6195 = vmax.f32 %v6123, 0.0
        %v6196 = vmax.f32 %v6124, 0.0
        %v6197 = vmax.f32 %v6125, 0.0
        %v6198 = vmax.f32 %v6126, 0.0
        %v6199 = vmax.f32 %v6127, 0.0
        %v6200 = vmax.f32 %v6128, 0.0
        %v6201 = vmax.f32 %v6129, 0.0
        %v6202 = vmax.f32 %v6130, 0.0
        %v6203 = vmax.f32 %v6131, 0.0
        %v6204 = vmax.f32 %v6132, 0.0
        %v6205 = vmax.f32 %v6133, 0.0
        %v6206 = vmax.f32 %v6134, 0.0
        %v6207 = vmax.f32 %v6135, 0.0
        %v6208 = vmax.f32 %v6136, 0.0
        %v6209 = vmax.f32 %v6137, 0.0
        %v6210 = vmax.f32 %v6138, 0.0
        %v6211 = vmax.f32 %v6139, 0.0
        %v6212 = vmax.f32 %v6140, 0.0
        %v6213 = vmax.f32 %v6141, 0.0
        %v6214 = vmax.f32 %v6142, 0.0
        %v6215 = vmax.f32 %v6143, 0.0
        %v6216 = vmax.f32 %v6144, 0.0
        %v6217 = vmax.f32 %v6145, 0.0
        %v6218 = vmax.f32 %v6146, 0.0
        %v6219 = vmax.f32 %v6147, 0.0
        %v6220 = vmax.f32 %v6148, 0.0
        %v6221 = vmax.f32 %v6149, 0.0
        %v6222 = vmax.f32 %v6150, 0.0
        %v6223 = vmax.f32 %v6151, 0.0
        %v6224 = vmax.f32 %v6152, 0.0
        %v6225 = vmax.f32 %v6153, 0.0
        %v6226 = vmax.f32 %v6154, 0.0
        %v6227 = vmax.f32 %v6155, 0.0
        %v6228 = vmax.f32 %v6156, 0.0
        %v6229 = vmax.f32 %v6157, 0.0
        %v6230 = vmax.f32 %v6158, 0.0
        %v6231 = vmax.f32 %v6159, 0.0
        %v6232 = vmax.f32 %v6160, 0.0
        %v6233 = vmax.f32 %v6161, 0.0
        %v6234 = vmax.f32 %v6162, 0.0
        %v6235 = vmax.f32 %v6163, 0.0
        %v6236 = vmax.f32 %v6164, 0.0
        %v6237 = vmax.f32 %v6165, 0.0
        %v6238 = vmax.f32 %v6166, 0.0
        %v6239 = vmax.f32 %v6167, 0.0
        %v6240 = vmax.f32 %v6168, 0.0
        %v6241 = vmax.f32 %v6169, 0.0
        %v6242 = vmax.f32 %v6170, 0.0
        %v6243 = vmax.f32 %v6171, 0.0
        %v6244 = vmax.f32 %v6172, 0.0
        %v6245 = vmax.f32 %v6173, 0.0
        %v6246 = vmax.f32 %v6174, 0.0
        %v6247 = vmax.f32 %v6175, 0.0
        %v6248 = vmax.f32 %v6176, 0.0
        %v6249 = vmax.f32 %v6177, 0.0
        %v6250 = vmax.f32 %v6178, 0.0
        %v6251 = vmax.f32 %v6179, 0.0
        %v6252 = vmax.f32 %v6180, 0.0
        %v6253 = vmax.f32 %v6181, 0.0
        %v6254 = vmax.f32 %v6182, 0.0
        %v6255 = vmax.f32 %v6183, 0.0
        %v6256 = vmax.f32 %v6184, 0.0
        %v6257 = vmax.f32 %v6185, 0.0
        %v6258 = vmax.f32 %v6186, 0.0
        %v6259 = vmax.f32 %v6187, 0.0
        %v6260 = vmax.f32 %v6188, 0.0
        %v6261 = vmax.f32 %v6189, 0.0
        %v6262 = vmax.f32 %v6190, 0.0
        %vm6329 = vcmask 1046528
        %v6330 = vrot.slane %v6194, 1
        %v6331 = vrot.slane %v6195, 1
        %v6332 = vsel %vm6329, %v6330, %v6331
        %v6333 = vrot.slane %v6196, 1
        %v6334 = vsel %vm6329, %v6331, %v6333
        %v6335 = vrot.slane %v6197, 1
        %v6336 = vsel %vm6329, %v6333, %v6335
        %v6337 = vrot.slane %v6198, 1
        %v6338 = vsel %vm6329, %v6335, %v6337
        %v6339 = vrot.slane %v6199, 1
        %v6340 = vsel %vm6329, %v6337, %v6339
        %v6341 = vrot.slane %v6200, 1
        %v6342 = vsel %vm6329, %v6339, %v6341
        %v6343 = vrot.slane %v6201, 1
        %v6344 = vsel %vm6329, %v6341, %v6343
        %v6345 = vrot.slane %v6202, 1
        %v6346 = vsel %vm6329, %v6343, %v6345
        %v6347 = vrot.slane %v6203, 1
        %v6348 = vsel %vm6329, %v6345, %v6347
        %v6349 = vrot.slane %v6204, 1
        %v6350 = vsel %vm6329, %v6347, %v6349
        %v6351 = vrot.slane %v6205, 1
        %v6352 = vsel %vm6329, %v6349, %v6351
        %v6353 = vrot.slane %v6206, 1
        %v6354 = vsel %vm6329, %v6351, %v6353
        %v6355 = vrot.slane %v6207, 1
        %v6356 = vsel %vm6329, %v6353, %v6355
        %v6357 = vrot.slane %v6208, 1
        %v6358 = vsel %vm6329, %v6355, %v6357
        %v6359 = vrot.slane %v6209, 1
        %v6360 = vsel %vm6329, %v6357, %v6359
        %v6361 = vrot.slane %v6210, 1
        %v6362 = vsel %vm6329, %v6359, %v6361
        %v6363 = vrot.slane %v6211, 1
        %v6364 = vsel %vm6329, %v6361, %v6363
        %v6365 = vrot.slane %v6212, 1
        %v6366 = vsel %vm6329, %v6363, %v6365
        %v6367 = vrot.slane %v6213, 1
        %v6368 = vsel %vm6329, %v6365, %v6367
        %v6369 = vrot.slane %v6214, 1
        %v6370 = vsel %vm6329, %v6367, %v6369
        %v6371 = vrot.slane %v6215, 1
        %v6372 = vsel %vm6329, %v6369, %v6371
        %v6373 = vrot.slane %v6216, 1
        %v6374 = vsel %vm6329, %v6371, %v6373
        %v6375 = vrot.slane %v6217, 1
        %v6376 = vsel %vm6329, %v6373, %v6375
        %v6377 = vrot.slane %v6218, 1
        %v6378 = vsel %vm6329, %v6375, %v6377
        %v6379 = vrot.slane %v6219, 1
        %v6380 = vsel %vm6329, %v6377, %v6379
        %v6381 = vrot.slane %v6220, 1
        %v6382 = vsel %vm6329, %v6379, %v6381
        %v6383 = vrot.slane %v6221, 1
        %v6384 = vsel %vm6329, %v6381, %v6383
        %v6385 = vrot.slane %v6222, 1
        %v6386 = vsel %vm6329, %v6383, %v6385
        %v6387 = vrot.slane %v6223, 1
        %v6388 = vsel %vm6329, %v6385, %v6387
        %v6389 = vrot.slane %v6224, 1
        %v6390 = vsel %vm6329, %v6387, %v6389
        %v6391 = vrot.slane %v6225, 1
        %v6392 = vsel %vm6329, %v6389, %v6391
        %v6393 = vrot.slane %v6226, 1
        %v6394 = vsel %vm6329, %v6391, %v6393
        %v6395 = vrot.slane %v6227, 1
        %v6396 = vsel %vm6329, %v6393, %v6395
        %v6397 = vrot.slane %v6228, 1
        %v6398 = vsel %vm6329, %v6395, %v6397
        %v6399 = vrot.slane %v6229, 1
        %v6400 = vsel %vm6329, %v6397, %v6399
        %v6401 = vrot.slane %v6230, 1
        %v6402 = vsel %vm6329, %v6399, %v6401
        %v6403 = vrot.slane %v6231, 1
        %v6404 = vsel %vm6329, %v6401, %v6403
        %v6405 = vrot.slane %v6232, 1
        %v6406 = vsel %vm6329, %v6403, %v6405
        %v6407 = vrot.slane %v6233, 1
        %v6408 = vsel %vm6329, %v6405, %v6407
        %v6409 = vrot.slane %v6234, 1
        %v6410 = vsel %vm6329, %v6407, %v6409
        %v6411 = vrot.slane %v6235, 1
        %v6412 = vsel %vm6329, %v6409, %v6411
        %v6413 = vrot.slane %v6236, 1
        %v6414 = vsel %vm6329, %v6411, %v6413
        %v6415 = vrot.slane %v6237, 1
        %v6416 = vsel %vm6329, %v6413, %v6415
        %v6417 = vrot.slane %v6238, 1
        %v6418 = vsel %vm6329, %v6415, %v6417
        %v6419 = vrot.slane %v6239, 1
        %v6420 = vsel %vm6329, %v6417, %v6419
        %v6421 = vrot.slane %v6240, 1
        %v6422 = vsel %vm6329, %v6419, %v6421
        %v6423 = vrot.slane %v6241, 1
        %v6424 = vsel %vm6329, %v6421, %v6423
        %v6425 = vrot.slane %v6242, 1
        %v6426 = vsel %vm6329, %v6423, %v6425
        %v6427 = vrot.slane %v6243, 1
        %v6428 = vsel %vm6329, %v6425, %v6427
        %v6429 = vrot.slane %v6244, 1
        %v6430 = vsel %vm6329, %v6427, %v6429
        %v6431 = vrot.slane %v6245, 1
        %v6432 = vsel %vm6329, %v6429, %v6431
        %v6433 = vrot.slane %v6246, 1
        %v6434 = vsel %vm6329, %v6431, %v6433
        %v6435 = vrot.slane %v6247, 1
        %v6436 = vsel %vm6329, %v6433, %v6435
        %v6437 = vrot.slane %v6248, 1
        %v6438 = vsel %vm6329, %v6435, %v6437
        %v6439 = vrot.slane %v6249, 1
        %v6440 = vsel %vm6329, %v6437, %v6439
        %v6441 = vrot.slane %v6250, 1
        %v6442 = vsel %vm6329, %v6439, %v6441
        %v6443 = vrot.slane %v6251, 1
        %v6444 = vsel %vm6329, %v6441, %v6443
        %v6445 = vrot.slane %v6252, 1
        %v6446 = vsel %vm6329, %v6443, %v6445
        %v6447 = vrot.slane %v6253, 1
        %v6448 = vsel %vm6329, %v6445, %v6447
        %v6449 = vrot.slane %v6254, 1
        %v6450 = vsel %vm6329, %v6447, %v6449
        %v6451 = vrot.slane %v6255, 1
        %v6452 = vsel %vm6329, %v6449, %v6451
        %v6453 = vrot.slane %v6256, 1
        %v6454 = vsel %vm6329, %v6451, %v6453
        %v6455 = vrot.slane %v6257, 1
        %v6456 = vsel %vm6329, %v6453, %v6455
        %v6457 = vrot.slane %v6258, 1
        %v6458 = vsel %vm6329, %v6455, %v6457
        %v6459 = vrot.slane %v6259, 1
        %v6460 = vsel %vm6329, %v6457, %v6459
        %v6527 = vmax.f32 %v6191, %v6332
        %v6528 = vmax.f32 %v6192, %v6334
        %v6529 = vmax.f32 %v6193, %v6336
        %v6530 = vmax.f32 %v6194, %v6338
        %v6531 = vmax.f32 %v6195, %v6340
        %v6532 = vmax.f32 %v6196, %v6342
        %v6533 = vmax.f32 %v6197, %v6344
        %v6534 = vmax.f32 %v6198, %v6346
        %v6535 = vmax.f32 %v6199, %v6348
        %v6536 = vmax.f32 %v6200, %v6350
        %v6537 = vmax.f32 %v6201, %v6352
        %v6538 = vmax.f32 %v6202, %v6354
        %v6539 = vmax.f32 %v6203, %v6356
        %v6540 = vmax.f32 %v6204, %v6358
        %v6541 = vmax.f32 %v6205, %v6360
        %v6542 = vmax.f32 %v6206, %v6362
        %v6543 = vmax.f32 %v6207, %v6364
        %v6544 = vmax.f32 %v6208, %v6366
        %v6545 = vmax.f32 %v6209, %v6368
        %v6546 = vmax.f32 %v6210, %v6370
        %v6547 = vmax.f32 %v6211, %v6372
        %v6548 = vmax.f32 %v6212, %v6374
        %v6549 = vmax.f32 %v6213, %v6376
        %v6550 = vmax.f32 %v6214, %v6378
        %v6551 = vmax.f32 %v6215, %v6380
        %v6552 = vmax.f32 %v6216, %v6382
        %v6553 = vmax.f32 %v6217, %v6384
        %v6554 = vmax.f32 %v6218, %v6386
        %v6555 = vmax.f32 %v6219, %v6388
        %v6556 = vmax.f32 %v6220, %v6390
        %v6557 = vmax.f32 %v6221, %v6392
        %v6558 = vmax.f32 %v6222, %v6394
        %v6559 = vmax.f32 %v6223, %v6396
        %v6560 = vmax.f32 %v6224, %v6398
        %v6561 = vmax.f32 %v6225, %v6400
        %v6562 = vmax.f32 %v6226, %v6402
        %v6563 = vmax.f32 %v6227, %v6404
        %v6564 = vmax.f32 %v6228, %v6406
        %v6565 = vmax.f32 %v6229, %v6408
        %v6566 = vmax.f32 %v6230, %v6410
        %v6567 = vmax.f32 %v6231, %v6412
        %v6568 = vmax.f32 %v6232, %v6414
        %v6569 = vmax.f32 %v6233, %v6416
        %v6570 = vmax.f32 %v6234, %v6418
        %v6571 = vmax.f32 %v6235, %v6420
        %v6572 = vmax.f32 %v6236, %v6422
        %v6573 = vmax.f32 %v6237, %v6424
        %v6574 = vmax.f32 %v6238, %v6426
        %v6575 = vmax.f32 %v6239, %v6428
        %v6576 = vmax.f32 %v6240, %v6430
        %v6577 = vmax.f32 %v6241, %v6432
        %v6578 = vmax.f32 %v6242, %v6434
        %v6579 = vmax.f32 %v6243, %v6436
        %v6580 = vmax.f32 %v6244, %v6438
        %v6581 = vmax.f32 %v6245, %v6440
        %v6582 = vmax.f32 %v6246, %v6442
        %v6583 = vmax.f32 %v6247, %v6444
        %v6584 = vmax.f32 %v6248, %v6446
        %v6585 = vmax.f32 %v6249, %v6448
        %v6586 = vmax.f32 %v6250, %v6450
        %v6587 = vmax.f32 %v6251, %v6452
        %v6588 = vmax.f32 %v6252, %v6454
        %v6589 = vmax.f32 %v6253, %v6456
        %v6590 = vmax.f32 %v6254, %v6458
        %v6591 = vmax.f32 %v6255, %v6460
        %v6592 = vmax.f32 %v6256, %v6459
        %vm6596 = vcmask 1045504
        %v6597 = vrot.slane %v6197, 2
        %v6598 = vrot.slane %v6198, 2
        %v6599 = vsel %vm6596, %v6597, %v6598
        %v6600 = vrot.slane %v6199, 2
        %v6601 = vsel %vm6596, %v6598, %v6600
        %v6602 = vrot.slane %v6200, 2
        %v6603 = vsel %vm6596, %v6600, %v6602
        %v6604 = vrot.slane %v6201, 2
        %v6605 = vsel %vm6596, %v6602, %v6604
        %v6606 = vrot.slane %v6202, 2
        %v6607 = vsel %vm6596, %v6604, %v6606
        %v6608 = vrot.slane %v6203, 2
        %v6609 = vsel %vm6596, %v6606, %v6608
        %v6610 = vrot.slane %v6204, 2
        %v6611 = vsel %vm6596, %v6608, %v6610
        %v6612 = vrot.slane %v6205, 2
        %v6613 = vsel %vm6596, %v6610, %v6612
        %v6614 = vrot.slane %v6206, 2
        %v6615 = vsel %vm6596, %v6612, %v6614
        %v6616 = vrot.slane %v6207, 2
        %v6617 = vsel %vm6596, %v6614, %v6616
        %v6618 = vrot.slane %v6208, 2
        %v6619 = vsel %vm6596, %v6616, %v6618
        %v6620 = vrot.slane %v6209, 2
        %v6621 = vsel %vm6596, %v6618, %v6620
        %v6622 = vrot.slane %v6210, 2
        %v6623 = vsel %vm6596, %v6620, %v6622
        %v6624 = vrot.slane %v6211, 2
        %v6625 = vsel %vm6596, %v6622, %v6624
        %v6626 = vrot.slane %v6212, 2
        %v6627 = vsel %vm6596, %v6624, %v6626
        %v6628 = vrot.slane %v6213, 2
        %v6629 = vsel %vm6596, %v6626, %v6628
        %v6630 = vrot.slane %v6214, 2
        %v6631 = vsel %vm6596, %v6628, %v6630
        %v6632 = vrot.slane %v6215, 2
        %v6633 = vsel %vm6596, %v6630, %v6632
        %v6634 = vrot.slane %v6216, 2
        %v6635 = vsel %vm6596, %v6632, %v6634
        %v6636 = vrot.slane %v6217, 2
        %v6637 = vsel %vm6596, %v6634, %v6636
        %v6638 = vrot.slane %v6218, 2
        %v6639 = vsel %vm6596, %v6636, %v6638
        %v6640 = vrot.slane %v6219, 2
        %v6641 = vsel %vm6596, %v6638, %v6640
        %v6642 = vrot.slane %v6220, 2
        %v6643 = vsel %vm6596, %v6640, %v6642
        %v6644 = vrot.slane %v6221, 2
        %v6645 = vsel %vm6596, %v6642, %v6644
        %v6646 = vrot.slane %v6222, 2
        %v6647 = vsel %vm6596, %v6644, %v6646
        %v6648 = vrot.slane %v6223, 2
        %v6649 = vsel %vm6596, %v6646, %v6648
        %v6650 = vrot.slane %v6224, 2
        %v6651 = vsel %vm6596, %v6648, %v6650
        %v6652 = vrot.slane %v6225, 2
        %v6653 = vsel %vm6596, %v6650, %v6652
        %v6654 = vrot.slane %v6226, 2
        %v6655 = vsel %vm6596, %v6652, %v6654
        %v6656 = vrot.slane %v6227, 2
        %v6657 = vsel %vm6596, %v6654, %v6656
        %v6658 = vrot.slane %v6228, 2
        %v6659 = vsel %vm6596, %v6656, %v6658
        %v6660 = vrot.slane %v6229, 2
        %v6661 = vsel %vm6596, %v6658, %v6660
        %v6662 = vrot.slane %v6230, 2
        %v6663 = vsel %vm6596, %v6660, %v6662
        %v6664 = vrot.slane %v6231, 2
        %v6665 = vsel %vm6596, %v6662, %v6664
        %v6666 = vrot.slane %v6232, 2
        %v6667 = vsel %vm6596, %v6664, %v6666
        %v6668 = vrot.slane %v6233, 2
        %v6669 = vsel %vm6596, %v6666, %v6668
        %v6670 = vrot.slane %v6234, 2
        %v6671 = vsel %vm6596, %v6668, %v6670
        %v6672 = vrot.slane %v6235, 2
        %v6673 = vsel %vm6596, %v6670, %v6672
        %v6674 = vrot.slane %v6236, 2
        %v6675 = vsel %vm6596, %v6672, %v6674
        %v6676 = vrot.slane %v6237, 2
        %v6677 = vsel %vm6596, %v6674, %v6676
        %v6678 = vrot.slane %v6238, 2
        %v6679 = vsel %vm6596, %v6676, %v6678
        %v6680 = vrot.slane %v6239, 2
        %v6681 = vsel %vm6596, %v6678, %v6680
        %v6682 = vrot.slane %v6240, 2
        %v6683 = vsel %vm6596, %v6680, %v6682
        %v6684 = vrot.slane %v6241, 2
        %v6685 = vsel %vm6596, %v6682, %v6684
        %v6686 = vrot.slane %v6242, 2
        %v6687 = vsel %vm6596, %v6684, %v6686
        %v6688 = vrot.slane %v6243, 2
        %v6689 = vsel %vm6596, %v6686, %v6688
        %v6690 = vrot.slane %v6244, 2
        %v6691 = vsel %vm6596, %v6688, %v6690
        %v6692 = vrot.slane %v6245, 2
        %v6693 = vsel %vm6596, %v6690, %v6692
        %v6694 = vrot.slane %v6246, 2
        %v6695 = vsel %vm6596, %v6692, %v6694
        %v6696 = vrot.slane %v6247, 2
        %v6697 = vsel %vm6596, %v6694, %v6696
        %v6698 = vrot.slane %v6248, 2
        %v6699 = vsel %vm6596, %v6696, %v6698
        %v6700 = vrot.slane %v6249, 2
        %v6701 = vsel %vm6596, %v6698, %v6700
        %v6702 = vrot.slane %v6250, 2
        %v6703 = vsel %vm6596, %v6700, %v6702
        %v6704 = vrot.slane %v6251, 2
        %v6705 = vsel %vm6596, %v6702, %v6704
        %v6706 = vrot.slane %v6252, 2
        %v6707 = vsel %vm6596, %v6704, %v6706
        %v6708 = vrot.slane %v6253, 2
        %v6709 = vsel %vm6596, %v6706, %v6708
        %v6710 = vrot.slane %v6254, 2
        %v6711 = vsel %vm6596, %v6708, %v6710
        %v6712 = vrot.slane %v6255, 2
        %v6713 = vsel %vm6596, %v6710, %v6712
        %v6714 = vrot.slane %v6256, 2
        %v6715 = vsel %vm6596, %v6712, %v6714
        %v6716 = vrot.slane %v6257, 2
        %v6717 = vsel %vm6596, %v6714, %v6716
        %v6718 = vrot.slane %v6258, 2
        %v6719 = vsel %vm6596, %v6716, %v6718
        %v6720 = vrot.slane %v6259, 2
        %v6721 = vsel %vm6596, %v6718, %v6720
        %v6722 = vrot.slane %v6260, 2
        %v6723 = vsel %vm6596, %v6720, %v6722
        %v6724 = vrot.slane %v6261, 2
        %v6725 = vsel %vm6596, %v6722, %v6724
        %v6726 = vrot.slane %v6262, 2
        %v6727 = vsel %vm6596, %v6724, %v6726
        %v6794 = vmax.f32 %v6527, %v6599
        %v6795 = vmax.f32 %v6528, %v6601
        %v6796 = vmax.f32 %v6529, %v6603
        %v6797 = vmax.f32 %v6530, %v6605
        %v6798 = vmax.f32 %v6531, %v6607
        %v6799 = vmax.f32 %v6532, %v6609
        %v6800 = vmax.f32 %v6533, %v6611
        %v6801 = vmax.f32 %v6534, %v6613
        %v6802 = vmax.f32 %v6535, %v6615
        %v6803 = vmax.f32 %v6536, %v6617
        %v6804 = vmax.f32 %v6537, %v6619
        %v6805 = vmax.f32 %v6538, %v6621
        %v6806 = vmax.f32 %v6539, %v6623
        %v6807 = vmax.f32 %v6540, %v6625
        %v6808 = vmax.f32 %v6541, %v6627
        %v6809 = vmax.f32 %v6542, %v6629
        %v6810 = vmax.f32 %v6543, %v6631
        %v6811 = vmax.f32 %v6544, %v6633
        %v6812 = vmax.f32 %v6545, %v6635
        %v6813 = vmax.f32 %v6546, %v6637
        %v6814 = vmax.f32 %v6547, %v6639
        %v6815 = vmax.f32 %v6548, %v6641
        %v6816 = vmax.f32 %v6549, %v6643
        %v6817 = vmax.f32 %v6550, %v6645
        %v6818 = vmax.f32 %v6551, %v6647
        %v6819 = vmax.f32 %v6552, %v6649
        %v6820 = vmax.f32 %v6553, %v6651
        %v6821 = vmax.f32 %v6554, %v6653
        %v6822 = vmax.f32 %v6555, %v6655
        %v6823 = vmax.f32 %v6556, %v6657
        %v6824 = vmax.f32 %v6557, %v6659
        %v6825 = vmax.f32 %v6558, %v6661
        %v6826 = vmax.f32 %v6559, %v6663
        %v6827 = vmax.f32 %v6560, %v6665
        %v6828 = vmax.f32 %v6561, %v6667
        %v6829 = vmax.f32 %v6562, %v6669
        %v6830 = vmax.f32 %v6563, %v6671
        %v6831 = vmax.f32 %v6564, %v6673
        %v6832 = vmax.f32 %v6565, %v6675
        %v6833 = vmax.f32 %v6566, %v6677
        %v6834 = vmax.f32 %v6567, %v6679
        %v6835 = vmax.f32 %v6568, %v6681
        %v6836 = vmax.f32 %v6569, %v6683
        %v6837 = vmax.f32 %v6570, %v6685
        %v6838 = vmax.f32 %v6571, %v6687
        %v6839 = vmax.f32 %v6572, %v6689
        %v6840 = vmax.f32 %v6573, %v6691
        %v6841 = vmax.f32 %v6574, %v6693
        %v6842 = vmax.f32 %v6575, %v6695
        %v6843 = vmax.f32 %v6576, %v6697
        %v6844 = vmax.f32 %v6577, %v6699
        %v6845 = vmax.f32 %v6578, %v6701
        %v6846 = vmax.f32 %v6579, %v6703
        %v6847 = vmax.f32 %v6580, %v6705
        %v6848 = vmax.f32 %v6581, %v6707
        %v6849 = vmax.f32 %v6582, %v6709
        %v6850 = vmax.f32 %v6583, %v6711
        %v6851 = vmax.f32 %v6584, %v6713
        %v6852 = vmax.f32 %v6585, %v6715
        %v6853 = vmax.f32 %v6586, %v6717
        %v6854 = vmax.f32 %v6587, %v6719
        %v6855 = vmax.f32 %v6588, %v6721
        %v6856 = vmax.f32 %v6589, %v6723
        %v6857 = vmax.f32 %v6590, %v6725
        %v6858 = vmax.f32 %v6591, %v6727
        %v6859 = vmax.f32 %v6592, %v6726
        %v6926 = vrot.slane %v6794, 1
        %v6927 = vrot.slane %v6795, 1
        %v6928 = vsel %vm6329, %v6926, %v6927
        %v6929 = vrot.slane %v6796, 1
        %v6930 = vsel %vm6329, %v6927, %v6929
        %v6931 = vrot.slane %v6797, 1
        %v6932 = vsel %vm6329, %v6929, %v6931
        %v6933 = vrot.slane %v6798, 1
        %v6934 = vsel %vm6329, %v6931, %v6933
        %v6935 = vrot.slane %v6799, 1
        %v6936 = vsel %vm6329, %v6933, %v6935
        %v6937 = vrot.slane %v6800, 1
        %v6938 = vsel %vm6329, %v6935, %v6937
        %v6939 = vrot.slane %v6801, 1
        %v6940 = vsel %vm6329, %v6937, %v6939
        %v6941 = vrot.slane %v6802, 1
        %v6942 = vsel %vm6329, %v6939, %v6941
        %v6943 = vrot.slane %v6803, 1
        %v6944 = vsel %vm6329, %v6941, %v6943
        %v6945 = vrot.slane %v6804, 1
        %v6946 = vsel %vm6329, %v6943, %v6945
        %v6947 = vrot.slane %v6805, 1
        %v6948 = vsel %vm6329, %v6945, %v6947
        %v6949 = vrot.slane %v6806, 1
        %v6950 = vsel %vm6329, %v6947, %v6949
        %v6951 = vrot.slane %v6807, 1
        %v6952 = vsel %vm6329, %v6949, %v6951
        %v6953 = vrot.slane %v6808, 1
        %v6954 = vsel %vm6329, %v6951, %v6953
        %v6955 = vrot.slane %v6809, 1
        %v6956 = vsel %vm6329, %v6953, %v6955
        %v6957 = vrot.slane %v6810, 1
        %v6958 = vsel %vm6329, %v6955, %v6957
        %v6959 = vrot.slane %v6811, 1
        %v6960 = vsel %vm6329, %v6957, %v6959
        %v6961 = vrot.slane %v6812, 1
        %v6962 = vsel %vm6329, %v6959, %v6961
        %v6963 = vrot.slane %v6813, 1
        %v6964 = vsel %vm6329, %v6961, %v6963
        %v6965 = vrot.slane %v6814, 1
        %v6966 = vsel %vm6329, %v6963, %v6965
        %v6967 = vrot.slane %v6815, 1
        %v6968 = vsel %vm6329, %v6965, %v6967
        %v6969 = vrot.slane %v6816, 1
        %v6970 = vsel %vm6329, %v6967, %v6969
        %v6971 = vrot.slane %v6817, 1
        %v6972 = vsel %vm6329, %v6969, %v6971
        %v6973 = vrot.slane %v6818, 1
        %v6974 = vsel %vm6329, %v6971, %v6973
        %v6975 = vrot.slane %v6819, 1
        %v6976 = vsel %vm6329, %v6973, %v6975
        %v6977 = vrot.slane %v6820, 1
        %v6978 = vsel %vm6329, %v6975, %v6977
        %v6979 = vrot.slane %v6821, 1
        %v6980 = vsel %vm6329, %v6977, %v6979
        %v6981 = vrot.slane %v6822, 1
        %v6982 = vsel %vm6329, %v6979, %v6981
        %v6983 = vrot.slane %v6823, 1
        %v6984 = vsel %vm6329, %v6981, %v6983
        %v6985 = vrot.slane %v6824, 1
        %v6986 = vsel %vm6329, %v6983, %v6985
        %v6987 = vrot.slane %v6825, 1
        %v6988 = vsel %vm6329, %v6985, %v6987
        %v6989 = vrot.slane %v6826, 1
        %v6990 = vsel %vm6329, %v6987, %v6989
        %v6991 = vrot.slane %v6827, 1
        %v6992 = vsel %vm6329, %v6989, %v6991
        %v6993 = vrot.slane %v6828, 1
        %v6994 = vsel %vm6329, %v6991, %v6993
        %v6995 = vrot.slane %v6829, 1
        %v6996 = vsel %vm6329, %v6993, %v6995
        %v6997 = vrot.slane %v6830, 1
        %v6998 = vsel %vm6329, %v6995, %v6997
        %v6999 = vrot.slane %v6831, 1
        %v7000 = vsel %vm6329, %v6997, %v6999
        %v7001 = vrot.slane %v6832, 1
        %v7002 = vsel %vm6329, %v6999, %v7001
        %v7003 = vrot.slane %v6833, 1
        %v7004 = vsel %vm6329, %v7001, %v7003
        %v7005 = vrot.slane %v6834, 1
        %v7006 = vsel %vm6329, %v7003, %v7005
        %v7007 = vrot.slane %v6835, 1
        %v7008 = vsel %vm6329, %v7005, %v7007
        %v7009 = vrot.slane %v6836, 1
        %v7010 = vsel %vm6329, %v7007, %v7009
        %v7011 = vrot.slane %v6837, 1
        %v7012 = vsel %vm6329, %v7009, %v7011
        %v7013 = vrot.slane %v6838, 1
        %v7014 = vsel %vm6329, %v7011, %v7013
        %v7015 = vrot.slane %v6839, 1
        %v7016 = vsel %vm6329, %v7013, %v7015
        %v7017 = vrot.slane %v6840, 1
        %v7018 = vsel %vm6329, %v7015, %v7017
        %v7019 = vrot.slane %v6841, 1
        %v7020 = vsel %vm6329, %v7017, %v7019
        %v7021 = vrot.slane %v6842, 1
        %v7022 = vsel %vm6329, %v7019, %v7021
        %v7023 = vrot.slane %v6843, 1
        %v7024 = vsel %vm6329, %v7021, %v7023
        %v7025 = vrot.slane %v6844, 1
        %v7026 = vsel %vm6329, %v7023, %v7025
        %v7027 = vrot.slane %v6845, 1
        %v7028 = vsel %vm6329, %v7025, %v7027
        %v7029 = vrot.slane %v6846, 1
        %v7030 = vsel %vm6329, %v7027, %v7029
        %v7031 = vrot.slane %v6847, 1
        %v7032 = vsel %vm6329, %v7029, %v7031
        %v7033 = vrot.slane %v6848, 1
        %v7034 = vsel %vm6329, %v7031, %v7033
        %v7035 = vrot.slane %v6849, 1
        %v7036 = vsel %vm6329, %v7033, %v7035
        %v7037 = vrot.slane %v6850, 1
        %v7038 = vsel %vm6329, %v7035, %v7037
        %v7039 = vrot.slane %v6851, 1
        %v7040 = vsel %vm6329, %v7037, %v7039
        %v7041 = vrot.slane %v6852, 1
        %v7042 = vsel %vm6329, %v7039, %v7041
        %v7043 = vrot.slane %v6853, 1
        %v7044 = vsel %vm6329, %v7041, %v7043
        %v7045 = vrot.slane %v6854, 1
        %v7046 = vsel %vm6329, %v7043, %v7045
        %v7047 = vrot.slane %v6855, 1
        %v7048 = vsel %vm6329, %v7045, %v7047
        %v7049 = vrot.slane %v6856, 1
        %v7050 = vsel %vm6329, %v7047, %v7049
        %v7051 = vrot.slane %v6857, 1
        %v7052 = vsel %vm6329, %v7049, %v7051
        %v7053 = vrot.slane %v6858, 1
        %v7054 = vsel %vm6329, %v7051, %v7053
        %v7055 = vrot.slane %v6859, 1
        %v7056 = vsel %vm6329, %v7053, %v7055
        %v7123 = vmax.f32 %v6794, %v6928
        %v7124 = vmax.f32 %v6795, %v6930
        %v7125 = vmax.f32 %v6796, %v6932
        %v7126 = vmax.f32 %v6797, %v6934
        %v7127 = vmax.f32 %v6798, %v6936
        %v7128 = vmax.f32 %v6799, %v6938
        %v7129 = vmax.f32 %v6800, %v6940
        %v7130 = vmax.f32 %v6801, %v6942
        %v7131 = vmax.f32 %v6802, %v6944
        %v7132 = vmax.f32 %v6803, %v6946
        %v7133 = vmax.f32 %v6804, %v6948
        %v7134 = vmax.f32 %v6805, %v6950
        %v7135 = vmax.f32 %v6806, %v6952
        %v7136 = vmax.f32 %v6807, %v6954
        %v7137 = vmax.f32 %v6808, %v6956
        %v7138 = vmax.f32 %v6809, %v6958
        %v7139 = vmax.f32 %v6810, %v6960
        %v7140 = vmax.f32 %v6811, %v6962
        %v7141 = vmax.f32 %v6812, %v6964
        %v7142 = vmax.f32 %v6813, %v6966
        %v7143 = vmax.f32 %v6814, %v6968
        %v7144 = vmax.f32 %v6815, %v6970
        %v7145 = vmax.f32 %v6816, %v6972
        %v7146 = vmax.f32 %v6817, %v6974
        %v7147 = vmax.f32 %v6818, %v6976
        %v7148 = vmax.f32 %v6819, %v6978
        %v7149 = vmax.f32 %v6820, %v6980
        %v7150 = vmax.f32 %v6821, %v6982
        %v7151 = vmax.f32 %v6822, %v6984
        %v7152 = vmax.f32 %v6823, %v6986
        %v7153 = vmax.f32 %v6824, %v6988
        %v7154 = vmax.f32 %v6825, %v6990
        %v7155 = vmax.f32 %v6826, %v6992
        %v7156 = vmax.f32 %v6827, %v6994
        %v7157 = vmax.f32 %v6828, %v6996
        %v7158 = vmax.f32 %v6829, %v6998
        %v7159 = vmax.f32 %v6830, %v7000
        %v7160 = vmax.f32 %v6831, %v7002
        %v7161 = vmax.f32 %v6832, %v7004
        %v7162 = vmax.f32 %v6833, %v7006
        %v7163 = vmax.f32 %v6834, %v7008
        %v7164 = vmax.f32 %v6835, %v7010
        %v7165 = vmax.f32 %v6836, %v7012
        %v7166 = vmax.f32 %v6837, %v7014
        %v7167 = vmax.f32 %v6838, %v7016
        %v7168 = vmax.f32 %v6839, %v7018
        %v7169 = vmax.f32 %v6840, %v7020
        %v7170 = vmax.f32 %v6841, %v7022
        %v7171 = vmax.f32 %v6842, %v7024
        %v7172 = vmax.f32 %v6843, %v7026
        %v7173 = vmax.f32 %v6844, %v7028
        %v7174 = vmax.f32 %v6845, %v7030
        %v7175 = vmax.f32 %v6846, %v7032
        %v7176 = vmax.f32 %v6847, %v7034
        %v7177 = vmax.f32 %v6848, %v7036
        %v7178 = vmax.f32 %v6849, %v7038
        %v7179 = vmax.f32 %v6850, %v7040
        %v7180 = vmax.f32 %v6851, %v7042
        %v7181 = vmax.f32 %v6852, %v7044
        %v7182 = vmax.f32 %v6853, %v7046
        %v7183 = vmax.f32 %v6854, %v7048
        %v7184 = vmax.f32 %v6855, %v7050
        %v7185 = vmax.f32 %v6856, %v7052
        %v7186 = vmax.f32 %v6857, %v7054
        %v7187 = vmax.f32 %v6858, %v7056
        %v7188 = vmax.f32 %v6859, %v7055
        %v7189 = vrot.slane %v6794, 2
        %v7190 = vrot.slane %v6795, 2
        %v7191 = vsel %vm6596, %v7189, %v7190
        %v7192 = vrot.slane %v6796, 2
        %v7193 = vsel %vm6596, %v7190, %v7192
        %v7194 = vrot.slane %v6797, 2
        %v7195 = vsel %vm6596, %v7192, %v7194
        %v7196 = vrot.slane %v6798, 2
        %v7197 = vsel %vm6596, %v7194, %v7196
        %v7198 = vrot.slane %v6799, 2
        %v7199 = vsel %vm6596, %v7196, %v7198
        %v7200 = vrot.slane %v6800, 2
        %v7201 = vsel %vm6596, %v7198, %v7200
        %v7202 = vrot.slane %v6801, 2
        %v7203 = vsel %vm6596, %v7200, %v7202
        %v7204 = vrot.slane %v6802, 2
        %v7205 = vsel %vm6596, %v7202, %v7204
        %v7206 = vrot.slane %v6803, 2
        %v7207 = vsel %vm6596, %v7204, %v7206
        %v7208 = vrot.slane %v6804, 2
        %v7209 = vsel %vm6596, %v7206, %v7208
        %v7210 = vrot.slane %v6805, 2
        %v7211 = vsel %vm6596, %v7208, %v7210
        %v7212 = vrot.slane %v6806, 2
        %v7213 = vsel %vm6596, %v7210, %v7212
        %v7214 = vrot.slane %v6807, 2
        %v7215 = vsel %vm6596, %v7212, %v7214
        %v7216 = vrot.slane %v6808, 2
        %v7217 = vsel %vm6596, %v7214, %v7216
        %v7218 = vrot.slane %v6809, 2
        %v7219 = vsel %vm6596, %v7216, %v7218
        %v7220 = vrot.slane %v6810, 2
        %v7221 = vsel %vm6596, %v7218, %v7220
        %v7222 = vrot.slane %v6811, 2
        %v7223 = vsel %vm6596, %v7220, %v7222
        %v7224 = vrot.slane %v6812, 2
        %v7225 = vsel %vm6596, %v7222, %v7224
        %v7226 = vrot.slane %v6813, 2
        %v7227 = vsel %vm6596, %v7224, %v7226
        %v7228 = vrot.slane %v6814, 2
        %v7229 = vsel %vm6596, %v7226, %v7228
        %v7230 = vrot.slane %v6815, 2
        %v7231 = vsel %vm6596, %v7228, %v7230
        %v7232 = vrot.slane %v6816, 2
        %v7233 = vsel %vm6596, %v7230, %v7232
        %v7234 = vrot.slane %v6817, 2
        %v7235 = vsel %vm6596, %v7232, %v7234
        %v7236 = vrot.slane %v6818, 2
        %v7237 = vsel %vm6596, %v7234, %v7236
        %v7238 = vrot.slane %v6819, 2
        %v7239 = vsel %vm6596, %v7236, %v7238
        %v7240 = vrot.slane %v6820, 2
        %v7241 = vsel %vm6596, %v7238, %v7240
        %v7242 = vrot.slane %v6821, 2
        %v7243 = vsel %vm6596, %v7240, %v7242
        %v7244 = vrot.slane %v6822, 2
        %v7245 = vsel %vm6596, %v7242, %v7244
        %v7246 = vrot.slane %v6823, 2
        %v7247 = vsel %vm6596, %v7244, %v7246
        %v7248 = vrot.slane %v6824, 2
        %v7249 = vsel %vm6596, %v7246, %v7248
        %v7250 = vrot.slane %v6825, 2
        %v7251 = vsel %vm6596, %v7248, %v7250
        %v7252 = vrot.slane %v6826, 2
        %v7253 = vsel %vm6596, %v7250, %v7252
        %v7254 = vrot.slane %v6827, 2
        %v7255 = vsel %vm6596, %v7252, %v7254
        %v7256 = vrot.slane %v6828, 2
        %v7257 = vsel %vm6596, %v7254, %v7256
        %v7258 = vrot.slane %v6829, 2
        %v7259 = vsel %vm6596, %v7256, %v7258
        %v7260 = vrot.slane %v6830, 2
        %v7261 = vsel %vm6596, %v7258, %v7260
        %v7262 = vrot.slane %v6831, 2
        %v7263 = vsel %vm6596, %v7260, %v7262
        %v7264 = vrot.slane %v6832, 2
        %v7265 = vsel %vm6596, %v7262, %v7264
        %v7266 = vrot.slane %v6833, 2
        %v7267 = vsel %vm6596, %v7264, %v7266
        %v7268 = vrot.slane %v6834, 2
        %v7269 = vsel %vm6596, %v7266, %v7268
        %v7270 = vrot.slane %v6835, 2
        %v7271 = vsel %vm6596, %v7268, %v7270
        %v7272 = vrot.slane %v6836, 2
        %v7273 = vsel %vm6596, %v7270, %v7272
        %v7274 = vrot.slane %v6837, 2
        %v7275 = vsel %vm6596, %v7272, %v7274
        %v7276 = vrot.slane %v6838, 2
        %v7277 = vsel %vm6596, %v7274, %v7276
        %v7278 = vrot.slane %v6839, 2
        %v7279 = vsel %vm6596, %v7276, %v7278
        %v7280 = vrot.slane %v6840, 2
        %v7281 = vsel %vm6596, %v7278, %v7280
        %v7282 = vrot.slane %v6841, 2
        %v7283 = vsel %vm6596, %v7280, %v7282
        %v7284 = vrot.slane %v6842, 2
        %v7285 = vsel %vm6596, %v7282, %v7284
        %v7286 = vrot.slane %v6843, 2
        %v7287 = vsel %vm6596, %v7284, %v7286
        %v7288 = vrot.slane %v6844, 2
        %v7289 = vsel %vm6596, %v7286, %v7288
        %v7290 = vrot.slane %v6845, 2
        %v7291 = vsel %vm6596, %v7288, %v7290
        %v7292 = vrot.slane %v6846, 2
        %v7293 = vsel %vm6596, %v7290, %v7292
        %v7294 = vrot.slane %v6847, 2
        %v7295 = vsel %vm6596, %v7292, %v7294
        %v7296 = vrot.slane %v6848, 2
        %v7297 = vsel %vm6596, %v7294, %v7296
        %v7298 = vrot.slane %v6849, 2
        %v7299 = vsel %vm6596, %v7296, %v7298
        %v7300 = vrot.slane %v6850, 2
        %v7301 = vsel %vm6596, %v7298, %v7300
        %v7302 = vrot.slane %v6851, 2
        %v7303 = vsel %vm6596, %v7300, %v7302
        %v7304 = vrot.slane %v6852, 2
        %v7305 = vsel %vm6596, %v7302, %v7304
        %v7306 = vrot.slane %v6853, 2
        %v7307 = vsel %vm6596, %v7304, %v7306
        %v7308 = vrot.slane %v6854, 2
        %v7309 = vsel %vm6596, %v7306, %v7308
        %v7310 = vrot.slane %v6855, 2
        %v7311 = vsel %vm6596, %v7308, %v7310
        %v7312 = vrot.slane %v6856, 2
        %v7313 = vsel %vm6596, %v7310, %v7312
        %v7314 = vrot.slane %v6857, 2
        %v7315 = vsel %vm6596, %v7312, %v7314
        %v7316 = vrot.slane %v6858, 2
        %v7317 = vsel %vm6596, %v7314, %v7316
        %v7318 = vrot.slane %v6859, 2
        %v7319 = vsel %vm6596, %v7316, %v7318
        %v7386 = vmax.f32 %v7123, %v7191
        %v7387 = vmax.f32 %v7124, %v7193
        %v7388 = vmax.f32 %v7125, %v7195
        %v7389 = vmax.f32 %v7126, %v7197
        %v7390 = vmax.f32 %v7127, %v7199
        %v7391 = vmax.f32 %v7128, %v7201
        %v7392 = vmax.f32 %v7129, %v7203
        %v7393 = vmax.f32 %v7130, %v7205
        %v7394 = vmax.f32 %v7131, %v7207
        %v7395 = vmax.f32 %v7132, %v7209
        %v7396 = vmax.f32 %v7133, %v7211
        %v7397 = vmax.f32 %v7134, %v7213
        %v7398 = vmax.f32 %v7135, %v7215
        %v7399 = vmax.f32 %v7136, %v7217
        %v7400 = vmax.f32 %v7137, %v7219
        %v7401 = vmax.f32 %v7138, %v7221
        %v7402 = vmax.f32 %v7139, %v7223
        %v7403 = vmax.f32 %v7140, %v7225
        %v7404 = vmax.f32 %v7141, %v7227
        %v7405 = vmax.f32 %v7142, %v7229
        %v7406 = vmax.f32 %v7143, %v7231
        %v7407 = vmax.f32 %v7144, %v7233
        %v7408 = vmax.f32 %v7145, %v7235
        %v7409 = vmax.f32 %v7146, %v7237
        %v7410 = vmax.f32 %v7147, %v7239
        %v7411 = vmax.f32 %v7148, %v7241
        %v7412 = vmax.f32 %v7149, %v7243
        %v7413 = vmax.f32 %v7150, %v7245
        %v7414 = vmax.f32 %v7151, %v7247
        %v7415 = vmax.f32 %v7152, %v7249
        %v7416 = vmax.f32 %v7153, %v7251
        %v7417 = vmax.f32 %v7154, %v7253
        %v7418 = vmax.f32 %v7155, %v7255
        %v7419 = vmax.f32 %v7156, %v7257
        %v7420 = vmax.f32 %v7157, %v7259
        %v7421 = vmax.f32 %v7158, %v7261
        %v7422 = vmax.f32 %v7159, %v7263
        %v7423 = vmax.f32 %v7160, %v7265
        %v7424 = vmax.f32 %v7161, %v7267
        %v7425 = vmax.f32 %v7162, %v7269
        %v7426 = vmax.f32 %v7163, %v7271
        %v7427 = vmax.f32 %v7164, %v7273
        %v7428 = vmax.f32 %v7165, %v7275
        %v7429 = vmax.f32 %v7166, %v7277
        %v7430 = vmax.f32 %v7167, %v7279
        %v7431 = vmax.f32 %v7168, %v7281
        %v7432 = vmax.f32 %v7169, %v7283
        %v7433 = vmax.f32 %v7170, %v7285
        %v7434 = vmax.f32 %v7171, %v7287
        %v7435 = vmax.f32 %v7172, %v7289
        %v7436 = vmax.f32 %v7173, %v7291
        %v7437 = vmax.f32 %v7174, %v7293
        %v7438 = vmax.f32 %v7175, %v7295
        %v7439 = vmax.f32 %v7176, %v7297
        %v7440 = vmax.f32 %v7177, %v7299
        %v7441 = vmax.f32 %v7178, %v7301
        %v7442 = vmax.f32 %v7179, %v7303
        %v7443 = vmax.f32 %v7180, %v7305
        %v7444 = vmax.f32 %v7181, %v7307
        %v7445 = vmax.f32 %v7182, %v7309
        %v7446 = vmax.f32 %v7183, %v7311
        %v7447 = vmax.f32 %v7184, %v7313
        %v7448 = vmax.f32 %v7185, %v7315
        %v7449 = vmax.f32 %v7186, %v7317
        %v7450 = vmax.f32 %v7187, %v7319
        %v7451 = vmax.f32 %v7188, %v7318
        %v7452 = vpack.c.bf16 %v7387, %v7386
        %v7453 = vpack.c.bf16 %v7389, %v7388
        %v7454 = vpack.c.bf16 %v7391, %v7390
        %v7455 = vpack.c.bf16 %v7393, %v7392
        %v7456 = vpack.c.bf16 %v7395, %v7394
        %v7457 = vpack.c.bf16 %v7397, %v7396
        %v7458 = vpack.c.bf16 %v7399, %v7398
        %v7459 = vpack.c.bf16 %v7401, %v7400
        %v7460 = vpack.c.bf16 %v7403, %v7402
        %v7461 = vpack.c.bf16 %v7405, %v7404
        %v7462 = vpack.c.bf16 %v7407, %v7406
        %v7463 = vpack.c.bf16 %v7409, %v7408
        %v7464 = vpack.c.bf16 %v7411, %v7410
        %v7465 = vpack.c.bf16 %v7413, %v7412
        %v7466 = vpack.c.bf16 %v7415, %v7414
        %v7467 = vpack.c.bf16 %v7417, %v7416
        %v7468 = vpack.c.bf16 %v7419, %v7418
        %v7469 = vpack.c.bf16 %v7421, %v7420
        %v7470 = vpack.c.bf16 %v7423, %v7422
        %v7471 = vpack.c.bf16 %v7425, %v7424
        %v7472 = vpack.c.bf16 %v7427, %v7426
        %v7473 = vpack.c.bf16 %v7429, %v7428
        %v7474 = vpack.c.bf16 %v7431, %v7430
        %v7475 = vpack.c.bf16 %v7433, %v7432
        %v7476 = vpack.c.bf16 %v7435, %v7434
        %v7477 = vpack.c.bf16 %v7437, %v7436
        %v7478 = vpack.c.bf16 %v7439, %v7438
        %v7479 = vpack.c.bf16 %v7441, %v7440
        %v7480 = vpack.c.bf16 %v7443, %v7442
        %v7481 = vpack.c.bf16 %v7445, %v7444
        %v7482 = vpack.c.bf16 %v7447, %v7446
        %v7483 = vpack.c.bf16 %v7449, %v7448
        %v7484 = vpack.c.bf16 %v7451, %v7450
        %v7485 = vld [vmem:[%s3] sm:$0xf]
        %v7486 = vld [vmem:[%s3 + $0x4] sm:$0xf]
        %v7487 = vld [vmem:[%s3 + $0x8] sm:$0xf]
        %v7488 = vld [vmem:[%s3 + $0xc] sm:$0xf]
        %v7489 = vld [vmem:[%s3 + $0x10] sm:$0xf]
        %v7490 = vld [vmem:[%s3 + $0x14] sm:$0xf]
        %v7491 = vld [vmem:[%s3 + $0x18] sm:$0xf]
        %v7492 = vld [vmem:[%s3 + $0x1c] sm:$0xf]
        %v7493 = vld [vmem:[%s3 + $0x20] sm:$0xf]
        %v7494 = vld [vmem:[%s3 + $0x24] sm:$0xf]
        %v7495 = vld [vmem:[%s3 + $0x28] sm:$0xf]
        %v7496 = vld [vmem:[%s3 + $0x2c] sm:$0xf]
        %v7497 = vld [vmem:[%s3 + $0x30] sm:$0xf]
        %v7498 = vld [vmem:[%s3 + $0x34] sm:$0xf]
        %v7499 = vld [vmem:[%s3 + $0x38] sm:$0xf]
        %v7500 = vld [vmem:[%s3 + $0x3c] sm:$0xf]
        %v7501 = vld [vmem:[%s3 + $0x40] sm:$0xf]
        %v7502 = vld [vmem:[%s3 + $0x44] sm:$0xf]
        %v7503 = vld [vmem:[%s3 + $0x48] sm:$0xf]
        %v7504 = vld [vmem:[%s3 + $0x4c] sm:$0xf]
        %v7505 = vld [vmem:[%s3 + $0x50] sm:$0xf]
        %v7506 = vld [vmem:[%s3 + $0x54] sm:$0xf]
        %v7507 = vld [vmem:[%s3 + $0x58] sm:$0xf]
        %v7508 = vld [vmem:[%s3 + $0x5c] sm:$0xf]
        %v7509 = vld [vmem:[%s3 + $0x60] sm:$0xf]
        %v7510 = vld [vmem:[%s3 + $0x64] sm:$0xf]
        %v7511 = vld [vmem:[%s3 + $0x68] sm:$0xf]
        %v7512 = vld [vmem:[%s3 + $0x6c] sm:$0xf]
        %v7513 = vld [vmem:[%s3 + $0x70] sm:$0xf]
        %v7514 = vld [vmem:[%s3 + $0x74] sm:$0xf]
        %v7515 = vld [vmem:[%s3 + $0x78] sm:$0xf]
        %v7516 = vld [vmem:[%s3 + $0x7c] sm:$0xf]
        %v7517 = vld [vmem:[%s3 + $0x80] sm:$0xf]
        %v7518 = vld [vmem:[%s3 + $0x84] sm:$0xf]
        %v7519 = vld [vmem:[%s3 + $0x88] sm:$0xf]
        %v7520 = vld [vmem:[%s3 + $0x8c] sm:$0xf]
        %v7548 = vrot.slane %v7452, 1
        %v7549 = vrot.slane %v7453, 1
        %v7550 = vsel %vm1780, %v7548, %v7549
        %v7551 = vrot.slane %v7454, 1
        %v7552 = vsel %vm1780, %v7549, %v7551
        %v7553 = vrot.slane %v7455, 1
        %v7554 = vsel %vm1780, %v7551, %v7553
        %v7555 = vrot.slane %v7456, 1
        %v7556 = vsel %vm1780, %v7553, %v7555
        %v7557 = vrot.slane %v7457, 1
        %v7558 = vsel %vm1780, %v7555, %v7557
        %v7559 = vrot.slane %v7458, 1
        %v7560 = vsel %vm1780, %v7557, %v7559
        %v7561 = vrot.slane %v7459, 1
        %v7562 = vsel %vm1780, %v7559, %v7561
        %v7563 = vrot.slane %v7460, 1
        %v7564 = vsel %vm1780, %v7561, %v7563
        %v7565 = vrot.slane %v7461, 1
        %v7566 = vsel %vm1780, %v7563, %v7565
        %v7567 = vrot.slane %v7462, 1
        %v7568 = vsel %vm1780, %v7565, %v7567
        %v7569 = vrot.slane %v7463, 1
        %v7570 = vsel %vm1780, %v7567, %v7569
        %v7571 = vrot.slane %v7464, 1
        %v7572 = vsel %vm1780, %v7569, %v7571
        %v7573 = vrot.slane %v7465, 1
        %v7574 = vsel %vm1780, %v7571, %v7573
        %v7575 = vrot.slane %v7466, 1
        %v7576 = vsel %vm1780, %v7573, %v7575
        %v7577 = vrot.slane %v7467, 1
        %v7578 = vsel %vm1780, %v7575, %v7577
        %v7579 = vrot.slane %v7468, 1
        %v7580 = vsel %vm1780, %v7577, %v7579
        %v7581 = vrot.slane %v7469, 1
        %v7582 = vsel %vm1780, %v7579, %v7581
        %v7583 = vrot.slane %v7470, 1
        %v7584 = vsel %vm1780, %v7581, %v7583
        %v7585 = vrot.slane %v7471, 1
        %v7586 = vsel %vm1780, %v7583, %v7585
        %v7587 = vrot.slane %v7472, 1
        %v7588 = vsel %vm1780, %v7585, %v7587
        %v7589 = vrot.slane %v7473, 1
        %v7590 = vsel %vm1780, %v7587, %v7589
        %v7591 = vrot.slane %v7474, 1
        %v7592 = vsel %vm1780, %v7589, %v7591
        %v7593 = vrot.slane %v7475, 1
        %v7594 = vsel %vm1780, %v7591, %v7593
        %v7595 = vrot.slane %v7476, 1
        %v7596 = vsel %vm1780, %v7593, %v7595
        %v7597 = vrot.slane %v7477, 1
        %v7598 = vsel %vm1780, %v7595, %v7597
        %v7599 = vrot.slane %v7478, 1
        %v7600 = vsel %vm1780, %v7597, %v7599
        %v7605 = vunpack.c.l.b16 %v7489
        %v7606 = vunpack.c.l.b16 %v7490
        %v7607 = vunpack.c.l.b16 %v7491
        %v7608 = vunpack.c.l.b16 %v7492
        %v7609 = vpack.c.b16 %v7606, %v7605
        %v7610 = vpack.c.b16 %v7608, %v7607
        %vm7613 = vcmask 261120
        %v7615 = vsel %vm7613, %v7550, 0
        %v7618 = vsel %vm7613, %v7552, 0
        %v7621 = vsel %vm7613, %v7554, 0
        %v7624 = vsel %vm7613, %v7556, 0
        %v7627 = vsel %vm7613, %v7558, 0
        %v7630 = vsel %vm7613, %v7560, 0
        %v7633 = vsel %vm7613, %v7562, 0
        %v7636 = vsel %vm7613, %v7564, 0
        %v7639 = vsel %vm7613, %v7566, 0
        %v7642 = vsel %vm7613, %v7568, 0
        %v7645 = vsel %vm7613, %v7570, 0
        %v7648 = vsel %vm7613, %v7572, 0
        %v7651 = vsel %vm7613, %v7574, 0
        %v7654 = vsel %vm7613, %v7576, 0
        %v7657 = vsel %vm7613, %v7578, 0
        %v7660 = vsel %vm7613, %v7580, 0
        %v7663 = vsel %vm7613, %v7582, 0
        %v7666 = vsel %vm7613, %v7584, 0
        %v7669 = vsel %vm7613, %v7586, 0
        %v7672 = vsel %vm7613, %v7588, 0
        %v7675 = vsel %vm7613, %v7590, 0
        %v7678 = vsel %vm7613, %v7592, 0
        %v7681 = vsel %vm7613, %v7594, 0
        %v7684 = vsel %vm7613, %v7596, 0
        %v7687 = vsel %vm7613, %v7598, 0
        %v7690 = vsel %vm7613, %v7600, 0
        %v7693 = vsel %vm7613, %v7599, 0
        %7695 = vmatprep.subr.bf16.mxu0 0
        %7696 = vmatpush1.bf16.msra.mxu0 %v7609
        %7697 = vmatprep.subr.bf16.mxu0 0
        %7698 = vmatpush1.bf16.msra.mxu0 %v7610
        %7699 = vmatprep.subr.bf16.mxu0 0
        %7700 = vmatpush1.bf16.msra.mxu0 0
        %7701 = vmatprep.subr.bf16.mxu0 0
        %7702 = vmatpush1.bf16.msra.mxu0 0
        %7703 = vmatprep.subr.bf16.mxu0 0
        %7704 = vmatpush1.bf16.msra.mxu0 0
        %7705 = vmatprep.subr.bf16.mxu0 0
        %7706 = vmatpush1.bf16.msra.mxu0 0
        %7707 = vmatprep.subr.bf16.mxu0 0
        %7708 = vmatpush1.bf16.msra.mxu0 0
        %7709 = vmatprep.subr.bf16.mxu0 0
        %7710 = vmatpush1.bf16.msra.mxu0 0
        %7711 = vmatprep.subr.bf16.mxu0 0
        %7712 = vmatpush1.bf16.msra.mxu0 0
        %7713 = vmatprep.subr.bf16.mxu0 0
        %7714 = vmatpush1.bf16.msra.mxu0 0
        %7715 = vmatprep.subr.bf16.mxu0 0
        %7716 = vmatpush1.bf16.msra.mxu0 0
        %7717 = vmatprep.subr.bf16.mxu0 0
        %7718 = vmatpush1.bf16.msra.mxu0 0
        %7719 = vmatprep.subr.bf16.mxu0 0
        %7720 = vmatpush1.bf16.msra.mxu0 0
        %7721 = vmatprep.subr.bf16.mxu0 0
        %7722 = vmatpush1.bf16.msra.mxu0 0
        %7723 = vmatprep.subr.bf16.mxu0 0
        %7724 = vmatpush1.bf16.msra.mxu0 0
        %7725 = vmatprep.subr.bf16.mxu0 0
        %7726 = vmatpush1.bf16.msra.mxu0 0
        %7727 = vmatprep.mubr.bf16.mxu0 0
        %7728 = vmatmul.mubr.bf16.gmra.mrb[0].mxu0 %v7615
        %v7729 = vpop.f32.mrb[0].mxu0
        %v7730 = vadd.f32 0.0, %v7729
        %v7731 = vpop.f32.mrb[0].mxu0
        %v7732 = vpop.f32.mrb[0].mxu0
        %v7733 = vadd.f32 0.0, %v7732
        %v7734 = vpop.f32.mrb[0].mxu0
        %7735 = vmatprep.mubr.bf16.mxu0 0
        %7736 = vmatmul.mubr.bf16.gmra.mrb[0].mxu0 %v7618
        %v7737 = vpop.f32.mrb[0].mxu0
        %v7738 = vadd.f32 0.0, %v7737
        %v7739 = vpop.f32.mrb[0].mxu0
        %v7740 = vpop.f32.mrb[0].mxu0
        %v7741 = vpop.f32.mrb[0].mxu0
        %7742 = vmatprep.mubr.bf16.mxu0 0
        %7743 = vmatmul.mubr.bf16.gmra.mrb[0].mxu0 %v7621
        %v7744 = vpop.f32.mrb[0].mxu0
        %v7745 = vpop.f32.mrb[0].mxu0
        %v7746 = vpop.f32.mrb[0].mxu0
        %v7747 = vpop.f32.mrb[0].mxu0
        %7748 = vmatprep.mubr.bf16.mxu0 0
        %7749 = vmatmul.mubr.bf16.gmra.mrb[0].mxu0 %v7624
        %v7750 = vpop.f32.mrb[0].mxu0
        %v7751 = vadd.f32 0.0, %v7750
        %v7752 = vpop.f32.mrb[0].mxu0
        %v7753 = vpop.f32.mrb[0].mxu0
        %v7754 = vadd.f32 0.0, %v7753
        %v7755 = vpop.f32.mrb[0].mxu0
        %7756 = vmatprep.mubr.bf16.mxu0 0
        %7757 = vmatmul.mubr.bf16.gmra.mrb[0].mxu0 %v7627
        %v7758 = vpop.f32.mrb[0].mxu0
        %v7759 = vadd.f32 0.0, %v7758
        %v7760 = vpop.f32.mrb[0].mxu0
        %v7761 = vpop.f32.mrb[0].mxu0
        %v7762 = vadd.f32 0.0, %v7761
        %v7763 = vpop.f32.mrb[0].mxu0
        %7764 = vmatprep.mubr.bf16.mxu0 0
        %7765 = vmatmul.mubr.bf16.gmra.mrb[0].mxu0 %v7630
        %v7766 = vpop.f32.mrb[0].mxu0
        %v7767 = vpop.f32.mrb[0].mxu0
        %v7768 = vpop.f32.mrb[0].mxu0
        %v7769 = vpop.f32.mrb[0].mxu0
        %7770 = vmatprep.mubr.bf16.mxu0 0
        %7771 = vmatmul.mubr.bf16.gmra.mrb[0].mxu0 %v7633
        %v7772 = vpop.f32.mrb[0].mxu0
        %v7773 = vadd.f32 0.0, %v7772
        %v7774 = vpop.f32.mrb[0].mxu0
        %v7775 = vpop.f32.mrb[0].mxu0
        %v7776 = vadd.f32 0.0, %v7775
        %v7777 = vpop.f32.mrb[0].mxu0
        %7778 = vmatprep.mubr.bf16.mxu0 0
        %7779 = vmatmul.mubr.bf16.gmra.mrb[0].mxu0 %v7636
        %v7780 = vpop.f32.mrb[0].mxu0
        %v7781 = vadd.f32 0.0, %v7780
        %v7782 = vpop.f32.mrb[0].mxu0
        %v7783 = vpop.f32.mrb[0].mxu0
        %v7784 = vadd.f32 0.0, %v7783
        %v7785 = vpop.f32.mrb[0].mxu0
        %7786 = vmatprep.mubr.bf16.mxu0 0
        %7787 = vmatmul.mubr.bf16.gmra.mrb[0].mxu0 %v7639
        %v7788 = vpop.f32.mrb[0].mxu0
        %v7789 = vpop.f32.mrb[0].mxu0
        %v7790 = vpop.f32.mrb[0].mxu0
        %v7791 = vpop.f32.mrb[0].mxu0
        %7792 = vmatprep.mubr.bf16.mxu0 0
        %7793 = vmatmul.mubr.bf16.gmra.mrb[0].mxu0 %v7642
        %v7794 = vpop.f32.mrb[0].mxu0
        %v7795 = vadd.f32 0.0, %v7794
        %v7796 = vpop.f32.mrb[0].mxu0
        %v7797 = vpop.f32.mrb[0].mxu0
        %v7798 = vadd.f32 0.0, %v7797
        %v7799 = vpop.f32.mrb[0].mxu0
        %7800 = vmatprep.mubr.bf16.mxu0 0
        %7801 = vmatmul.mubr.bf16.gmra.mrb[0].mxu0 %v7645
        %v7802 = vpop.f32.mrb[0].mxu0
        %v7803 = vadd.f32 0.0, %v7802
        %v7804 = vpop.f32.mrb[0].mxu0
        %v7805 = vpop.f32.mrb[0].mxu0
        %v7806 = vadd.f32 0.0, %v7805
        %v7807 = vpop.f32.mrb[0].mxu0
        %7808 = vmatprep.mubr.bf16.mxu0 0
        %7809 = vmatmul.mubr.bf16.gmra.mrb[0].mxu0 %v7648
        %v7810 = vpop.f32.mrb[0].mxu0
        %v7811 = vadd.f32 0.0, %v7810
        %v7812 = vpop.f32.mrb[0].mxu0
        %v7813 = vpop.f32.mrb[0].mxu0
        %v7814 = vpop.f32.mrb[0].mxu0
        %7815 = vmatprep.mubr.bf16.mxu0 0
        %7816 = vmatmul.mubr.bf16.gmra.mrb[0].mxu0 %v7651
        %v7817 = vpop.f32.mrb[0].mxu0
        %v7818 = vadd.f32 0.0, %v7817
        %v7819 = vpop.f32.mrb[0].mxu0
        %v7820 = vpop.f32.mrb[0].mxu0
        %v7821 = vadd.f32 0.0, %v7820
        %v7822 = vpop.f32.mrb[0].mxu0
        %7823 = vmatprep.mubr.bf16.mxu0 0
        %7824 = vmatmul.mubr.bf16.gmra.mrb[0].mxu0 %v7654
        %v7825 = vpop.f32.mrb[0].mxu0
        %v7826 = vadd.f32 0.0, %v7825
        %v7827 = vpop.f32.mrb[0].mxu0
        %v7828 = vpop.f32.mrb[0].mxu0
        %v7829 = vadd.f32 0.0, %v7828
        %v7830 = vpop.f32.mrb[0].mxu0
        %7831 = vmatprep.mubr.bf16.mxu0 0
        %7832 = vmatmul.mubr.bf16.gmra.mrb[0].mxu0 %v7657
        %v7833 = vpop.f32.mrb[0].mxu0
        %v7834 = vadd.f32 0.0, %v7833
        %v7835 = vpop.f32.mrb[0].mxu0
        %v7836 = vpop.f32.mrb[0].mxu0
        %v7837 = vpop.f32.mrb[0].mxu0
        %7838 = vmatprep.mubr.bf16.mxu0 0
        %7839 = vmatmul.mubr.bf16.gmra.mrb[0].mxu0 %v7660
        %v7840 = vpop.f32.mrb[0].mxu0
        %v7841 = vpop.f32.mrb[0].mxu0
        %v7842 = vpop.f32.mrb[0].mxu0
        %v7843 = vadd.f32 0.0, %v7842
        %v7844 = vpop.f32.mrb[0].mxu0
        %7845 = vmatprep.mubr.bf16.mxu0 0
        %7846 = vmatmul.mubr.bf16.gmra.mrb[0].mxu0 %v7663
        %v7847 = vpop.f32.mrb[0].mxu0
        %v7848 = vadd.f32 0.0, %v7847
        %v7849 = vpop.f32.mrb[0].mxu0
        %v7850 = vpop.f32.mrb[0].mxu0
        %v7851 = vadd.f32 0.0, %v7850
        %v7852 = vpop.f32.mrb[0].mxu0
        %7853 = vmatprep.mubr.bf16.mxu0 0
        %7854 = vmatmul.mubr.bf16.gmra.mrb[0].mxu0 %v7666
        %v7855 = vpop.f32.mrb[0].mxu0
        %v7856 = vadd.f32 0.0, %v7855
        %v7857 = vpop.f32.mrb[0].mxu0
        %v7858 = vpop.f32.mrb[0].mxu0
        %v7859 = vpop.f32.mrb[0].mxu0
        %7860 = vmatprep.mubr.bf16.mxu0 0
        %7861 = vmatmul.mubr.bf16.gmra.mrb[0].mxu0 %v7669
        %v7862 = vpop.f32.mrb[0].mxu0
        %v7863 = vpop.f32.mrb[0].mxu0
        %v7864 = vpop.f32.mrb[0].mxu0
        %v7865 = vadd.f32 0.0, %v7864
        %v7866 = vpop.f32.mrb[0].mxu0
        %7867 = vmatprep.mubr.bf16.mxu0 0
        %7868 = vmatmul.mubr.bf16.gmra.mrb[0].mxu0 %v7672
        %v7869 = vpop.f32.mrb[0].mxu0
        %v7870 = vadd.f32 0.0, %v7869
        %v7871 = vpop.f32.mrb[0].mxu0
        %v7872 = vpop.f32.mrb[0].mxu0
        %v7873 = vadd.f32 0.0, %v7872
        %v7874 = vpop.f32.mrb[0].mxu0
        %7875 = vmatprep.mubr.bf16.mxu0 0
        %7876 = vmatmul.mubr.bf16.gmra.mrb[0].mxu0 %v7675
        %v7877 = vpop.f32.mrb[0].mxu0
        %v7878 = vadd.f32 0.0, %v7877
        %v7879 = vpop.f32.mrb[0].mxu0
        %v7880 = vpop.f32.mrb[0].mxu0
        %v7881 = vpop.f32.mrb[0].mxu0
        %7882 = vmatprep.mubr.bf16.mxu0 0
        %7883 = vmatmul.mubr.bf16.gmra.mrb[0].mxu0 %v7678
        %v7884 = vpop.f32.mrb[0].mxu0
        %v7885 = vpop.f32.mrb[0].mxu0
        %v7886 = vpop.f32.mrb[0].mxu0
        %v7887 = vadd.f32 0.0, %v7886
        %v7888 = vpop.f32.mrb[0].mxu0
        %7889 = vmatprep.mubr.bf16.mxu0 0
        %7890 = vmatmul.mubr.bf16.gmra.mrb[0].mxu0 %v7681
        %v7891 = vpop.f32.mrb[0].mxu0
        %v7892 = vadd.f32 0.0, %v7891
        %v7893 = vpop.f32.mrb[0].mxu0
        %v7894 = vpop.f32.mrb[0].mxu0
        %v7895 = vadd.f32 0.0, %v7894
        %v7896 = vpop.f32.mrb[0].mxu0
        %7897 = vmatprep.mubr.bf16.mxu0 0
        %7898 = vmatmul.mubr.bf16.gmra.mrb[0].mxu0 %v7684
        %v7899 = vpop.f32.mrb[0].mxu0
        %v7900 = vpop.f32.mrb[0].mxu0
        %v7901 = vpop.f32.mrb[0].mxu0
        %v7902 = vpop.f32.mrb[0].mxu0
        %7903 = vmatprep.mubr.bf16.mxu0 0
        %7904 = vmatmul.mubr.bf16.gmra.mrb[0].mxu0 %v7687
        %v7905 = vpop.f32.mrb[0].mxu0
        %v7906 = vpop.f32.mrb[0].mxu0
        %v7907 = vpop.f32.mrb[0].mxu0
        %v7908 = vadd.f32 0.0, %v7907
        %v7909 = vpop.f32.mrb[0].mxu0
        %7910 = vmatprep.mubr.bf16.mxu0 0
        %7911 = vmatmul.mubr.bf16.gmra.mrb[0].mxu0 %v7690
        %v7912 = vpop.f32.mrb[0].mxu0
        %v7913 = vadd.f32 0.0, %v7912
        %v7914 = vpop.f32.mrb[0].mxu0
        %v7915 = vpop.f32.mrb[0].mxu0
        %v7916 = vadd.f32 0.0, %v7915
        %v7917 = vpop.f32.mrb[0].mxu0
        %7918 = vmatprep.mubr.bf16.mxu0 0
        %7919 = vmatmul.mubr.bf16.gmra.mrb[0].mxu0 %v7693
        %v7920 = vpop.f32.mrb[0].mxu0
        %v7921 = vadd.f32 0.0, %v7920
        %v7922 = vpop.f32.mrb[0].mxu0
        %v7923 = vpop.f32.mrb[0].mxu0
        %v7924 = vpop.f32.mrb[0].mxu0
        %7925 = vdwg.mxu0
        %v7930 = vunpack.c.l.b16 %v7485
        %v7931 = vunpack.c.l.b16 %v7486
        %v7932 = vunpack.c.l.b16 %v7487
        %v7933 = vunpack.c.l.b16 %v7488
        %v7934 = vpack.c.b16 %v7931, %v7930
        %v7935 = vpack.c.b16 %v7933, %v7932
        %v7939 = vsel %vm7613, %v7452, 0
        %v7942 = vsel %vm7613, %v7453, 0
        %v7945 = vsel %vm7613, %v7454, 0
        %v7948 = vsel %vm7613, %v7455, 0
        %v7951 = vsel %vm7613, %v7456, 0
        %v7954 = vsel %vm7613, %v7457, 0
        %v7957 = vsel %vm7613, %v7458, 0
        %v7960 = vsel %vm7613, %v7459, 0
        %v7963 = vsel %vm7613, %v7460, 0
        %v7966 = vsel %vm7613, %v7461, 0
        %v7969 = vsel %vm7613, %v7462, 0
        %v7972 = vsel %vm7613, %v7463, 0
        %v7975 = vsel %vm7613, %v7464, 0
        %v7978 = vsel %vm7613, %v7465, 0
        %v7981 = vsel %vm7613, %v7466, 0
        %v7984 = vsel %vm7613, %v7467, 0
        %v7987 = vsel %vm7613, %v7468, 0
        %v7990 = vsel %vm7613, %v7469, 0
        %v7993 = vsel %vm7613, %v7470, 0
        %v7996 = vsel %vm7613, %v7471, 0
        %v7999 = vsel %vm7613, %v7472, 0
        %v8002 = vsel %vm7613, %v7473, 0
        %v8005 = vsel %vm7613, %v7474, 0
        %v8008 = vsel %vm7613, %v7475, 0
        %v8011 = vsel %vm7613, %v7476, 0
        %v8014 = vsel %vm7613, %v7477, 0
        %v8017 = vsel %vm7613, %v7478, 0
        %8019 = vmatprep.subr.bf16.mxu0 0
        %8020 = vmatpush1.bf16.msra.mxu0 %v7934
        %8021 = vmatprep.subr.bf16.mxu0 0
        %8022 = vmatpush1.bf16.msra.mxu0 %v7935
        %8023 = vmatprep.subr.bf16.mxu0 0
        %8024 = vmatpush1.bf16.msra.mxu0 0
        %8025 = vmatprep.subr.bf16.mxu0 0
        %8026 = vmatpush1.bf16.msra.mxu0 0
        %8027 = vmatprep.subr.bf16.mxu0 0
        %8028 = vmatpush1.bf16.msra.mxu0 0
        %8029 = vmatprep.subr.bf16.mxu0 0
        %8030 = vmatpush1.bf16.msra.mxu0 0
        %8031 = vmatprep.subr.bf16.mxu0 0
        %8032 = vmatpush1.bf16.msra.mxu0 0
        %8033 = vmatprep.subr.bf16.mxu0 0
        %8034 = vmatpush1.bf16.msra.mxu0 0
        %8035 = vmatprep.subr.bf16.mxu0 0
        %8036 = vmatpush1.bf16.msra.mxu0 0
        %8037 = vmatprep.subr.bf16.mxu0 0
        %8038 = vmatpush1.bf16.msra.mxu0 0
        %8039 = vmatprep.subr.bf16.mxu0 0
        %8040 = vmatpush1.bf16.msra.mxu0 0
        %8041 = vmatprep.subr.bf16.mxu0 0
        %8042 = vmatpush1.bf16.msra.mxu0 0
        %8043 = vmatprep.subr.bf16.mxu0 0
        %8044 = vmatpush1.bf16.msra.mxu0 0
        %8045 = vmatprep.subr.bf16.mxu0 0
        %8046 = vmatpush1.bf16.msra.mxu0 0
        %8047 = vmatprep.subr.bf16.mxu0 0
        %8048 = vmatpush1.bf16.msra.mxu0 0
        %8049 = vmatprep.subr.bf16.mxu0 0
        %8050 = vmatpush1.bf16.msra.mxu0 0
        %8051 = vmatprep.mubr.bf16.mxu0 0
        %8052 = vmatmul.mubr.bf16.gmra.mrb[0].mxu0 %v7939
        %v8053 = vpop.f32.mrb[0].mxu0
        %v8054 = vadd.f32 %v7730, %v8053
        %v8055 = vpop.f32.mrb[0].mxu0
        %v8056 = vpop.f32.mrb[0].mxu0
        %v8057 = vadd.f32 %v7733, %v8056
        %v8058 = vpop.f32.mrb[0].mxu0
        %8059 = vmatprep.mubr.bf16.mxu0 0
        %8060 = vmatmul.mubr.bf16.gmra.mrb[0].mxu0 %v7942
        %v8061 = vpop.f32.mrb[0].mxu0
        %v8062 = vadd.f32 %v7738, %v8061
        %v8063 = vpop.f32.mrb[0].mxu0
        %v8064 = vpop.f32.mrb[0].mxu0
        %v8065 = vpop.f32.mrb[0].mxu0
        %8066 = vmatprep.mubr.bf16.mxu0 0
        %8067 = vmatmul.mubr.bf16.gmra.mrb[0].mxu0 %v7945
        %v8068 = vpop.f32.mrb[0].mxu0
        %v8069 = vpop.f32.mrb[0].mxu0
        %v8070 = vpop.f32.mrb[0].mxu0
        %v8071 = vpop.f32.mrb[0].mxu0
        %8072 = vmatprep.mubr.bf16.mxu0 0
        %8073 = vmatmul.mubr.bf16.gmra.mrb[0].mxu0 %v7948
        %v8074 = vpop.f32.mrb[0].mxu0
        %v8075 = vadd.f32 %v7751, %v8074
        %v8076 = vpop.f32.mrb[0].mxu0
        %v8077 = vpop.f32.mrb[0].mxu0
        %v8078 = vadd.f32 %v7754, %v8077
        %v8079 = vpop.f32.mrb[0].mxu0
        %8080 = vmatprep.mubr.bf16.mxu0 0
        %8081 = vmatmul.mubr.bf16.gmra.mrb[0].mxu0 %v7951
        %v8082 = vpop.f32.mrb[0].mxu0
        %v8083 = vadd.f32 %v7759, %v8082
        %v8084 = vpop.f32.mrb[0].mxu0
        %v8085 = vpop.f32.mrb[0].mxu0
        %v8086 = vadd.f32 %v7762, %v8085
        %v8087 = vpop.f32.mrb[0].mxu0
        %8088 = vmatprep.mubr.bf16.mxu0 0
        %8089 = vmatmul.mubr.bf16.gmra.mrb[0].mxu0 %v7954
        %v8090 = vpop.f32.mrb[0].mxu0
        %v8091 = vpop.f32.mrb[0].mxu0
        %v8092 = vpop.f32.mrb[0].mxu0
        %v8093 = vpop.f32.mrb[0].mxu0
        %8094 = vmatprep.mubr.bf16.mxu0 0
        %8095 = vmatmul.mubr.bf16.gmra.mrb[0].mxu0 %v7957
        %v8096 = vpop.f32.mrb[0].mxu0
        %v8097 = vadd.f32 %v7773, %v8096
        %v8098 = vpop.f32.mrb[0].mxu0
        %v8099 = vpop.f32.mrb[0].mxu0
        %v8100 = vadd.f32 %v7776, %v8099
        %v8101 = vpop.f32.mrb[0].mxu0
        %8102 = vmatprep.mubr.bf16.mxu0 0
        %8103 = vmatmul.mubr.bf16.gmra.mrb[0].mxu0 %v7960
        %v8104 = vpop.f32.mrb[0].mxu0
        %v8105 = vadd.f32 %v7781, %v8104
        %v8106 = vpop.f32.mrb[0].mxu0
        %v8107 = vpop.f32.mrb[0].mxu0
        %v8108 = vadd.f32 %v7784, %v8107
        %v8109 = vpop.f32.mrb[0].mxu0
        %8110 = vmatprep.mubr.bf16.mxu0 0
        %8111 = vmatmul.mubr.bf16.gmra.mrb[0].mxu0 %v7963
        %v8112 = vpop.f32.mrb[0].mxu0
        %v8113 = vpop.f32.mrb[0].mxu0
        %v8114 = vpop.f32.mrb[0].mxu0
        %v8115 = vpop.f32.mrb[0].mxu0
        %8116 = vmatprep.mubr.bf16.mxu0 0
        %8117 = vmatmul.mubr.bf16.gmra.mrb[0].mxu0 %v7966
        %v8118 = vpop.f32.mrb[0].mxu0
        %v8119 = vadd.f32 %v7795, %v8118
        %v8120 = vpop.f32.mrb[0].mxu0
        %v8121 = vpop.f32.mrb[0].mxu0
        %v8122 = vadd.f32 %v7798, %v8121
        %v8123 = vpop.f32.mrb[0].mxu0
        %8124 = vmatprep.mubr.bf16.mxu0 0
        %8125 = vmatmul.mubr.bf16.gmra.mrb[0].mxu0 %v7969
        %v8126 = vpop.f32.mrb[0].mxu0
        %v8127 = vadd.f32 %v7803, %v8126
        %v8128 = vpop.f32.mrb[0].mxu0
        %v8129 = vpop.f32.mrb[0].mxu0
        %v8130 = vadd.f32 %v7806, %v8129
        %v8131 = vpop.f32.mrb[0].mxu0
        %8132 = vmatprep.mubr.bf16.mxu0 0
        %8133 = vmatmul.mubr.bf16.gmra.mrb[0].mxu0 %v7972
        %v8134 = vpop.f32.mrb[0].mxu0
        %v8135 = vadd.f32 %v7811, %v8134
        %v8136 = vpop.f32.mrb[0].mxu0
        %v8137 = vpop.f32.mrb[0].mxu0
        %v8138 = vpop.f32.mrb[0].mxu0
        %8139 = vmatprep.mubr.bf16.mxu0 0
        %8140 = vmatmul.mubr.bf16.gmra.mrb[0].mxu0 %v7975
        %v8141 = vpop.f32.mrb[0].mxu0
        %v8142 = vadd.f32 %v7818, %v8141
        %v8143 = vpop.f32.mrb[0].mxu0
        %v8144 = vpop.f32.mrb[0].mxu0
        %v8145 = vadd.f32 %v7821, %v8144
        %v8146 = vpop.f32.mrb[0].mxu0
        %8147 = vmatprep.mubr.bf16.mxu0 0
        %8148 = vmatmul.mubr.bf16.gmra.mrb[0].mxu0 %v7978
        %v8149 = vpop.f32.mrb[0].mxu0
        %v8150 = vadd.f32 %v7826, %v8149
        %v8151 = vpop.f32.mrb[0].mxu0
        %v8152 = vpop.f32.mrb[0].mxu0
        %v8153 = vadd.f32 %v7829, %v8152
        %v8154 = vpop.f32.mrb[0].mxu0
        %8155 = vmatprep.mubr.bf16.mxu0 0
        %8156 = vmatmul.mubr.bf16.gmra.mrb[0].mxu0 %v7981
        %v8157 = vpop.f32.mrb[0].mxu0
        %v8158 = vadd.f32 %v7834, %v8157
        %v8159 = vpop.f32.mrb[0].mxu0
        %v8160 = vpop.f32.mrb[0].mxu0
        %v8161 = vpop.f32.mrb[0].mxu0
        %8162 = vmatprep.mubr.bf16.mxu0 0
        %8163 = vmatmul.mubr.bf16.gmra.mrb[0].mxu0 %v7984
        %v8164 = vpop.f32.mrb[0].mxu0
        %v8165 = vpop.f32.mrb[0].mxu0
        %v8166 = vpop.f32.mrb[0].mxu0
        %v8167 = vadd.f32 %v7843, %v8166
        %v8168 = vpop.f32.mrb[0].mxu0
        %8169 = vmatprep.mubr.bf16.mxu0 0
        %8170 = vmatmul.mubr.bf16.gmra.mrb[0].mxu0 %v7987
        %v8171 = vpop.f32.mrb[0].mxu0
        %v8172 = vadd.f32 %v7848, %v8171
        %v8173 = vpop.f32.mrb[0].mxu0
        %v8174 = vpop.f32.mrb[0].mxu0
        %v8175 = vadd.f32 %v7851, %v8174
        %v8176 = vpop.f32.mrb[0].mxu0
        %8177 = vmatprep.mubr.bf16.mxu0 0
        %8178 = vmatmul.mubr.bf16.gmra.mrb[0].mxu0 %v7990
        %v8179 = vpop.f32.mrb[0].mxu0
        %v8180 = vadd.f32 %v7856, %v8179
        %v8181 = vpop.f32.mrb[0].mxu0
        %v8182 = vpop.f32.mrb[0].mxu0
        %v8183 = vpop.f32.mrb[0].mxu0
        %8184 = vmatprep.mubr.bf16.mxu0 0
        %8185 = vmatmul.mubr.bf16.gmra.mrb[0].mxu0 %v7993
        %v8186 = vpop.f32.mrb[0].mxu0
        %v8187 = vpop.f32.mrb[0].mxu0
        %v8188 = vpop.f32.mrb[0].mxu0
        %v8189 = vadd.f32 %v7865, %v8188
        %v8190 = vpop.f32.mrb[0].mxu0
        %8191 = vmatprep.mubr.bf16.mxu0 0
        %8192 = vmatmul.mubr.bf16.gmra.mrb[0].mxu0 %v7996
        %v8193 = vpop.f32.mrb[0].mxu0
        %v8194 = vadd.f32 %v7870, %v8193
        %v8195 = vpop.f32.mrb[0].mxu0
        %v8196 = vpop.f32.mrb[0].mxu0
        %v8197 = vadd.f32 %v7873, %v8196
        %v8198 = vpop.f32.mrb[0].mxu0
        %8199 = vmatprep.mubr.bf16.mxu0 0
        %8200 = vmatmul.mubr.bf16.gmra.mrb[0].mxu0 %v7999
        %v8201 = vpop.f32.mrb[0].mxu0
        %v8202 = vadd.f32 %v7878, %v8201
        %v8203 = vpop.f32.mrb[0].mxu0
        %v8204 = vpop.f32.mrb[0].mxu0
        %v8205 = vpop.f32.mrb[0].mxu0
        %8206 = vmatprep.mubr.bf16.mxu0 0
        %8207 = vmatmul.mubr.bf16.gmra.mrb[0].mxu0 %v8002
        %v8208 = vpop.f32.mrb[0].mxu0
        %v8209 = vpop.f32.mrb[0].mxu0
        %v8210 = vpop.f32.mrb[0].mxu0
        %v8211 = vadd.f32 %v7887, %v8210
        %v8212 = vpop.f32.mrb[0].mxu0
        %8213 = vmatprep.mubr.bf16.mxu0 0
        %8214 = vmatmul.mubr.bf16.gmra.mrb[0].mxu0 %v8005
        %v8215 = vpop.f32.mrb[0].mxu0
        %v8216 = vadd.f32 %v7892, %v8215
        %v8217 = vpop.f32.mrb[0].mxu0
        %v8218 = vpop.f32.mrb[0].mxu0
        %v8219 = vadd.f32 %v7895, %v8218
        %v8220 = vpop.f32.mrb[0].mxu0
        %8221 = vmatprep.mubr.bf16.mxu0 0
        %8222 = vmatmul.mubr.bf16.gmra.mrb[0].mxu0 %v8008
        %v8223 = vpop.f32.mrb[0].mxu0
        %v8224 = vpop.f32.mrb[0].mxu0
        %v8225 = vpop.f32.mrb[0].mxu0
        %v8226 = vpop.f32.mrb[0].mxu0
        %8227 = vmatprep.mubr.bf16.mxu0 0
        %8228 = vmatmul.mubr.bf16.gmra.mrb[0].mxu0 %v8011
        %v8229 = vpop.f32.mrb[0].mxu0
        %v8230 = vpop.f32.mrb[0].mxu0
        %v8231 = vpop.f32.mrb[0].mxu0
        %v8232 = vadd.f32 %v7908, %v8231
        %v8233 = vpop.f32.mrb[0].mxu0
        %8234 = vmatprep.mubr.bf16.mxu0 0
        %8235 = vmatmul.mubr.bf16.gmra.mrb[0].mxu0 %v8014
        %v8236 = vpop.f32.mrb[0].mxu0
        %v8237 = vadd.f32 %v7913, %v8236
        %v8238 = vpop.f32.mrb[0].mxu0
        %v8239 = vpop.f32.mrb[0].mxu0
        %v8240 = vadd.f32 %v7916, %v8239
        %v8241 = vpop.f32.mrb[0].mxu0
        %8242 = vmatprep.mubr.bf16.mxu0 0
        %8243 = vmatmul.mubr.bf16.gmra.mrb[0].mxu0 %v8017
        %v8244 = vpop.f32.mrb[0].mxu0
        %v8245 = vadd.f32 %v7921, %v8244
        %v8246 = vpop.f32.mrb[0].mxu0
        %v8247 = vpop.f32.mrb[0].mxu0
        %v8248 = vpop.f32.mrb[0].mxu0
        %8249 = vdwg.mxu0
        %v8250 = vrot.slane %v7452, 2
        %v8251 = vrot.slane %v7453, 2
        %v8252 = vsel %vm5534, %v8250, %v8251
        %v8253 = vrot.slane %v7454, 2
        %v8254 = vsel %vm5534, %v8251, %v8253
        %v8255 = vrot.slane %v7455, 2
        %v8256 = vsel %vm5534, %v8253, %v8255
        %v8257 = vrot.slane %v7456, 2
        %v8258 = vsel %vm5534, %v8255, %v8257
        %v8259 = vrot.slane %v7457, 2
        %v8260 = vsel %vm5534, %v8257, %v8259
        %v8261 = vrot.slane %v7458, 2
        %v8262 = vsel %vm5534, %v8259, %v8261
        %v8263 = vrot.slane %v7459, 2
        %v8264 = vsel %vm5534, %v8261, %v8263
        %v8265 = vrot.slane %v7460, 2
        %v8266 = vsel %vm5534, %v8263, %v8265
        %v8267 = vrot.slane %v7461, 2
        %v8268 = vsel %vm5534, %v8265, %v8267
        %v8269 = vrot.slane %v7462, 2
        %v8270 = vsel %vm5534, %v8267, %v8269
        %v8271 = vrot.slane %v7463, 2
        %v8272 = vsel %vm5534, %v8269, %v8271
        %v8273 = vrot.slane %v7464, 2
        %v8274 = vsel %vm5534, %v8271, %v8273
        %v8275 = vrot.slane %v7465, 2
        %v8276 = vsel %vm5534, %v8273, %v8275
        %v8277 = vrot.slane %v7466, 2
        %v8278 = vsel %vm5534, %v8275, %v8277
        %v8279 = vrot.slane %v7467, 2
        %v8280 = vsel %vm5534, %v8277, %v8279
        %v8281 = vrot.slane %v7468, 2
        %v8282 = vsel %vm5534, %v8279, %v8281
        %v8283 = vrot.slane %v7469, 2
        %v8284 = vsel %vm5534, %v8281, %v8283
        %v8285 = vrot.slane %v7470, 2
        %v8286 = vsel %vm5534, %v8283, %v8285
        %v8287 = vrot.slane %v7471, 2
        %v8288 = vsel %vm5534, %v8285, %v8287
        %v8289 = vrot.slane %v7472, 2
        %v8290 = vsel %vm5534, %v8287, %v8289
        %v8291 = vrot.slane %v7473, 2
        %v8292 = vsel %vm5534, %v8289, %v8291
        %v8293 = vrot.slane %v7474, 2
        %v8294 = vsel %vm5534, %v8291, %v8293
        %v8295 = vrot.slane %v7475, 2
        %v8296 = vsel %vm5534, %v8293, %v8295
        %v8297 = vrot.slane %v7476, 2
        %v8298 = vsel %vm5534, %v8295, %v8297
        %v8299 = vrot.slane %v7477, 2
        %v8300 = vsel %vm5534, %v8297, %v8299
        %v8301 = vrot.slane %v7478, 2
        %v8302 = vsel %vm5534, %v8299, %v8301
        %v8307 = vunpack.c.l.b16 %v7493
        %v8308 = vunpack.c.l.b16 %v7494
        %v8309 = vunpack.c.l.b16 %v7495
        %v8310 = vunpack.c.l.b16 %v7496
        %v8311 = vpack.c.b16 %v8308, %v8307
        %v8312 = vpack.c.b16 %v8310, %v8309
        %v8316 = vsel %vm7613, %v8252, 0
        %v8319 = vsel %vm7613, %v8254, 0
        %v8322 = vsel %vm7613, %v8256, 0
        %v8325 = vsel %vm7613, %v8258, 0
        %v8328 = vsel %vm7613, %v8260, 0
        %v8331 = vsel %vm7613, %v8262, 0
        %v8334 = vsel %vm7613, %v8264, 0
        %v8337 = vsel %vm7613, %v8266, 0
        %v8340 = vsel %vm7613, %v8268, 0
        %v8343 = vsel %vm7613, %v8270, 0
        %v8346 = vsel %vm7613, %v8272, 0
        %v8349 = vsel %vm7613, %v8274, 0
        %v8352 = vsel %vm7613, %v8276, 0
        %v8355 = vsel %vm7613, %v8278, 0
        %v8358 = vsel %vm7613, %v8280, 0
        %v8361 = vsel %vm7613, %v8282, 0
        %v8364 = vsel %vm7613, %v8284, 0
        %v8367 = vsel %vm7613, %v8286, 0
        %v8370 = vsel %vm7613, %v8288, 0
        %v8373 = vsel %vm7613, %v8290, 0
        %v8376 = vsel %vm7613, %v8292, 0
        %v8379 = vsel %vm7613, %v8294, 0
        %v8382 = vsel %vm7613, %v8296, 0
        %v8385 = vsel %vm7613, %v8298, 0
        %v8388 = vsel %vm7613, %v8300, 0
        %v8391 = vsel %vm7613, %v8302, 0
        %v8394 = vsel %vm7613, %v8301, 0
        %8396 = vmatprep.subr.bf16.mxu0 0
        %8397 = vmatpush1.bf16.msra.mxu0 %v8311
        %8398 = vmatprep.subr.bf16.mxu0 0
        %8399 = vmatpush1.bf16.msra.mxu0 %v8312
        %8400 = vmatprep.subr.bf16.mxu0 0
        %8401 = vmatpush1.bf16.msra.mxu0 0
        %8402 = vmatprep.subr.bf16.mxu0 0
        %8403 = vmatpush1.bf16.msra.mxu0 0
        %8404 = vmatprep.subr.bf16.mxu0 0
        %8405 = vmatpush1.bf16.msra.mxu0 0
        %8406 = vmatprep.subr.bf16.mxu0 0
        %8407 = vmatpush1.bf16.msra.mxu0 0
        %8408 = vmatprep.subr.bf16.mxu0 0
        %8409 = vmatpush1.bf16.msra.mxu0 0
        %8410 = vmatprep.subr.bf16.mxu0 0
        %8411 = vmatpush1.bf16.msra.mxu0 0
        %8412 = vmatprep.subr.bf16.mxu0 0
        %8413 = vmatpush1.bf16.msra.mxu0 0
        %8414 = vmatprep.subr.bf16.mxu0 0
        %8415 = vmatpush1.bf16.msra.mxu0 0
        %8416 = vmatprep.subr.bf16.mxu0 0
        %8417 = vmatpush1.bf16.msra.mxu0 0
        %8418 = vmatprep.subr.bf16.mxu0 0
        %8419 = vmatpush1.bf16.msra.mxu0 0
        %8420 = vmatprep.subr.bf16.mxu0 0
        %8421 = vmatpush1.bf16.msra.mxu0 0
        %8422 = vmatprep.subr.bf16.mxu0 0
        %8423 = vmatpush1.bf16.msra.mxu0 0
        %8424 = vmatprep.subr.bf16.mxu0 0
        %8425 = vmatpush1.bf16.msra.mxu0 0
        %8426 = vmatprep.subr.bf16.mxu0 0
        %8427 = vmatpush1.bf16.msra.mxu0 0
        %8428 = vmatprep.mubr.bf16.mxu0 0
        %8429 = vmatmul.mubr.bf16.gmra.mrb[0].mxu0 %v8316
        %v8430 = vpop.f32.mrb[0].mxu0
        %v8431 = vadd.f32 0.0, %v8430
        %v8432 = vpop.f32.mrb[0].mxu0
        %v8433 = vpop.f32.mrb[0].mxu0
        %v8434 = vadd.f32 0.0, %v8433
        %v8435 = vpop.f32.mrb[0].mxu0
        %8436 = vmatprep.mubr.bf16.mxu0 0
        %8437 = vmatmul.mubr.bf16.gmra.mrb[0].mxu0 %v8319
        %v8438 = vpop.f32.mrb[0].mxu0
        %v8439 = vadd.f32 0.0, %v8438
        %v8440 = vpop.f32.mrb[0].mxu0
        %v8441 = vpop.f32.mrb[0].mxu0
        %v8442 = vpop.f32.mrb[0].mxu0
        %8443 = vmatprep.mubr.bf16.mxu0 0
        %8444 = vmatmul.mubr.bf16.gmra.mrb[0].mxu0 %v8322
        %v8445 = vpop.f32.mrb[0].mxu0
        %v8446 = vpop.f32.mrb[0].mxu0
        %v8447 = vpop.f32.mrb[0].mxu0
        %v8448 = vpop.f32.mrb[0].mxu0
        %8449 = vmatprep.mubr.bf16.mxu0 0
        %8450 = vmatmul.mubr.bf16.gmra.mrb[0].mxu0 %v8325
        %v8451 = vpop.f32.mrb[0].mxu0
        %v8452 = vadd.f32 0.0, %v8451
        %v8453 = vpop.f32.mrb[0].mxu0
        %v8454 = vpop.f32.mrb[0].mxu0
        %v8455 = vadd.f32 0.0, %v8454
        %v8456 = vpop.f32.mrb[0].mxu0
        %8457 = vmatprep.mubr.bf16.mxu0 0
        %8458 = vmatmul.mubr.bf16.gmra.mrb[0].mxu0 %v8328
        %v8459 = vpop.f32.mrb[0].mxu0
        %v8460 = vadd.f32 0.0, %v8459
        %v8461 = vpop.f32.mrb[0].mxu0
        %v8462 = vpop.f32.mrb[0].mxu0
        %v8463 = vadd.f32 0.0, %v8462
        %v8464 = vpop.f32.mrb[0].mxu0
        %8465 = vmatprep.mubr.bf16.mxu0 0
        %8466 = vmatmul.mubr.bf16.gmra.mrb[0].mxu0 %v8331
        %v8467 = vpop.f32.mrb[0].mxu0
        %v8468 = vpop.f32.mrb[0].mxu0
        %v8469 = vpop.f32.mrb[0].mxu0
        %v8470 = vpop.f32.mrb[0].mxu0
        %8471 = vmatprep.mubr.bf16.mxu0 0
        %8472 = vmatmul.mubr.bf16.gmra.mrb[0].mxu0 %v8334
        %v8473 = vpop.f32.mrb[0].mxu0
        %v8474 = vadd.f32 0.0, %v8473
        %v8475 = vpop.f32.mrb[0].mxu0
        %v8476 = vpop.f32.mrb[0].mxu0
        %v8477 = vadd.f32 0.0, %v8476
        %v8478 = vpop.f32.mrb[0].mxu0
        %8479 = vmatprep.mubr.bf16.mxu0 0
        %8480 = vmatmul.mubr.bf16.gmra.mrb[0].mxu0 %v8337
        %v8481 = vpop.f32.mrb[0].mxu0
        %v8482 = vadd.f32 0.0, %v8481
        %v8483 = vpop.f32.mrb[0].mxu0
        %v8484 = vpop.f32.mrb[0].mxu0
        %v8485 = vadd.f32 0.0, %v8484
        %v8486 = vpop.f32.mrb[0].mxu0
        %8487 = vmatprep.mubr.bf16.mxu0 0
        %8488 = vmatmul.mubr.bf16.gmra.mrb[0].mxu0 %v8340
        %v8489 = vpop.f32.mrb[0].mxu0
        %v8490 = vpop.f32.mrb[0].mxu0
        %v8491 = vpop.f32.mrb[0].mxu0
        %v8492 = vpop.f32.mrb[0].mxu0
        %8493 = vmatprep.mubr.bf16.mxu0 0
        %8494 = vmatmul.mubr.bf16.gmra.mrb[0].mxu0 %v8343
        %v8495 = vpop.f32.mrb[0].mxu0
        %v8496 = vadd.f32 0.0, %v8495
        %v8497 = vpop.f32.mrb[0].mxu0
        %v8498 = vpop.f32.mrb[0].mxu0
        %v8499 = vadd.f32 0.0, %v8498
        %v8500 = vpop.f32.mrb[0].mxu0
        %8501 = vmatprep.mubr.bf16.mxu0 0
        %8502 = vmatmul.mubr.bf16.gmra.mrb[0].mxu0 %v8346
        %v8503 = vpop.f32.mrb[0].mxu0
        %v8504 = vadd.f32 0.0, %v8503
        %v8505 = vpop.f32.mrb[0].mxu0
        %v8506 = vpop.f32.mrb[0].mxu0
        %v8507 = vadd.f32 0.0, %v8506
        %v8508 = vpop.f32.mrb[0].mxu0
        %8509 = vmatprep.mubr.bf16.mxu0 0
        %8510 = vmatmul.mubr.bf16.gmra.mrb[0].mxu0 %v8349
        %v8511 = vpop.f32.mrb[0].mxu0
        %v8512 = vadd.f32 0.0, %v8511
        %v8513 = vpop.f32.mrb[0].mxu0
        %v8514 = vpop.f32.mrb[0].mxu0
        %v8515 = vpop.f32.mrb[0].mxu0
        %8516 = vmatprep.mubr.bf16.mxu0 0
        %8517 = vmatmul.mubr.bf16.gmra.mrb[0].mxu0 %v8352
        %v8518 = vpop.f32.mrb[0].mxu0
        %v8519 = vadd.f32 0.0, %v8518
        %v8520 = vpop.f32.mrb[0].mxu0
        %v8521 = vpop.f32.mrb[0].mxu0
        %v8522 = vadd.f32 0.0, %v8521
        %v8523 = vpop.f32.mrb[0].mxu0
        %8524 = vmatprep.mubr.bf16.mxu0 0
        %8525 = vmatmul.mubr.bf16.gmra.mrb[0].mxu0 %v8355
        %v8526 = vpop.f32.mrb[0].mxu0
        %v8527 = vadd.f32 0.0, %v8526
        %v8528 = vpop.f32.mrb[0].mxu0
        %v8529 = vpop.f32.mrb[0].mxu0
        %v8530 = vadd.f32 0.0, %v8529
        %v8531 = vpop.f32.mrb[0].mxu0
        %8532 = vmatprep.mubr.bf16.mxu0 0
        %8533 = vmatmul.mubr.bf16.gmra.mrb[0].mxu0 %v8358
        %v8534 = vpop.f32.mrb[0].mxu0
        %v8535 = vadd.f32 0.0, %v8534
        %v8536 = vpop.f32.mrb[0].mxu0
        %v8537 = vpop.f32.mrb[0].mxu0
        %v8538 = vpop.f32.mrb[0].mxu0
        %8539 = vmatprep.mubr.bf16.mxu0 0
        %8540 = vmatmul.mubr.bf16.gmra.mrb[0].mxu0 %v8361
        %v8541 = vpop.f32.mrb[0].mxu0
        %v8542 = vpop.f32.mrb[0].mxu0
        %v8543 = vpop.f32.mrb[0].mxu0
        %v8544 = vadd.f32 0.0, %v8543
        %v8545 = vpop.f32.mrb[0].mxu0
        %8546 = vmatprep.mubr.bf16.mxu0 0
        %8547 = vmatmul.mubr.bf16.gmra.mrb[0].mxu0 %v8364
        %v8548 = vpop.f32.mrb[0].mxu0
        %v8549 = vadd.f32 0.0, %v8548
        %v8550 = vpop.f32.mrb[0].mxu0
        %v8551 = vpop.f32.mrb[0].mxu0
        %v8552 = vadd.f32 0.0, %v8551
        %v8553 = vpop.f32.mrb[0].mxu0
        %8554 = vmatprep.mubr.bf16.mxu0 0
        %8555 = vmatmul.mubr.bf16.gmra.mrb[0].mxu0 %v8367
        %v8556 = vpop.f32.mrb[0].mxu0
        %v8557 = vadd.f32 0.0, %v8556
        %v8558 = vpop.f32.mrb[0].mxu0
        %v8559 = vpop.f32.mrb[0].mxu0
        %v8560 = vpop.f32.mrb[0].mxu0
        %8561 = vmatprep.mubr.bf16.mxu0 0
        %8562 = vmatmul.mubr.bf16.gmra.mrb[0].mxu0 %v8370
        %v8563 = vpop.f32.mrb[0].mxu0
        %v8564 = vpop.f32.mrb[0].mxu0
        %v8565 = vpop.f32.mrb[0].mxu0
        %v8566 = vadd.f32 0.0, %v8565
        %v8567 = vpop.f32.mrb[0].mxu0
        %8568 = vmatprep.mubr.bf16.mxu0 0
        %8569 = vmatmul.mubr.bf16.gmra.mrb[0].mxu0 %v8373
        %v8570 = vpop.f32.mrb[0].mxu0
        %v8571 = vadd.f32 0.0, %v8570
        %v8572 = vpop.f32.mrb[0].mxu0
        %v8573 = vpop.f32.mrb[0].mxu0
        %v8574 = vadd.f32 0.0, %v8573
        %v8575 = vpop.f32.mrb[0].mxu0
        %8576 = vmatprep.mubr.bf16.mxu0 0
        %8577 = vmatmul.mubr.bf16.gmra.mrb[0].mxu0 %v8376
        %v8578 = vpop.f32.mrb[0].mxu0
        %v8579 = vadd.f32 0.0, %v8578
        %v8580 = vpop.f32.mrb[0].mxu0
        %v8581 = vpop.f32.mrb[0].mxu0
        %v8582 = vpop.f32.mrb[0].mxu0
        %8583 = vmatprep.mubr.bf16.mxu0 0
        %8584 = vmatmul.mubr.bf16.gmra.mrb[0].mxu0 %v8379
        %v8585 = vpop.f32.mrb[0].mxu0
        %v8586 = vpop.f32.mrb[0].mxu0
        %v8587 = vpop.f32.mrb[0].mxu0
        %v8588 = vadd.f32 0.0, %v8587
        %v8589 = vpop.f32.mrb[0].mxu0
        %8590 = vmatprep.mubr.bf16.mxu0 0
        %8591 = vmatmul.mubr.bf16.gmra.mrb[0].mxu0 %v8382
        %v8592 = vpop.f32.mrb[0].mxu0
        %v8593 = vadd.f32 0.0, %v8592
        %v8594 = vpop.f32.mrb[0].mxu0
        %v8595 = vpop.f32.mrb[0].mxu0
        %v8596 = vadd.f32 0.0, %v8595
        %v8597 = vpop.f32.mrb[0].mxu0
        %8598 = vmatprep.mubr.bf16.mxu0 0
        %8599 = vmatmul.mubr.bf16.gmra.mrb[0].mxu0 %v8385
        %v8600 = vpop.f32.mrb[0].mxu0
        %v8601 = vpop.f32.mrb[0].mxu0
        %v8602 = vpop.f32.mrb[0].mxu0
        %v8603 = vpop.f32.mrb[0].mxu0
        %8604 = vmatprep.mubr.bf16.mxu0 0
        %8605 = vmatmul.mubr.bf16.gmra.mrb[0].mxu0 %v8388
        %v8606 = vpop.f32.mrb[0].mxu0
        %v8607 = vpop.f32.mrb[0].mxu0
        %v8608 = vpop.f32.mrb[0].mxu0
        %v8609 = vadd.f32 0.0, %v8608
        %v8610 = vpop.f32.mrb[0].mxu0
        %8611 = vmatprep.mubr.bf16.mxu0 0
        %8612 = vmatmul.mubr.bf16.gmra.mrb[0].mxu0 %v8391
        %v8613 = vpop.f32.mrb[0].mxu0
        %v8614 = vadd.f32 0.0, %v8613
        %v8615 = vpop.f32.mrb[0].mxu0
        %v8616 = vpop.f32.mrb[0].mxu0
        %v8617 = vadd.f32 0.0, %v8616
        %v8618 = vpop.f32.mrb[0].mxu0
        %8619 = vmatprep.mubr.bf16.mxu0 0
        %8620 = vmatmul.mubr.bf16.gmra.mrb[0].mxu0 %v8394
        %v8621 = vpop.f32.mrb[0].mxu0
        %v8622 = vadd.f32 0.0, %v8621
        %v8623 = vpop.f32.mrb[0].mxu0
        %v8624 = vpop.f32.mrb[0].mxu0
        %v8625 = vpop.f32.mrb[0].mxu0
        %8626 = vdwg.mxu0
        %v8627 = vadd.f32 %v8054, %v8431
        %v8628 = vadd.f32 %v8057, %v8434
        %v8629 = vadd.f32 %v8062, %v8439
        %v8630 = vadd.f32 %v8075, %v8452
        %v8631 = vadd.f32 %v8078, %v8455
        %v8632 = vadd.f32 %v8083, %v8460
        %v8633 = vadd.f32 %v8086, %v8463
        %v8634 = vadd.f32 %v8097, %v8474
        %v8635 = vadd.f32 %v8100, %v8477
        %v8636 = vadd.f32 %v8105, %v8482
        %v8637 = vadd.f32 %v8108, %v8485
        %v8638 = vadd.f32 %v8119, %v8496
        %v8639 = vadd.f32 %v8122, %v8499
        %v8640 = vadd.f32 %v8127, %v8504
        %v8641 = vadd.f32 %v8130, %v8507
        %v8642 = vadd.f32 %v8135, %v8512
        %v8643 = vadd.f32 %v8142, %v8519
        %v8644 = vadd.f32 %v8145, %v8522
        %v8645 = vadd.f32 %v8150, %v8527
        %v8646 = vadd.f32 %v8153, %v8530
        %v8647 = vadd.f32 %v8158, %v8535
        %v8648 = vadd.f32 %v8167, %v8544
        %v8649 = vadd.f32 %v8172, %v8549
        %v8650 = vadd.f32 %v8175, %v8552
        %v8651 = vadd.f32 %v8180, %v8557
        %v8652 = vadd.f32 %v8189, %v8566
        %v8653 = vadd.f32 %v8194, %v8571
        %v8654 = vadd.f32 %v8197, %v8574
        %v8655 = vadd.f32 %v8202, %v8579
        %v8656 = vadd.f32 %v8211, %v8588
        %v8657 = vadd.f32 %v8216, %v8593
        %v8658 = vadd.f32 %v8219, %v8596
        %v8659 = vadd.f32 %v8232, %v8609
        %v8660 = vadd.f32 %v8237, %v8614
        %v8661 = vadd.f32 %v8240, %v8617
        %v8662 = vadd.f32 %v8245, %v8622
        %v8666 = vrot.slane %v7479, 1
        %v8667 = vsel %vm1780, %v7599, %v8666
        %v8668 = vrot.slane %v7480, 1
        %v8669 = vsel %vm1780, %v8666, %v8668
        %v8670 = vrot.slane %v7481, 1
        %v8671 = vsel %vm1780, %v8668, %v8670
        %v8676 = vunpack.c.l.b16 %v7497
        %v8677 = vunpack.c.l.b16 %v7498
        %v8678 = vunpack.c.l.b16 %v7499
        %v8679 = vunpack.c.l.b16 %v7500
        %v8680 = vpack.c.b16 %v8677, %v8676
        %v8681 = vpack.c.b16 %v8679, %v8678
        %v8685 = vsel %vm7613, %v8667, 0
        %v8688 = vsel %vm7613, %v8669, 0
        %v8691 = vsel %vm7613, %v8671, 0
        %v8694 = vsel %vm7613, %v8670, 0
        %8696 = vmatprep.subr.bf16.mxu0 0
        %8697 = vmatpush1.bf16.msra.mxu0 %v8680
        %8698 = vmatprep.subr.bf16.mxu0 0
        %8699 = vmatpush1.bf16.msra.mxu0 %v8681
        %8700 = vmatprep.subr.bf16.mxu0 0
        %8701 = vmatpush1.bf16.msra.mxu0 0
        %8702 = vmatprep.subr.bf16.mxu0 0
        %8703 = vmatpush1.bf16.msra.mxu0 0
        %8704 = vmatprep.subr.bf16.mxu0 0
        %8705 = vmatpush1.bf16.msra.mxu0 0
        %8706 = vmatprep.subr.bf16.mxu0 0
        %8707 = vmatpush1.bf16.msra.mxu0 0
        %8708 = vmatprep.subr.bf16.mxu0 0
        %8709 = vmatpush1.bf16.msra.mxu0 0
        %8710 = vmatprep.subr.bf16.mxu0 0
        %8711 = vmatpush1.bf16.msra.mxu0 0
        %8712 = vmatprep.subr.bf16.mxu0 0
        %8713 = vmatpush1.bf16.msra.mxu0 0
        %8714 = vmatprep.subr.bf16.mxu0 0
        %8715 = vmatpush1.bf16.msra.mxu0 0
        %8716 = vmatprep.subr.bf16.mxu0 0
        %8717 = vmatpush1.bf16.msra.mxu0 0
        %8718 = vmatprep.subr.bf16.mxu0 0
        %8719 = vmatpush1.bf16.msra.mxu0 0
        %8720 = vmatprep.subr.bf16.mxu0 0
        %8721 = vmatpush1.bf16.msra.mxu0 0
        %8722 = vmatprep.subr.bf16.mxu0 0
        %8723 = vmatpush1.bf16.msra.mxu0 0
        %8724 = vmatprep.subr.bf16.mxu0 0
        %8725 = vmatpush1.bf16.msra.mxu0 0
        %8726 = vmatprep.subr.bf16.mxu0 0
        %8727 = vmatpush1.bf16.msra.mxu0 0
        %8728 = vmatprep.mubr.bf16.mxu0 0
        %8729 = vmatmul.mubr.bf16.gmra.mrb[0].mxu0 %v7624
        %v8730 = vpop.f32.mrb[0].mxu0
        %v8731 = vadd.f32 0.0, %v8730
        %v8732 = vpop.f32.mrb[0].mxu0
        %v8733 = vpop.f32.mrb[0].mxu0
        %v8734 = vadd.f32 0.0, %v8733
        %v8735 = vpop.f32.mrb[0].mxu0
        %8736 = vmatprep.mubr.bf16.mxu0 0
        %8737 = vmatmul.mubr.bf16.gmra.mrb[0].mxu0 %v7627
        %v8738 = vpop.f32.mrb[0].mxu0
        %v8739 = vadd.f32 0.0, %v8738
        %v8740 = vpop.f32.mrb[0].mxu0
        %v8741 = vpop.f32.mrb[0].mxu0
        %v8742 = vpop.f32.mrb[0].mxu0
        %8743 = vmatprep.mubr.bf16.mxu0 0
        %8744 = vmatmul.mubr.bf16.gmra.mrb[0].mxu0 %v7630
        %v8745 = vpop.f32.mrb[0].mxu0
        %v8746 = vpop.f32.mrb[0].mxu0
        %v8747 = vpop.f32.mrb[0].mxu0
        %v8748 = vpop.f32.mrb[0].mxu0
        %8749 = vmatprep.mubr.bf16.mxu0 0
        %8750 = vmatmul.mubr.bf16.gmra.mrb[0].mxu0 %v7633
        %v8751 = vpop.f32.mrb[0].mxu0
        %v8752 = vadd.f32 0.0, %v8751
        %v8753 = vpop.f32.mrb[0].mxu0
        %v8754 = vpop.f32.mrb[0].mxu0
        %v8755 = vadd.f32 0.0, %v8754
        %v8756 = vpop.f32.mrb[0].mxu0
        %8757 = vmatprep.mubr.bf16.mxu0 0
        %8758 = vmatmul.mubr.bf16.gmra.mrb[0].mxu0 %v7636
        %v8759 = vpop.f32.mrb[0].mxu0
        %v8760 = vadd.f32 0.0, %v8759
        %v8761 = vpop.f32.mrb[0].mxu0
        %v8762 = vpop.f32.mrb[0].mxu0
        %v8763 = vadd.f32 0.0, %v8762
        %v8764 = vpop.f32.mrb[0].mxu0
        %8765 = vmatprep.mubr.bf16.mxu0 0
        %8766 = vmatmul.mubr.bf16.gmra.mrb[0].mxu0 %v7639
        %v8767 = vpop.f32.mrb[0].mxu0
        %v8768 = vpop.f32.mrb[0].mxu0
        %v8769 = vpop.f32.mrb[0].mxu0
        %v8770 = vpop.f32.mrb[0].mxu0
        %8771 = vmatprep.mubr.bf16.mxu0 0
        %8772 = vmatmul.mubr.bf16.gmra.mrb[0].mxu0 %v7642
        %v8773 = vpop.f32.mrb[0].mxu0
        %v8774 = vadd.f32 0.0, %v8773
        %v8775 = vpop.f32.mrb[0].mxu0
        %v8776 = vpop.f32.mrb[0].mxu0
        %v8777 = vadd.f32 0.0, %v8776
        %v8778 = vpop.f32.mrb[0].mxu0
        %8779 = vmatprep.mubr.bf16.mxu0 0
        %8780 = vmatmul.mubr.bf16.gmra.mrb[0].mxu0 %v7645
        %v8781 = vpop.f32.mrb[0].mxu0
        %v8782 = vadd.f32 0.0, %v8781
        %v8783 = vpop.f32.mrb[0].mxu0
        %v8784 = vpop.f32.mrb[0].mxu0
        %v8785 = vadd.f32 0.0, %v8784
        %v8786 = vpop.f32.mrb[0].mxu0
        %8787 = vmatprep.mubr.bf16.mxu0 0
        %8788 = vmatmul.mubr.bf16.gmra.mrb[0].mxu0 %v7648
        %v8789 = vpop.f32.mrb[0].mxu0
        %v8790 = vpop.f32.mrb[0].mxu0
        %v8791 = vpop.f32.mrb[0].mxu0
        %v8792 = vpop.f32.mrb[0].mxu0
        %8793 = vmatprep.mubr.bf16.mxu0 0
        %8794 = vmatmul.mubr.bf16.gmra.mrb[0].mxu0 %v7651
        %v8795 = vpop.f32.mrb[0].mxu0
        %v8796 = vadd.f32 0.0, %v8795
        %v8797 = vpop.f32.mrb[0].mxu0
        %v8798 = vpop.f32.mrb[0].mxu0
        %v8799 = vadd.f32 0.0, %v8798
        %v8800 = vpop.f32.mrb[0].mxu0
        %8801 = vmatprep.mubr.bf16.mxu0 0
        %8802 = vmatmul.mubr.bf16.gmra.mrb[0].mxu0 %v7654
        %v8803 = vpop.f32.mrb[0].mxu0
        %v8804 = vadd.f32 0.0, %v8803
        %v8805 = vpop.f32.mrb[0].mxu0
        %v8806 = vpop.f32.mrb[0].mxu0
        %v8807 = vadd.f32 0.0, %v8806
        %v8808 = vpop.f32.mrb[0].mxu0
        %8809 = vmatprep.mubr.bf16.mxu0 0
        %8810 = vmatmul.mubr.bf16.gmra.mrb[0].mxu0 %v7657
        %v8811 = vpop.f32.mrb[0].mxu0
        %v8812 = vadd.f32 0.0, %v8811
        %v8813 = vpop.f32.mrb[0].mxu0
        %v8814 = vpop.f32.mrb[0].mxu0
        %v8815 = vpop.f32.mrb[0].mxu0
        %8816 = vmatprep.mubr.bf16.mxu0 0
        %8817 = vmatmul.mubr.bf16.gmra.mrb[0].mxu0 %v7660
        %v8818 = vpop.f32.mrb[0].mxu0
        %v8819 = vadd.f32 0.0, %v8818
        %v8820 = vpop.f32.mrb[0].mxu0
        %v8821 = vpop.f32.mrb[0].mxu0
        %v8822 = vadd.f32 0.0, %v8821
        %v8823 = vpop.f32.mrb[0].mxu0
        %8824 = vmatprep.mubr.bf16.mxu0 0
        %8825 = vmatmul.mubr.bf16.gmra.mrb[0].mxu0 %v7663
        %v8826 = vpop.f32.mrb[0].mxu0
        %v8827 = vadd.f32 0.0, %v8826
        %v8828 = vpop.f32.mrb[0].mxu0
        %v8829 = vpop.f32.mrb[0].mxu0
        %v8830 = vadd.f32 0.0, %v8829
        %v8831 = vpop.f32.mrb[0].mxu0
        %8832 = vmatprep.mubr.bf16.mxu0 0
        %8833 = vmatmul.mubr.bf16.gmra.mrb[0].mxu0 %v7666
        %v8834 = vpop.f32.mrb[0].mxu0
        %v8835 = vadd.f32 0.0, %v8834
        %v8836 = vpop.f32.mrb[0].mxu0
        %v8837 = vpop.f32.mrb[0].mxu0
        %v8838 = vpop.f32.mrb[0].mxu0
        %8839 = vmatprep.mubr.bf16.mxu0 0
        %8840 = vmatmul.mubr.bf16.gmra.mrb[0].mxu0 %v7669
        %v8841 = vpop.f32.mrb[0].mxu0
        %v8842 = vpop.f32.mrb[0].mxu0
        %v8843 = vpop.f32.mrb[0].mxu0
        %v8844 = vadd.f32 0.0, %v8843
        %v8845 = vpop.f32.mrb[0].mxu0
        %8846 = vmatprep.mubr.bf16.mxu0 0
        %8847 = vmatmul.mubr.bf16.gmra.mrb[0].mxu0 %v7672
        %v8848 = vpop.f32.mrb[0].mxu0
        %v8849 = vadd.f32 0.0, %v8848
        %v8850 = vpop.f32.mrb[0].mxu0
        %v8851 = vpop.f32.mrb[0].mxu0
        %v8852 = vadd.f32 0.0, %v8851
        %v8853 = vpop.f32.mrb[0].mxu0
        %8854 = vmatprep.mubr.bf16.mxu0 0
        %8855 = vmatmul.mubr.bf16.gmra.mrb[0].mxu0 %v7675
        %v8856 = vpop.f32.mrb[0].mxu0
        %v8857 = vadd.f32 0.0, %v8856
        %v8858 = vpop.f32.mrb[0].mxu0
        %v8859 = vpop.f32.mrb[0].mxu0
        %v8860 = vpop.f32.mrb[0].mxu0
        %8861 = vmatprep.mubr.bf16.mxu0 0
        %8862 = vmatmul.mubr.bf16.gmra.mrb[0].mxu0 %v7678
        %v8863 = vpop.f32.mrb[0].mxu0
        %v8864 = vpop.f32.mrb[0].mxu0
        %v8865 = vpop.f32.mrb[0].mxu0
        %v8866 = vadd.f32 0.0, %v8865
        %v8867 = vpop.f32.mrb[0].mxu0
        %8868 = vmatprep.mubr.bf16.mxu0 0
        %8869 = vmatmul.mubr.bf16.gmra.mrb[0].mxu0 %v7681
        %v8870 = vpop.f32.mrb[0].mxu0
        %v8871 = vadd.f32 0.0, %v8870
        %v8872 = vpop.f32.mrb[0].mxu0
        %v8873 = vpop.f32.mrb[0].mxu0
        %v8874 = vadd.f32 0.0, %v8873
        %v8875 = vpop.f32.mrb[0].mxu0
        %8876 = vmatprep.mubr.bf16.mxu0 0
        %8877 = vmatmul.mubr.bf16.gmra.mrb[0].mxu0 %v7684
        %v8878 = vpop.f32.mrb[0].mxu0
        %v8879 = vadd.f32 0.0, %v8878
        %v8880 = vpop.f32.mrb[0].mxu0
        %v8881 = vpop.f32.mrb[0].mxu0
        %v8882 = vpop.f32.mrb[0].mxu0
        %8883 = vmatprep.mubr.bf16.mxu0 0
        %8884 = vmatmul.mubr.bf16.gmra.mrb[0].mxu0 %v7687
        %v8885 = vpop.f32.mrb[0].mxu0
        %v8886 = vpop.f32.mrb[0].mxu0
        %v8887 = vpop.f32.mrb[0].mxu0
        %v8888 = vadd.f32 0.0, %v8887
        %v8889 = vpop.f32.mrb[0].mxu0
        %8890 = vmatprep.mubr.bf16.mxu0 0
        %8891 = vmatmul.mubr.bf16.gmra.mrb[0].mxu0 %v7690
        %v8892 = vpop.f32.mrb[0].mxu0
        %v8893 = vadd.f32 0.0, %v8892
        %v8894 = vpop.f32.mrb[0].mxu0
        %v8895 = vpop.f32.mrb[0].mxu0
        %v8896 = vadd.f32 0.0, %v8895
        %v8897 = vpop.f32.mrb[0].mxu0
        %8898 = vmatprep.mubr.bf16.mxu0 0
        %8899 = vmatmul.mubr.bf16.gmra.mrb[0].mxu0 %v8685
        %v8900 = vpop.f32.mrb[0].mxu0
        %v8901 = vpop.f32.mrb[0].mxu0
        %v8902 = vpop.f32.mrb[0].mxu0
        %v8903 = vpop.f32.mrb[0].mxu0
        %8904 = vmatprep.mubr.bf16.mxu0 0
        %8905 = vmatmul.mubr.bf16.gmra.mrb[0].mxu0 %v8688
        %v8906 = vpop.f32.mrb[0].mxu0
        %v8907 = vpop.f32.mrb[0].mxu0
        %v8908 = vpop.f32.mrb[0].mxu0
        %v8909 = vadd.f32 0.0, %v8908
        %v8910 = vpop.f32.mrb[0].mxu0
        %8911 = vmatprep.mubr.bf16.mxu0 0
        %8912 = vmatmul.mubr.bf16.gmra.mrb[0].mxu0 %v8691
        %v8913 = vpop.f32.mrb[0].mxu0
        %v8914 = vadd.f32 0.0, %v8913
        %v8915 = vpop.f32.mrb[0].mxu0
        %v8916 = vpop.f32.mrb[0].mxu0
        %v8917 = vadd.f32 0.0, %v8916
        %v8918 = vpop.f32.mrb[0].mxu0
        %8919 = vmatprep.mubr.bf16.mxu0 0
        %8920 = vmatmul.mubr.bf16.gmra.mrb[0].mxu0 %v8694
        %v8921 = vpop.f32.mrb[0].mxu0
        %v8922 = vadd.f32 0.0, %v8921
        %v8923 = vpop.f32.mrb[0].mxu0
        %v8924 = vpop.f32.mrb[0].mxu0
        %v8925 = vpop.f32.mrb[0].mxu0
        %8926 = vdwg.mxu0
        %v8927 = vadd.f32 %v8627, %v8731
        %v8928 = vadd.f32 %v8628, %v8734
        %v8929 = vadd.f32 %v8629, %v8739
        %v8930 = vadd.f32 %v8630, %v8752
        %v8931 = vadd.f32 %v8631, %v8755
        %v8932 = vadd.f32 %v8632, %v8760
        %v8933 = vadd.f32 %v8633, %v8763
        %v8934 = vadd.f32 %v8634, %v8774
        %v8935 = vadd.f32 %v8635, %v8777
        %v8936 = vadd.f32 %v8636, %v8782
        %v8937 = vadd.f32 %v8637, %v8785
        %v8938 = vadd.f32 %v8638, %v8796
        %v8939 = vadd.f32 %v8639, %v8799
        %v8940 = vadd.f32 %v8640, %v8804
        %v8941 = vadd.f32 %v8641, %v8807
        %v8942 = vadd.f32 %v8642, %v8812
        %v8943 = vadd.f32 %v8643, %v8819
        %v8944 = vadd.f32 %v8644, %v8822
        %v8945 = vadd.f32 %v8645, %v8827
        %v8946 = vadd.f32 %v8646, %v8830
        %v8947 = vadd.f32 %v8647, %v8835
        %v8948 = vadd.f32 %v8648, %v8844
        %v8949 = vadd.f32 %v8649, %v8849
        %v8950 = vadd.f32 %v8650, %v8852
        %v8951 = vadd.f32 %v8651, %v8857
        %v8952 = vadd.f32 %v8652, %v8866
        %v8953 = vadd.f32 %v8653, %v8871
        %v8954 = vadd.f32 %v8654, %v8874
        %v8955 = vadd.f32 %v8655, %v8879
        %v8956 = vadd.f32 %v8656, %v8888
        %v8957 = vadd.f32 %v8657, %v8893
        %v8958 = vadd.f32 %v8658, %v8896
        %v8959 = vadd.f32 %v8659, %v8909
        %v8960 = vadd.f32 %v8660, %v8914
        %v8961 = vadd.f32 %v8661, %v8917
        %v8962 = vadd.f32 %v8662, %v8922
        %v8963 = vrot.slane %v7479, 2
        %v8964 = vsel %vm5534, %v8301, %v8963
        %v8965 = vrot.slane %v7480, 2
        %v8966 = vsel %vm5534, %v8963, %v8965
        %v8967 = vrot.slane %v7481, 2
        %v8968 = vsel %vm5534, %v8965, %v8967
        %v8973 = vunpack.c.l.b16 %v7501
        %v8974 = vunpack.c.l.b16 %v7502
        %v8975 = vunpack.c.l.b16 %v7503
        %v8976 = vunpack.c.l.b16 %v7504
        %v8977 = vpack.c.b16 %v8974, %v8973
        %v8978 = vpack.c.b16 %v8976, %v8975
        %v8982 = vsel %vm7613, %v8964, 0
        %v8985 = vsel %vm7613, %v8966, 0
        %v8988 = vsel %vm7613, %v8968, 0
        %v8991 = vsel %vm7613, %v8967, 0
        %8993 = vmatprep.subr.bf16.mxu0 0
        %8994 = vmatpush1.bf16.msra.mxu0 %v8977
        %8995 = vmatprep.subr.bf16.mxu0 0
        %8996 = vmatpush1.bf16.msra.mxu0 %v8978
        %8997 = vmatprep.subr.bf16.mxu0 0
        %8998 = vmatpush1.bf16.msra.mxu0 0
        %8999 = vmatprep.subr.bf16.mxu0 0
        %9000 = vmatpush1.bf16.msra.mxu0 0
        %9001 = vmatprep.subr.bf16.mxu0 0
        %9002 = vmatpush1.bf16.msra.mxu0 0
        %9003 = vmatprep.subr.bf16.mxu0 0
        %9004 = vmatpush1.bf16.msra.mxu0 0
        %9005 = vmatprep.subr.bf16.mxu0 0
        %9006 = vmatpush1.bf16.msra.mxu0 0
        %9007 = vmatprep.subr.bf16.mxu0 0
        %9008 = vmatpush1.bf16.msra.mxu0 0
        %9009 = vmatprep.subr.bf16.mxu0 0
        %9010 = vmatpush1.bf16.msra.mxu0 0
        %9011 = vmatprep.subr.bf16.mxu0 0
        %9012 = vmatpush1.bf16.msra.mxu0 0
        %9013 = vmatprep.subr.bf16.mxu0 0
        %9014 = vmatpush1.bf16.msra.mxu0 0
        %9015 = vmatprep.subr.bf16.mxu0 0
        %9016 = vmatpush1.bf16.msra.mxu0 0
        %9017 = vmatprep.subr.bf16.mxu0 0
        %9018 = vmatpush1.bf16.msra.mxu0 0
        %9019 = vmatprep.subr.bf16.mxu0 0
        %9020 = vmatpush1.bf16.msra.mxu0 0
        %9021 = vmatprep.subr.bf16.mxu0 0
        %9022 = vmatpush1.bf16.msra.mxu0 0
        %9023 = vmatprep.subr.bf16.mxu0 0
        %9024 = vmatpush1.bf16.msra.mxu0 0
        %9025 = vmatprep.mubr.bf16.mxu0 0
        %9026 = vmatmul.mubr.bf16.gmra.mrb[0].mxu0 %v8325
        %v9027 = vpop.f32.mrb[0].mxu0
        %v9028 = vadd.f32 0.0, %v9027
        %v9029 = vpop.f32.mrb[0].mxu0
        %v9030 = vpop.f32.mrb[0].mxu0
        %v9031 = vadd.f32 0.0, %v9030
        %v9032 = vpop.f32.mrb[0].mxu0
        %9033 = vmatprep.mubr.bf16.mxu0 0
        %9034 = vmatmul.mubr.bf16.gmra.mrb[0].mxu0 %v8328
        %v9035 = vpop.f32.mrb[0].mxu0
        %v9036 = vadd.f32 0.0, %v9035
        %v9037 = vpop.f32.mrb[0].mxu0
        %v9038 = vpop.f32.mrb[0].mxu0
        %v9039 = vpop.f32.mrb[0].mxu0
        %9040 = vmatprep.mubr.bf16.mxu0 0
        %9041 = vmatmul.mubr.bf16.gmra.mrb[0].mxu0 %v8331
        %v9042 = vpop.f32.mrb[0].mxu0
        %v9043 = vpop.f32.mrb[0].mxu0
        %v9044 = vpop.f32.mrb[0].mxu0
        %v9045 = vpop.f32.mrb[0].mxu0
        %9046 = vmatprep.mubr.bf16.mxu0 0
        %9047 = vmatmul.mubr.bf16.gmra.mrb[0].mxu0 %v8334
        %v9048 = vpop.f32.mrb[0].mxu0
        %v9049 = vadd.f32 0.0, %v9048
        %v9050 = vpop.f32.mrb[0].mxu0
        %v9051 = vpop.f32.mrb[0].mxu0
        %v9052 = vadd.f32 0.0, %v9051
        %v9053 = vpop.f32.mrb[0].mxu0
        %9054 = vmatprep.mubr.bf16.mxu0 0
        %9055 = vmatmul.mubr.bf16.gmra.mrb[0].mxu0 %v8337
        %v9056 = vpop.f32.mrb[0].mxu0
        %v9057 = vadd.f32 0.0, %v9056
        %v9058 = vpop.f32.mrb[0].mxu0
        %v9059 = vpop.f32.mrb[0].mxu0
        %v9060 = vadd.f32 0.0, %v9059
        %v9061 = vpop.f32.mrb[0].mxu0
        %9062 = vmatprep.mubr.bf16.mxu0 0
        %9063 = vmatmul.mubr.bf16.gmra.mrb[0].mxu0 %v8340
        %v9064 = vpop.f32.mrb[0].mxu0
        %v9065 = vpop.f32.mrb[0].mxu0
        %v9066 = vpop.f32.mrb[0].mxu0
        %v9067 = vpop.f32.mrb[0].mxu0
        %9068 = vmatprep.mubr.bf16.mxu0 0
        %9069 = vmatmul.mubr.bf16.gmra.mrb[0].mxu0 %v8343
        %v9070 = vpop.f32.mrb[0].mxu0
        %v9071 = vadd.f32 0.0, %v9070
        %v9072 = vpop.f32.mrb[0].mxu0
        %v9073 = vpop.f32.mrb[0].mxu0
        %v9074 = vadd.f32 0.0, %v9073
        %v9075 = vpop.f32.mrb[0].mxu0
        %9076 = vmatprep.mubr.bf16.mxu0 0
        %9077 = vmatmul.mubr.bf16.gmra.mrb[0].mxu0 %v8346
        %v9078 = vpop.f32.mrb[0].mxu0
        %v9079 = vadd.f32 0.0, %v9078
        %v9080 = vpop.f32.mrb[0].mxu0
        %v9081 = vpop.f32.mrb[0].mxu0
        %v9082 = vadd.f32 0.0, %v9081
        %v9083 = vpop.f32.mrb[0].mxu0
        %9084 = vmatprep.mubr.bf16.mxu0 0
        %9085 = vmatmul.mubr.bf16.gmra.mrb[0].mxu0 %v8349
        %v9086 = vpop.f32.mrb[0].mxu0
        %v9087 = vpop.f32.mrb[0].mxu0
        %v9088 = vpop.f32.mrb[0].mxu0
        %v9089 = vpop.f32.mrb[0].mxu0
        %9090 = vmatprep.mubr.bf16.mxu0 0
        %9091 = vmatmul.mubr.bf16.gmra.mrb[0].mxu0 %v8352
        %v9092 = vpop.f32.mrb[0].mxu0
        %v9093 = vadd.f32 0.0, %v9092
        %v9094 = vpop.f32.mrb[0].mxu0
        %v9095 = vpop.f32.mrb[0].mxu0
        %v9096 = vadd.f32 0.0, %v9095
        %v9097 = vpop.f32.mrb[0].mxu0
        %9098 = vmatprep.mubr.bf16.mxu0 0
        %9099 = vmatmul.mubr.bf16.gmra.mrb[0].mxu0 %v8355
        %v9100 = vpop.f32.mrb[0].mxu0
        %v9101 = vadd.f32 0.0, %v9100
        %v9102 = vpop.f32.mrb[0].mxu0
        %v9103 = vpop.f32.mrb[0].mxu0
        %v9104 = vadd.f32 0.0, %v9103
        %v9105 = vpop.f32.mrb[0].mxu0
        %9106 = vmatprep.mubr.bf16.mxu0 0
        %9107 = vmatmul.mubr.bf16.gmra.mrb[0].mxu0 %v8358
        %v9108 = vpop.f32.mrb[0].mxu0
        %v9109 = vadd.f32 0.0, %v9108
        %v9110 = vpop.f32.mrb[0].mxu0
        %v9111 = vpop.f32.mrb[0].mxu0
        %v9112 = vpop.f32.mrb[0].mxu0
        %9113 = vmatprep.mubr.bf16.mxu0 0
        %9114 = vmatmul.mubr.bf16.gmra.mrb[0].mxu0 %v8361
        %v9115 = vpop.f32.mrb[0].mxu0
        %v9116 = vadd.f32 0.0, %v9115
        %v9117 = vpop.f32.mrb[0].mxu0
        %v9118 = vpop.f32.mrb[0].mxu0
        %v9119 = vadd.f32 0.0, %v9118
        %v9120 = vpop.f32.mrb[0].mxu0
        %9121 = vmatprep.mubr.bf16.mxu0 0
        %9122 = vmatmul.mubr.bf16.gmra.mrb[0].mxu0 %v8364
        %v9123 = vpop.f32.mrb[0].mxu0
        %v9124 = vadd.f32 0.0, %v9123
        %v9125 = vpop.f32.mrb[0].mxu0
        %v9126 = vpop.f32.mrb[0].mxu0
        %v9127 = vadd.f32 0.0, %v9126
        %v9128 = vpop.f32.mrb[0].mxu0
        %9129 = vmatprep.mubr.bf16.mxu0 0
        %9130 = vmatmul.mubr.bf16.gmra.mrb[0].mxu0 %v8367
        %v9131 = vpop.f32.mrb[0].mxu0
        %v9132 = vadd.f32 0.0, %v9131
        %v9133 = vpop.f32.mrb[0].mxu0
        %v9134 = vpop.f32.mrb[0].mxu0
        %v9135 = vpop.f32.mrb[0].mxu0
        %9136 = vmatprep.mubr.bf16.mxu0 0
        %9137 = vmatmul.mubr.bf16.gmra.mrb[0].mxu0 %v8370
        %v9138 = vpop.f32.mrb[0].mxu0
        %v9139 = vpop.f32.mrb[0].mxu0
        %v9140 = vpop.f32.mrb[0].mxu0
        %v9141 = vadd.f32 0.0, %v9140
        %v9142 = vpop.f32.mrb[0].mxu0
        %9143 = vmatprep.mubr.bf16.mxu0 0
        %9144 = vmatmul.mubr.bf16.gmra.mrb[0].mxu0 %v8373
        %v9145 = vpop.f32.mrb[0].mxu0
        %v9146 = vadd.f32 0.0, %v9145
        %v9147 = vpop.f32.mrb[0].mxu0
        %v9148 = vpop.f32.mrb[0].mxu0
        %v9149 = vadd.f32 0.0, %v9148
        %v9150 = vpop.f32.mrb[0].mxu0
        %9151 = vmatprep.mubr.bf16.mxu0 0
        %9152 = vmatmul.mubr.bf16.gmra.mrb[0].mxu0 %v8376
        %v9153 = vpop.f32.mrb[0].mxu0
        %v9154 = vadd.f32 0.0, %v9153
        %v9155 = vpop.f32.mrb[0].mxu0
        %v9156 = vpop.f32.mrb[0].mxu0
        %v9157 = vpop.f32.mrb[0].mxu0
        %9158 = vmatprep.mubr.bf16.mxu0 0
        %9159 = vmatmul.mubr.bf16.gmra.mrb[0].mxu0 %v8379
        %v9160 = vpop.f32.mrb[0].mxu0
        %v9161 = vpop.f32.mrb[0].mxu0
        %v9162 = vpop.f32.mrb[0].mxu0
        %v9163 = vadd.f32 0.0, %v9162
        %v9164 = vpop.f32.mrb[0].mxu0
        %9165 = vmatprep.mubr.bf16.mxu0 0
        %9166 = vmatmul.mubr.bf16.gmra.mrb[0].mxu0 %v8382
        %v9167 = vpop.f32.mrb[0].mxu0
        %v9168 = vadd.f32 0.0, %v9167
        %v9169 = vpop.f32.mrb[0].mxu0
        %v9170 = vpop.f32.mrb[0].mxu0
        %v9171 = vadd.f32 0.0, %v9170
        %v9172 = vpop.f32.mrb[0].mxu0
        %9173 = vmatprep.mubr.bf16.mxu0 0
        %9174 = vmatmul.mubr.bf16.gmra.mrb[0].mxu0 %v8385
        %v9175 = vpop.f32.mrb[0].mxu0
        %v9176 = vadd.f32 0.0, %v9175
        %v9177 = vpop.f32.mrb[0].mxu0
        %v9178 = vpop.f32.mrb[0].mxu0
        %v9179 = vpop.f32.mrb[0].mxu0
        %9180 = vmatprep.mubr.bf16.mxu0 0
        %9181 = vmatmul.mubr.bf16.gmra.mrb[0].mxu0 %v8388
        %v9182 = vpop.f32.mrb[0].mxu0
        %v9183 = vpop.f32.mrb[0].mxu0
        %v9184 = vpop.f32.mrb[0].mxu0
        %v9185 = vadd.f32 0.0, %v9184
        %v9186 = vpop.f32.mrb[0].mxu0
        %9187 = vmatprep.mubr.bf16.mxu0 0
        %9188 = vmatmul.mubr.bf16.gmra.mrb[0].mxu0 %v8391
        %v9189 = vpop.f32.mrb[0].mxu0
        %v9190 = vadd.f32 0.0, %v9189
        %v9191 = vpop.f32.mrb[0].mxu0
        %v9192 = vpop.f32.mrb[0].mxu0
        %v9193 = vadd.f32 0.0, %v9192
        %v9194 = vpop.f32.mrb[0].mxu0
        %9195 = vmatprep.mubr.bf16.mxu0 0
        %9196 = vmatmul.mubr.bf16.gmra.mrb[0].mxu0 %v8982
        %v9197 = vpop.f32.mrb[0].mxu0
        %v9198 = vpop.f32.mrb[0].mxu0
        %v9199 = vpop.f32.mrb[0].mxu0
        %v9200 = vpop.f32.mrb[0].mxu0
        %9201 = vmatprep.mubr.bf16.mxu0 0
        %9202 = vmatmul.mubr.bf16.gmra.mrb[0].mxu0 %v8985
        %v9203 = vpop.f32.mrb[0].mxu0
        %v9204 = vpop.f32.mrb[0].mxu0
        %v9205 = vpop.f32.mrb[0].mxu0
        %v9206 = vadd.f32 0.0, %v9205
        %v9207 = vpop.f32.mrb[0].mxu0
        %9208 = vmatprep.mubr.bf16.mxu0 0
        %9209 = vmatmul.mubr.bf16.gmra.mrb[0].mxu0 %v8988
        %v9210 = vpop.f32.mrb[0].mxu0
        %v9211 = vadd.f32 0.0, %v9210
        %v9212 = vpop.f32.mrb[0].mxu0
        %v9213 = vpop.f32.mrb[0].mxu0
        %v9214 = vadd.f32 0.0, %v9213
        %v9215 = vpop.f32.mrb[0].mxu0
        %9216 = vmatprep.mubr.bf16.mxu0 0
        %9217 = vmatmul.mubr.bf16.gmra.mrb[0].mxu0 %v8991
        %v9218 = vpop.f32.mrb[0].mxu0
        %v9219 = vadd.f32 0.0, %v9218
        %v9220 = vpop.f32.mrb[0].mxu0
        %v9221 = vpop.f32.mrb[0].mxu0
        %v9222 = vpop.f32.mrb[0].mxu0
        %9223 = vdwg.mxu0
        %v9224 = vadd.f32 %v8927, %v9028
        %v9225 = vadd.f32 %v8928, %v9031
        %v9226 = vadd.f32 %v8929, %v9036
        %v9227 = vadd.f32 %v8930, %v9049
        %v9228 = vadd.f32 %v8931, %v9052
        %v9229 = vadd.f32 %v8932, %v9057
        %v9230 = vadd.f32 %v8933, %v9060
        %v9231 = vadd.f32 %v8934, %v9071
        %v9232 = vadd.f32 %v8935, %v9074
        %v9233 = vadd.f32 %v8936, %v9079
        %v9234 = vadd.f32 %v8937, %v9082
        %v9235 = vadd.f32 %v8938, %v9093
        %v9236 = vadd.f32 %v8939, %v9096
        %v9237 = vadd.f32 %v8940, %v9101
        %v9238 = vadd.f32 %v8941, %v9104
        %v9239 = vadd.f32 %v8942, %v9109
        %v9240 = vadd.f32 %v8943, %v9116
        %v9241 = vadd.f32 %v8944, %v9119
        %v9242 = vadd.f32 %v8945, %v9124
        %v9243 = vadd.f32 %v8946, %v9127
        %v9244 = vadd.f32 %v8947, %v9132
        %v9245 = vadd.f32 %v8948, %v9141
        %v9246 = vadd.f32 %v8949, %v9146
        %v9247 = vadd.f32 %v8950, %v9149
        %v9248 = vadd.f32 %v8951, %v9154
        %v9249 = vadd.f32 %v8952, %v9163
        %v9250 = vadd.f32 %v8953, %v9168
        %v9251 = vadd.f32 %v8954, %v9171
        %v9252 = vadd.f32 %v8955, %v9176
        %v9253 = vadd.f32 %v8956, %v9185
        %v9254 = vadd.f32 %v8957, %v9190
        %v9255 = vadd.f32 %v8958, %v9193
        %v9256 = vadd.f32 %v8959, %v9206
        %v9257 = vadd.f32 %v8960, %v9211
        %v9258 = vadd.f32 %v8961, %v9214
        %v9259 = vadd.f32 %v8962, %v9219
        %vm9260 = vcmask 1044480
        %v9261 = vrot.slane %v7455, 3
        %v9262 = vrot.slane %v7456, 3
        %v9263 = vsel %vm9260, %v9261, %v9262
        %v9264 = vrot.slane %v7457, 3
        %v9265 = vsel %vm9260, %v9262, %v9264
        %v9266 = vrot.slane %v7458, 3
        %v9267 = vsel %vm9260, %v9264, %v9266
        %v9268 = vrot.slane %v7459, 3
        %v9269 = vsel %vm9260, %v9266, %v9268
        %v9270 = vrot.slane %v7460, 3
        %v9271 = vsel %vm9260, %v9268, %v9270
        %v9272 = vrot.slane %v7461, 3
        %v9273 = vsel %vm9260, %v9270, %v9272
        %v9274 = vrot.slane %v7462, 3
        %v9275 = vsel %vm9260, %v9272, %v9274
        %v9276 = vrot.slane %v7463, 3
        %v9277 = vsel %vm9260, %v9274, %v9276
        %v9278 = vrot.slane %v7464, 3
        %v9279 = vsel %vm9260, %v9276, %v9278
        %v9280 = vrot.slane %v7465, 3
        %v9281 = vsel %vm9260, %v9278, %v9280
        %v9282 = vrot.slane %v7466, 3
        %v9283 = vsel %vm9260, %v9280, %v9282
        %v9284 = vrot.slane %v7467, 3
        %v9285 = vsel %vm9260, %v9282, %v9284
        %v9286 = vrot.slane %v7468, 3
        %v9287 = vsel %vm9260, %v9284, %v9286
        %v9288 = vrot.slane %v7469, 3
        %v9289 = vsel %vm9260, %v9286, %v9288
        %v9290 = vrot.slane %v7470, 3
        %v9291 = vsel %vm9260, %v9288, %v9290
        %v9292 = vrot.slane %v7471, 3
        %v9293 = vsel %vm9260, %v9290, %v9292
        %v9294 = vrot.slane %v7472, 3
        %v9295 = vsel %vm9260, %v9292, %v9294
        %v9296 = vrot.slane %v7473, 3
        %v9297 = vsel %vm9260, %v9294, %v9296
        %v9298 = vrot.slane %v7474, 3
        %v9299 = vsel %vm9260, %v9296, %v9298
        %v9300 = vrot.slane %v7475, 3
        %v9301 = vsel %vm9260, %v9298, %v9300
        %v9302 = vrot.slane %v7476, 3
        %v9303 = vsel %vm9260, %v9300, %v9302
        %v9304 = vrot.slane %v7477, 3
        %v9305 = vsel %vm9260, %v9302, %v9304
        %v9306 = vrot.slane %v7478, 3
        %v9307 = vsel %vm9260, %v9304, %v9306
        %v9308 = vrot.slane %v7479, 3
        %v9309 = vsel %vm9260, %v9306, %v9308
        %v9310 = vrot.slane %v7480, 3
        %v9311 = vsel %vm9260, %v9308, %v9310
        %v9312 = vrot.slane %v7481, 3
        %v9313 = vsel %vm9260, %v9310, %v9312
        %v9318 = vunpack.c.l.b16 %v7505
        %v9319 = vunpack.c.l.b16 %v7506
        %v9320 = vunpack.c.l.b16 %v7507
        %v9321 = vunpack.c.l.b16 %v7508
        %v9322 = vpack.c.b16 %v9319, %v9318
        %v9323 = vpack.c.b16 %v9321, %v9320
        %v9327 = vsel %vm7613, %v9263, 0
        %v9330 = vsel %vm7613, %v9265, 0
        %v9333 = vsel %vm7613, %v9267, 0
        %v9336 = vsel %vm7613, %v9269, 0
        %v9339 = vsel %vm7613, %v9271, 0
        %v9342 = vsel %vm7613, %v9273, 0
        %v9345 = vsel %vm7613, %v9275, 0
        %v9348 = vsel %vm7613, %v9277, 0
        %v9351 = vsel %vm7613, %v9279, 0
        %v9354 = vsel %vm7613, %v9281, 0
        %v9357 = vsel %vm7613, %v9283, 0
        %v9360 = vsel %vm7613, %v9285, 0
        %v9363 = vsel %vm7613, %v9287, 0
        %v9366 = vsel %vm7613, %v9289, 0
        %v9369 = vsel %vm7613, %v9291, 0
        %v9372 = vsel %vm7613, %v9293, 0
        %v9375 = vsel %vm7613, %v9295, 0
        %v9378 = vsel %vm7613, %v9297, 0
        %v9381 = vsel %vm7613, %v9299, 0
        %v9384 = vsel %vm7613, %v9301, 0
        %v9387 = vsel %vm7613, %v9303, 0
        %v9390 = vsel %vm7613, %v9305, 0
        %v9393 = vsel %vm7613, %v9307, 0
        %v9396 = vsel %vm7613, %v9309, 0
        %v9399 = vsel %vm7613, %v9311, 0
        %v9402 = vsel %vm7613, %v9313, 0
        %v9405 = vsel %vm7613, %v9312, 0
        %9407 = vmatprep.subr.bf16.mxu0 0
        %9408 = vmatpush1.bf16.msra.mxu0 %v9322
        %9409 = vmatprep.subr.bf16.mxu0 0
        %9410 = vmatpush1.bf16.msra.mxu0 %v9323
        %9411 = vmatprep.subr.bf16.mxu0 0
        %9412 = vmatpush1.bf16.msra.mxu0 0
        %9413 = vmatprep.subr.bf16.mxu0 0
        %9414 = vmatpush1.bf16.msra.mxu0 0
        %9415 = vmatprep.subr.bf16.mxu0 0
        %9416 = vmatpush1.bf16.msra.mxu0 0
        %9417 = vmatprep.subr.bf16.mxu0 0
        %9418 = vmatpush1.bf16.msra.mxu0 0
        %9419 = vmatprep.subr.bf16.mxu0 0
        %9420 = vmatpush1.bf16.msra.mxu0 0
        %9421 = vmatprep.subr.bf16.mxu0 0
        %9422 = vmatpush1.bf16.msra.mxu0 0
        %9423 = vmatprep.subr.bf16.mxu0 0
        %9424 = vmatpush1.bf16.msra.mxu0 0
        %9425 = vmatprep.subr.bf16.mxu0 0
        %9426 = vmatpush1.bf16.msra.mxu0 0
        %9427 = vmatprep.subr.bf16.mxu0 0
        %9428 = vmatpush1.bf16.msra.mxu0 0
        %9429 = vmatprep.subr.bf16.mxu0 0
        %9430 = vmatpush1.bf16.msra.mxu0 0
        %9431 = vmatprep.subr.bf16.mxu0 0
        %9432 = vmatpush1.bf16.msra.mxu0 0
        %9433 = vmatprep.subr.bf16.mxu0 0
        %9434 = vmatpush1.bf16.msra.mxu0 0
        %9435 = vmatprep.subr.bf16.mxu0 0
        %9436 = vmatpush1.bf16.msra.mxu0 0
        %9437 = vmatprep.subr.bf16.mxu0 0
        %9438 = vmatpush1.bf16.msra.mxu0 0
        %9439 = vmatprep.mubr.bf16.mxu0 0
        %9440 = vmatmul.mubr.bf16.gmra.mrb[0].mxu0 %v9327
        %v9441 = vpop.f32.mrb[0].mxu0
        %v9442 = vadd.f32 0.0, %v9441
        %v9443 = vpop.f32.mrb[0].mxu0
        %v9444 = vpop.f32.mrb[0].mxu0
        %v9445 = vadd.f32 0.0, %v9444
        %v9446 = vpop.f32.mrb[0].mxu0
        %9447 = vmatprep.mubr.bf16.mxu0 0
        %9448 = vmatmul.mubr.bf16.gmra.mrb[0].mxu0 %v9330
        %v9449 = vpop.f32.mrb[0].mxu0
        %v9450 = vadd.f32 0.0, %v9449
        %v9451 = vpop.f32.mrb[0].mxu0
        %v9452 = vpop.f32.mrb[0].mxu0
        %v9453 = vpop.f32.mrb[0].mxu0
        %9454 = vmatprep.mubr.bf16.mxu0 0
        %9455 = vmatmul.mubr.bf16.gmra.mrb[0].mxu0 %v9333
        %v9456 = vpop.f32.mrb[0].mxu0
        %v9457 = vpop.f32.mrb[0].mxu0
        %v9458 = vpop.f32.mrb[0].mxu0
        %v9459 = vpop.f32.mrb[0].mxu0
        %9460 = vmatprep.mubr.bf16.mxu0 0
        %9461 = vmatmul.mubr.bf16.gmra.mrb[0].mxu0 %v9336
        %v9462 = vpop.f32.mrb[0].mxu0
        %v9463 = vadd.f32 0.0, %v9462
        %v9464 = vpop.f32.mrb[0].mxu0
        %v9465 = vpop.f32.mrb[0].mxu0
        %v9466 = vadd.f32 0.0, %v9465
        %v9467 = vpop.f32.mrb[0].mxu0
        %9468 = vmatprep.mubr.bf16.mxu0 0
        %9469 = vmatmul.mubr.bf16.gmra.mrb[0].mxu0 %v9339
        %v9470 = vpop.f32.mrb[0].mxu0
        %v9471 = vadd.f32 0.0, %v9470
        %v9472 = vpop.f32.mrb[0].mxu0
        %v9473 = vpop.f32.mrb[0].mxu0
        %v9474 = vadd.f32 0.0, %v9473
        %v9475 = vpop.f32.mrb[0].mxu0
        %9476 = vmatprep.mubr.bf16.mxu0 0
        %9477 = vmatmul.mubr.bf16.gmra.mrb[0].mxu0 %v9342
        %v9478 = vpop.f32.mrb[0].mxu0
        %v9479 = vpop.f32.mrb[0].mxu0
        %v9480 = vpop.f32.mrb[0].mxu0
        %v9481 = vpop.f32.mrb[0].mxu0
        %9482 = vmatprep.mubr.bf16.mxu0 0
        %9483 = vmatmul.mubr.bf16.gmra.mrb[0].mxu0 %v9345
        %v9484 = vpop.f32.mrb[0].mxu0
        %v9485 = vadd.f32 0.0, %v9484
        %v9486 = vpop.f32.mrb[0].mxu0
        %v9487 = vpop.f32.mrb[0].mxu0
        %v9488 = vadd.f32 0.0, %v9487
        %v9489 = vpop.f32.mrb[0].mxu0
        %9490 = vmatprep.mubr.bf16.mxu0 0
        %9491 = vmatmul.mubr.bf16.gmra.mrb[0].mxu0 %v9348
        %v9492 = vpop.f32.mrb[0].mxu0
        %v9493 = vadd.f32 0.0, %v9492
        %v9494 = vpop.f32.mrb[0].mxu0
        %v9495 = vpop.f32.mrb[0].mxu0
        %v9496 = vadd.f32 0.0, %v9495
        %v9497 = vpop.f32.mrb[0].mxu0
        %9498 = vmatprep.mubr.bf16.mxu0 0
        %9499 = vmatmul.mubr.bf16.gmra.mrb[0].mxu0 %v9351
        %v9500 = vpop.f32.mrb[0].mxu0
        %v9501 = vpop.f32.mrb[0].mxu0
        %v9502 = vpop.f32.mrb[0].mxu0
        %v9503 = vpop.f32.mrb[0].mxu0
        %9504 = vmatprep.mubr.bf16.mxu0 0
        %9505 = vmatmul.mubr.bf16.gmra.mrb[0].mxu0 %v9354
        %v9506 = vpop.f32.mrb[0].mxu0
        %v9507 = vadd.f32 0.0, %v9506
        %v9508 = vpop.f32.mrb[0].mxu0
        %v9509 = vpop.f32.mrb[0].mxu0
        %v9510 = vadd.f32 0.0, %v9509
        %v9511 = vpop.f32.mrb[0].mxu0
        %9512 = vmatprep.mubr.bf16.mxu0 0
        %9513 = vmatmul.mubr.bf16.gmra.mrb[0].mxu0 %v9357
        %v9514 = vpop.f32.mrb[0].mxu0
        %v9515 = vadd.f32 0.0, %v9514
        %v9516 = vpop.f32.mrb[0].mxu0
        %v9517 = vpop.f32.mrb[0].mxu0
        %v9518 = vadd.f32 0.0, %v9517
        %v9519 = vpop.f32.mrb[0].mxu0
        %9520 = vmatprep.mubr.bf16.mxu0 0
        %9521 = vmatmul.mubr.bf16.gmra.mrb[0].mxu0 %v9360
        %v9522 = vpop.f32.mrb[0].mxu0
        %v9523 = vadd.f32 0.0, %v9522
        %v9524 = vpop.f32.mrb[0].mxu0
        %v9525 = vpop.f32.mrb[0].mxu0
        %v9526 = vpop.f32.mrb[0].mxu0
        %9527 = vmatprep.mubr.bf16.mxu0 0
        %9528 = vmatmul.mubr.bf16.gmra.mrb[0].mxu0 %v9363
        %v9529 = vpop.f32.mrb[0].mxu0
        %v9530 = vadd.f32 0.0, %v9529
        %v9531 = vpop.f32.mrb[0].mxu0
        %v9532 = vpop.f32.mrb[0].mxu0
        %v9533 = vadd.f32 0.0, %v9532
        %v9534 = vpop.f32.mrb[0].mxu0
        %9535 = vmatprep.mubr.bf16.mxu0 0
        %9536 = vmatmul.mubr.bf16.gmra.mrb[0].mxu0 %v9366
        %v9537 = vpop.f32.mrb[0].mxu0
        %v9538 = vadd.f32 0.0, %v9537
        %v9539 = vpop.f32.mrb[0].mxu0
        %v9540 = vpop.f32.mrb[0].mxu0
        %v9541 = vadd.f32 0.0, %v9540
        %v9542 = vpop.f32.mrb[0].mxu0
        %9543 = vmatprep.mubr.bf16.mxu0 0
        %9544 = vmatmul.mubr.bf16.gmra.mrb[0].mxu0 %v9369
        %v9545 = vpop.f32.mrb[0].mxu0
        %v9546 = vadd.f32 0.0, %v9545
        %v9547 = vpop.f32.mrb[0].mxu0
        %v9548 = vpop.f32.mrb[0].mxu0
        %v9549 = vpop.f32.mrb[0].mxu0
        %9550 = vmatprep.mubr.bf16.mxu0 0
        %9551 = vmatmul.mubr.bf16.gmra.mrb[0].mxu0 %v9372
        %v9552 = vpop.f32.mrb[0].mxu0
        %v9553 = vpop.f32.mrb[0].mxu0
        %v9554 = vpop.f32.mrb[0].mxu0
        %v9555 = vadd.f32 0.0, %v9554
        %v9556 = vpop.f32.mrb[0].mxu0
        %9557 = vmatprep.mubr.bf16.mxu0 0
        %9558 = vmatmul.mubr.bf16.gmra.mrb[0].mxu0 %v9375
        %v9559 = vpop.f32.mrb[0].mxu0
        %v9560 = vadd.f32 0.0, %v9559
        %v9561 = vpop.f32.mrb[0].mxu0
        %v9562 = vpop.f32.mrb[0].mxu0
        %v9563 = vadd.f32 0.0, %v9562
        %v9564 = vpop.f32.mrb[0].mxu0
        %9565 = vmatprep.mubr.bf16.mxu0 0
        %9566 = vmatmul.mubr.bf16.gmra.mrb[0].mxu0 %v9378
        %v9567 = vpop.f32.mrb[0].mxu0
        %v9568 = vadd.f32 0.0, %v9567
        %v9569 = vpop.f32.mrb[0].mxu0
        %v9570 = vpop.f32.mrb[0].mxu0
        %v9571 = vpop.f32.mrb[0].mxu0
        %9572 = vmatprep.mubr.bf16.mxu0 0
        %9573 = vmatmul.mubr.bf16.gmra.mrb[0].mxu0 %v9381
        %v9574 = vpop.f32.mrb[0].mxu0
        %v9575 = vpop.f32.mrb[0].mxu0
        %v9576 = vpop.f32.mrb[0].mxu0
        %v9577 = vadd.f32 0.0, %v9576
        %v9578 = vpop.f32.mrb[0].mxu0
        %9579 = vmatprep.mubr.bf16.mxu0 0
        %9580 = vmatmul.mubr.bf16.gmra.mrb[0].mxu0 %v9384
        %v9581 = vpop.f32.mrb[0].mxu0
        %v9582 = vadd.f32 0.0, %v9581
        %v9583 = vpop.f32.mrb[0].mxu0
        %v9584 = vpop.f32.mrb[0].mxu0
        %v9585 = vadd.f32 0.0, %v9584
        %v9586 = vpop.f32.mrb[0].mxu0
        %9587 = vmatprep.mubr.bf16.mxu0 0
        %9588 = vmatmul.mubr.bf16.gmra.mrb[0].mxu0 %v9387
        %v9589 = vpop.f32.mrb[0].mxu0
        %v9590 = vadd.f32 0.0, %v9589
        %v9591 = vpop.f32.mrb[0].mxu0
        %v9592 = vpop.f32.mrb[0].mxu0
        %v9593 = vpop.f32.mrb[0].mxu0
        %9594 = vmatprep.mubr.bf16.mxu0 0
        %9595 = vmatmul.mubr.bf16.gmra.mrb[0].mxu0 %v9390
        %v9596 = vpop.f32.mrb[0].mxu0
        %v9597 = vpop.f32.mrb[0].mxu0
        %v9598 = vpop.f32.mrb[0].mxu0
        %v9599 = vadd.f32 0.0, %v9598
        %v9600 = vpop.f32.mrb[0].mxu0
        %9601 = vmatprep.mubr.bf16.mxu0 0
        %9602 = vmatmul.mubr.bf16.gmra.mrb[0].mxu0 %v9393
        %v9603 = vpop.f32.mrb[0].mxu0
        %v9604 = vadd.f32 0.0, %v9603
        %v9605 = vpop.f32.mrb[0].mxu0
        %v9606 = vpop.f32.mrb[0].mxu0
        %v9607 = vadd.f32 0.0, %v9606
        %v9608 = vpop.f32.mrb[0].mxu0
        %9609 = vmatprep.mubr.bf16.mxu0 0
        %9610 = vmatmul.mubr.bf16.gmra.mrb[0].mxu0 %v9396
        %v9611 = vpop.f32.mrb[0].mxu0
        %v9612 = vpop.f32.mrb[0].mxu0
        %v9613 = vpop.f32.mrb[0].mxu0
        %v9614 = vpop.f32.mrb[0].mxu0
        %9615 = vmatprep.mubr.bf16.mxu0 0
        %9616 = vmatmul.mubr.bf16.gmra.mrb[0].mxu0 %v9399
        %v9617 = vpop.f32.mrb[0].mxu0
        %v9618 = vpop.f32.mrb[0].mxu0
        %v9619 = vpop.f32.mrb[0].mxu0
        %v9620 = vadd.f32 0.0, %v9619
        %v9621 = vpop.f32.mrb[0].mxu0
        %9622 = vmatprep.mubr.bf16.mxu0 0
        %9623 = vmatmul.mubr.bf16.gmra.mrb[0].mxu0 %v9402
        %v9624 = vpop.f32.mrb[0].mxu0
        %v9625 = vadd.f32 0.0, %v9624
        %v9626 = vpop.f32.mrb[0].mxu0
        %v9627 = vpop.f32.mrb[0].mxu0
        %v9628 = vadd.f32 0.0, %v9627
        %v9629 = vpop.f32.mrb[0].mxu0
        %9630 = vmatprep.mubr.bf16.mxu0 0
        %9631 = vmatmul.mubr.bf16.gmra.mrb[0].mxu0 %v9405
        %v9632 = vpop.f32.mrb[0].mxu0
        %v9633 = vadd.f32 0.0, %v9632
        %v9634 = vpop.f32.mrb[0].mxu0
        %v9635 = vpop.f32.mrb[0].mxu0
        %v9636 = vpop.f32.mrb[0].mxu0
        %9637 = vdwg.mxu0
        %v9638 = vadd.f32 %v9224, %v9442
        %v9639 = vadd.f32 %v9225, %v9445
        %v9640 = vadd.f32 %v9226, %v9450
        %v9641 = vadd.f32 %v9227, %v9463
        %v9642 = vadd.f32 %v9228, %v9466
        %v9643 = vadd.f32 %v9229, %v9471
        %v9644 = vadd.f32 %v9230, %v9474
        %v9645 = vadd.f32 %v9231, %v9485
        %v9646 = vadd.f32 %v9232, %v9488
        %v9647 = vadd.f32 %v9233, %v9493
        %v9648 = vadd.f32 %v9234, %v9496
        %v9649 = vadd.f32 %v9235, %v9507
        %v9650 = vadd.f32 %v9236, %v9510
        %v9651 = vadd.f32 %v9237, %v9515
        %v9652 = vadd.f32 %v9238, %v9518
        %v9653 = vadd.f32 %v9239, %v9523
        %v9654 = vadd.f32 %v9240, %v9530
        %v9655 = vadd.f32 %v9241, %v9533
        %v9656 = vadd.f32 %v9242, %v9538
        %v9657 = vadd.f32 %v9243, %v9541
        %v9658 = vadd.f32 %v9244, %v9546
        %v9659 = vadd.f32 %v9245, %v9555
        %v9660 = vadd.f32 %v9246, %v9560
        %v9661 = vadd.f32 %v9247, %v9563
        %v9662 = vadd.f32 %v9248, %v9568
        %v9663 = vadd.f32 %v9249, %v9577
        %v9664 = vadd.f32 %v9250, %v9582
        %v9665 = vadd.f32 %v9251, %v9585
        %v9666 = vadd.f32 %v9252, %v9590
        %v9667 = vadd.f32 %v9253, %v9599
        %v9668 = vadd.f32 %v9254, %v9604
        %v9669 = vadd.f32 %v9255, %v9607
        %v9670 = vadd.f32 %v9256, %v9620
        %v9671 = vadd.f32 %v9257, %v9625
        %v9672 = vadd.f32 %v9258, %v9628
        %v9673 = vadd.f32 %v9259, %v9633
        %v9677 = vrot.slane %v7482, 2
        %v9678 = vsel %vm5534, %v8967, %v9677
        %v9679 = vrot.slane %v7483, 2
        %v9680 = vsel %vm5534, %v9677, %v9679
        %v9681 = vrot.slane %v7484, 2
        %v9682 = vsel %vm5534, %v9679, %v9681
        %v9687 = vunpack.c.l.b16 %v7509
        %v9688 = vunpack.c.l.b16 %v7510
        %v9689 = vunpack.c.l.b16 %v7511
        %v9690 = vunpack.c.l.b16 %v7512
        %v9691 = vpack.c.b16 %v9688, %v9687
        %v9692 = vpack.c.b16 %v9690, %v9689
        %v9696 = vsel %vm7613, %v9678, 0
        %v9699 = vsel %vm7613, %v9680, 0
        %v9702 = vsel %vm7613, %v9682, 0
        %v9705 = vsel %vm7613, %v9681, 0
        %9707 = vmatprep.subr.bf16.mxu0 0
        %9708 = vmatpush1.bf16.msra.mxu0 %v9691
        %9709 = vmatprep.subr.bf16.mxu0 0
        %9710 = vmatpush1.bf16.msra.mxu0 %v9692
        %9711 = vmatprep.subr.bf16.mxu0 0
        %9712 = vmatpush1.bf16.msra.mxu0 0
        %9713 = vmatprep.subr.bf16.mxu0 0
        %9714 = vmatpush1.bf16.msra.mxu0 0
        %9715 = vmatprep.subr.bf16.mxu0 0
        %9716 = vmatpush1.bf16.msra.mxu0 0
        %9717 = vmatprep.subr.bf16.mxu0 0
        %9718 = vmatpush1.bf16.msra.mxu0 0
        %9719 = vmatprep.subr.bf16.mxu0 0
        %9720 = vmatpush1.bf16.msra.mxu0 0
        %9721 = vmatprep.subr.bf16.mxu0 0
        %9722 = vmatpush1.bf16.msra.mxu0 0
        %9723 = vmatprep.subr.bf16.mxu0 0
        %9724 = vmatpush1.bf16.msra.mxu0 0
        %9725 = vmatprep.subr.bf16.mxu0 0
        %9726 = vmatpush1.bf16.msra.mxu0 0
        %9727 = vmatprep.subr.bf16.mxu0 0
        %9728 = vmatpush1.bf16.msra.mxu0 0
        %9729 = vmatprep.subr.bf16.mxu0 0
        %9730 = vmatpush1.bf16.msra.mxu0 0
        %9731 = vmatprep.subr.bf16.mxu0 0
        %9732 = vmatpush1.bf16.msra.mxu0 0
        %9733 = vmatprep.subr.bf16.mxu0 0
        %9734 = vmatpush1.bf16.msra.mxu0 0
        %9735 = vmatprep.subr.bf16.mxu0 0
        %9736 = vmatpush1.bf16.msra.mxu0 0
        %9737 = vmatprep.subr.bf16.mxu0 0
        %9738 = vmatpush1.bf16.msra.mxu0 0
        %9739 = vmatprep.mubr.bf16.mxu0 0
        %9740 = vmatmul.mubr.bf16.gmra.mrb[0].mxu0 %v8334
        %v9741 = vpop.f32.mrb[0].mxu0
        %v9742 = vadd.f32 0.0, %v9741
        %v9743 = vpop.f32.mrb[0].mxu0
        %v9744 = vpop.f32.mrb[0].mxu0
        %v9745 = vadd.f32 0.0, %v9744
        %v9746 = vpop.f32.mrb[0].mxu0
        %9747 = vmatprep.mubr.bf16.mxu0 0
        %9748 = vmatmul.mubr.bf16.gmra.mrb[0].mxu0 %v8337
        %v9749 = vpop.f32.mrb[0].mxu0
        %v9750 = vadd.f32 0.0, %v9749
        %v9751 = vpop.f32.mrb[0].mxu0
        %v9752 = vpop.f32.mrb[0].mxu0
        %v9753 = vpop.f32.mrb[0].mxu0
        %9754 = vmatprep.mubr.bf16.mxu0 0
        %9755 = vmatmul.mubr.bf16.gmra.mrb[0].mxu0 %v8340
        %v9756 = vpop.f32.mrb[0].mxu0
        %v9757 = vpop.f32.mrb[0].mxu0
        %v9758 = vpop.f32.mrb[0].mxu0
        %v9759 = vpop.f32.mrb[0].mxu0
        %9760 = vmatprep.mubr.bf16.mxu0 0
        %9761 = vmatmul.mubr.bf16.gmra.mrb[0].mxu0 %v8343
        %v9762 = vpop.f32.mrb[0].mxu0
        %v9763 = vadd.f32 0.0, %v9762
        %v9764 = vpop.f32.mrb[0].mxu0
        %v9765 = vpop.f32.mrb[0].mxu0
        %v9766 = vadd.f32 0.0, %v9765
        %v9767 = vpop.f32.mrb[0].mxu0
        %9768 = vmatprep.mubr.bf16.mxu0 0
        %9769 = vmatmul.mubr.bf16.gmra.mrb[0].mxu0 %v8346
        %v9770 = vpop.f32.mrb[0].mxu0
        %v9771 = vadd.f32 0.0, %v9770
        %v9772 = vpop.f32.mrb[0].mxu0
        %v9773 = vpop.f32.mrb[0].mxu0
        %v9774 = vadd.f32 0.0, %v9773
        %v9775 = vpop.f32.mrb[0].mxu0
        %9776 = vmatprep.mubr.bf16.mxu0 0
        %9777 = vmatmul.mubr.bf16.gmra.mrb[0].mxu0 %v8349
        %v9778 = vpop.f32.mrb[0].mxu0
        %v9779 = vpop.f32.mrb[0].mxu0
        %v9780 = vpop.f32.mrb[0].mxu0
        %v9781 = vpop.f32.mrb[0].mxu0
        %9782 = vmatprep.mubr.bf16.mxu0 0
        %9783 = vmatmul.mubr.bf16.gmra.mrb[0].mxu0 %v8352
        %v9784 = vpop.f32.mrb[0].mxu0
        %v9785 = vadd.f32 0.0, %v9784
        %v9786 = vpop.f32.mrb[0].mxu0
        %v9787 = vpop.f32.mrb[0].mxu0
        %v9788 = vadd.f32 0.0, %v9787
        %v9789 = vpop.f32.mrb[0].mxu0
        %9790 = vmatprep.mubr.bf16.mxu0 0
        %9791 = vmatmul.mubr.bf16.gmra.mrb[0].mxu0 %v8355
        %v9792 = vpop.f32.mrb[0].mxu0
        %v9793 = vadd.f32 0.0, %v9792
        %v9794 = vpop.f32.mrb[0].mxu0
        %v9795 = vpop.f32.mrb[0].mxu0
        %v9796 = vadd.f32 0.0, %v9795
        %v9797 = vpop.f32.mrb[0].mxu0
        %9798 = vmatprep.mubr.bf16.mxu0 0
        %9799 = vmatmul.mubr.bf16.gmra.mrb[0].mxu0 %v8358
        %v9800 = vpop.f32.mrb[0].mxu0
        %v9801 = vpop.f32.mrb[0].mxu0
        %v9802 = vpop.f32.mrb[0].mxu0
        %v9803 = vpop.f32.mrb[0].mxu0
        %9804 = vmatprep.mubr.bf16.mxu0 0
        %9805 = vmatmul.mubr.bf16.gmra.mrb[0].mxu0 %v8361
        %v9806 = vpop.f32.mrb[0].mxu0
        %v9807 = vadd.f32 0.0, %v9806
        %v9808 = vpop.f32.mrb[0].mxu0
        %v9809 = vpop.f32.mrb[0].mxu0
        %v9810 = vadd.f32 0.0, %v9809
        %v9811 = vpop.f32.mrb[0].mxu0
        %9812 = vmatprep.mubr.bf16.mxu0 0
        %9813 = vmatmul.mubr.bf16.gmra.mrb[0].mxu0 %v8364
        %v9814 = vpop.f32.mrb[0].mxu0
        %v9815 = vadd.f32 0.0, %v9814
        %v9816 = vpop.f32.mrb[0].mxu0
        %v9817 = vpop.f32.mrb[0].mxu0
        %v9818 = vadd.f32 0.0, %v9817
        %v9819 = vpop.f32.mrb[0].mxu0
        %9820 = vmatprep.mubr.bf16.mxu0 0
        %9821 = vmatmul.mubr.bf16.gmra.mrb[0].mxu0 %v8367
        %v9822 = vpop.f32.mrb[0].mxu0
        %v9823 = vadd.f32 0.0, %v9822
        %v9824 = vpop.f32.mrb[0].mxu0
        %v9825 = vpop.f32.mrb[0].mxu0
        %v9826 = vpop.f32.mrb[0].mxu0
        %9827 = vmatprep.mubr.bf16.mxu0 0
        %9828 = vmatmul.mubr.bf16.gmra.mrb[0].mxu0 %v8370
        %v9829 = vpop.f32.mrb[0].mxu0
        %v9830 = vadd.f32 0.0, %v9829
        %v9831 = vpop.f32.mrb[0].mxu0
        %v9832 = vpop.f32.mrb[0].mxu0
        %v9833 = vadd.f32 0.0, %v9832
        %v9834 = vpop.f32.mrb[0].mxu0
        %9835 = vmatprep.mubr.bf16.mxu0 0
        %9836 = vmatmul.mubr.bf16.gmra.mrb[0].mxu0 %v8373
        %v9837 = vpop.f32.mrb[0].mxu0
        %v9838 = vadd.f32 0.0, %v9837
        %v9839 = vpop.f32.mrb[0].mxu0
        %v9840 = vpop.f32.mrb[0].mxu0
        %v9841 = vadd.f32 0.0, %v9840
        %v9842 = vpop.f32.mrb[0].mxu0
        %9843 = vmatprep.mubr.bf16.mxu0 0
        %9844 = vmatmul.mubr.bf16.gmra.mrb[0].mxu0 %v8376
        %v9845 = vpop.f32.mrb[0].mxu0
        %v9846 = vadd.f32 0.0, %v9845
        %v9847 = vpop.f32.mrb[0].mxu0
        %v9848 = vpop.f32.mrb[0].mxu0
        %v9849 = vpop.f32.mrb[0].mxu0
        %9850 = vmatprep.mubr.bf16.mxu0 0
        %9851 = vmatmul.mubr.bf16.gmra.mrb[0].mxu0 %v8379
        %v9852 = vpop.f32.mrb[0].mxu0
        %v9853 = vpop.f32.mrb[0].mxu0
        %v9854 = vpop.f32.mrb[0].mxu0
        %v9855 = vadd.f32 0.0, %v9854
        %v9856 = vpop.f32.mrb[0].mxu0
        %9857 = vmatprep.mubr.bf16.mxu0 0
        %9858 = vmatmul.mubr.bf16.gmra.mrb[0].mxu0 %v8382
        %v9859 = vpop.f32.mrb[0].mxu0
        %v9860 = vadd.f32 0.0, %v9859
        %v9861 = vpop.f32.mrb[0].mxu0
        %v9862 = vpop.f32.mrb[0].mxu0
        %v9863 = vadd.f32 0.0, %v9862
        %v9864 = vpop.f32.mrb[0].mxu0
        %9865 = vmatprep.mubr.bf16.mxu0 0
        %9866 = vmatmul.mubr.bf16.gmra.mrb[0].mxu0 %v8385
        %v9867 = vpop.f32.mrb[0].mxu0
        %v9868 = vadd.f32 0.0, %v9867
        %v9869 = vpop.f32.mrb[0].mxu0
        %v9870 = vpop.f32.mrb[0].mxu0
        %v9871 = vpop.f32.mrb[0].mxu0
        %9872 = vmatprep.mubr.bf16.mxu0 0
        %9873 = vmatmul.mubr.bf16.gmra.mrb[0].mxu0 %v8388
        %v9874 = vpop.f32.mrb[0].mxu0
        %v9875 = vpop.f32.mrb[0].mxu0
        %v9876 = vpop.f32.mrb[0].mxu0
        %v9877 = vadd.f32 0.0, %v9876
        %v9878 = vpop.f32.mrb[0].mxu0
        %9879 = vmatprep.mubr.bf16.mxu0 0
        %9880 = vmatmul.mubr.bf16.gmra.mrb[0].mxu0 %v8391
        %v9881 = vpop.f32.mrb[0].mxu0
        %v9882 = vadd.f32 0.0, %v9881
        %v9883 = vpop.f32.mrb[0].mxu0
        %v9884 = vpop.f32.mrb[0].mxu0
        %v9885 = vadd.f32 0.0, %v9884
        %v9886 = vpop.f32.mrb[0].mxu0
        %9887 = vmatprep.mubr.bf16.mxu0 0
        %9888 = vmatmul.mubr.bf16.gmra.mrb[0].mxu0 %v8982
        %v9889 = vpop.f32.mrb[0].mxu0
        %v9890 = vadd.f32 0.0, %v9889
        %v9891 = vpop.f32.mrb[0].mxu0
        %v9892 = vpop.f32.mrb[0].mxu0
        %v9893 = vpop.f32.mrb[0].mxu0
        %9894 = vmatprep.mubr.bf16.mxu0 0
        %9895 = vmatmul.mubr.bf16.gmra.mrb[0].mxu0 %v8985
        %v9896 = vpop.f32.mrb[0].mxu0
        %v9897 = vpop.f32.mrb[0].mxu0
        %v9898 = vpop.f32.mrb[0].mxu0
        %v9899 = vadd.f32 0.0, %v9898
        %v9900 = vpop.f32.mrb[0].mxu0
        %9901 = vmatprep.mubr.bf16.mxu0 0
        %9902 = vmatmul.mubr.bf16.gmra.mrb[0].mxu0 %v8988
        %v9903 = vpop.f32.mrb[0].mxu0
        %v9904 = vadd.f32 0.0, %v9903
        %v9905 = vpop.f32.mrb[0].mxu0
        %v9906 = vpop.f32.mrb[0].mxu0
        %v9907 = vadd.f32 0.0, %v9906
        %v9908 = vpop.f32.mrb[0].mxu0
        %9909 = vmatprep.mubr.bf16.mxu0 0
        %9910 = vmatmul.mubr.bf16.gmra.mrb[0].mxu0 %v9696
        %v9911 = vpop.f32.mrb[0].mxu0
        %v9912 = vpop.f32.mrb[0].mxu0
        %v9913 = vpop.f32.mrb[0].mxu0
        %v9914 = vpop.f32.mrb[0].mxu0
        %9915 = vmatprep.mubr.bf16.mxu0 0
        %9916 = vmatmul.mubr.bf16.gmra.mrb[0].mxu0 %v9699
        %v9917 = vpop.f32.mrb[0].mxu0
        %v9918 = vpop.f32.mrb[0].mxu0
        %v9919 = vpop.f32.mrb[0].mxu0
        %v9920 = vadd.f32 0.0, %v9919
        %v9921 = vpop.f32.mrb[0].mxu0
        %9922 = vmatprep.mubr.bf16.mxu0 0
        %9923 = vmatmul.mubr.bf16.gmra.mrb[0].mxu0 %v9702
        %v9924 = vpop.f32.mrb[0].mxu0
        %v9925 = vadd.f32 0.0, %v9924
        %v9926 = vpop.f32.mrb[0].mxu0
        %v9927 = vpop.f32.mrb[0].mxu0
        %v9928 = vadd.f32 0.0, %v9927
        %v9929 = vpop.f32.mrb[0].mxu0
        %9930 = vmatprep.mubr.bf16.mxu0 0
        %9931 = vmatmul.mubr.bf16.gmra.mrb[0].mxu0 %v9705
        %v9932 = vpop.f32.mrb[0].mxu0
        %v9933 = vadd.f32 0.0, %v9932
        %v9934 = vpop.f32.mrb[0].mxu0
        %v9935 = vpop.f32.mrb[0].mxu0
        %v9936 = vpop.f32.mrb[0].mxu0
        %9937 = vdwg.mxu0
        %v9938 = vadd.f32 %v9638, %v9742
        %v9939 = vadd.f32 %v9639, %v9745
        %v9940 = vadd.f32 %v9640, %v9750
        %v9941 = vadd.f32 %v9641, %v9763
        %v9942 = vadd.f32 %v9642, %v9766
        %v9943 = vadd.f32 %v9643, %v9771
        %v9944 = vadd.f32 %v9644, %v9774
        %v9945 = vadd.f32 %v9645, %v9785
        %v9946 = vadd.f32 %v9646, %v9788
        %v9947 = vadd.f32 %v9647, %v9793
        %v9948 = vadd.f32 %v9648, %v9796
        %v9949 = vadd.f32 %v9649, %v9807
        %v9950 = vadd.f32 %v9650, %v9810
        %v9951 = vadd.f32 %v9651, %v9815
        %v9952 = vadd.f32 %v9652, %v9818
        %v9953 = vadd.f32 %v9653, %v9823
        %v9954 = vadd.f32 %v9654, %v9830
        %v9955 = vadd.f32 %v9655, %v9833
        %v9956 = vadd.f32 %v9656, %v9838
        %v9957 = vadd.f32 %v9657, %v9841
        %v9958 = vadd.f32 %v9658, %v9846
        %v9959 = vadd.f32 %v9659, %v9855
        %v9960 = vadd.f32 %v9660, %v9860
        %v9961 = vadd.f32 %v9661, %v9863
        %v9962 = vadd.f32 %v9662, %v9868
        %v9963 = vadd.f32 %v9663, %v9877
        %v9964 = vadd.f32 %v9664, %v9882
        %v9965 = vadd.f32 %v9665, %v9885
        %v9966 = vadd.f32 %v9666, %v9890
        %v9967 = vadd.f32 %v9667, %v9899
        %v9968 = vadd.f32 %v9668, %v9904
        %v9969 = vadd.f32 %v9669, %v9907
        %v9970 = vadd.f32 %v9670, %v9920
        %v9971 = vadd.f32 %v9671, %v9925
        %v9972 = vadd.f32 %v9672, %v9928
        %v9973 = vadd.f32 %v9673, %v9933
        %v9974 = vrot.slane %v7482, 3
        %v9975 = vsel %vm9260, %v9312, %v9974
        %v9976 = vrot.slane %v7483, 3
        %v9977 = vsel %vm9260, %v9974, %v9976
        %v9978 = vrot.slane %v7484, 3
        %v9979 = vsel %vm9260, %v9976, %v9978
        %v9984 = vunpack.c.l.b16 %v7513
        %v9985 = vunpack.c.l.b16 %v7514
        %v9986 = vunpack.c.l.b16 %v7515
        %v9987 = vunpack.c.l.b16 %v7516
        %v9988 = vpack.c.b16 %v9985, %v9984
        %v9989 = vpack.c.b16 %v9987, %v9986
        %v9993 = vsel %vm7613, %v9975, 0
        %v9996 = vsel %vm7613, %v9977, 0
        %v9999 = vsel %vm7613, %v9979, 0
        %v10002 = vsel %vm7613, %v9978, 0
        %10004 = vmatprep.subr.bf16.mxu0 0
        %10005 = vmatpush1.bf16.msra.mxu0 %v9988
        %10006 = vmatprep.subr.bf16.mxu0 0
        %10007 = vmatpush1.bf16.msra.mxu0 %v9989
        %10008 = vmatprep.subr.bf16.mxu0 0
        %10009 = vmatpush1.bf16.msra.mxu0 0
        %10010 = vmatprep.subr.bf16.mxu0 0
        %10011 = vmatpush1.bf16.msra.mxu0 0
        %10012 = vmatprep.subr.bf16.mxu0 0
        %10013 = vmatpush1.bf16.msra.mxu0 0
        %10014 = vmatprep.subr.bf16.mxu0 0
        %10015 = vmatpush1.bf16.msra.mxu0 0
        %10016 = vmatprep.subr.bf16.mxu0 0
        %10017 = vmatpush1.bf16.msra.mxu0 0
        %10018 = vmatprep.subr.bf16.mxu0 0
        %10019 = vmatpush1.bf16.msra.mxu0 0
        %10020 = vmatprep.subr.bf16.mxu0 0
        %10021 = vmatpush1.bf16.msra.mxu0 0
        %10022 = vmatprep.subr.bf16.mxu0 0
        %10023 = vmatpush1.bf16.msra.mxu0 0
        %10024 = vmatprep.subr.bf16.mxu0 0
        %10025 = vmatpush1.bf16.msra.mxu0 0
        %10026 = vmatprep.subr.bf16.mxu0 0
        %10027 = vmatpush1.bf16.msra.mxu0 0
        %10028 = vmatprep.subr.bf16.mxu0 0
        %10029 = vmatpush1.bf16.msra.mxu0 0
        %10030 = vmatprep.subr.bf16.mxu0 0
        %10031 = vmatpush1.bf16.msra.mxu0 0
        %10032 = vmatprep.subr.bf16.mxu0 0
        %10033 = vmatpush1.bf16.msra.mxu0 0
        %10034 = vmatprep.subr.bf16.mxu0 0
        %10035 = vmatpush1.bf16.msra.mxu0 0
        %10036 = vmatprep.mubr.bf16.mxu0 0
        %10037 = vmatmul.mubr.bf16.gmra.mrb[0].mxu0 %v9336
        %v10038 = vpop.f32.mrb[0].mxu0
        %v10039 = vadd.f32 0.0, %v10038
        %v10040 = vpop.f32.mrb[0].mxu0
        %v10041 = vpop.f32.mrb[0].mxu0
        %v10042 = vadd.f32 0.0, %v10041
        %v10043 = vpop.f32.mrb[0].mxu0
        %10044 = vmatprep.mubr.bf16.mxu0 0
        %10045 = vmatmul.mubr.bf16.gmra.mrb[0].mxu0 %v9339
        %v10046 = vpop.f32.mrb[0].mxu0
        %v10047 = vadd.f32 0.0, %v10046
        %v10048 = vpop.f32.mrb[0].mxu0
        %v10049 = vpop.f32.mrb[0].mxu0
        %v10050 = vpop.f32.mrb[0].mxu0
        %10051 = vmatprep.mubr.bf16.mxu0 0
        %10052 = vmatmul.mubr.bf16.gmra.mrb[0].mxu0 %v9342
        %v10053 = vpop.f32.mrb[0].mxu0
        %v10054 = vpop.f32.mrb[0].mxu0
        %v10055 = vpop.f32.mrb[0].mxu0
        %v10056 = vpop.f32.mrb[0].mxu0
        %10057 = vmatprep.mubr.bf16.mxu0 0
        %10058 = vmatmul.mubr.bf16.gmra.mrb[0].mxu0 %v9345
        %v10059 = vpop.f32.mrb[0].mxu0
        %v10060 = vadd.f32 0.0, %v10059
        %v10061 = vpop.f32.mrb[0].mxu0
        %v10062 = vpop.f32.mrb[0].mxu0
        %v10063 = vadd.f32 0.0, %v10062
        %v10064 = vpop.f32.mrb[0].mxu0
        %10065 = vmatprep.mubr.bf16.mxu0 0
        %10066 = vmatmul.mubr.bf16.gmra.mrb[0].mxu0 %v9348
        %v10067 = vpop.f32.mrb[0].mxu0
        %v10068 = vadd.f32 0.0, %v10067
        %v10069 = vpop.f32.mrb[0].mxu0
        %v10070 = vpop.f32.mrb[0].mxu0
        %v10071 = vadd.f32 0.0, %v10070
        %v10072 = vpop.f32.mrb[0].mxu0
        %10073 = vmatprep.mubr.bf16.mxu0 0
        %10074 = vmatmul.mubr.bf16.gmra.mrb[0].mxu0 %v9351
        %v10075 = vpop.f32.mrb[0].mxu0
        %v10076 = vpop.f32.mrb[0].mxu0
        %v10077 = vpop.f32.mrb[0].mxu0
        %v10078 = vpop.f32.mrb[0].mxu0
        %10079 = vmatprep.mubr.bf16.mxu0 0
        %10080 = vmatmul.mubr.bf16.gmra.mrb[0].mxu0 %v9354
        %v10081 = vpop.f32.mrb[0].mxu0
        %v10082 = vadd.f32 0.0, %v10081
        %v10083 = vpop.f32.mrb[0].mxu0
        %v10084 = vpop.f32.mrb[0].mxu0
        %v10085 = vadd.f32 0.0, %v10084
        %v10086 = vpop.f32.mrb[0].mxu0
        %10087 = vmatprep.mubr.bf16.mxu0 0
        %10088 = vmatmul.mubr.bf16.gmra.mrb[0].mxu0 %v9357
        %v10089 = vpop.f32.mrb[0].mxu0
        %v10090 = vadd.f32 0.0, %v10089
        %v10091 = vpop.f32.mrb[0].mxu0
        %v10092 = vpop.f32.mrb[0].mxu0
        %v10093 = vadd.f32 0.0, %v10092
        %v10094 = vpop.f32.mrb[0].mxu0
        %10095 = vmatprep.mubr.bf16.mxu0 0
        %10096 = vmatmul.mubr.bf16.gmra.mrb[0].mxu0 %v9360
        %v10097 = vpop.f32.mrb[0].mxu0
        %v10098 = vpop.f32.mrb[0].mxu0
        %v10099 = vpop.f32.mrb[0].mxu0
        %v10100 = vpop.f32.mrb[0].mxu0
        %10101 = vmatprep.mubr.bf16.mxu0 0
        %10102 = vmatmul.mubr.bf16.gmra.mrb[0].mxu0 %v9363
        %v10103 = vpop.f32.mrb[0].mxu0
        %v10104 = vadd.f32 0.0, %v10103
        %v10105 = vpop.f32.mrb[0].mxu0
        %v10106 = vpop.f32.mrb[0].mxu0
        %v10107 = vadd.f32 0.0, %v10106
        %v10108 = vpop.f32.mrb[0].mxu0
        %10109 = vmatprep.mubr.bf16.mxu0 0
        %10110 = vmatmul.mubr.bf16.gmra.mrb[0].mxu0 %v9366
        %v10111 = vpop.f32.mrb[0].mxu0
        %v10112 = vadd.f32 0.0, %v10111
        %v10113 = vpop.f32.mrb[0].mxu0
        %v10114 = vpop.f32.mrb[0].mxu0
        %v10115 = vadd.f32 0.0, %v10114
        %v10116 = vpop.f32.mrb[0].mxu0
        %10117 = vmatprep.mubr.bf16.mxu0 0
        %10118 = vmatmul.mubr.bf16.gmra.mrb[0].mxu0 %v9369
        %v10119 = vpop.f32.mrb[0].mxu0
        %v10120 = vadd.f32 0.0, %v10119
        %v10121 = vpop.f32.mrb[0].mxu0
        %v10122 = vpop.f32.mrb[0].mxu0
        %v10123 = vpop.f32.mrb[0].mxu0
        %10124 = vmatprep.mubr.bf16.mxu0 0
        %10125 = vmatmul.mubr.bf16.gmra.mrb[0].mxu0 %v9372
        %v10126 = vpop.f32.mrb[0].mxu0
        %v10127 = vadd.f32 0.0, %v10126
        %v10128 = vpop.f32.mrb[0].mxu0
        %v10129 = vpop.f32.mrb[0].mxu0
        %v10130 = vadd.f32 0.0, %v10129
        %v10131 = vpop.f32.mrb[0].mxu0
        %10132 = vmatprep.mubr.bf16.mxu0 0
        %10133 = vmatmul.mubr.bf16.gmra.mrb[0].mxu0 %v9375
        %v10134 = vpop.f32.mrb[0].mxu0
        %v10135 = vadd.f32 0.0, %v10134
        %v10136 = vpop.f32.mrb[0].mxu0
        %v10137 = vpop.f32.mrb[0].mxu0
        %v10138 = vadd.f32 0.0, %v10137
        %v10139 = vpop.f32.mrb[0].mxu0
        %10140 = vmatprep.mubr.bf16.mxu0 0
        %10141 = vmatmul.mubr.bf16.gmra.mrb[0].mxu0 %v9378
        %v10142 = vpop.f32.mrb[0].mxu0
        %v10143 = vadd.f32 0.0, %v10142
        %v10144 = vpop.f32.mrb[0].mxu0
        %v10145 = vpop.f32.mrb[0].mxu0
        %v10146 = vpop.f32.mrb[0].mxu0
        %10147 = vmatprep.mubr.bf16.mxu0 0
        %10148 = vmatmul.mubr.bf16.gmra.mrb[0].mxu0 %v9381
        %v10149 = vpop.f32.mrb[0].mxu0
        %v10150 = vpop.f32.mrb[0].mxu0
        %v10151 = vpop.f32.mrb[0].mxu0
        %v10152 = vadd.f32 0.0, %v10151
        %v10153 = vpop.f32.mrb[0].mxu0
        %10154 = vmatprep.mubr.bf16.mxu0 0
        %10155 = vmatmul.mubr.bf16.gmra.mrb[0].mxu0 %v9384
        %v10156 = vpop.f32.mrb[0].mxu0
        %v10157 = vadd.f32 0.0, %v10156
        %v10158 = vpop.f32.mrb[0].mxu0
        %v10159 = vpop.f32.mrb[0].mxu0
        %v10160 = vadd.f32 0.0, %v10159
        %v10161 = vpop.f32.mrb[0].mxu0
        %10162 = vmatprep.mubr.bf16.mxu0 0
        %10163 = vmatmul.mubr.bf16.gmra.mrb[0].mxu0 %v9387
        %v10164 = vpop.f32.mrb[0].mxu0
        %v10165 = vadd.f32 0.0, %v10164
        %v10166 = vpop.f32.mrb[0].mxu0
        %v10167 = vpop.f32.mrb[0].mxu0
        %v10168 = vpop.f32.mrb[0].mxu0
        %10169 = vmatprep.mubr.bf16.mxu0 0
        %10170 = vmatmul.mubr.bf16.gmra.mrb[0].mxu0 %v9390
        %v10171 = vpop.f32.mrb[0].mxu0
        %v10172 = vpop.f32.mrb[0].mxu0
        %v10173 = vpop.f32.mrb[0].mxu0
        %v10174 = vadd.f32 0.0, %v10173
        %v10175 = vpop.f32.mrb[0].mxu0
        %10176 = vmatprep.mubr.bf16.mxu0 0
        %10177 = vmatmul.mubr.bf16.gmra.mrb[0].mxu0 %v9393
        %v10178 = vpop.f32.mrb[0].mxu0
        %v10179 = vadd.f32 0.0, %v10178
        %v10180 = vpop.f32.mrb[0].mxu0
        %v10181 = vpop.f32.mrb[0].mxu0
        %v10182 = vadd.f32 0.0, %v10181
        %v10183 = vpop.f32.mrb[0].mxu0
        %10184 = vmatprep.mubr.bf16.mxu0 0
        %10185 = vmatmul.mubr.bf16.gmra.mrb[0].mxu0 %v9396
        %v10186 = vpop.f32.mrb[0].mxu0
        %v10187 = vadd.f32 0.0, %v10186
        %v10188 = vpop.f32.mrb[0].mxu0
        %v10189 = vpop.f32.mrb[0].mxu0
        %v10190 = vpop.f32.mrb[0].mxu0
        %10191 = vmatprep.mubr.bf16.mxu0 0
        %10192 = vmatmul.mubr.bf16.gmra.mrb[0].mxu0 %v9399
        %v10193 = vpop.f32.mrb[0].mxu0
        %v10194 = vpop.f32.mrb[0].mxu0
        %v10195 = vpop.f32.mrb[0].mxu0
        %v10196 = vadd.f32 0.0, %v10195
        %v10197 = vpop.f32.mrb[0].mxu0
        %10198 = vmatprep.mubr.bf16.mxu0 0
        %10199 = vmatmul.mubr.bf16.gmra.mrb[0].mxu0 %v9402
        %v10200 = vpop.f32.mrb[0].mxu0
        %v10201 = vadd.f32 0.0, %v10200
        %v10202 = vpop.f32.mrb[0].mxu0
        %v10203 = vpop.f32.mrb[0].mxu0
        %v10204 = vadd.f32 0.0, %v10203
        %v10205 = vpop.f32.mrb[0].mxu0
        %10206 = vmatprep.mubr.bf16.mxu0 0
        %10207 = vmatmul.mubr.bf16.gmra.mrb[0].mxu0 %v9993
        %v10208 = vpop.f32.mrb[0].mxu0
        %v10209 = vpop.f32.mrb[0].mxu0
        %v10210 = vpop.f32.mrb[0].mxu0
        %v10211 = vpop.f32.mrb[0].mxu0
        %10212 = vmatprep.mubr.bf16.mxu0 0
        %10213 = vmatmul.mubr.bf16.gmra.mrb[0].mxu0 %v9996
        %v10214 = vpop.f32.mrb[0].mxu0
        %v10215 = vpop.f32.mrb[0].mxu0
        %v10216 = vpop.f32.mrb[0].mxu0
        %v10217 = vadd.f32 0.0, %v10216
        %v10218 = vpop.f32.mrb[0].mxu0
        %10219 = vmatprep.mubr.bf16.mxu0 0
        %10220 = vmatmul.mubr.bf16.gmra.mrb[0].mxu0 %v9999
        %v10221 = vpop.f32.mrb[0].mxu0
        %v10222 = vadd.f32 0.0, %v10221
        %v10223 = vpop.f32.mrb[0].mxu0
        %v10224 = vpop.f32.mrb[0].mxu0
        %v10225 = vadd.f32 0.0, %v10224
        %v10226 = vpop.f32.mrb[0].mxu0
        %10227 = vmatprep.mubr.bf16.mxu0 0
        %10228 = vmatmul.mubr.bf16.gmra.mrb[0].mxu0 %v10002
        %v10229 = vpop.f32.mrb[0].mxu0
        %v10230 = vadd.f32 0.0, %v10229
        %v10231 = vpop.f32.mrb[0].mxu0
        %v10232 = vpop.f32.mrb[0].mxu0
        %v10233 = vpop.f32.mrb[0].mxu0
        %10234 = vdwg.mxu0
        %v10235 = vadd.f32 %v9938, %v10039
        %v10236 = vadd.f32 %v9939, %v10042
        %v10237 = vadd.f32 %v9940, %v10047
        %v10238 = vadd.f32 %v9941, %v10060
        %v10239 = vadd.f32 %v9942, %v10063
        %v10240 = vadd.f32 %v9943, %v10068
        %v10241 = vadd.f32 %v9944, %v10071
        %v10242 = vadd.f32 %v9945, %v10082
        %v10243 = vadd.f32 %v9946, %v10085
        %v10244 = vadd.f32 %v9947, %v10090
        %v10245 = vadd.f32 %v9948, %v10093
        %v10246 = vadd.f32 %v9949, %v10104
        %v10247 = vadd.f32 %v9950, %v10107
        %v10248 = vadd.f32 %v9951, %v10112
        %v10249 = vadd.f32 %v9952, %v10115
        %v10250 = vadd.f32 %v9953, %v10120
        %v10251 = vadd.f32 %v9954, %v10127
        %v10252 = vadd.f32 %v9955, %v10130
        %v10253 = vadd.f32 %v9956, %v10135
        %v10254 = vadd.f32 %v9957, %v10138
        %v10255 = vadd.f32 %v9958, %v10143
        %v10256 = vadd.f32 %v9959, %v10152
        %v10257 = vadd.f32 %v9960, %v10157
        %v10258 = vadd.f32 %v9961, %v10160
        %v10259 = vadd.f32 %v9962, %v10165
        %v10260 = vadd.f32 %v9963, %v10174
        %v10261 = vadd.f32 %v9964, %v10179
        %v10262 = vadd.f32 %v9965, %v10182
        %v10263 = vadd.f32 %v9966, %v10187
        %v10264 = vadd.f32 %v9967, %v10196
        %v10265 = vadd.f32 %v9968, %v10201
        %v10266 = vadd.f32 %v9969, %v10204
        %v10267 = vadd.f32 %v9970, %v10217
        %v10268 = vadd.f32 %v9971, %v10222
        %v10269 = vadd.f32 %v9972, %v10225
        %v10270 = vadd.f32 %v9973, %v10230
        %vm10271 = vcmask 1043456
        %v10272 = vrot.slane %v7458, 4
        %v10273 = vrot.slane %v7459, 4
        %v10274 = vsel %vm10271, %v10272, %v10273
        %v10275 = vrot.slane %v7460, 4
        %v10276 = vsel %vm10271, %v10273, %v10275
        %v10277 = vrot.slane %v7461, 4
        %v10278 = vsel %vm10271, %v10275, %v10277
        %v10279 = vrot.slane %v7462, 4
        %v10280 = vsel %vm10271, %v10277, %v10279
        %v10281 = vrot.slane %v7463, 4
        %v10282 = vsel %vm10271, %v10279, %v10281
        %v10283 = vrot.slane %v7464, 4
        %v10284 = vsel %vm10271, %v10281, %v10283
        %v10285 = vrot.slane %v7465, 4
        %v10286 = vsel %vm10271, %v10283, %v10285
        %v10287 = vrot.slane %v7466, 4
        %v10288 = vsel %vm10271, %v10285, %v10287
        %v10289 = vrot.slane %v7467, 4
        %v10290 = vsel %vm10271, %v10287, %v10289
        %v10291 = vrot.slane %v7468, 4
        %v10292 = vsel %vm10271, %v10289, %v10291
        %v10293 = vrot.slane %v7469, 4
        %v10294 = vsel %vm10271, %v10291, %v10293
        %v10295 = vrot.slane %v7470, 4
        %v10296 = vsel %vm10271, %v10293, %v10295
        %v10297 = vrot.slane %v7471, 4
        %v10298 = vsel %vm10271, %v10295, %v10297
        %v10299 = vrot.slane %v7472, 4
        %v10300 = vsel %vm10271, %v10297, %v10299
        %v10301 = vrot.slane %v7473, 4
        %v10302 = vsel %vm10271, %v10299, %v10301
        %v10303 = vrot.slane %v7474, 4
        %v10304 = vsel %vm10271, %v10301, %v10303
        %v10305 = vrot.slane %v7475, 4
        %v10306 = vsel %vm10271, %v10303, %v10305
        %v10307 = vrot.slane %v7476, 4
        %v10308 = vsel %vm10271, %v10305, %v10307
        %v10309 = vrot.slane %v7477, 4
        %v10310 = vsel %vm10271, %v10307, %v10309
        %v10311 = vrot.slane %v7478, 4
        %v10312 = vsel %vm10271, %v10309, %v10311
        %v10313 = vrot.slane %v7479, 4
        %v10314 = vsel %vm10271, %v10311, %v10313
        %v10315 = vrot.slane %v7480, 4
        %v10316 = vsel %vm10271, %v10313, %v10315
        %v10317 = vrot.slane %v7481, 4
        %v10318 = vsel %vm10271, %v10315, %v10317
        %v10319 = vrot.slane %v7482, 4
        %v10320 = vsel %vm10271, %v10317, %v10319
        %v10321 = vrot.slane %v7483, 4
        %v10322 = vsel %vm10271, %v10319, %v10321
        %v10323 = vrot.slane %v7484, 4
        %v10324 = vsel %vm10271, %v10321, %v10323
        %v10329 = vunpack.c.l.b16 %v7517
        %v10330 = vunpack.c.l.b16 %v7518
        %v10331 = vunpack.c.l.b16 %v7519
        %v10332 = vunpack.c.l.b16 %v7520
        %v10333 = vpack.c.b16 %v10330, %v10329
        %v10334 = vpack.c.b16 %v10332, %v10331
        %v10338 = vsel %vm7613, %v10274, 0
        %v10341 = vsel %vm7613, %v10276, 0
        %v10344 = vsel %vm7613, %v10278, 0
        %v10347 = vsel %vm7613, %v10280, 0
        %v10350 = vsel %vm7613, %v10282, 0
        %v10353 = vsel %vm7613, %v10284, 0
        %v10356 = vsel %vm7613, %v10286, 0
        %v10359 = vsel %vm7613, %v10288, 0
        %v10362 = vsel %vm7613, %v10290, 0
        %v10365 = vsel %vm7613, %v10292, 0
        %v10368 = vsel %vm7613, %v10294, 0
        %v10371 = vsel %vm7613, %v10296, 0
        %v10374 = vsel %vm7613, %v10298, 0
        %v10377 = vsel %vm7613, %v10300, 0
        %v10380 = vsel %vm7613, %v10302, 0
        %v10383 = vsel %vm7613, %v10304, 0
        %v10386 = vsel %vm7613, %v10306, 0
        %v10389 = vsel %vm7613, %v10308, 0
        %v10392 = vsel %vm7613, %v10310, 0
        %v10395 = vsel %vm7613, %v10312, 0
        %v10398 = vsel %vm7613, %v10314, 0
        %v10401 = vsel %vm7613, %v10316, 0
        %v10404 = vsel %vm7613, %v10318, 0
        %v10407 = vsel %vm7613, %v10320, 0
        %v10410 = vsel %vm7613, %v10322, 0
        %v10413 = vsel %vm7613, %v10324, 0
        %v10416 = vsel %vm7613, %v10323, 0
        %10418 = vmatprep.subr.bf16.mxu0 0
        %10419 = vmatpush1.bf16.msra.mxu0 %v10333
        %10420 = vmatprep.subr.bf16.mxu0 0
        %10421 = vmatpush1.bf16.msra.mxu0 %v10334
        %10422 = vmatprep.subr.bf16.mxu0 0
        %10423 = vmatpush1.bf16.msra.mxu0 0
        %10424 = vmatprep.subr.bf16.mxu0 0
        %10425 = vmatpush1.bf16.msra.mxu0 0
        %10426 = vmatprep.subr.bf16.mxu0 0
        %10427 = vmatpush1.bf16.msra.mxu0 0
        %10428 = vmatprep.subr.bf16.mxu0 0
        %10429 = vmatpush1.bf16.msra.mxu0 0
        %10430 = vmatprep.subr.bf16.mxu0 0
        %10431 = vmatpush1.bf16.msra.mxu0 0
        %10432 = vmatprep.subr.bf16.mxu0 0
        %10433 = vmatpush1.bf16.msra.mxu0 0
        %10434 = vmatprep.subr.bf16.mxu0 0
        %10435 = vmatpush1.bf16.msra.mxu0 0
        %10436 = vmatprep.subr.bf16.mxu0 0
        %10437 = vmatpush1.bf16.msra.mxu0 0
        %10438 = vmatprep.subr.bf16.mxu0 0
        %10439 = vmatpush1.bf16.msra.mxu0 0
        %10440 = vmatprep.subr.bf16.mxu0 0
        %10441 = vmatpush1.bf16.msra.mxu0 0
        %10442 = vmatprep.subr.bf16.mxu0 0
        %10443 = vmatpush1.bf16.msra.mxu0 0
        %10444 = vmatprep.subr.bf16.mxu0 0
        %10445 = vmatpush1.bf16.msra.mxu0 0
        %10446 = vmatprep.subr.bf16.mxu0 0
        %10447 = vmatpush1.bf16.msra.mxu0 0
        %10448 = vmatprep.subr.bf16.mxu0 0
        %10449 = vmatpush1.bf16.msra.mxu0 0
        %10450 = vmatprep.mubr.bf16.mxu0 0
        %10451 = vmatmul.mubr.bf16.gmra.mrb[0].mxu0 %v10338
        %v10452 = vpop.f32.mrb[0].mxu0
        %v10453 = vadd.f32 0.0, %v10452
        %v10454 = vpop.f32.mrb[0].mxu0
        %v10455 = vpop.f32.mrb[0].mxu0
        %v10456 = vadd.f32 0.0, %v10455
        %v10457 = vpop.f32.mrb[0].mxu0
        %10458 = vmatprep.mubr.bf16.mxu0 0
        %10459 = vmatmul.mubr.bf16.gmra.mrb[0].mxu0 %v10341
        %v10460 = vpop.f32.mrb[0].mxu0
        %v10461 = vadd.f32 0.0, %v10460
        %v10462 = vpop.f32.mrb[0].mxu0
        %v10463 = vpop.f32.mrb[0].mxu0
        %v10464 = vpop.f32.mrb[0].mxu0
        %10465 = vmatprep.mubr.bf16.mxu0 0
        %10466 = vmatmul.mubr.bf16.gmra.mrb[0].mxu0 %v10344
        %v10467 = vpop.f32.mrb[0].mxu0
        %v10468 = vpop.f32.mrb[0].mxu0
        %v10469 = vpop.f32.mrb[0].mxu0
        %v10470 = vpop.f32.mrb[0].mxu0
        %10471 = vmatprep.mubr.bf16.mxu0 0
        %10472 = vmatmul.mubr.bf16.gmra.mrb[0].mxu0 %v10347
        %v10473 = vpop.f32.mrb[0].mxu0
        %v10474 = vadd.f32 0.0, %v10473
        %v10475 = vpop.f32.mrb[0].mxu0
        %v10476 = vpop.f32.mrb[0].mxu0
        %v10477 = vadd.f32 0.0, %v10476
        %v10478 = vpop.f32.mrb[0].mxu0
        %10479 = vmatprep.mubr.bf16.mxu0 0
        %10480 = vmatmul.mubr.bf16.gmra.mrb[0].mxu0 %v10350
        %v10481 = vpop.f32.mrb[0].mxu0
        %v10482 = vadd.f32 0.0, %v10481
        %v10483 = vpop.f32.mrb[0].mxu0
        %v10484 = vpop.f32.mrb[0].mxu0
        %v10485 = vadd.f32 0.0, %v10484
        %v10486 = vpop.f32.mrb[0].mxu0
        %10487 = vmatprep.mubr.bf16.mxu0 0
        %10488 = vmatmul.mubr.bf16.gmra.mrb[0].mxu0 %v10353
        %v10489 = vpop.f32.mrb[0].mxu0
        %v10490 = vpop.f32.mrb[0].mxu0
        %v10491 = vpop.f32.mrb[0].mxu0
        %v10492 = vpop.f32.mrb[0].mxu0
        %10493 = vmatprep.mubr.bf16.mxu0 0
        %10494 = vmatmul.mubr.bf16.gmra.mrb[0].mxu0 %v10356
        %v10495 = vpop.f32.mrb[0].mxu0
        %v10496 = vadd.f32 0.0, %v10495
        %v10497 = vpop.f32.mrb[0].mxu0
        %v10498 = vpop.f32.mrb[0].mxu0
        %v10499 = vadd.f32 0.0, %v10498
        %v10500 = vpop.f32.mrb[0].mxu0
        %10501 = vmatprep.mubr.bf16.mxu0 0
        %10502 = vmatmul.mubr.bf16.gmra.mrb[0].mxu0 %v10359
        %v10503 = vpop.f32.mrb[0].mxu0
        %v10504 = vadd.f32 0.0, %v10503
        %v10505 = vpop.f32.mrb[0].mxu0
        %v10506 = vpop.f32.mrb[0].mxu0
        %v10507 = vadd.f32 0.0, %v10506
        %v10508 = vpop.f32.mrb[0].mxu0
        %10509 = vmatprep.mubr.bf16.mxu0 0
        %10510 = vmatmul.mubr.bf16.gmra.mrb[0].mxu0 %v10362
        %v10511 = vpop.f32.mrb[0].mxu0
        %v10512 = vpop.f32.mrb[0].mxu0
        %v10513 = vpop.f32.mrb[0].mxu0
        %v10514 = vpop.f32.mrb[0].mxu0
        %10515 = vmatprep.mubr.bf16.mxu0 0
        %10516 = vmatmul.mubr.bf16.gmra.mrb[0].mxu0 %v10365
        %v10517 = vpop.f32.mrb[0].mxu0
        %v10518 = vadd.f32 0.0, %v10517
        %v10519 = vpop.f32.mrb[0].mxu0
        %v10520 = vpop.f32.mrb[0].mxu0
        %v10521 = vadd.f32 0.0, %v10520
        %v10522 = vpop.f32.mrb[0].mxu0
        %10523 = vmatprep.mubr.bf16.mxu0 0
        %10524 = vmatmul.mubr.bf16.gmra.mrb[0].mxu0 %v10368
        %v10525 = vpop.f32.mrb[0].mxu0
        %v10526 = vadd.f32 0.0, %v10525
        %v10527 = vpop.f32.mrb[0].mxu0
        %v10528 = vpop.f32.mrb[0].mxu0
        %v10529 = vadd.f32 0.0, %v10528
        %v10530 = vpop.f32.mrb[0].mxu0
        %10531 = vmatprep.mubr.bf16.mxu0 0
        %10532 = vmatmul.mubr.bf16.gmra.mrb[0].mxu0 %v10371
        %v10533 = vpop.f32.mrb[0].mxu0
        %v10534 = vadd.f32 0.0, %v10533
        %v10535 = vpop.f32.mrb[0].mxu0
        %v10536 = vpop.f32.mrb[0].mxu0
        %v10537 = vpop.f32.mrb[0].mxu0
        %10538 = vmatprep.mubr.bf16.mxu0 0
        %10539 = vmatmul.mubr.bf16.gmra.mrb[0].mxu0 %v10374
        %v10540 = vpop.f32.mrb[0].mxu0
        %v10541 = vadd.f32 0.0, %v10540
        %v10542 = vpop.f32.mrb[0].mxu0
        %v10543 = vpop.f32.mrb[0].mxu0
        %v10544 = vadd.f32 0.0, %v10543
        %v10545 = vpop.f32.mrb[0].mxu0
        %10546 = vmatprep.mubr.bf16.mxu0 0
        %10547 = vmatmul.mubr.bf16.gmra.mrb[0].mxu0 %v10377
        %v10548 = vpop.f32.mrb[0].mxu0
        %v10549 = vadd.f32 0.0, %v10548
        %v10550 = vpop.f32.mrb[0].mxu0
        %v10551 = vpop.f32.mrb[0].mxu0
        %v10552 = vadd.f32 0.0, %v10551
        %v10553 = vpop.f32.mrb[0].mxu0
        %10554 = vmatprep.mubr.bf16.mxu0 0
        %10555 = vmatmul.mubr.bf16.gmra.mrb[0].mxu0 %v10380
        %v10556 = vpop.f32.mrb[0].mxu0
        %v10557 = vadd.f32 0.0, %v10556
        %v10558 = vpop.f32.mrb[0].mxu0
        %v10559 = vpop.f32.mrb[0].mxu0
        %v10560 = vpop.f32.mrb[0].mxu0
        %10561 = vmatprep.mubr.bf16.mxu0 0
        %10562 = vmatmul.mubr.bf16.gmra.mrb[0].mxu0 %v10383
        %v10563 = vpop.f32.mrb[0].mxu0
        %v10564 = vpop.f32.mrb[0].mxu0
        %v10565 = vpop.f32.mrb[0].mxu0
        %v10566 = vadd.f32 0.0, %v10565
        %v10567 = vpop.f32.mrb[0].mxu0
        %10568 = vmatprep.mubr.bf16.mxu0 0
        %10569 = vmatmul.mubr.bf16.gmra.mrb[0].mxu0 %v10386
        %v10570 = vpop.f32.mrb[0].mxu0
        %v10571 = vadd.f32 0.0, %v10570
        %v10572 = vpop.f32.mrb[0].mxu0
        %v10573 = vpop.f32.mrb[0].mxu0
        %v10574 = vadd.f32 0.0, %v10573
        %v10575 = vpop.f32.mrb[0].mxu0
        %10576 = vmatprep.mubr.bf16.mxu0 0
        %10577 = vmatmul.mubr.bf16.gmra.mrb[0].mxu0 %v10389
        %v10578 = vpop.f32.mrb[0].mxu0
        %v10579 = vadd.f32 0.0, %v10578
        %v10580 = vpop.f32.mrb[0].mxu0
        %v10581 = vpop.f32.mrb[0].mxu0
        %v10582 = vpop.f32.mrb[0].mxu0
        %10583 = vmatprep.mubr.bf16.mxu0 0
        %10584 = vmatmul.mubr.bf16.gmra.mrb[0].mxu0 %v10392
        %v10585 = vpop.f32.mrb[0].mxu0
        %v10586 = vpop.f32.mrb[0].mxu0
        %v10587 = vpop.f32.mrb[0].mxu0
        %v10588 = vadd.f32 0.0, %v10587
        %v10589 = vpop.f32.mrb[0].mxu0
        %10590 = vmatprep.mubr.bf16.mxu0 0
        %10591 = vmatmul.mubr.bf16.gmra.mrb[0].mxu0 %v10395
        %v10592 = vpop.f32.mrb[0].mxu0
        %v10593 = vadd.f32 0.0, %v10592
        %v10594 = vpop.f32.mrb[0].mxu0
        %v10595 = vpop.f32.mrb[0].mxu0
        %v10596 = vadd.f32 0.0, %v10595
        %v10597 = vpop.f32.mrb[0].mxu0
        %10598 = vmatprep.mubr.bf16.mxu0 0
        %10599 = vmatmul.mubr.bf16.gmra.mrb[0].mxu0 %v10398
        %v10600 = vpop.f32.mrb[0].mxu0
        %v10601 = vadd.f32 0.0, %v10600
        %v10602 = vpop.f32.mrb[0].mxu0
        %v10603 = vpop.f32.mrb[0].mxu0
        %v10604 = vpop.f32.mrb[0].mxu0
        %10605 = vmatprep.mubr.bf16.mxu0 0
        %10606 = vmatmul.mubr.bf16.gmra.mrb[0].mxu0 %v10401
        %v10607 = vpop.f32.mrb[0].mxu0
        %v10608 = vpop.f32.mrb[0].mxu0
        %v10609 = vpop.f32.mrb[0].mxu0
        %v10610 = vadd.f32 0.0, %v10609
        %v10611 = vpop.f32.mrb[0].mxu0
        %10612 = vmatprep.mubr.bf16.mxu0 0
        %10613 = vmatmul.mubr.bf16.gmra.mrb[0].mxu0 %v10404
        %v10614 = vpop.f32.mrb[0].mxu0
        %v10615 = vadd.f32 0.0, %v10614
        %v10616 = vpop.f32.mrb[0].mxu0
        %v10617 = vpop.f32.mrb[0].mxu0
        %v10618 = vadd.f32 0.0, %v10617
        %v10619 = vpop.f32.mrb[0].mxu0
        %10620 = vmatprep.mubr.bf16.mxu0 0
        %10621 = vmatmul.mubr.bf16.gmra.mrb[0].mxu0 %v10407
        %v10622 = vpop.f32.mrb[0].mxu0
        %v10623 = vpop.f32.mrb[0].mxu0
        %v10624 = vpop.f32.mrb[0].mxu0
        %v10625 = vpop.f32.mrb[0].mxu0
        %10626 = vmatprep.mubr.bf16.mxu0 0
        %10627 = vmatmul.mubr.bf16.gmra.mrb[0].mxu0 %v10410
        %v10628 = vpop.f32.mrb[0].mxu0
        %v10629 = vpop.f32.mrb[0].mxu0
        %v10630 = vpop.f32.mrb[0].mxu0
        %v10631 = vadd.f32 0.0, %v10630
        %v10632 = vpop.f32.mrb[0].mxu0
        %10633 = vmatprep.mubr.bf16.mxu0 0
        %10634 = vmatmul.mubr.bf16.gmra.mrb[0].mxu0 %v10413
        %v10635 = vpop.f32.mrb[0].mxu0
        %v10636 = vadd.f32 0.0, %v10635
        %v10637 = vpop.f32.mrb[0].mxu0
        %v10638 = vpop.f32.mrb[0].mxu0
        %v10639 = vadd.f32 0.0, %v10638
        %v10640 = vpop.f32.mrb[0].mxu0
        %10641 = vmatprep.mubr.bf16.mxu0 0
        %10642 = vmatmul.mubr.bf16.gmra.mrb[0].mxu0 %v10416
        %v10643 = vpop.f32.mrb[0].mxu0
        %v10644 = vadd.f32 0.0, %v10643
        %v10645 = vpop.f32.mrb[0].mxu0
        %v10646 = vpop.f32.mrb[0].mxu0
        %v10647 = vpop.f32.mrb[0].mxu0
        %10648 = vdwg.mxu0
        %v10649 = vadd.f32 %v10235, %v10453
        %v10650 = vadd.f32 %v10236, %v10456
        %v10651 = vadd.f32 %v10237, %v10461
        %v10652 = vadd.f32 %v10238, %v10474
        %v10653 = vadd.f32 %v10239, %v10477
        %v10654 = vadd.f32 %v10240, %v10482
        %v10655 = vadd.f32 %v10241, %v10485
        %v10656 = vadd.f32 %v10242, %v10496
        %v10657 = vadd.f32 %v10243, %v10499
        %v10658 = vadd.f32 %v10244, %v10504
        %v10659 = vadd.f32 %v10245, %v10507
        %v10660 = vadd.f32 %v10246, %v10518
        %v10661 = vadd.f32 %v10247, %v10521
        %v10662 = vadd.f32 %v10248, %v10526
        %v10663 = vadd.f32 %v10249, %v10529
        %v10664 = vadd.f32 %v10250, %v10534
        %v10665 = vadd.f32 %v10251, %v10541
        %v10666 = vadd.f32 %v10252, %v10544
        %v10667 = vadd.f32 %v10253, %v10549
        %v10668 = vadd.f32 %v10254, %v10552
        %v10669 = vadd.f32 %v10255, %v10557
        %v10670 = vadd.f32 %v10256, %v10566
        %v10671 = vadd.f32 %v10257, %v10571
        %v10672 = vadd.f32 %v10258, %v10574
        %v10673 = vadd.f32 %v10259, %v10579
        %v10674 = vadd.f32 %v10260, %v10588
        %v10675 = vadd.f32 %v10261, %v10593
        %v10676 = vadd.f32 %v10262, %v10596
        %v10677 = vadd.f32 %v10263, %v10601
        %v10678 = vadd.f32 %v10264, %v10610
        %v10679 = vadd.f32 %v10265, %v10615
        %v10680 = vadd.f32 %v10266, %v10618
        %v10681 = vadd.f32 %v10267, %v10631
        %v10682 = vadd.f32 %v10268, %v10636
        %v10683 = vadd.f32 %v10269, %v10639
        %v10684 = vadd.f32 %v10270, %v10644
        %v10685 = vld [vmem:[%s4] sm:$0x1]
        %v10687 = vlaneseq
        %v10688 = vshrl.u32 %v10687, 7
        %v10689 = vsub.s32 0, %v10688
        %v10690 = vrot.slane %v10685, %v10689
        %v10692 = vadd.f32 %v10649, %v10690
        %v10693 = vadd.f32 %v10650, %v10690
        %v10694 = vadd.f32 %v10651, %v10690
        %v10695 = vadd.f32 %v10652, %v10690
        %v10696 = vadd.f32 %v10653, %v10690
        %v10697 = vadd.f32 %v10654, %v10690
        %v10698 = vadd.f32 %v10655, %v10690
        %v10699 = vadd.f32 %v10656, %v10690
        %v10700 = vadd.f32 %v10657, %v10690
        %v10701 = vadd.f32 %v10658, %v10690
        %v10702 = vadd.f32 %v10659, %v10690
        %v10703 = vadd.f32 %v10660, %v10690
        %v10704 = vadd.f32 %v10661, %v10690
        %v10705 = vadd.f32 %v10662, %v10690
        %v10706 = vadd.f32 %v10663, %v10690
        %v10707 = vadd.f32 %v10664, %v10690
        %v10708 = vadd.f32 %v10665, %v10690
        %v10709 = vadd.f32 %v10666, %v10690
        %v10710 = vadd.f32 %v10667, %v10690
        %v10711 = vadd.f32 %v10668, %v10690
        %v10712 = vadd.f32 %v10669, %v10690
        %v10713 = vadd.f32 %v10670, %v10690
        %v10714 = vadd.f32 %v10671, %v10690
        %v10715 = vadd.f32 %v10672, %v10690
        %v10716 = vadd.f32 %v10673, %v10690
        %v10717 = vadd.f32 %v10674, %v10690
        %v10718 = vadd.f32 %v10675, %v10690
        %v10719 = vadd.f32 %v10676, %v10690
        %v10720 = vadd.f32 %v10677, %v10690
        %v10721 = vadd.f32 %v10678, %v10690
        %v10722 = vadd.f32 %v10679, %v10690
        %v10723 = vadd.f32 %v10680, %v10690
        %v10724 = vadd.f32 %v10681, %v10690
        %v10725 = vadd.f32 %v10682, %v10690
        %v10726 = vadd.f32 %v10683, %v10690
        %v10727 = vadd.f32 %v10684, %v10690
        %v10728 = vmax.f32 %v10692, 0.0
        %v10729 = vmax.f32 %v10693, 0.0
        %v10730 = vmax.f32 %v10694, 0.0
        %v10731 = vmax.f32 %v10695, 0.0
        %v10732 = vmax.f32 %v10696, 0.0
        %v10733 = vmax.f32 %v10697, 0.0
        %v10734 = vmax.f32 %v10698, 0.0
        %v10735 = vmax.f32 %v10699, 0.0
        %v10736 = vmax.f32 %v10700, 0.0
        %v10737 = vmax.f32 %v10701, 0.0
        %v10738 = vmax.f32 %v10702, 0.0
        %v10739 = vmax.f32 %v10703, 0.0
        %v10740 = vmax.f32 %v10704, 0.0
        %v10741 = vmax.f32 %v10705, 0.0
        %v10742 = vmax.f32 %v10706, 0.0
        %v10743 = vmax.f32 %v10707, 0.0
        %v10744 = vmax.f32 %v10708, 0.0
        %v10745 = vmax.f32 %v10709, 0.0
        %v10746 = vmax.f32 %v10710, 0.0
        %v10747 = vmax.f32 %v10711, 0.0
        %v10748 = vmax.f32 %v10712, 0.0
        %v10749 = vmax.f32 %v10713, 0.0
        %v10750 = vmax.f32 %v10714, 0.0
        %v10751 = vmax.f32 %v10715, 0.0
        %v10752 = vmax.f32 %v10716, 0.0
        %v10753 = vmax.f32 %v10717, 0.0
        %v10754 = vmax.f32 %v10718, 0.0
        %v10755 = vmax.f32 %v10719, 0.0
        %v10756 = vmax.f32 %v10720, 0.0
        %v10757 = vmax.f32 %v10721, 0.0
        %v10758 = vmax.f32 %v10722, 0.0
        %v10759 = vmax.f32 %v10723, 0.0
        %v10760 = vmax.f32 %v10724, 0.0
        %v10761 = vmax.f32 %v10725, 0.0
        %v10762 = vmax.f32 %v10726, 0.0
        %v10763 = vmax.f32 %v10727, 0.0
        %v10780 = vrot.slane %v10731, 2
        %v10781 = vrot.slane %v10732, 2
        %v10782 = vsel %vm6596, %v10780, %v10781
        %v10783 = vrot.slane %v10733, 2
        %v10784 = vsel %vm6596, %v10781, %v10783
        %v10785 = vrot.slane %v10734, 2
        %v10786 = vsel %vm6596, %v10783, %v10785
        %v10787 = vrot.slane %v10739, 2
        %v10788 = vrot.slane %v10740, 2
        %v10789 = vsel %vm6596, %v10787, %v10788
        %v10790 = vrot.slane %v10741, 2
        %v10791 = vsel %vm6596, %v10788, %v10790
        %v10792 = vrot.slane %v10742, 2
        %v10793 = vsel %vm6596, %v10790, %v10792
        %v10794 = vrot.slane %v10743, 2
        %v10795 = vsel %vm6596, %v10792, %v10794
        %v10796 = vrot.slane %v10749, 2
        %v10797 = vrot.slane %v10750, 2
        %v10798 = vsel %vm6596, %v10796, %v10797
        %v10799 = vrot.slane %v10751, 2
        %v10800 = vsel %vm6596, %v10797, %v10799
        %v10801 = vrot.slane %v10752, 2
        %v10802 = vsel %vm6596, %v10799, %v10801
        %v10803 = vrot.slane %v10757, 2
        %v10804 = vrot.slane %v10758, 2
        %v10805 = vsel %vm6596, %v10803, %v10804
        %v10806 = vrot.slane %v10759, 2
        %v10807 = vsel %vm6596, %v10804, %v10806
        %v10821 = vmax.f32 %v10728, %v10782
        %v10822 = vmax.f32 %v10729, %v10784
        %v10823 = vmax.f32 %v10730, %v10786
        %v10824 = vmax.f32 %v10735, %v10789
        %v10825 = vmax.f32 %v10736, %v10791
        %v10826 = vmax.f32 %v10737, %v10793
        %v10827 = vmax.f32 %v10738, %v10795
        %v10828 = vmax.f32 %v10745, %v10798
        %v10829 = vmax.f32 %v10746, %v10800
        %v10830 = vmax.f32 %v10747, %v10802
        %v10831 = vmax.f32 %v10753, %v10805
        %v10832 = vmax.f32 %v10754, %v10807
        %v10833 = vmax.f32 %v10755, %v10806
        %vm10851 = vcmask 1043456
        %v10852 = vrot.slane %v10735, 4
        %v10853 = vrot.slane %v10736, 4
        %v10854 = vsel %vm10851, %v10852, %v10853
        %v10855 = vrot.slane %v10737, 4
        %v10856 = vsel %vm10851, %v10853, %v10855
        %v10857 = vrot.slane %v10738, 4
        %v10858 = vsel %vm10851, %v10855, %v10857
        %v10859 = vrot.slane %v10744, 4
        %v10860 = vrot.slane %v10745, 4
        %v10861 = vsel %vm10851, %v10859, %v10860
        %v10862 = vrot.slane %v10746, 4
        %v10863 = vsel %vm10851, %v10860, %v10862
        %v10864 = vrot.slane %v10747, 4
        %v10865 = vsel %vm10851, %v10862, %v10864
        %v10866 = vrot.slane %v10748, 4
        %v10867 = vsel %vm10851, %v10864, %v10866
        %v10868 = vrot.slane %v10753, 4
        %v10869 = vrot.slane %v10754, 4
        %v10870 = vsel %vm10851, %v10868, %v10869
        %v10871 = vrot.slane %v10755, 4
        %v10872 = vsel %vm10851, %v10869, %v10871
        %v10873 = vrot.slane %v10756, 4
        %v10874 = vsel %vm10851, %v10871, %v10873
        %v10875 = vrot.slane %v10760, 4
        %v10876 = vrot.slane %v10761, 4
        %v10877 = vsel %vm10851, %v10875, %v10876
        %v10878 = vrot.slane %v10762, 4
        %v10879 = vsel %vm10851, %v10876, %v10878
        %v10880 = vrot.slane %v10763, 4
        %v10881 = vsel %vm10851, %v10878, %v10880
        %v10895 = vmax.f32 %v10821, %v10854
        %v10896 = vmax.f32 %v10822, %v10856
        %v10897 = vmax.f32 %v10823, %v10858
        %v10898 = vmax.f32 %v10824, %v10861
        %v10899 = vmax.f32 %v10825, %v10863
        %v10900 = vmax.f32 %v10826, %v10865
        %v10901 = vmax.f32 %v10827, %v10867
        %v10902 = vmax.f32 %v10828, %v10870
        %v10903 = vmax.f32 %v10829, %v10872
        %v10904 = vmax.f32 %v10830, %v10874
        %v10905 = vmax.f32 %v10831, %v10877
        %v10906 = vmax.f32 %v10832, %v10879
        %v10907 = vmax.f32 %v10833, %v10881
        %v10921 = vrot.slane %v10895, 2
        %v10922 = vrot.slane %v10896, 2
        %v10923 = vsel %vm6596, %v10921, %v10922
        %v10924 = vrot.slane %v10897, 2
        %v10925 = vsel %vm6596, %v10922, %v10924
        %v10926 = vrot.slane %v10898, 2
        %v10927 = vrot.slane %v10899, 2
        %v10928 = vsel %vm6596, %v10926, %v10927
        %v10929 = vrot.slane %v10900, 2
        %v10930 = vsel %vm6596, %v10927, %v10929
        %v10931 = vrot.slane %v10901, 2
        %v10932 = vsel %vm6596, %v10929, %v10931
        %v10933 = vrot.slane %v10902, 2
        %v10934 = vrot.slane %v10903, 2
        %v10935 = vsel %vm6596, %v10933, %v10934
        %v10936 = vrot.slane %v10904, 2
        %v10937 = vsel %vm6596, %v10934, %v10936
        %v10938 = vrot.slane %v10905, 2
        %v10939 = vrot.slane %v10906, 2
        %v10940 = vsel %vm6596, %v10938, %v10939
        %v10941 = vrot.slane %v10907, 2
        %v10942 = vsel %vm6596, %v10939, %v10941
        %v10953 = vmax.f32 %v10895, %v10923
        %v10954 = vmax.f32 %v10896, %v10925
        %v10955 = vmax.f32 %v10898, %v10928
        %v10956 = vmax.f32 %v10899, %v10930
        %v10957 = vmax.f32 %v10900, %v10932
        %v10958 = vmax.f32 %v10902, %v10935
        %v10959 = vmax.f32 %v10903, %v10937
        %v10960 = vmax.f32 %v10905, %v10940
        %v10961 = vmax.f32 %v10906, %v10942
        %v10962 = vmax.f32 %v10907, %v10941
        %v10963 = vrot.slane %v10895, 4
        %v10964 = vrot.slane %v10896, 4
        %v10965 = vsel %vm10851, %v10963, %v10964
        %v10966 = vrot.slane %v10897, 4
        %v10967 = vsel %vm10851, %v10964, %v10966
        %v10968 = vrot.slane %v10898, 4
        %v10969 = vrot.slane %v10899, 4
        %v10970 = vsel %vm10851, %v10968, %v10969
        %v10971 = vrot.slane %v10900, 4
        %v10972 = vsel %vm10851, %v10969, %v10971
        %v10973 = vrot.slane %v10901, 4
        %v10974 = vsel %vm10851, %v10971, %v10973
        %v10975 = vrot.slane %v10902, 4
        %v10976 = vrot.slane %v10903, 4
        %v10977 = vsel %vm10851, %v10975, %v10976
        %v10978 = vrot.slane %v10904, 4
        %v10979 = vsel %vm10851, %v10976, %v10978
        %v10980 = vrot.slane %v10905, 4
        %v10981 = vrot.slane %v10906, 4
        %v10982 = vsel %vm10851, %v10980, %v10981
        %v10983 = vrot.slane %v10907, 4
        %v10984 = vsel %vm10851, %v10981, %v10983
        %v10995 = vmax.f32 %v10953, %v10965
        %v10996 = vmax.f32 %v10954, %v10967
        %v10997 = vmax.f32 %v10955, %v10970
        %v10998 = vmax.f32 %v10956, %v10972
        %v10999 = vmax.f32 %v10957, %v10974
        %v11000 = vmax.f32 %v10958, %v10977
        %v11001 = vmax.f32 %v10959, %v10979
        %v11002 = vmax.f32 %v10960, %v10982
        %v11003 = vmax.f32 %v10961, %v10984
        %v11004 = vmax.f32 %v10962, %v10983
        %v11006 = vrot.slane %v10995, 4
        %11007 = vrot.lane.b32.xlu0 %v11006, 64
        %v11008 = vpop.permute.xlu0 %11007
        %v11011 = vrot.slane %v10996, 4
        %11012 = vrot.lane.b32.xlu0 %v11011, 64
        %v11013 = vpop.permute.xlu0 %11012
        %v11016 = vrot.slane %v10997, 4
        %11019 = vrot.lane.b32.xlu0 %v10998, 64
        %v11020 = vpop.permute.xlu0 %11019
        %v11022 = vrot.slane %v10998, 4
        %11025 = vrot.lane.b32.xlu0 %v10999, 64
        %v11026 = vpop.permute.xlu0 %11025
        %v11029 = vrot.slane %v11000, 4
        %11030 = vrot.lane.b32.xlu0 %v11029, 64
        %v11031 = vpop.permute.xlu0 %11030
        %v11034 = vrot.slane %v11001, 4
        %11035 = vrot.lane.b32.xlu0 %v11034, 64
        %v11036 = vpop.permute.xlu0 %11035
        %v11039 = vrot.slane %v11002, 4
        %11042 = vrot.lane.b32.xlu0 %v11003, 64
        %v11043 = vpop.permute.xlu0 %11042
        %v11045 = vrot.slane %v11003, 4
        %11048 = vrot.lane.b32.xlu0 %v11004, 64
        %v11049 = vpop.permute.xlu0 %11048
        %vm11051 = vcmask 523264
        %v11052 = vsel %vm11051, %v10995, %v11008
        %v11053 = vsel %vm11051, %v10996, %v11013
        %v11054 = vsel %vm11051, %v11016, %v11020
        %v11055 = vsel %vm11051, %v11022, %v11026
        %v11056 = vsel %vm11051, %v11000, %v11031
        %v11057 = vsel %vm11051, %v11001, %v11036
        %v11058 = vsel %vm11051, %v11039, %v11043
        %v11059 = vsel %vm11051, %v11045, %v11049
        %v11060 = vpack.c.bf16 %v11052, %v11052
        %v11061 = vpack.c.bf16 %v11053, %v11053
        %v11062 = vpack.c.bf16 %v11054, %v11054
        %v11063 = vpack.c.bf16 %v11055, %v11055
        %v11064 = vpack.c.bf16 %v11056, %v11056
        %v11065 = vpack.c.bf16 %v11057, %v11057
        %v11066 = vpack.c.bf16 %v11058, %v11058
        %v11067 = vpack.c.bf16 %v11059, %v11059
        %v11068 = vld [vmem:[%s5] sm:$0xf]
        %v11069 = vld [vmem:[%s5 + $0x4] sm:$0xf]
        %v11070 = vld [vmem:[%s5 + $0x8] sm:$0xf]
        %v11071 = vld [vmem:[%s5 + $0xc] sm:$0xf]
        %v11072 = vld [vmem:[%s5 + $0x10] sm:$0xf]
        %v11073 = vld [vmem:[%s5 + $0x14] sm:$0xf]
        %v11074 = vld [vmem:[%s5 + $0x18] sm:$0xf]
        %v11075 = vld [vmem:[%s5 + $0x1c] sm:$0xf]
        %v11076 = vld [vmem:[%s5 + $0x20] sm:$0xf]
        %v11077 = vld [vmem:[%s5 + $0x24] sm:$0xf]
        %v11078 = vld [vmem:[%s5 + $0x28] sm:$0xf]
        %v11079 = vld [vmem:[%s5 + $0x2c] sm:$0xf]
        %v11080 = vld [vmem:[%s5 + $0x30] sm:$0xf]
        %v11081 = vld [vmem:[%s5 + $0x34] sm:$0xf]
        %v11082 = vld [vmem:[%s5 + $0x38] sm:$0xf]
        %v11083 = vld [vmem:[%s5 + $0x3c] sm:$0xf]
        %v11084 = vld [vmem:[%s5 + $0x40] sm:$0xf]
        %v11085 = vld [vmem:[%s5 + $0x44] sm:$0xf]
        %v11086 = vld [vmem:[%s5 + $0x48] sm:$0xf]
        %v11087 = vld [vmem:[%s5 + $0x4c] sm:$0xf]
        %v11088 = vld [vmem:[%s5 + $0x50] sm:$0xf]
        %v11089 = vld [vmem:[%s5 + $0x54] sm:$0xf]
        %v11090 = vld [vmem:[%s5 + $0x58] sm:$0xf]
        %v11091 = vld [vmem:[%s5 + $0x5c] sm:$0xf]
        %v11092 = vld [vmem:[%s5 + $0x60] sm:$0xf]
        %v11093 = vld [vmem:[%s5 + $0x64] sm:$0xf]
        %v11094 = vld [vmem:[%s5 + $0x68] sm:$0xf]
        %v11095 = vld [vmem:[%s5 + $0x6c] sm:$0xf]
        %v11096 = vld [vmem:[%s5 + $0x70] sm:$0xf]
        %v11097 = vld [vmem:[%s5 + $0x74] sm:$0xf]
        %v11098 = vld [vmem:[%s5 + $0x78] sm:$0xf]
        %v11099 = vld [vmem:[%s5 + $0x7c] sm:$0xf]
        %v11100 = vld [vmem:[%s5 + $0x80] sm:$0xf]
        %v11101 = vld [vmem:[%s5 + $0x84] sm:$0xf]
        %v11102 = vld [vmem:[%s5 + $0x88] sm:$0xf]
        %v11103 = vld [vmem:[%s5 + $0x8c] sm:$0xf]
        %v11104 = vld [vmem:[%s5 + $0x90] sm:$0xf]
        %v11105 = vld [vmem:[%s5 + $0x94] sm:$0xf]
        %v11106 = vld [vmem:[%s5 + $0x98] sm:$0xf]
        %v11107 = vld [vmem:[%s5 + $0x9c] sm:$0xf]
        %v11108 = vld [vmem:[%s5 + $0xa0] sm:$0xf]
        %v11109 = vld [vmem:[%s5 + $0xa4] sm:$0xf]
        %v11110 = vld [vmem:[%s5 + $0xa8] sm:$0xf]
        %v11111 = vld [vmem:[%s5 + $0xac] sm:$0xf]
        %v11112 = vld [vmem:[%s5 + $0xb0] sm:$0xf]
        %v11113 = vld [vmem:[%s5 + $0xb4] sm:$0xf]
        %v11114 = vld [vmem:[%s5 + $0xb8] sm:$0xf]
        %v11115 = vld [vmem:[%s5 + $0xbc] sm:$0xf]
        %v11116 = vld [vmem:[%s5 + $0xc0] sm:$0xf]
        %v11117 = vld [vmem:[%s5 + $0xc4] sm:$0xf]
        %v11118 = vld [vmem:[%s5 + $0xc8] sm:$0xf]
        %v11119 = vld [vmem:[%s5 + $0xcc] sm:$0xf]
        %v11120 = vld [vmem:[%s5 + $0xd0] sm:$0xf]
        %v11121 = vld [vmem:[%s5 + $0xd4] sm:$0xf]
        %v11122 = vld [vmem:[%s5 + $0xd8] sm:$0xf]
        %v11123 = vld [vmem:[%s5 + $0xdc] sm:$0xf]
        %v11124 = vld [vmem:[%s5 + $0xe0] sm:$0xf]
        %v11125 = vld [vmem:[%s5 + $0xe4] sm:$0xf]
        %v11126 = vld [vmem:[%s5 + $0xe8] sm:$0xf]
        %v11127 = vld [vmem:[%s5 + $0xec] sm:$0xf]
        %v11128 = vld [vmem:[%s5 + $0xf0] sm:$0xf]
        %v11129 = vld [vmem:[%s5 + $0xf4] sm:$0xf]
        %v11130 = vld [vmem:[%s5 + $0xf8] sm:$0xf]
        %v11131 = vld [vmem:[%s5 + $0xfc] sm:$0xf]
        %v11132 = vld [vmem:[%s5 + $0x100] sm:$0xf]
        %v11133 = vld [vmem:[%s5 + $0x104] sm:$0xf]
        %v11134 = vld [vmem:[%s5 + $0x108] sm:$0xf]
        %v11135 = vld [vmem:[%s5 + $0x10c] sm:$0xf]
        %v11136 = vld [vmem:[%s5 + $0x110] sm:$0xf]
        %v11137 = vld [vmem:[%s5 + $0x114] sm:$0xf]
        %v11138 = vld [vmem:[%s5 + $0x118] sm:$0xf]
        %v11139 = vld [vmem:[%s5 + $0x11c] sm:$0xf]
        %v11140 = vld [vmem:[%s5 + $0x120] sm:$0xf]
        %v11141 = vld [vmem:[%s5 + $0x124] sm:$0xf]
        %v11142 = vld [vmem:[%s5 + $0x128] sm:$0xf]
        %v11143 = vld [vmem:[%s5 + $0x12c] sm:$0xf]
        %v11144 = vld [vmem:[%s5 + $0x130] sm:$0xf]
        %v11145 = vld [vmem:[%s5 + $0x134] sm:$0xf]
        %v11146 = vld [vmem:[%s5 + $0x138] sm:$0xf]
        %v11147 = vld [vmem:[%s5 + $0x13c] sm:$0xf]
        %v11148 = vld [vmem:[%s5 + $0x140] sm:$0xf]
        %v11149 = vld [vmem:[%s5 + $0x144] sm:$0xf]
        %v11150 = vld [vmem:[%s5 + $0x148] sm:$0xf]
        %v11151 = vld [vmem:[%s5 + $0x14c] sm:$0xf]
        %v11152 = vld [vmem:[%s5 + $0x150] sm:$0xf]
        %v11153 = vld [vmem:[%s5 + $0x154] sm:$0xf]
        %v11154 = vld [vmem:[%s5 + $0x158] sm:$0xf]
        %v11155 = vld [vmem:[%s5 + $0x15c] sm:$0xf]
        %v11156 = vld [vmem:[%s5 + $0x160] sm:$0xf]
        %v11157 = vld [vmem:[%s5 + $0x164] sm:$0xf]
        %v11158 = vld [vmem:[%s5 + $0x168] sm:$0xf]
        %v11159 = vld [vmem:[%s5 + $0x16c] sm:$0xf]
        %v11160 = vld [vmem:[%s5 + $0x170] sm:$0xf]
        %v11161 = vld [vmem:[%s5 + $0x174] sm:$0xf]
        %v11162 = vld [vmem:[%s5 + $0x178] sm:$0xf]
        %v11163 = vld [vmem:[%s5 + $0x17c] sm:$0xf]
        %v11164 = vld [vmem:[%s5 + $0x180] sm:$0xf]
        %v11165 = vld [vmem:[%s5 + $0x184] sm:$0xf]
        %v11166 = vld [vmem:[%s5 + $0x188] sm:$0xf]
        %v11167 = vld [vmem:[%s5 + $0x18c] sm:$0xf]
        %v11168 = vld [vmem:[%s5 + $0x190] sm:$0xf]
        %v11169 = vld [vmem:[%s5 + $0x194] sm:$0xf]
        %v11170 = vld [vmem:[%s5 + $0x198] sm:$0xf]
        %v11171 = vld [vmem:[%s5 + $0x19c] sm:$0xf]
        %v11172 = vld [vmem:[%s5 + $0x1a0] sm:$0xf]
        %v11173 = vld [vmem:[%s5 + $0x1a4] sm:$0xf]
        %v11174 = vld [vmem:[%s5 + $0x1a8] sm:$0xf]
        %v11175 = vld [vmem:[%s5 + $0x1ac] sm:$0xf]
        %v11176 = vld [vmem:[%s5 + $0x1b0] sm:$0xf]
        %v11177 = vld [vmem:[%s5 + $0x1b4] sm:$0xf]
        %v11178 = vld [vmem:[%s5 + $0x1b8] sm:$0xf]
        %v11179 = vld [vmem:[%s5 + $0x1bc] sm:$0xf]
        %v11180 = vld [vmem:[%s5 + $0x1c0] sm:$0xf]
        %v11181 = vld [vmem:[%s5 + $0x1c4] sm:$0xf]
        %v11182 = vld [vmem:[%s5 + $0x1c8] sm:$0xf]
        %v11183 = vld [vmem:[%s5 + $0x1cc] sm:$0xf]
        %v11184 = vld [vmem:[%s5 + $0x1d0] sm:$0xf]
        %v11185 = vld [vmem:[%s5 + $0x1d4] sm:$0xf]
        %v11186 = vld [vmem:[%s5 + $0x1d8] sm:$0xf]
        %v11187 = vld [vmem:[%s5 + $0x1dc] sm:$0xf]
        %v11188 = vld [vmem:[%s5 + $0x1e0] sm:$0xf]
        %v11189 = vld [vmem:[%s5 + $0x1e4] sm:$0xf]
        %v11190 = vld [vmem:[%s5 + $0x1e8] sm:$0xf]
        %v11191 = vld [vmem:[%s5 + $0x1ec] sm:$0xf]
        %v11192 = vld [vmem:[%s5 + $0x1f0] sm:$0xf]
        %v11193 = vld [vmem:[%s5 + $0x1f4] sm:$0xf]
        %v11194 = vld [vmem:[%s5 + $0x1f8] sm:$0xf]
        %v11195 = vld [vmem:[%s5 + $0x1fc] sm:$0xf]
        %v11196 = vld [vmem:[%s6] sm:$0x1]
        %v11325 = vunpack.c.l.b16 %v11068
        %v11326 = vunpack.c.l.b16 %v11069
        %v11327 = vunpack.c.l.b16 %v11070
        %v11328 = vunpack.c.l.b16 %v11071
        %v11329 = vunpack.c.l.b16 %v11072
        %v11330 = vunpack.c.l.b16 %v11073
        %v11331 = vunpack.c.l.b16 %v11074
        %v11332 = vunpack.c.l.b16 %v11075
        %v11333 = vunpack.c.l.b16 %v11076
        %v11334 = vunpack.c.l.b16 %v11077
        %v11335 = vunpack.c.l.b16 %v11078
        %v11336 = vunpack.c.l.b16 %v11079
        %v11337 = vunpack.c.l.b16 %v11080
        %v11338 = vunpack.c.l.b16 %v11081
        %v11339 = vunpack.c.l.b16 %v11082
        %v11340 = vunpack.c.l.b16 %v11083
        %v11341 = vunpack.c.l.b16 %v11084
        %v11342 = vunpack.c.l.b16 %v11085
        %v11343 = vunpack.c.l.b16 %v11086
        %v11344 = vunpack.c.l.b16 %v11087
        %v11345 = vunpack.c.l.b16 %v11088
        %v11346 = vunpack.c.l.b16 %v11089
        %v11347 = vunpack.c.l.b16 %v11090
        %v11348 = vunpack.c.l.b16 %v11091
        %v11349 = vunpack.c.l.b16 %v11092
        %v11350 = vunpack.c.l.b16 %v11093
        %v11351 = vunpack.c.l.b16 %v11094
        %v11352 = vunpack.c.l.b16 %v11095
        %v11353 = vunpack.c.l.b16 %v11096
        %v11354 = vunpack.c.l.b16 %v11097
        %v11355 = vunpack.c.l.b16 %v11098
        %v11356 = vunpack.c.l.b16 %v11099
        %v11357 = vunpack.c.l.b16 %v11100
        %v11358 = vunpack.c.l.b16 %v11101
        %v11359 = vunpack.c.l.b16 %v11102
        %v11360 = vunpack.c.l.b16 %v11103
        %v11361 = vunpack.c.l.b16 %v11104
        %v11362 = vunpack.c.l.b16 %v11105
        %v11363 = vunpack.c.l.b16 %v11106
        %v11364 = vunpack.c.l.b16 %v11107
        %v11365 = vunpack.c.l.b16 %v11108
        %v11366 = vunpack.c.l.b16 %v11109
        %v11367 = vunpack.c.l.b16 %v11110
        %v11368 = vunpack.c.l.b16 %v11111
        %v11369 = vunpack.c.l.b16 %v11112
        %v11370 = vunpack.c.l.b16 %v11113
        %v11371 = vunpack.c.l.b16 %v11114
        %v11372 = vunpack.c.l.b16 %v11115
        %v11373 = vunpack.c.l.b16 %v11116
        %v11374 = vunpack.c.l.b16 %v11117
        %v11375 = vunpack.c.l.b16 %v11118
        %v11376 = vunpack.c.l.b16 %v11119
        %v11377 = vunpack.c.l.b16 %v11120
        %v11378 = vunpack.c.l.b16 %v11121
        %v11379 = vunpack.c.l.b16 %v11122
        %v11380 = vunpack.c.l.b16 %v11123
        %v11381 = vunpack.c.l.b16 %v11124
        %v11382 = vunpack.c.l.b16 %v11125
        %v11383 = vunpack.c.l.b16 %v11126
        %v11384 = vunpack.c.l.b16 %v11127
        %v11385 = vunpack.c.l.b16 %v11128
        %v11386 = vunpack.c.l.b16 %v11129
        %v11387 = vunpack.c.l.b16 %v11130
        %v11388 = vunpack.c.l.b16 %v11131
        %v11389 = vunpack.c.l.b16 %v11132
        %v11390 = vunpack.c.l.b16 %v11133
        %v11391 = vunpack.c.l.b16 %v11134
        %v11392 = vunpack.c.l.b16 %v11135
        %v11393 = vunpack.c.l.b16 %v11136
        %v11394 = vunpack.c.l.b16 %v11137
        %v11395 = vunpack.c.l.b16 %v11138
        %v11396 = vunpack.c.l.b16 %v11139
        %v11397 = vunpack.c.l.b16 %v11140
        %v11398 = vunpack.c.l.b16 %v11141
        %v11399 = vunpack.c.l.b16 %v11142
        %v11400 = vunpack.c.l.b16 %v11143
        %v11401 = vunpack.c.l.b16 %v11144
        %v11402 = vunpack.c.l.b16 %v11145
        %v11403 = vunpack.c.l.b16 %v11146
        %v11404 = vunpack.c.l.b16 %v11147
        %v11405 = vunpack.c.l.b16 %v11148
        %v11406 = vunpack.c.l.b16 %v11149
        %v11407 = vunpack.c.l.b16 %v11150
        %v11408 = vunpack.c.l.b16 %v11151
        %v11409 = vunpack.c.l.b16 %v11152
        %v11410 = vunpack.c.l.b16 %v11153
        %v11411 = vunpack.c.l.b16 %v11154
        %v11412 = vunpack.c.l.b16 %v11155
        %v11413 = vunpack.c.l.b16 %v11156
        %v11414 = vunpack.c.l.b16 %v11157
        %v11415 = vunpack.c.l.b16 %v11158
        %v11416 = vunpack.c.l.b16 %v11159
        %v11417 = vunpack.c.l.b16 %v11160
        %v11418 = vunpack.c.l.b16 %v11161
        %v11419 = vunpack.c.l.b16 %v11162
        %v11420 = vunpack.c.l.b16 %v11163
        %v11421 = vunpack.c.l.b16 %v11164
        %v11422 = vunpack.c.l.b16 %v11165
        %v11423 = vunpack.c.l.b16 %v11166
        %v11424 = vunpack.c.l.b16 %v11167
        %v11425 = vunpack.c.l.b16 %v11168
        %v11426 = vunpack.c.l.b16 %v11169
        %v11427 = vunpack.c.l.b16 %v11170
        %v11428 = vunpack.c.l.b16 %v11171
        %v11429 = vunpack.c.l.b16 %v11172
        %v11430 = vunpack.c.l.b16 %v11173
        %v11431 = vunpack.c.l.b16 %v11174
        %v11432 = vunpack.c.l.b16 %v11175
        %v11433 = vunpack.c.l.b16 %v11176
        %v11434 = vunpack.c.l.b16 %v11177
        %v11435 = vunpack.c.l.b16 %v11178
        %v11436 = vunpack.c.l.b16 %v11179
        %v11437 = vunpack.c.l.b16 %v11180
        %v11438 = vunpack.c.l.b16 %v11181
        %v11439 = vunpack.c.l.b16 %v11182
        %v11440 = vunpack.c.l.b16 %v11183
        %v11441 = vunpack.c.l.b16 %v11184
        %v11442 = vunpack.c.l.b16 %v11185
        %v11443 = vunpack.c.l.b16 %v11186
        %v11444 = vunpack.c.l.b16 %v11187
        %v11445 = vunpack.c.l.b16 %v11188
        %v11446 = vunpack.c.l.b16 %v11189
        %v11447 = vunpack.c.l.b16 %v11190
        %v11448 = vunpack.c.l.b16 %v11191
        %v11449 = vunpack.c.l.b16 %v11192
        %v11450 = vunpack.c.l.b16 %v11193
        %v11451 = vunpack.c.l.b16 %v11194
        %v11452 = vunpack.c.l.b16 %v11195
        %v11453 = vpack.c.b16 %v11326, %v11325
        %v11454 = vpack.c.b16 %v11328, %v11327
        %v11455 = vpack.c.b16 %v11330, %v11329
        %v11456 = vpack.c.b16 %v11332, %v11331
        %v11457 = vpack.c.b16 %v11334, %v11333
        %v11458 = vpack.c.b16 %v11336, %v11335
        %v11459 = vpack.c.b16 %v11338, %v11337
        %v11460 = vpack.c.b16 %v11340, %v11339
        %v11461 = vpack.c.b16 %v11342, %v11341
        %v11462 = vpack.c.b16 %v11344, %v11343
        %v11463 = vpack.c.b16 %v11346, %v11345
        %v11464 = vpack.c.b16 %v11348, %v11347
        %v11465 = vpack.c.b16 %v11350, %v11349
        %v11466 = vpack.c.b16 %v11352, %v11351
        %v11467 = vpack.c.b16 %v11354, %v11353
        %v11468 = vpack.c.b16 %v11356, %v11355
        %v11469 = vpack.c.b16 %v11358, %v11357
        %v11470 = vpack.c.b16 %v11360, %v11359
        %v11471 = vpack.c.b16 %v11362, %v11361
        %v11472 = vpack.c.b16 %v11364, %v11363
        %v11473 = vpack.c.b16 %v11366, %v11365
        %v11474 = vpack.c.b16 %v11368, %v11367
        %v11475 = vpack.c.b16 %v11370, %v11369
        %v11476 = vpack.c.b16 %v11372, %v11371
        %v11477 = vpack.c.b16 %v11374, %v11373
        %v11478 = vpack.c.b16 %v11376, %v11375
        %v11479 = vpack.c.b16 %v11378, %v11377
        %v11480 = vpack.c.b16 %v11380, %v11379
        %v11481 = vpack.c.b16 %v11382, %v11381
        %v11482 = vpack.c.b16 %v11384, %v11383
        %v11483 = vpack.c.b16 %v11386, %v11385
        %v11484 = vpack.c.b16 %v11388, %v11387
        %v11485 = vpack.c.b16 %v11390, %v11389
        %v11486 = vpack.c.b16 %v11392, %v11391
        %v11487 = vpack.c.b16 %v11394, %v11393
        %v11488 = vpack.c.b16 %v11396, %v11395
        %v11489 = vpack.c.b16 %v11398, %v11397
        %v11490 = vpack.c.b16 %v11400, %v11399
        %v11491 = vpack.c.b16 %v11402, %v11401
        %v11492 = vpack.c.b16 %v11404, %v11403
        %v11493 = vpack.c.b16 %v11406, %v11405
        %v11494 = vpack.c.b16 %v11408, %v11407
        %v11495 = vpack.c.b16 %v11410, %v11409
        %v11496 = vpack.c.b16 %v11412, %v11411
        %v11497 = vpack.c.b16 %v11414, %v11413
        %v11498 = vpack.c.b16 %v11416, %v11415
        %v11499 = vpack.c.b16 %v11418, %v11417
        %v11500 = vpack.c.b16 %v11420, %v11419
        %v11501 = vpack.c.b16 %v11422, %v11421
        %v11502 = vpack.c.b16 %v11424, %v11423
        %v11503 = vpack.c.b16 %v11426, %v11425
        %v11504 = vpack.c.b16 %v11428, %v11427
        %v11505 = vpack.c.b16 %v11430, %v11429
        %v11506 = vpack.c.b16 %v11432, %v11431
        %v11507 = vpack.c.b16 %v11434, %v11433
        %v11508 = vpack.c.b16 %v11436, %v11435
        %v11509 = vpack.c.b16 %v11438, %v11437
        %v11510 = vpack.c.b16 %v11440, %v11439
        %v11511 = vpack.c.b16 %v11442, %v11441
        %v11512 = vpack.c.b16 %v11444, %v11443
        %v11513 = vpack.c.b16 %v11446, %v11445
        %v11514 = vpack.c.b16 %v11448, %v11447
        %v11515 = vpack.c.b16 %v11450, %v11449
        %v11516 = vpack.c.b16 %v11452, %v11451
        %11581 = vmatprep.subr.bf16.mxu0 0
        %11582 = vmatpush1.bf16.msra.mxu0 %v11453
        %11583 = vmatprep.subr.bf16.mxu0 0
        %11584 = vmatpush1.bf16.msra.mxu0 %v11454
        %11585 = vmatprep.subr.bf16.mxu0 0
        %11586 = vmatpush1.bf16.msra.mxu0 %v11455
        %11587 = vmatprep.subr.bf16.mxu0 0
        %11588 = vmatpush1.bf16.msra.mxu0 %v11456
        %11589 = vmatprep.subr.bf16.mxu0 0
        %11590 = vmatpush1.bf16.msra.mxu0 %v11457
        %11591 = vmatprep.subr.bf16.mxu0 0
        %11592 = vmatpush1.bf16.msra.mxu0 %v11458
        %11593 = vmatprep.subr.bf16.mxu0 0
        %11594 = vmatpush1.bf16.msra.mxu0 %v11459
        %11595 = vmatprep.subr.bf16.mxu0 0
        %11596 = vmatpush1.bf16.msra.mxu0 %v11460
        %11597 = vmatprep.subr.bf16.mxu0 0
        %11598 = vmatpush1.bf16.msra.mxu0 %v11461
        %11599 = vmatprep.subr.bf16.mxu0 0
        %11600 = vmatpush1.bf16.msra.mxu0 %v11462
        %11601 = vmatprep.subr.bf16.mxu0 0
        %11602 = vmatpush1.bf16.msra.mxu0 %v11463
        %11603 = vmatprep.subr.bf16.mxu0 0
        %11604 = vmatpush1.bf16.msra.mxu0 %v11464
        %11605 = vmatprep.subr.bf16.mxu0 0
        %11606 = vmatpush1.bf16.msra.mxu0 %v11465
        %11607 = vmatprep.subr.bf16.mxu0 0
        %11608 = vmatpush1.bf16.msra.mxu0 %v11466
        %11609 = vmatprep.subr.bf16.mxu0 0
        %11610 = vmatpush1.bf16.msra.mxu0 %v11467
        %11611 = vmatprep.subr.bf16.mxu0 0
        %11612 = vmatpush1.bf16.msra.mxu0 %v11468
        %11613 = vmatprep.mubr.bf16.mxu0 %v11061
        %11614 = vmatmul.mubr.bf16.gmra.mrb[0].mxu0 %v11060
        %v11615 = vpop.f32.mrb[0].mxu0
        %v11616 = vadd.f32 %v11196, %v11615
        %v11617 = vpop.f32.mrb[0].mxu0
        %v11618 = vpop.f32.mrb[0].mxu0
        %v11619 = vpop.f32.mrb[0].mxu0
        %11620 = vdwg.mxu0
        %11621 = vmatprep.subr.bf16.mxu0 0
        %11622 = vmatpush1.bf16.msra.mxu0 %v11469
        %11623 = vmatprep.subr.bf16.mxu0 0
        %11624 = vmatpush1.bf16.msra.mxu0 %v11470
        %11625 = vmatprep.subr.bf16.mxu0 0
        %11626 = vmatpush1.bf16.msra.mxu0 %v11471
        %11627 = vmatprep.subr.bf16.mxu0 0
        %11628 = vmatpush1.bf16.msra.mxu0 %v11472
        %11629 = vmatprep.subr.bf16.mxu0 0
        %11630 = vmatpush1.bf16.msra.mxu0 %v11473
        %11631 = vmatprep.subr.bf16.mxu0 0
        %11632 = vmatpush1.bf16.msra.mxu0 %v11474
        %11633 = vmatprep.subr.bf16.mxu0 0
        %11634 = vmatpush1.bf16.msra.mxu0 %v11475
        %11635 = vmatprep.subr.bf16.mxu0 0
        %11636 = vmatpush1.bf16.msra.mxu0 %v11476
        %11637 = vmatprep.subr.bf16.mxu0 0
        %11638 = vmatpush1.bf16.msra.mxu0 %v11477
        %11639 = vmatprep.subr.bf16.mxu0 0
        %11640 = vmatpush1.bf16.msra.mxu0 %v11478
        %11641 = vmatprep.subr.bf16.mxu0 0
        %11642 = vmatpush1.bf16.msra.mxu0 %v11479
        %11643 = vmatprep.subr.bf16.mxu0 0
        %11644 = vmatpush1.bf16.msra.mxu0 %v11480
        %11645 = vmatprep.subr.bf16.mxu0 0
        %11646 = vmatpush1.bf16.msra.mxu0 %v11481
        %11647 = vmatprep.subr.bf16.mxu0 0
        %11648 = vmatpush1.bf16.msra.mxu0 %v11482
        %11649 = vmatprep.subr.bf16.mxu0 0
        %11650 = vmatpush1.bf16.msra.mxu0 %v11483
        %11651 = vmatprep.subr.bf16.mxu0 0
        %11652 = vmatpush1.bf16.msra.mxu0 %v11484
        %11653 = vmatprep.mubr.bf16.mxu0 %v11063
        %11654 = vmatmul.mubr.bf16.gmra.mrb[0].mxu0 %v11062
        %v11655 = vpop.f32.mrb[0].mxu0
        %v11656 = vadd.f32 %v11616, %v11655
        %v11657 = vpop.f32.mrb[0].mxu0
        %v11658 = vpop.f32.mrb[0].mxu0
        %v11659 = vpop.f32.mrb[0].mxu0
        %11660 = vdwg.mxu0
        %11661 = vmatprep.subr.bf16.mxu0 0
        %11662 = vmatpush1.bf16.msra.mxu0 %v11485
        %11663 = vmatprep.subr.bf16.mxu0 0
        %11664 = vmatpush1.bf16.msra.mxu0 %v11486
        %11665 = vmatprep.subr.bf16.mxu0 0
        %11666 = vmatpush1.bf16.msra.mxu0 %v11487
        %11667 = vmatprep.subr.bf16.mxu0 0
        %11668 = vmatpush1.bf16.msra.mxu0 %v11488
        %11669 = vmatprep.subr.bf16.mxu0 0
        %11670 = vmatpush1.bf16.msra.mxu0 %v11489
        %11671 = vmatprep.subr.bf16.mxu0 0
        %11672 = vmatpush1.bf16.msra.mxu0 %v11490
        %11673 = vmatprep.subr.bf16.mxu0 0
        %11674 = vmatpush1.bf16.msra.mxu0 %v11491
        %11675 = vmatprep.subr.bf16.mxu0 0
        %11676 = vmatpush1.bf16.msra.mxu0 %v11492
        %11677 = vmatprep.subr.bf16.mxu0 0
        %11678 = vmatpush1.bf16.msra.mxu0 %v11493
        %11679 = vmatprep.subr.bf16.mxu0 0
        %11680 = vmatpush1.bf16.msra.mxu0 %v11494
        %11681 = vmatprep.subr.bf16.mxu0 0
        %11682 = vmatpush1.bf16.msra.mxu0 %v11495
        %11683 = vmatprep.subr.bf16.mxu0 0
        %11684 = vmatpush1.bf16.msra.mxu0 %v11496
        %11685 = vmatprep.subr.bf16.mxu0 0
        %11686 = vmatpush1.bf16.msra.mxu0 %v11497
        %11687 = vmatprep.subr.bf16.mxu0 0
        %11688 = vmatpush1.bf16.msra.mxu0 %v11498
        %11689 = vmatprep.subr.bf16.mxu0 0
        %11690 = vmatpush1.bf16.msra.mxu0 %v11499
        %11691 = vmatprep.subr.bf16.mxu0 0
        %11692 = vmatpush1.bf16.msra.mxu0 %v11500
        %11693 = vmatprep.mubr.bf16.mxu0 %v11065
        %11694 = vmatmul.mubr.bf16.gmra.mrb[0].mxu0 %v11064
        %v11695 = vpop.f32.mrb[0].mxu0
        %v11696 = vadd.f32 %v11656, %v11695
        %v11697 = vpop.f32.mrb[0].mxu0
        %v11698 = vpop.f32.mrb[0].mxu0
        %v11699 = vpop.f32.mrb[0].mxu0
        %11700 = vdwg.mxu0
        %11701 = vmatprep.subr.bf16.mxu0 0
        %11702 = vmatpush1.bf16.msra.mxu0 %v11501
        %11703 = vmatprep.subr.bf16.mxu0 0
        %11704 = vmatpush1.bf16.msra.mxu0 %v11502
        %11705 = vmatprep.subr.bf16.mxu0 0
        %11706 = vmatpush1.bf16.msra.mxu0 %v11503
        %11707 = vmatprep.subr.bf16.mxu0 0
        %11708 = vmatpush1.bf16.msra.mxu0 %v11504
        %11709 = vmatprep.subr.bf16.mxu0 0
        %11710 = vmatpush1.bf16.msra.mxu0 %v11505
        %11711 = vmatprep.subr.bf16.mxu0 0
        %11712 = vmatpush1.bf16.msra.mxu0 %v11506
        %11713 = vmatprep.subr.bf16.mxu0 0
        %11714 = vmatpush1.bf16.msra.mxu0 %v11507
        %11715 = vmatprep.subr.bf16.mxu0 0
        %11716 = vmatpush1.bf16.msra.mxu0 %v11508
        %11717 = vmatprep.subr.bf16.mxu0 0
        %11718 = vmatpush1.bf16.msra.mxu0 %v11509
        %11719 = vmatprep.subr.bf16.mxu0 0
        %11720 = vmatpush1.bf16.msra.mxu0 %v11510
        %11721 = vmatprep.subr.bf16.mxu0 0
        %11722 = vmatpush1.bf16.msra.mxu0 %v11511
        %11723 = vmatprep.subr.bf16.mxu0 0
        %11724 = vmatpush1.bf16.msra.mxu0 %v11512
        %11725 = vmatprep.subr.bf16.mxu0 0
        %11726 = vmatpush1.bf16.msra.mxu0 %v11513
        %11727 = vmatprep.subr.bf16.mxu0 0
        %11728 = vmatpush1.bf16.msra.mxu0 %v11514
        %11729 = vmatprep.subr.bf16.mxu0 0
        %11730 = vmatpush1.bf16.msra.mxu0 %v11515
        %11731 = vmatprep.subr.bf16.mxu0 0
        %11732 = vmatpush1.bf16.msra.mxu0 %v11516
        %11733 = vmatprep.mubr.bf16.mxu0 %v11067
        %11734 = vmatmul.mubr.bf16.gmra.mrb[0].mxu0 %v11066
        %v11735 = vpop.f32.mrb[0].mxu0
        %v11736 = vadd.f32 %v11696, %v11735
        %v11737 = vpop.f32.mrb[0].mxu0
        %v11738 = vpop.f32.mrb[0].mxu0
        %v11739 = vpop.f32.mrb[0].mxu0
        %11740 = vdwg.mxu0
        %v11741 = vmax.f32 %v11736, 0.0
        %v11742 = vpack.c.bf16 %v11741, %v11741
        %v11743 = vld [vmem:[%s7] sm:$0xf]
        %v11744 = vld [vmem:[%s7 + $0x4] sm:$0xf]
        %v11745 = vld [vmem:[%s7 + $0x8] sm:$0xf]
        %v11746 = vld [vmem:[%s7 + $0xc] sm:$0xf]
        %v11747 = vld [vmem:[%s8] sm:$0x1]
        %v11752 = vunpack.c.l.b16 %v11743
        %v11753 = vunpack.c.l.b16 %v11744
        %v11754 = vunpack.c.l.b16 %v11745
        %v11755 = vunpack.c.l.b16 %v11746
        %v11756 = vpack.c.b16 %v11753, %v11752
        %v11757 = vpack.c.b16 %v11755, %v11754
        %v11761 = vsel %vm7613, %v11742, 0
        %11763 = vmatprep.subr.bf16.mxu0 0
        %11764 = vmatpush1.bf16.msra.mxu0 %v11756
        %11765 = vmatprep.subr.bf16.mxu0 0
        %11766 = vmatpush1.bf16.msra.mxu0 %v11757
        %11767 = vmatprep.subr.bf16.mxu0 0
        %11768 = vmatpush1.bf16.msra.mxu0 0
        %11769 = vmatprep.subr.bf16.mxu0 0
        %11770 = vmatpush1.bf16.msra.mxu0 0
        %11771 = vmatprep.subr.bf16.mxu0 0
        %11772 = vmatpush1.bf16.msra.mxu0 0
        %11773 = vmatprep.subr.bf16.mxu0 0
        %11774 = vmatpush1.bf16.msra.mxu0 0
        %11775 = vmatprep.subr.bf16.mxu0 0
        %11776 = vmatpush1.bf16.msra.mxu0 0
        %11777 = vmatprep.subr.bf16.mxu0 0
        %11778 = vmatpush1.bf16.msra.mxu0 0
        %11779 = vmatprep.subr.bf16.mxu0 0
        %11780 = vmatpush1.bf16.msra.mxu0 0
        %11781 = vmatprep.subr.bf16.mxu0 0
        %11782 = vmatpush1.bf16.msra.mxu0 0
        %11783 = vmatprep.subr.bf16.mxu0 0
        %11784 = vmatpush1.bf16.msra.mxu0 0
        %11785 = vmatprep.subr.bf16.mxu0 0
        %11786 = vmatpush1.bf16.msra.mxu0 0
        %11787 = vmatprep.subr.bf16.mxu0 0
        %11788 = vmatpush1.bf16.msra.mxu0 0
        %11789 = vmatprep.subr.bf16.mxu0 0
        %11790 = vmatpush1.bf16.msra.mxu0 0
        %11791 = vmatprep.subr.bf16.mxu0 0
        %11792 = vmatpush1.bf16.msra.mxu0 0
        %11793 = vmatprep.subr.bf16.mxu0 0
        %11794 = vmatpush1.bf16.msra.mxu0 0
        %11795 = vmatprep.mubr.bf16.mxu0 0
        %11796 = vmatmul.mubr.bf16.gmra.mrb[0].mxu0 %v11761
        %v11797 = vpop.f32.mrb[0].mxu0
        %v11798 = vadd.f32 %v11747, %v11797
        %v11799 = vpop.f32.mrb[0].mxu0
        %v11800 = vpop.f32.mrb[0].mxu0
        %v11801 = vpop.f32.mrb[0].mxu0
        %11802 = vdwg.mxu0
        %v11803 = vmax.f32 %v11798, 0.0
        %v11804 = vpack.c.bf16 %v11803, %v11803
        %v11805 = vld [vmem:[%s9] sm:$0xf]
        %v11806 = vld [vmem:[%s9 + $0x4] sm:$0xf]
        %v11807 = vld [vmem:[%s10] sm:$0x1]
        %v11810 = vunpack.c.l.b16 %v11805
        %v11811 = vunpack.c.l.b16 %v11806
        %v11812 = vpack.c.b16 %v11811, %v11810
        %vm11814 = vcmask 130048
        %v11816 = vsel %vm11814, %v11804, 0
        %11818 = vmatprep.subr.bf16.mxu0 0
        %11819 = vmatpush1.bf16.msra.mxu0 %v11812
        %11820 = vmatprep.subr.bf16.mxu0 0
        %11821 = vmatpush1.bf16.msra.mxu0 0
        %11822 = vmatprep.subr.bf16.mxu0 0
        %11823 = vmatpush1.bf16.msra.mxu0 0
        %11824 = vmatprep.subr.bf16.mxu0 0
        %11825 = vmatpush1.bf16.msra.mxu0 0
        %11826 = vmatprep.subr.bf16.mxu0 0
        %11827 = vmatpush1.bf16.msra.mxu0 0
        %11828 = vmatprep.subr.bf16.mxu0 0
        %11829 = vmatpush1.bf16.msra.mxu0 0
        %11830 = vmatprep.subr.bf16.mxu0 0
        %11831 = vmatpush1.bf16.msra.mxu0 0
        %11832 = vmatprep.subr.bf16.mxu0 0
        %11833 = vmatpush1.bf16.msra.mxu0 0
        %11834 = vmatprep.subr.bf16.mxu0 0
        %11835 = vmatpush1.bf16.msra.mxu0 0
        %11836 = vmatprep.subr.bf16.mxu0 0
        %11837 = vmatpush1.bf16.msra.mxu0 0
        %11838 = vmatprep.subr.bf16.mxu0 0
        %11839 = vmatpush1.bf16.msra.mxu0 0
        %11840 = vmatprep.subr.bf16.mxu0 0
        %11841 = vmatpush1.bf16.msra.mxu0 0
        %11842 = vmatprep.subr.bf16.mxu0 0
        %11843 = vmatpush1.bf16.msra.mxu0 0
        %11844 = vmatprep.subr.bf16.mxu0 0
        %11845 = vmatpush1.bf16.msra.mxu0 0
        %11846 = vmatprep.subr.bf16.mxu0 0
        %11847 = vmatpush1.bf16.msra.mxu0 0
        %11848 = vmatprep.subr.bf16.mxu0 0
        %11849 = vmatpush1.bf16.msra.mxu0 0
        %11850 = vmatprep.mubr.bf16.mxu0 0
        %11851 = vmatmul.mubr.bf16.gmra.mrb[0].mxu0 %v11816
        %v11852 = vpop.f32.mrb[0].mxu0
        %v11853 = vadd.f32 %v11807, %v11852
        %v11854 = vpop.f32.mrb[0].mxu0
        %v11855 = vpop.f32.mrb[0].mxu0
        %v11856 = vpop.f32.mrb[0].mxu0
        %11857 = vdwg.mxu0
        %vm11858 = vcmask 73728
        %11859 = vst.msk [vmem:[%s378] sm:$0x1] %vm11858, %v11853
        %s11860 = sand.u32 %s269, 1
        %s11861 = scalar_lea.sflag [#allocation3], %s11860
        %s11862 = sand.u32 %s269, 1
        %s11863 = scalar_lea.vmem [#allocation2], %s11862
        // Predicated region
        $region65: #{conv_classification_forward.1} parent=63 // pred_check
          %p11864 = pneg %p279
        $region66: #{conv_classification_forward.1} parent=63 // pred_check_branch
          %11866 = sbr.rel (%p11864) target = $region68
        $region67: #{conv_classification_forward.1} parent=63 // pred_region
          %s11868 = ssub.s32 16, 16
          %11869 = vsyncadd %s11861, %s11868
          %s11870 = smul.addr %s25, 16
          %s11871 = scalar_lea.hbm %s11, %s11870
          %s11873 = sshll.u32 %s11863, 4
          %s11874 = int_to_ptr.vmem [resolvable:$true] %s11873
          %11876 = dma.vmem_to_hbm [thread:$0]  %s11874, 16, %s11871, %s11861
        $region68: #{conv_classification_forward.1} parent=63 // pred_fallthru
          _
      $region64: #{conv_classification_forward.1} parent=5 // pred_fallthru
        _
      %p11877 = scmp.le.s32.totalorder 2, %s20
      // Predicated region
      $region69: #{conv_classification_forward.1} parent=5 // pred_check
        %p11878 = pneg %p11877
      $region70: #{conv_classification_forward.1} parent=5 // pred_check_branch
        %11880 = sbr.rel (%p11878) target = $region72
      $region71: #{conv_classification_forward.1} parent=5 // pred_region
        %s11881 = ssub.s32 %s20, 2
        // Predicated region
        $region73: #{conv_classification_forward.1} parent=71 // pred_check
          %p11882 = pneg %p285
        $region74: #{conv_classification_forward.1} parent=71 // pred_check_branch
          %11884 = sbr.rel (%p11882) target = $region76
        $region75: #{conv_classification_forward.1} parent=71 // pred_region
          %s11885 = sand.u32 %s270, 1
          %s11886 = scalar_lea.sflag [#allocation3], %s11885
          %s11887 = sand.u32 %s270, 1
          %s11888 = scalar_lea.vmem [#allocation2], %s11887
          %11889 = dma.done %s11886, 16
        $region76: #{conv_classification_forward.1} parent=71 // pred_fallthru
          _
      $region72: #{conv_classification_forward.1} parent=5 // pred_fallthru
        _
    $region6: #{conv_classification_forward.1} parent=1 // loop_footer
      %s24 = sadd.s32 1, %s20
    $region7: #{conv_classification_forward.1} parent=1 // loop_footer_branch
      %19 = sbr.rel target = $region3
    $region8: #{conv_classification_forward.1} parent=1 // loop_exit
      _
    %11890 = vsyncpa [#allocation3], 1
    %s11891 = scalar_lea.sflag [#allocation3], 1
    %11892 = vsyncpa %s11891, 1

</llo_original>
